<compile_context>
chip_gen: v7x
topology: tpu7x:2x2x1
jax: 0.10.0
libtpu: 0.0.40
codegen_flags: <defaults>
</compile_context>

<pallas_src>
import jax
import jax.numpy as jnp
from jax.experimental import pallas as pl
from jax.experimental.pallas import tpu as pltpu

# ---- model sizes -----------------------------------------------------------
HALF       = 64                  # dim of `uti` and of `ass` (= input_dim / 2)
INPUT_DIM  = 2 * HALF            # 128
RES_WIDTH  = 128                 # hidden width inside each residual block
RES_DEPTH  = 2                   # Linear->ReLU->Linear repetitions per block
NUM_BLOCKS = 2
NBD        = NUM_BLOCKS * RES_DEPTH   # stacked (W1,b1,W2,b2) layer pairs
MAX_TILE_B = 1024                # largest batch tile (2048 possible; see vmem note)
MIN_TILE_B = 256


def res_assort_kernel(uti_ref, ass_ref, w1_ref, b1_ref, w2_ref, b2_ref,
                      wf_ref, bf_ref, out_ref):
    """One batch tile of the full Res_Assort_Net forward.

    uti_ref : (tile_b, HALF)              bf16
    ass_ref : (tile_b, HALF)              bf16
    w1_ref  : (NBD, INPUT_DIM, RES_WIDTH) bf16   (VMEM-resident across steps)
    b1_ref  : (NBD, RES_WIDTH)            f32
    w2_ref  : (NBD, RES_WIDTH, INPUT_DIM) bf16
    b2_ref  : (NBD, INPUT_DIM)            f32
    wf_ref  : (INPUT_DIM, HALF)           bf16
    bf_ref  : (1, HALF)                   f32
    out_ref : (tile_b, HALF)              out_dtype (f32 by default)
    """
    uti = uti_ref[...]
    ass = ass_ref[...]
    # fused torch.cat((uti, ass), 1); residual stream kept in f32
    x = jnp.concatenate([uti, ass], axis=1).astype(jnp.float32)

    layer = 0
    for _blk in range(NUM_BLOCKS):                   # static unroll over blocks
        h = x
        for _d in range(RES_DEPTH):                  # static unroll over depth
            z = jnp.dot(h.astype(jnp.bfloat16), w1_ref[layer],
                        preferred_element_type=jnp.float32)
            z = jnp.maximum(z + b1_ref[layer:layer + 1, :], 0.0)   # ReLU
            h = jnp.dot(z.astype(jnp.bfloat16), w2_ref[layer],
                        preferred_element_type=jnp.float32)
            h = h + b2_ref[layer:layer + 1, :]
            layer += 1
        x = h + x                                    # residual shortcut

    score = jnp.dot(x.astype(jnp.bfloat16), wf_ref[...],
                    preferred_element_type=jnp.float32)
    score = score + bf_ref[...]
    score = score * ass.astype(jnp.float32)          # .mul(ass)
    # score[score == 0] = -1e20   (literal PyTorch semantics preserved)
    out_ref[...] = jnp.where(score == 0.0, jnp.float32(-1e20),
                             score).astype(out_ref.dtype)


def _pick_tile_b(B, max_tile=MAX_TILE_B, min_tile=MIN_TILE_B):
    """Batch-tile heuristic: big tiles to amortize per-step overhead, an even
    tile count for v7x's two TensorCores, and a divisor of B so no pad copy."""
    # (1) even tile count, no remainder (best: both v7x TCs loaded, no pad)
    for t in range(max_tile, min_tile - 1, -min_tile):
        if B % t == 0 and (B // t) % 2 == 0:
            return t
    # (2) no remainder (tile count may be odd)
    for t in range(max_tile, min_tile - 1, -min_tile):
        if B % t == 0:
            return t
    # (3) small / ragged batch that fits one tile: round rows to a sublane multiple
    if B <= max_tile:
        return max(8, ((B + 7) // 8) * 8)
    # (4) large ragged batch: biggest tile; wrapper pads the last tile
    return max_tile


def res_assort_net(uti, ass, params, *, tile_b=None, out_dtype=jnp.float32):
    w1, b1, w2, b2, wf, bf = params
    B = uti.shape[0]
    if tile_b is None:
        tile_b = _pick_tile_b(B)
    n_tiles = pl.cdiv(B, tile_b)
    b_pad = n_tiles * tile_b

    # Stream inputs as bf16 (under jit this cast fuses with the producer; ideally
    # the caller already provides bf16).  bf16 zero is exact -> ==0 mask preserved.
    uti_b = uti.astype(jnp.bfloat16)
    ass_b = ass.astype(jnp.bfloat16)
    if b_pad != B:                                   # only for ragged batches
        uti_b = jnp.pad(uti_b, ((0, b_pad - B), (0, 0)))
        ass_b = jnp.pad(ass_b, ((0, b_pad - B), (0, 0)))  # padded rows: ass==0

    batch_map = lambda i: (i, 0)
    const2 = lambda i: (0, 0)
    const3 = lambda i: (0, 0, 0)

    flops = b_pad * (NBD * 2 * (2 * INPUT_DIM * RES_WIDTH) + 2 * INPUT_DIM * HALF)
    out_bytes = jnp.dtype(out_dtype).itemsize
    bytes_accessed = (2 * b_pad * HALF * 2                    # bf16 inputs
                      + b_pad * HALF * out_bytes              # output
                      + (w1.size + w2.size + wf.size) * 2     # bf16 weights
                      + (b1.size + b2.size + bf.size) * 4)    # f32 biases

    cp_kwargs = dict(dimension_semantics=("parallel",))
    if tile_b > 1024:
        # v5e's scoped-VMEM default is 16 MiB; very large tiles need headroom.
        cp_kwargs["vmem_limit_bytes"] = 64 * 1024 * 1024

    out = pl.pallas_call(
        res_assort_kernel,
        out_shape=jax.ShapeDtypeStruct((b_pad, HALF), out_dtype),
        grid=(n_tiles,),
        in_specs=[
            pl.BlockSpec((tile_b, HALF), batch_map),            # uti
            pl.BlockSpec((tile_b, HALF), batch_map),            # ass
            pl.BlockSpec((NBD, INPUT_DIM, RES_WIDTH), const3),  # w1 (resident)
            pl.BlockSpec((NBD, RES_WIDTH), const2),             # b1
            pl.BlockSpec((NBD, RES_WIDTH, INPUT_DIM), const3),  # w2 (resident)
            pl.BlockSpec((NBD, INPUT_DIM), const2),             # b2
            pl.BlockSpec((INPUT_DIM, HALF), const2),            # wf (resident)
            pl.BlockSpec((1, HALF), const2),                    # bf
        ],
        out_specs=pl.BlockSpec((tile_b, HALF), batch_map),
        compiler_params=pltpu.CompilerParams(**cp_kwargs),
        cost_estimate=pl.CostEstimate(
            flops=flops, transcendentals=0, bytes_accessed=bytes_accessed),
    )(uti_b, ass_b, w1, b1, w2, b2, wf, bf)

    return out if b_pad == B else out[:B]


def res_assort_ref(uti, ass, params):
    """Pure-JAX reference (same bf16-IO / bf16-operand / f32-accumulate precision)."""
    w1, b1, w2, b2, wf, bf = params
    uti_b = uti.astype(jnp.bfloat16)
    ass_b = ass.astype(jnp.bfloat16)
    x = jnp.concatenate([uti_b, ass_b], axis=1).astype(jnp.float32)
    layer = 0
    for _blk in range(NUM_BLOCKS):
        h = x
        for _d in range(RES_DEPTH):
            z = jnp.dot(h.astype(jnp.bfloat16), w1[layer],
                        preferred_element_type=jnp.float32) + b1[layer]
            z = jnp.maximum(z, 0.0)
            h = jnp.dot(z.astype(jnp.bfloat16), w2[layer],
                        preferred_element_type=jnp.float32) + b2[layer]
            layer += 1
        x = h + x
    score = jnp.dot(x.astype(jnp.bfloat16), wf,
                    preferred_element_type=jnp.float32) + bf
    score = score * ass_b.astype(jnp.float32)
    return jnp.where(score == 0.0, jnp.float32(-1e20), score)


def make_params(key):
    ks = jax.random.split(key, 6)
    w1 = jax.random.normal(ks[0], (NBD, INPUT_DIM, RES_WIDTH), jnp.float32) / jnp.sqrt(INPUT_DIM)
    b1 = 0.01 * jax.random.normal(ks[1], (NBD, RES_WIDTH), jnp.float32)
    w2 = jax.random.normal(ks[2], (NBD, RES_WIDTH, INPUT_DIM), jnp.float32) / jnp.sqrt(RES_WIDTH)
    b2 = 0.01 * jax.random.normal(ks[3], (NBD, INPUT_DIM), jnp.float32)
    wf = jax.random.normal(ks[4], (INPUT_DIM, HALF), jnp.float32) / jnp.sqrt(INPUT_DIM)
    bf = 0.01 * jax.random.normal(ks[5], (1, HALF), jnp.float32)
    # bf16 weights (f32 accumulation in-kernel); biases stay f32.
    return (w1.astype(jnp.bfloat16), b1, w2.astype(jnp.bfloat16), b2,
            wf.astype(jnp.bfloat16), bf)


if __name__ == "__main__":
    key = jax.random.PRNGKey(0)
    k_p, k_data = jax.random.split(key, 2)
    params = make_params(k_p)

    # B=2048 -> 2 even tiles of 1024 rows (no pad, both v7x TCs busy);
    # B=300  -> ragged single 304-row tile (exercises the conditional pad path).
    for B in (2048, 300):
        k_u, k_a, k_m = jax.random.split(jax.random.fold_in(k_data, B), 3)
        uti = jax.random.normal(k_u, (B, HALF), jnp.float32)
        # assortment with exact zeros so the score==0 -> -1e20 path fires
        ass_vals = jax.random.uniform(k_a, (B, HALF), jnp.float32, 0.1, 1.0)
        mask = jax.random.bernoulli(k_m, 0.7, (B, HALF))
        ass = jnp.where(mask, ass_vals, 0.0)

        out = jax.block_until_ready(res_assort_net(uti, ass, params))
        ref = jax.block_until_ready(res_assort_ref(uti, ass, params))

        assert out.shape == (B, HALF) and out.dtype == jnp.float32
        assert bool(jnp.allclose(out, ref, rtol=1e-2, atol=1e-3)), f"mismatch vs reference at B={B}"

    print("KERNEL_OK")
</pallas_src>

<mosaic_0001>
module attributes {stable_mosaic.version = 11 : i64} {
  func.func @res_assort_kernel(%arg0: i32, %arg1: memref<1024x64xbf16, #tpu.memory_space<vmem>>, %arg2: memref<1024x64xbf16, #tpu.memory_space<vmem>>, %arg3: memref<4x128x128xbf16, #tpu.memory_space<vmem>>, %arg4: memref<4x128xf32, #tpu.memory_space<vmem>>, %arg5: memref<4x128x128xbf16, #tpu.memory_space<vmem>>, %arg6: memref<4x128xf32, #tpu.memory_space<vmem>>, %arg7: memref<128x64xbf16, #tpu.memory_space<vmem>>, %arg8: memref<1x64xf32, #tpu.memory_space<vmem>>, %arg9: memref<1024x64xf32, #tpu.memory_space<vmem>>) attributes {dimension_semantics = [#tpu.dimension_semantics<parallel>], iteration_bounds = array<i64: 2>, scalar_prefetch = 0 : i64, scratch_operands = 0 : i64, tpu.core_type = #tpu.core_type<tc>, window_params = [{transform_indices = @transform_0, window_bounds = array<i64: 1024, 64>}, {transform_indices = @transform_1, window_bounds = array<i64: 1024, 64>}, {pipeline_mode = #tpu.pipeline_mode<synchronous>, transform_indices = @transform_2, window_bounds = array<i64: 4, 128, 128>}, {pipeline_mode = #tpu.pipeline_mode<synchronous>, transform_indices = @transform_3, window_bounds = array<i64: 4, 128>}, {pipeline_mode = #tpu.pipeline_mode<synchronous>, transform_indices = @transform_4, window_bounds = array<i64: 4, 128, 128>}, {pipeline_mode = #tpu.pipeline_mode<synchronous>, transform_indices = @transform_5, window_bounds = array<i64: 4, 128>}, {pipeline_mode = #tpu.pipeline_mode<synchronous>, transform_indices = @transform_6, window_bounds = array<i64: 128, 64>}, {pipeline_mode = #tpu.pipeline_mode<synchronous>, transform_indices = @transform_7, window_bounds = array<i64: 1, 64>}, {transform_indices = @transform_8, window_bounds = array<i64: 1024, 64>}]} {
    %c0 = arith.constant 0 : index
    %c0_0 = arith.constant 0 : index
    %0 = vector.load %arg1[%c0, %c0_0] : memref<1024x64xbf16, #tpu.memory_space<vmem>>, vector<1024x64xbf16>
    %c0_1 = arith.constant 0 : index
    %c0_2 = arith.constant 0 : index
    %1 = vector.load %arg2[%c0_1, %c0_2] : memref<1024x64xbf16, #tpu.memory_space<vmem>>, vector<1024x64xbf16>
    %2 = tpu.concatenate %0, %1 in 1 : vector<1024x64xbf16>, vector<1024x64xbf16> -> vector<1024x128xbf16>
    %3 = arith.extf %2 : vector<1024x128xbf16> to vector<1024x128xf32>
    %4 = arith.truncf %3 : vector<1024x128xf32> to vector<1024x128xbf16>
    %c0_3 = arith.constant 0 : index
    %c0_4 = arith.constant 0 : index
    %c0_5 = arith.constant 0 : index
    %5 = vector.load %arg3[%c0_3, %c0_4, %c0_5] : memref<4x128x128xbf16, #tpu.memory_space<vmem>>, vector<1x128x128xbf16>
    %6 = vector.shape_cast %5 : vector<1x128x128xbf16> to vector<128x128xbf16>
    %cst = arith.constant dense<0.000000e+00> : vector<1024x128xf32>
    %7 = tpu.matmul %4, %6, %cst {dimension_numbers = #tpu.dot_dimension_numbers<[1], [0], [0], [1], [0, 0, 1, 1], [], []>} : vector<1024x128xbf16>, vector<128x128xbf16>, vector<1024x128xf32> -> vector<1024x128xf32>
    %c0_6 = arith.constant 0 : index
    %c0_7 = arith.constant 0 : index
    %8 = vector.load %arg4[%c0_6, %c0_7] : memref<4x128xf32, #tpu.memory_space<vmem>>, vector<1x128xf32>
    %9 = vector.broadcast %8 : vector<1x128xf32> to vector<1024x128xf32>
    %10 = arith.addf %7, %9 : vector<1024x128xf32>
    %cst_8 = arith.constant 0.000000e+00 : f32
    %11 = vector.broadcast %cst_8 : f32 to vector<1024x128xf32>
    %12 = arith.maximumf %10, %11 : vector<1024x128xf32>
    %13 = arith.truncf %12 : vector<1024x128xf32> to vector<1024x128xbf16>
    %c0_9 = arith.constant 0 : index
    %c0_10 = arith.constant 0 : index
    %c0_11 = arith.constant 0 : index
    %14 = vector.load %arg5[%c0_9, %c0_10, %c0_11] : memref<4x128x128xbf16, #tpu.memory_space<vmem>>, vector<1x128x128xbf16>
    %15 = vector.shape_cast %14 : vector<1x128x128xbf16> to vector<128x128xbf16>
    %cst_12 = arith.constant dense<0.000000e+00> : vector<1024x128xf32>
    %16 = tpu.matmul %13, %15, %cst_12 {dimension_numbers = #tpu.dot_dimension_numbers<[1], [0], [0], [1], [0, 0, 1, 1], [], []>} : vector<1024x128xbf16>, vector<128x128xbf16>, vector<1024x128xf32> -> vector<1024x128xf32>
    %c0_13 = arith.constant 0 : index
    %c0_14 = arith.constant 0 : index
    %17 = vector.load %arg6[%c0_13, %c0_14] : memref<4x128xf32, #tpu.memory_space<vmem>>, vector<1x128xf32>
    %18 = vector.broadcast %17 : vector<1x128xf32> to vector<1024x128xf32>
    %19 = arith.addf %16, %18 : vector<1024x128xf32>
    %20 = arith.truncf %19 : vector<1024x128xf32> to vector<1024x128xbf16>
    %c1 = arith.constant 1 : index
    %c0_15 = arith.constant 0 : index
    %c0_16 = arith.constant 0 : index
    %21 = vector.load %arg3[%c1, %c0_15, %c0_16] : memref<4x128x128xbf16, #tpu.memory_space<vmem>>, vector<1x128x128xbf16>
    %22 = vector.shape_cast %21 : vector<1x128x128xbf16> to vector<128x128xbf16>
    %cst_17 = arith.constant dense<0.000000e+00> : vector<1024x128xf32>
    %23 = tpu.matmul %20, %22, %cst_17 {dimension_numbers = #tpu.dot_dimension_numbers<[1], [0], [0], [1], [0, 0, 1, 1], [], []>} : vector<1024x128xbf16>, vector<128x128xbf16>, vector<1024x128xf32> -> vector<1024x128xf32>
    %c1_18 = arith.constant 1 : index
    %c0_19 = arith.constant 0 : index
    %24 = vector.load %arg4[%c1_18, %c0_19] : memref<4x128xf32, #tpu.memory_space<vmem>>, vector<1x128xf32>
    %25 = vector.broadcast %24 : vector<1x128xf32> to vector<1024x128xf32>
    %26 = arith.addf %23, %25 : vector<1024x128xf32>
    %cst_20 = arith.constant 0.000000e+00 : f32
    %27 = vector.broadcast %cst_20 : f32 to vector<1024x128xf32>
    %28 = arith.maximumf %26, %27 : vector<1024x128xf32>
    %29 = arith.truncf %28 : vector<1024x128xf32> to vector<1024x128xbf16>
    %c1_21 = arith.constant 1 : index
    %c0_22 = arith.constant 0 : index
    %c0_23 = arith.constant 0 : index
    %30 = vector.load %arg5[%c1_21, %c0_22, %c0_23] : memref<4x128x128xbf16, #tpu.memory_space<vmem>>, vector<1x128x128xbf16>
    %31 = vector.shape_cast %30 : vector<1x128x128xbf16> to vector<128x128xbf16>
    %cst_24 = arith.constant dense<0.000000e+00> : vector<1024x128xf32>
    %32 = tpu.matmul %29, %31, %cst_24 {dimension_numbers = #tpu.dot_dimension_numbers<[1], [0], [0], [1], [0, 0, 1, 1], [], []>} : vector<1024x128xbf16>, vector<128x128xbf16>, vector<1024x128xf32> -> vector<1024x128xf32>
    %c1_25 = arith.constant 1 : index
    %c0_26 = arith.constant 0 : index
    %33 = vector.load %arg6[%c1_25, %c0_26] : memref<4x128xf32, #tpu.memory_space<vmem>>, vector<1x128xf32>
    %34 = vector.broadcast %33 : vector<1x128xf32> to vector<1024x128xf32>
    %35 = arith.addf %32, %34 : vector<1024x128xf32>
    %36 = arith.addf %35, %3 : vector<1024x128xf32>
    %37 = arith.truncf %36 : vector<1024x128xf32> to vector<1024x128xbf16>
    %c2 = arith.constant 2 : index
    %c0_27 = arith.constant 0 : index
    %c0_28 = arith.constant 0 : index
    %38 = vector.load %arg3[%c2, %c0_27, %c0_28] : memref<4x128x128xbf16, #tpu.memory_space<vmem>>, vector<1x128x128xbf16>
    %39 = vector.shape_cast %38 : vector<1x128x128xbf16> to vector<128x128xbf16>
    %cst_29 = arith.constant dense<0.000000e+00> : vector<1024x128xf32>
    %40 = tpu.matmul %37, %39, %cst_29 {dimension_numbers = #tpu.dot_dimension_numbers<[1], [0], [0], [1], [0, 0, 1, 1], [], []>} : vector<1024x128xbf16>, vector<128x128xbf16>, vector<1024x128xf32> -> vector<1024x128xf32>
    %c2_30 = arith.constant 2 : index
    %c0_31 = arith.constant 0 : index
    %41 = vector.load %arg4[%c2_30, %c0_31] : memref<4x128xf32, #tpu.memory_space<vmem>>, vector<1x128xf32>
    %42 = vector.broadcast %41 : vector<1x128xf32> to vector<1024x128xf32>
    %43 = arith.addf %40, %42 : vector<1024x128xf32>
    %cst_32 = arith.constant 0.000000e+00 : f32
    %44 = vector.broadcast %cst_32 : f32 to vector<1024x128xf32>
    %45 = arith.maximumf %43, %44 : vector<1024x128xf32>
    %46 = arith.truncf %45 : vector<1024x128xf32> to vector<1024x128xbf16>
    %c2_33 = arith.constant 2 : index
    %c0_34 = arith.constant 0 : index
    %c0_35 = arith.constant 0 : index
    %47 = vector.load %arg5[%c2_33, %c0_34, %c0_35] : memref<4x128x128xbf16, #tpu.memory_space<vmem>>, vector<1x128x128xbf16>
    %48 = vector.shape_cast %47 : vector<1x128x128xbf16> to vector<128x128xbf16>
    %cst_36 = arith.constant dense<0.000000e+00> : vector<1024x128xf32>
    %49 = tpu.matmul %46, %48, %cst_36 {dimension_numbers = #tpu.dot_dimension_numbers<[1], [0], [0], [1], [0, 0, 1, 1], [], []>} : vector<1024x128xbf16>, vector<128x128xbf16>, vector<1024x128xf32> -> vector<1024x128xf32>
    %c2_37 = arith.constant 2 : index
    %c0_38 = arith.constant 0 : index
    %50 = vector.load %arg6[%c2_37, %c0_38] : memref<4x128xf32, #tpu.memory_space<vmem>>, vector<1x128xf32>
    %51 = vector.broadcast %50 : vector<1x128xf32> to vector<1024x128xf32>
    %52 = arith.addf %49, %51 : vector<1024x128xf32>
    %53 = arith.truncf %52 : vector<1024x128xf32> to vector<1024x128xbf16>
    %c3 = arith.constant 3 : index
    %c0_39 = arith.constant 0 : index
    %c0_40 = arith.constant 0 : index
    %54 = vector.load %arg3[%c3, %c0_39, %c0_40] : memref<4x128x128xbf16, #tpu.memory_space<vmem>>, vector<1x128x128xbf16>
    %55 = vector.shape_cast %54 : vector<1x128x128xbf16> to vector<128x128xbf16>
    %cst_41 = arith.constant dense<0.000000e+00> : vector<1024x128xf32>
    %56 = tpu.matmul %53, %55, %cst_41 {dimension_numbers = #tpu.dot_dimension_numbers<[1], [0], [0], [1], [0, 0, 1, 1], [], []>} : vector<1024x128xbf16>, vector<128x128xbf16>, vector<1024x128xf32> -> vector<1024x128xf32>
    %c3_42 = arith.constant 3 : index
    %c0_43 = arith.constant 0 : index
    %57 = vector.load %arg4[%c3_42, %c0_43] : memref<4x128xf32, #tpu.memory_space<vmem>>, vector<1x128xf32>
    %58 = vector.broadcast %57 : vector<1x128xf32> to vector<1024x128xf32>
    %59 = arith.addf %56, %58 : vector<1024x128xf32>
    %cst_44 = arith.constant 0.000000e+00 : f32
    %60 = vector.broadcast %cst_44 : f32 to vector<1024x128xf32>
    %61 = arith.maximumf %59, %60 : vector<1024x128xf32>
    %62 = arith.truncf %61 : vector<1024x128xf32> to vector<1024x128xbf16>
    %c3_45 = arith.constant 3 : index
    %c0_46 = arith.constant 0 : index
    %c0_47 = arith.constant 0 : index
    %63 = vector.load %arg5[%c3_45, %c0_46, %c0_47] : memref<4x128x128xbf16, #tpu.memory_space<vmem>>, vector<1x128x128xbf16>
    %64 = vector.shape_cast %63 : vector<1x128x128xbf16> to vector<128x128xbf16>
    %cst_48 = arith.constant dense<0.000000e+00> : vector<1024x128xf32>
    %65 = tpu.matmul %62, %64, %cst_48 {dimension_numbers = #tpu.dot_dimension_numbers<[1], [0], [0], [1], [0, 0, 1, 1], [], []>} : vector<1024x128xbf16>, vector<128x128xbf16>, vector<1024x128xf32> -> vector<1024x128xf32>
    %c3_49 = arith.constant 3 : index
    %c0_50 = arith.constant 0 : index
    %66 = vector.load %arg6[%c3_49, %c0_50] : memref<4x128xf32, #tpu.memory_space<vmem>>, vector<1x128xf32>
    %67 = vector.broadcast %66 : vector<1x128xf32> to vector<1024x128xf32>
    %68 = arith.addf %65, %67 : vector<1024x128xf32>
    %69 = arith.addf %68, %36 : vector<1024x128xf32>
    %70 = arith.truncf %69 : vector<1024x128xf32> to vector<1024x128xbf16>
    %c0_51 = arith.constant 0 : index
    %c0_52 = arith.constant 0 : index
    %71 = vector.load %arg7[%c0_51, %c0_52] : memref<128x64xbf16, #tpu.memory_space<vmem>>, vector<128x64xbf16>
    %cst_53 = arith.constant dense<0.000000e+00> : vector<1024x64xf32>
    %72 = tpu.matmul %70, %71, %cst_53 {dimension_numbers = #tpu.dot_dimension_numbers<[1], [0], [0], [1], [0, 0, 1, 1], [], []>} : vector<1024x128xbf16>, vector<128x64xbf16>, vector<1024x64xf32> -> vector<1024x64xf32>
    %c0_54 = arith.constant 0 : index
    %c0_55 = arith.constant 0 : index
    %73 = vector.load %arg8[%c0_54, %c0_55] : memref<1x64xf32, #tpu.memory_space<vmem>>, vector<1x64xf32>
    %74 = vector.broadcast %73 : vector<1x64xf32> to vector<1024x64xf32>
    %75 = arith.addf %72, %74 : vector<1024x64xf32>
    %76 = arith.extf %1 : vector<1024x64xbf16> to vector<1024x64xf32>
    %77 = arith.mulf %75, %76 : vector<1024x64xf32>
    %cst_56 = arith.constant 0.000000e+00 : f32
    %78 = vector.broadcast %cst_56 : f32 to vector<1024x64xf32>
    %79 = arith.cmpf oeq, %77, %78 : vector<1024x64xf32>
    %cst_57 = arith.constant -1.000000e+20 : f32
    %80 = vector.broadcast %cst_57 : f32 to vector<1024x64xf32>
    %81 = arith.select %79, %80, %77 : vector<1024x64xi1>, vector<1024x64xf32>
    %c0_58 = arith.constant 0 : index
    %c0_59 = arith.constant 0 : index
    %82 = vector.load %arg9[%c0_58, %c0_59] : memref<1024x64xf32, #tpu.memory_space<vmem>>, vector<1024x64xf32>
    tpu.vector_store %arg9[%c0_58, %c0_59], %81 {strides = array<i32>} : memref<1024x64xf32, #tpu.memory_space<vmem>>, vector<1024x64xf32>,
    return
  }
  func.func @transform_0(%arg0: i32) -> (i32, i32) {
    %c0_i32 = arith.constant 0 : i32
    %c0_i32_0 = arith.constant 0 : i32
    return %arg0, %c0_i32 : i32, i32
  }
  func.func @transform_1(%arg0: i32) -> (i32, i32) {
    %c0_i32 = arith.constant 0 : i32
    %c0_i32_0 = arith.constant 0 : i32
    return %arg0, %c0_i32 : i32, i32
  }
  func.func @transform_2(%arg0: i32) -> (i32, i32, i32) {
    %c0_i32 = arith.constant 0 : i32
    %c0_i32_0 = arith.constant 0 : i32
    %c0_i32_1 = arith.constant 0 : i32
    %c0_i32_2 = arith.constant 0 : i32
    return %c0_i32, %c0_i32_0, %c0_i32_1 : i32, i32, i32
  }
  func.func @transform_3(%arg0: i32) -> (i32, i32) {
    %c0_i32 = arith.constant 0 : i32
    %c0_i32_0 = arith.constant 0 : i32
    %c0_i32_1 = arith.constant 0 : i32
    return %c0_i32, %c0_i32_0 : i32, i32
  }
  func.func @transform_4(%arg0: i32) -> (i32, i32, i32) {
    %c0_i32 = arith.constant 0 : i32
    %c0_i32_0 = arith.constant 0 : i32
    %c0_i32_1 = arith.constant 0 : i32
    %c0_i32_2 = arith.constant 0 : i32
    return %c0_i32, %c0_i32_0, %c0_i32_1 : i32, i32, i32
  }
  func.func @transform_5(%arg0: i32) -> (i32, i32) {
    %c0_i32 = arith.constant 0 : i32
    %c0_i32_0 = arith.constant 0 : i32
    %c0_i32_1 = arith.constant 0 : i32
    return %c0_i32, %c0_i32_0 : i32, i32
  }
  func.func @transform_6(%arg0: i32) -> (i32, i32) {
    %c0_i32 = arith.constant 0 : i32
    %c0_i32_0 = arith.constant 0 : i32
    %c0_i32_1 = arith.constant 0 : i32
    return %c0_i32, %c0_i32_0 : i32, i32
  }
  func.func @transform_7(%arg0: i32) -> (i32, i32) {
    %c0_i32 = arith.constant 0 : i32
    %c0_i32_0 = arith.constant 0 : i32
    %c0_i32_1 = arith.constant 0 : i32
    return %c0_i32, %c0_i32_0 : i32, i32
  }
  func.func @transform_8(%arg0: i32) -> (i32, i32) {
    %c0_i32 = arith.constant 0 : i32
    %c0_i32_0 = arith.constant 0 : i32
    return %arg0, %c0_i32 : i32, i32
  }
}

</mosaic_0001>

<llo_original>
// kernel: tpu_custom_call.1
$region0: #{tpu_custom_call.1}
  #allocation0 [shape = 'u32[]', space=smem, size = 0x4, offset = 0x4, fixed_abs, tag = 'smem constant byte address 0x4 - core index']
  #allocation1 [shape = 'u32[144,128]{1,0:T(1,128)}', space=vmem, size = 0x12000, scoped, tag = 'internal scratch']
  %s0 = inlined_call_operand.vmem [shape: bf16[2048,64], index: 0, kind: input, shape index: {}]
  %s1 = inlined_call_operand.vmem [shape: bf16[2048,64], index: 1, kind: input, shape index: {}]
  %s2 = inlined_call_operand.vmem [shape: bf16[4,128,128], index: 2, kind: input, shape index: {}]
  %s3 = inlined_call_operand.vmem [shape: f32[4,128], index: 3, kind: input, shape index: {}]
  %s4 = inlined_call_operand.vmem [shape: bf16[4,128,128], index: 4, kind: input, shape index: {}]
  %s5 = inlined_call_operand.vmem [shape: f32[4,128], index: 5, kind: input, shape index: {}]
  %s6 = inlined_call_operand.vmem [shape: bf16[128,64], index: 6, kind: input, shape index: {}]
  %s7 = inlined_call_operand.vmem [shape: f32[1,64], index: 7, kind: input, shape index: {}]
  %s8 = inlined_call_operand.vmem [shape: f32[2048,64], index: 8, kind: output, shape index: {}]
  %s9 = sld [smem:[#allocation0]]
  $region65: #{tpu_custom_call.1} parent=0
    _
  %s11 = ssub.s32 1, %s9
  %s12 = scalar_select 0, %s11, %s9
  loop: start=0, step=1, limit=4
  $region2: #{tpu_custom_call.1} parent=0 // loop_pre_header
    _
  $region3: #{tpu_custom_call.1} parent=0 // loop_header
    %s14 = sphi 0, %s18
    %p15 = scmp.ge.s32.totalorder %s14, 4
    %s24 = sphi 0, %s26
    %s27 = sphi 0, %s24
    %s28 = sphi 0, %s27
    %s44 = sphi 0, %s28
    %s50 = sphi 0, %s52
    %s53 = sphi 0, %s50
    %s54 = sphi 0, %s53
    %s70 = sphi 0, %s54
    %s74 = sphi 0, %s74
    %s76 = sphi 0, %s74
    %s77 = sphi 0, %s76
    %s91 = sphi 0, %s77
    %s95 = sphi 0, %s95
    %s97 = sphi 0, %s95
    %s98 = sphi 0, %s97
    %s112 = sphi 0, %s98
    %s116 = sphi 0, %s116
    %s118 = sphi 0, %s116
    %s119 = sphi 0, %s118
    %s133 = sphi 0, %s119
    %s137 = sphi 0, %s137
    %s139 = sphi 0, %s137
    %s140 = sphi 0, %s139
    %s154 = sphi 0, %s140
    %s158 = sphi 0, %s158
    %s160 = sphi 0, %s158
    %s161 = sphi 0, %s160
    %s175 = sphi 0, %s161
    %s179 = sphi 0, %s179
    %s181 = sphi 0, %s179
    %s182 = sphi 0, %s181
    %s196 = sphi 0, %s182
    %s202 = sphi 0, %s204
    %s205 = sphi 0, %s202
    %s206 = sphi 0, %s205
    %s222 = sphi 0, %s206
  $region4: #{tpu_custom_call.1} parent=0 // loop_header_branch
    %17 = sbr.rel (%p15) target = $region8
  $region5: #{tpu_custom_call.1} parent=0 // loop_body
    %s19 = ssub.s32 %s14, 1
    %s20 = ssub.s32 %s14, 2
    %s21 = sadd.s32 %s14, 1
    %s22 = ssub.s32 %s14, %s21
    %p23 = scmp.eq.s32.totalorder %s22, 0
    %s25 = sadd.s32 %s24, 1
    %s26 = scalar_select %p23, %s24, %s25
    %p29 = pneg %p23
    %p30 = scmp.eq.s32.totalorder %s14, 1
    %p31 = por %p29, %p30
    %p32 = scmp.ne.s32.totalorder %s24, %s27
    %p33 = scmp.eq.s32.totalorder %s14, 0
    %p34 = por %p32, %p33
    %p35 = scmp.ne.s32.totalorder %s24, %s27
    %p36 = scmp.eq.s32.totalorder %s19, 1
    %p37 = por %p35, %p36
    %p38 = scmp.ne.s32.totalorder %s27, %s28
    %p39 = scmp.eq.s32.totalorder %s19, 0
    %p40 = por %p38, %p39
    %p41 = scmp.ne.s32.totalorder %s27, %s28
    %p42 = scmp.eq.s32.totalorder %s20, 1
    %p43 = por %p41, %p42
    %p45 = scmp.ne.s32.totalorder %s28, %s44
    %p46 = scmp.eq.s32.totalorder %s20, 0
    %p47 = por %p45, %p46
    %s48 = ssub.s32 %s14, %s21
    %p49 = scmp.eq.s32.totalorder %s48, 0
    %s51 = sadd.s32 %s50, 1
    %s52 = scalar_select %p49, %s50, %s51
    %p55 = pneg %p49
    %p56 = scmp.eq.s32.totalorder %s14, 1
    %p57 = por %p55, %p56
    %p58 = scmp.ne.s32.totalorder %s50, %s53
    %p59 = scmp.eq.s32.totalorder %s14, 0
    %p60 = por %p58, %p59
    %p61 = scmp.ne.s32.totalorder %s50, %s53
    %p62 = scmp.eq.s32.totalorder %s19, 1
    %p63 = por %p61, %p62
    %p64 = scmp.ne.s32.totalorder %s53, %s54
    %p65 = scmp.eq.s32.totalorder %s19, 0
    %p66 = por %p64, %p65
    %p67 = scmp.ne.s32.totalorder %s53, %s54
    %p68 = scmp.eq.s32.totalorder %s20, 1
    %p69 = por %p67, %p68
    %p71 = scmp.ne.s32.totalorder %s54, %s70
    %p72 = scmp.eq.s32.totalorder %s20, 0
    %p73 = por %p71, %p72
    %s75 = sadd.s32 %s74, 1
    %p78 = scmp.eq.s32.totalorder %s14, 1
    %p79 = scmp.ne.s32.totalorder %s74, %s76
    %p80 = scmp.eq.s32.totalorder %s14, 0
    %p81 = por %p79, %p80
    %p82 = scmp.ne.s32.totalorder %s74, %s76
    %p83 = scmp.eq.s32.totalorder %s19, 1
    %p84 = por %p82, %p83
    %p85 = scmp.ne.s32.totalorder %s76, %s77
    %p86 = scmp.eq.s32.totalorder %s19, 0
    %p87 = por %p85, %p86
    %p88 = scmp.ne.s32.totalorder %s76, %s77
    %p89 = scmp.eq.s32.totalorder %s20, 1
    %p90 = por %p88, %p89
    %p92 = scmp.ne.s32.totalorder %s77, %s91
    %p93 = scmp.eq.s32.totalorder %s20, 0
    %p94 = por %p92, %p93
    %s96 = sadd.s32 %s95, 1
    %p99 = scmp.eq.s32.totalorder %s14, 1
    %p100 = scmp.ne.s32.totalorder %s95, %s97
    %p101 = scmp.eq.s32.totalorder %s14, 0
    %p102 = por %p100, %p101
    %p103 = scmp.ne.s32.totalorder %s95, %s97
    %p104 = scmp.eq.s32.totalorder %s19, 1
    %p105 = por %p103, %p104
    %p106 = scmp.ne.s32.totalorder %s97, %s98
    %p107 = scmp.eq.s32.totalorder %s19, 0
    %p108 = por %p106, %p107
    %p109 = scmp.ne.s32.totalorder %s97, %s98
    %p110 = scmp.eq.s32.totalorder %s20, 1
    %p111 = por %p109, %p110
    %p113 = scmp.ne.s32.totalorder %s98, %s112
    %p114 = scmp.eq.s32.totalorder %s20, 0
    %p115 = por %p113, %p114
    %s117 = sadd.s32 %s116, 1
    %p120 = scmp.eq.s32.totalorder %s14, 1
    %p121 = scmp.ne.s32.totalorder %s116, %s118
    %p122 = scmp.eq.s32.totalorder %s14, 0
    %p123 = por %p121, %p122
    %p124 = scmp.ne.s32.totalorder %s116, %s118
    %p125 = scmp.eq.s32.totalorder %s19, 1
    %p126 = por %p124, %p125
    %p127 = scmp.ne.s32.totalorder %s118, %s119
    %p128 = scmp.eq.s32.totalorder %s19, 0
    %p129 = por %p127, %p128
    %p130 = scmp.ne.s32.totalorder %s118, %s119
    %p131 = scmp.eq.s32.totalorder %s20, 1
    %p132 = por %p130, %p131
    %p134 = scmp.ne.s32.totalorder %s119, %s133
    %p135 = scmp.eq.s32.totalorder %s20, 0
    %p136 = por %p134, %p135
    %s138 = sadd.s32 %s137, 1
    %p141 = scmp.eq.s32.totalorder %s14, 1
    %p142 = scmp.ne.s32.totalorder %s137, %s139
    %p143 = scmp.eq.s32.totalorder %s14, 0
    %p144 = por %p142, %p143
    %p145 = scmp.ne.s32.totalorder %s137, %s139
    %p146 = scmp.eq.s32.totalorder %s19, 1
    %p147 = por %p145, %p146
    %p148 = scmp.ne.s32.totalorder %s139, %s140
    %p149 = scmp.eq.s32.totalorder %s19, 0
    %p150 = por %p148, %p149
    %p151 = scmp.ne.s32.totalorder %s139, %s140
    %p152 = scmp.eq.s32.totalorder %s20, 1
    %p153 = por %p151, %p152
    %p155 = scmp.ne.s32.totalorder %s140, %s154
    %p156 = scmp.eq.s32.totalorder %s20, 0
    %p157 = por %p155, %p156
    %s159 = sadd.s32 %s158, 1
    %p162 = scmp.eq.s32.totalorder %s14, 1
    %p163 = scmp.ne.s32.totalorder %s158, %s160
    %p164 = scmp.eq.s32.totalorder %s14, 0
    %p165 = por %p163, %p164
    %p166 = scmp.ne.s32.totalorder %s158, %s160
    %p167 = scmp.eq.s32.totalorder %s19, 1
    %p168 = por %p166, %p167
    %p169 = scmp.ne.s32.totalorder %s160, %s161
    %p170 = scmp.eq.s32.totalorder %s19, 0
    %p171 = por %p169, %p170
    %p172 = scmp.ne.s32.totalorder %s160, %s161
    %p173 = scmp.eq.s32.totalorder %s20, 1
    %p174 = por %p172, %p173
    %p176 = scmp.ne.s32.totalorder %s161, %s175
    %p177 = scmp.eq.s32.totalorder %s20, 0
    %p178 = por %p176, %p177
    %s180 = sadd.s32 %s179, 1
    %p183 = scmp.eq.s32.totalorder %s14, 1
    %p184 = scmp.ne.s32.totalorder %s179, %s181
    %p185 = scmp.eq.s32.totalorder %s14, 0
    %p186 = por %p184, %p185
    %p187 = scmp.ne.s32.totalorder %s179, %s181
    %p188 = scmp.eq.s32.totalorder %s19, 1
    %p189 = por %p187, %p188
    %p190 = scmp.ne.s32.totalorder %s181, %s182
    %p191 = scmp.eq.s32.totalorder %s19, 0
    %p192 = por %p190, %p191
    %p193 = scmp.ne.s32.totalorder %s181, %s182
    %p194 = scmp.eq.s32.totalorder %s20, 1
    %p195 = por %p193, %p194
    %p197 = scmp.ne.s32.totalorder %s182, %s196
    %p198 = scmp.eq.s32.totalorder %s20, 0
    %p199 = por %p197, %p198
    %s200 = ssub.s32 %s14, %s21
    %p201 = scmp.eq.s32.totalorder %s200, 0
    %s203 = sadd.s32 %s202, 1
    %s204 = scalar_select %p201, %s202, %s203
    %p207 = pneg %p201
    %p208 = scmp.eq.s32.totalorder %s14, 1
    %p209 = por %p207, %p208
    %p210 = scmp.ne.s32.totalorder %s202, %s205
    %p211 = scmp.eq.s32.totalorder %s14, 0
    %p212 = por %p210, %p211
    %p213 = scmp.ne.s32.totalorder %s202, %s205
    %p214 = scmp.eq.s32.totalorder %s19, 1
    %p215 = por %p213, %p214
    %p216 = scmp.ne.s32.totalorder %s205, %s206
    %p217 = scmp.eq.s32.totalorder %s19, 0
    %p218 = por %p216, %p217
    %p219 = scmp.ne.s32.totalorder %s205, %s206
    %p220 = scmp.eq.s32.totalorder %s20, 1
    %p221 = por %p219, %p220
    %p223 = scmp.ne.s32.totalorder %s206, %s222
    %p224 = scmp.eq.s32.totalorder %s20, 0
    %p225 = por %p223, %p224
    %p226 = scmp.le.s32.totalorder 1, %s14
    %p227 = scmp.lt.s32.totalorder %s14, 3
    %p228 = pnand %p226, %p227
    %p229 = pneg %p228
    // Predicated region
    $region9: #{tpu_custom_call.1} parent=5 // pred_check
      _
    $region10: #{tpu_custom_call.1} parent=5 // pred_check_branch
      %231 = sbr.rel (%p228) target = $region12
    $region11: #{tpu_custom_call.1} parent=5 // pred_region
      %s232 = ssub.s32 %s14, 1
      // Predicated region
      $region13: #{tpu_custom_call.1} parent=11 // pred_check
        %p233 = pneg %p87
      $region14: #{tpu_custom_call.1} parent=11 // pred_check_branch
        %235 = sbr.rel (%p233) target = $region16
      $region15: #{tpu_custom_call.1} parent=11 // pred_region
        _
      $region16: #{tpu_custom_call.1} parent=11 // pred_fallthru
        _
      // Predicated region
      $region17: #{tpu_custom_call.1} parent=11 // pred_check
        %p236 = pneg %p108
      $region18: #{tpu_custom_call.1} parent=11 // pred_check_branch
        %238 = sbr.rel (%p236) target = $region20
      $region19: #{tpu_custom_call.1} parent=11 // pred_region
        _
      $region20: #{tpu_custom_call.1} parent=11 // pred_fallthru
        _
      // Predicated region
      $region21: #{tpu_custom_call.1} parent=11 // pred_check
        %p239 = pneg %p129
      $region22: #{tpu_custom_call.1} parent=11 // pred_check_branch
        %241 = sbr.rel (%p239) target = $region24
      $region23: #{tpu_custom_call.1} parent=11 // pred_region
        _
      $region24: #{tpu_custom_call.1} parent=11 // pred_fallthru
        _
      // Predicated region
      $region25: #{tpu_custom_call.1} parent=11 // pred_check
        %p242 = pneg %p150
      $region26: #{tpu_custom_call.1} parent=11 // pred_check_branch
        %244 = sbr.rel (%p242) target = $region28
      $region27: #{tpu_custom_call.1} parent=11 // pred_region
        _
      $region28: #{tpu_custom_call.1} parent=11 // pred_fallthru
        _
      // Predicated region
      $region29: #{tpu_custom_call.1} parent=11 // pred_check
        %p245 = pneg %p171
      $region30: #{tpu_custom_call.1} parent=11 // pred_check_branch
        %247 = sbr.rel (%p245) target = $region32
      $region31: #{tpu_custom_call.1} parent=11 // pred_region
        _
      $region32: #{tpu_custom_call.1} parent=11 // pred_fallthru
        _
      // Predicated region
      $region33: #{tpu_custom_call.1} parent=11 // pred_check
        %p248 = pneg %p192
      $region34: #{tpu_custom_call.1} parent=11 // pred_check_branch
        %250 = sbr.rel (%p248) target = $region36
      $region35: #{tpu_custom_call.1} parent=11 // pred_region
        _
      $region36: #{tpu_custom_call.1} parent=11 // pred_fallthru
        _
    $region12: #{tpu_custom_call.1} parent=5 // pred_fallthru
      _
    %p251 = scmp.lt.s32.totalorder %s14, 2
    // Predicated region
    $region37: #{tpu_custom_call.1} parent=5 // pred_check
      %p252 = pneg %p251
    $region38: #{tpu_custom_call.1} parent=5 // pred_check_branch
      %254 = sbr.rel (%p252) target = $region40
    $region39: #{tpu_custom_call.1} parent=5 // pred_region
      // Predicated region
      $region41: #{tpu_custom_call.1} parent=39 // pred_check
        %p255 = pneg %p34
      $region42: #{tpu_custom_call.1} parent=39 // pred_check_branch
        %257 = sbr.rel (%p255) target = $region44
      $region43: #{tpu_custom_call.1} parent=39 // pred_region
        %s258 = smul.u32 128, %s14
        %p259 = scmp.lt.s32.totalorder %s258, 255
        %s260 = scalar_select %p259, %s258, 255
        %s261 = smul.addr %s260, 4
        %s262 = scalar_lea.vmem %s0, %s261
        %s263 = smul.u32 128, %s14
      $region44: #{tpu_custom_call.1} parent=39 // pred_fallthru
        _
      // Predicated region
      $region45: #{tpu_custom_call.1} parent=39 // pred_check
        %p264 = pneg %p60
      $region46: #{tpu_custom_call.1} parent=39 // pred_check_branch
        %266 = sbr.rel (%p264) target = $region48
      $region47: #{tpu_custom_call.1} parent=39 // pred_region
        %s267 = smul.u32 128, %s14
        %p268 = scmp.lt.s32.totalorder %s267, 255
        %s269 = scalar_select %p268, %s267, 255
        %s270 = smul.addr %s269, 4
        %s271 = scalar_lea.vmem %s1, %s270
        %s272 = smul.u32 128, %s14
      $region48: #{tpu_custom_call.1} parent=39 // pred_fallthru
        _
    $region40: #{tpu_custom_call.1} parent=5 // pred_fallthru
      _
    %p273 = scmp.le.s32.totalorder 1, %s14
    %p274 = scmp.lt.s32.totalorder %s14, 3
    %p275 = pnand %p273, %p274
    %p276 = pneg %p275
    // Predicated region
    $region49: #{tpu_custom_call.1} parent=5 // pred_check
      _
    $region50: #{tpu_custom_call.1} parent=5 // pred_check_branch
      %278 = sbr.rel (%p275) target = $region52
    $region51: #{tpu_custom_call.1} parent=5 // pred_region
      %s279 = ssub.s32 %s14, 1
      %s280 = smul.u32 128, %s19
      %p281 = scmp.lt.s32.totalorder %s280, 255
      %s282 = scalar_select %p281, %s280, 255
      %s283 = smul.addr %s282, 4
      %s284 = scalar_lea.vmem %s0, %s283
      %p285 = pneg %p40
      %p286 = pneg %p37
      %s287 = smul.u32 128, %s19
      %p288 = scmp.lt.s32.totalorder %s287, 255
      %s289 = scalar_select %p288, %s287, 255
      %s290 = smul.addr %s289, 4
      %s291 = scalar_lea.vmem %s1, %s290
      %p292 = pneg %p66
      %p293 = pneg %p63
      %p294 = pneg %p87
      %p295 = pneg %p84
      %p296 = pneg %p108
      %p297 = pneg %p105
      %p298 = pneg %p129
      %p299 = pneg %p126
      %p300 = pneg %p150
      %p301 = pneg %p147
      %p302 = pneg %p171
      %p303 = pneg %p168
      %p304 = pneg %p192
      %p305 = pneg %p189
      %p306 = pneg %p218
      %p307 = pneg %p215
      %s308 = smul.u32 128, %s19
      %p309 = scmp.lt.s32.totalorder %s308, 255
      %s310 = scalar_select %p309, %s308, 255
      %s311 = smul.addr %s310, 8
      %s312 = scalar_lea.vmem %s8, %s311
      %s313 = smul.u32 128, %s19
      %p314 = scmp.lt.s32.totalorder %s313, 255
      %s315 = scalar_select %p314, %s313, 255
      %s316 = smul.addr %s315, 4
      %s317 = scalar_lea.vmem %s0, %s316
      %s318 = smul.u32 128, %s19
      %s319 = smul.u32 128, %s19
      %p320 = scmp.lt.s32.totalorder %s319, 255
      %s321 = scalar_select %p320, %s319, 255
      %s322 = smul.addr %s321, 4
      %s323 = scalar_lea.vmem %s1, %s322
      %s324 = smul.u32 128, %s19
      %s325 = smul.u32 128, %s19
      %p326 = scmp.lt.s32.totalorder %s325, 255
      %s327 = scalar_select %p326, %s325, 255
      %s328 = smul.addr %s327, 8
      %s329 = scalar_lea.vmem %s8, %s328
      %s330 = smul.u32 128, %s19
      %v332 = vld [vmem:[%s317] sm:$0xf]
      %v333 = vld [vmem:[%s317 + $0x4] sm:$0xf]
      %v334 = vld [vmem:[%s317 + $0x8] sm:$0xf]
      %v335 = vld [vmem:[%s317 + $0xc] sm:$0xf]
      %v336 = vld [vmem:[%s317 + $0x10] sm:$0xf]
      %v337 = vld [vmem:[%s317 + $0x14] sm:$0xf]
      %v338 = vld [vmem:[%s317 + $0x18] sm:$0xf]
      %v339 = vld [vmem:[%s317 + $0x1c] sm:$0xf]
      %v340 = vld [vmem:[%s317 + $0x20] sm:$0xf]
      %v341 = vld [vmem:[%s317 + $0x24] sm:$0xf]
      %v342 = vld [vmem:[%s317 + $0x28] sm:$0xf]
      %v343 = vld [vmem:[%s317 + $0x2c] sm:$0xf]
      %v344 = vld [vmem:[%s317 + $0x30] sm:$0xf]
      %v345 = vld [vmem:[%s317 + $0x34] sm:$0xf]
      %v346 = vld [vmem:[%s317 + $0x38] sm:$0xf]
      %v347 = vld [vmem:[%s317 + $0x3c] sm:$0xf]
      %v348 = vld [vmem:[%s317 + $0x40] sm:$0xf]
      %v349 = vld [vmem:[%s317 + $0x44] sm:$0xf]
      %v350 = vld [vmem:[%s317 + $0x48] sm:$0xf]
      %v351 = vld [vmem:[%s317 + $0x4c] sm:$0xf]
      %v352 = vld [vmem:[%s317 + $0x50] sm:$0xf]
      %v353 = vld [vmem:[%s317 + $0x54] sm:$0xf]
      %v354 = vld [vmem:[%s317 + $0x58] sm:$0xf]
      %v355 = vld [vmem:[%s317 + $0x5c] sm:$0xf]
      %v356 = vld [vmem:[%s317 + $0x60] sm:$0xf]
      %v357 = vld [vmem:[%s317 + $0x64] sm:$0xf]
      %v358 = vld [vmem:[%s317 + $0x68] sm:$0xf]
      %v359 = vld [vmem:[%s317 + $0x6c] sm:$0xf]
      %v360 = vld [vmem:[%s317 + $0x70] sm:$0xf]
      %v361 = vld [vmem:[%s317 + $0x74] sm:$0xf]
      %v362 = vld [vmem:[%s317 + $0x78] sm:$0xf]
      %v363 = vld [vmem:[%s317 + $0x7c] sm:$0xf]
      %v364 = vld [vmem:[%s317 + $0x80] sm:$0xf]
      %v365 = vld [vmem:[%s317 + $0x84] sm:$0xf]
      %v366 = vld [vmem:[%s317 + $0x88] sm:$0xf]
      %v367 = vld [vmem:[%s317 + $0x8c] sm:$0xf]
      %v368 = vld [vmem:[%s317 + $0x90] sm:$0xf]
      %v369 = vld [vmem:[%s317 + $0x94] sm:$0xf]
      %v370 = vld [vmem:[%s317 + $0x98] sm:$0xf]
      %v371 = vld [vmem:[%s317 + $0x9c] sm:$0xf]
      %v372 = vld [vmem:[%s317 + $0xa0] sm:$0xf]
      %v373 = vld [vmem:[%s317 + $0xa4] sm:$0xf]
      %v374 = vld [vmem:[%s317 + $0xa8] sm:$0xf]
      %v375 = vld [vmem:[%s317 + $0xac] sm:$0xf]
      %v376 = vld [vmem:[%s317 + $0xb0] sm:$0xf]
      %v377 = vld [vmem:[%s317 + $0xb4] sm:$0xf]
      %v378 = vld [vmem:[%s317 + $0xb8] sm:$0xf]
      %v379 = vld [vmem:[%s317 + $0xbc] sm:$0xf]
      %v380 = vld [vmem:[%s317 + $0xc0] sm:$0xf]
      %v381 = vld [vmem:[%s317 + $0xc4] sm:$0xf]
      %v382 = vld [vmem:[%s317 + $0xc8] sm:$0xf]
      %v383 = vld [vmem:[%s317 + $0xcc] sm:$0xf]
      %v384 = vld [vmem:[%s317 + $0xd0] sm:$0xf]
      %v385 = vld [vmem:[%s317 + $0xd4] sm:$0xf]
      %v386 = vld [vmem:[%s317 + $0xd8] sm:$0xf]
      %v387 = vld [vmem:[%s317 + $0xdc] sm:$0xf]
      %v388 = vld [vmem:[%s317 + $0xe0] sm:$0xf]
      %v389 = vld [vmem:[%s317 + $0xe4] sm:$0xf]
      %v390 = vld [vmem:[%s317 + $0xe8] sm:$0xf]
      %v391 = vld [vmem:[%s317 + $0xec] sm:$0xf]
      %v392 = vld [vmem:[%s317 + $0xf0] sm:$0xf]
      %v393 = vld [vmem:[%s317 + $0xf4] sm:$0xf]
      %v394 = vld [vmem:[%s317 + $0xf8] sm:$0xf]
      %v395 = vld [vmem:[%s317 + $0xfc] sm:$0xf]
      %v396 = vld [vmem:[%s317 + $0x100] sm:$0xf]
      %v397 = vld [vmem:[%s317 + $0x104] sm:$0xf]
      %v398 = vld [vmem:[%s317 + $0x108] sm:$0xf]
      %v399 = vld [vmem:[%s317 + $0x10c] sm:$0xf]
      %v400 = vld [vmem:[%s317 + $0x110] sm:$0xf]
      %v401 = vld [vmem:[%s317 + $0x114] sm:$0xf]
      %v402 = vld [vmem:[%s317 + $0x118] sm:$0xf]
      %v403 = vld [vmem:[%s317 + $0x11c] sm:$0xf]
      %v404 = vld [vmem:[%s317 + $0x120] sm:$0xf]
      %v405 = vld [vmem:[%s317 + $0x124] sm:$0xf]
      %v406 = vld [vmem:[%s317 + $0x128] sm:$0xf]
      %v407 = vld [vmem:[%s317 + $0x12c] sm:$0xf]
      %v408 = vld [vmem:[%s317 + $0x130] sm:$0xf]
      %v409 = vld [vmem:[%s317 + $0x134] sm:$0xf]
      %v410 = vld [vmem:[%s317 + $0x138] sm:$0xf]
      %v411 = vld [vmem:[%s317 + $0x13c] sm:$0xf]
      %v412 = vld [vmem:[%s317 + $0x140] sm:$0xf]
      %v413 = vld [vmem:[%s317 + $0x144] sm:$0xf]
      %v414 = vld [vmem:[%s317 + $0x148] sm:$0xf]
      %v415 = vld [vmem:[%s317 + $0x14c] sm:$0xf]
      %v416 = vld [vmem:[%s317 + $0x150] sm:$0xf]
      %v417 = vld [vmem:[%s317 + $0x154] sm:$0xf]
      %v418 = vld [vmem:[%s317 + $0x158] sm:$0xf]
      %v419 = vld [vmem:[%s317 + $0x15c] sm:$0xf]
      %v420 = vld [vmem:[%s317 + $0x160] sm:$0xf]
      %v421 = vld [vmem:[%s317 + $0x164] sm:$0xf]
      %v422 = vld [vmem:[%s317 + $0x168] sm:$0xf]
      %v423 = vld [vmem:[%s317 + $0x16c] sm:$0xf]
      %v424 = vld [vmem:[%s317 + $0x170] sm:$0xf]
      %v425 = vld [vmem:[%s317 + $0x174] sm:$0xf]
      %v426 = vld [vmem:[%s317 + $0x178] sm:$0xf]
      %v427 = vld [vmem:[%s317 + $0x17c] sm:$0xf]
      %v428 = vld [vmem:[%s317 + $0x180] sm:$0xf]
      %v429 = vld [vmem:[%s317 + $0x184] sm:$0xf]
      %v430 = vld [vmem:[%s317 + $0x188] sm:$0xf]
      %v431 = vld [vmem:[%s317 + $0x18c] sm:$0xf]
      %v432 = vld [vmem:[%s317 + $0x190] sm:$0xf]
      %v433 = vld [vmem:[%s317 + $0x194] sm:$0xf]
      %v434 = vld [vmem:[%s317 + $0x198] sm:$0xf]
      %v435 = vld [vmem:[%s317 + $0x19c] sm:$0xf]
      %v436 = vld [vmem:[%s317 + $0x1a0] sm:$0xf]
      %v437 = vld [vmem:[%s317 + $0x1a4] sm:$0xf]
      %v438 = vld [vmem:[%s317 + $0x1a8] sm:$0xf]
      %v439 = vld [vmem:[%s317 + $0x1ac] sm:$0xf]
      %v440 = vld [vmem:[%s317 + $0x1b0] sm:$0xf]
      %v441 = vld [vmem:[%s317 + $0x1b4] sm:$0xf]
      %v442 = vld [vmem:[%s317 + $0x1b8] sm:$0xf]
      %v443 = vld [vmem:[%s317 + $0x1bc] sm:$0xf]
      %v444 = vld [vmem:[%s317 + $0x1c0] sm:$0xf]
      %v445 = vld [vmem:[%s317 + $0x1c4] sm:$0xf]
      %v446 = vld [vmem:[%s317 + $0x1c8] sm:$0xf]
      %v447 = vld [vmem:[%s317 + $0x1cc] sm:$0xf]
      %v448 = vld [vmem:[%s317 + $0x1d0] sm:$0xf]
      %v449 = vld [vmem:[%s317 + $0x1d4] sm:$0xf]
      %v450 = vld [vmem:[%s317 + $0x1d8] sm:$0xf]
      %v451 = vld [vmem:[%s317 + $0x1dc] sm:$0xf]
      %v452 = vld [vmem:[%s317 + $0x1e0] sm:$0xf]
      %v453 = vld [vmem:[%s317 + $0x1e4] sm:$0xf]
      %v454 = vld [vmem:[%s317 + $0x1e8] sm:$0xf]
      %v455 = vld [vmem:[%s317 + $0x1ec] sm:$0xf]
      %v456 = vld [vmem:[%s317 + $0x1f0] sm:$0xf]
      %v457 = vld [vmem:[%s317 + $0x1f4] sm:$0xf]
      %v458 = vld [vmem:[%s317 + $0x1f8] sm:$0xf]
      %v459 = vld [vmem:[%s317 + $0x1fc] sm:$0xf]
      %v460 = vld [vmem:[%s323] sm:$0xf]
      %v461 = vld [vmem:[%s323 + $0x4] sm:$0xf]
      %v462 = vld [vmem:[%s323 + $0x8] sm:$0xf]
      %v463 = vld [vmem:[%s323 + $0xc] sm:$0xf]
      %v464 = vld [vmem:[%s323 + $0x10] sm:$0xf]
      %v465 = vld [vmem:[%s323 + $0x14] sm:$0xf]
      %v466 = vld [vmem:[%s323 + $0x18] sm:$0xf]
      %v467 = vld [vmem:[%s323 + $0x1c] sm:$0xf]
      %v468 = vld [vmem:[%s323 + $0x20] sm:$0xf]
      %v469 = vld [vmem:[%s323 + $0x24] sm:$0xf]
      %v470 = vld [vmem:[%s323 + $0x28] sm:$0xf]
      %v471 = vld [vmem:[%s323 + $0x2c] sm:$0xf]
      %v472 = vld [vmem:[%s323 + $0x30] sm:$0xf]
      %v473 = vld [vmem:[%s323 + $0x34] sm:$0xf]
      %v474 = vld [vmem:[%s323 + $0x38] sm:$0xf]
      %v475 = vld [vmem:[%s323 + $0x3c] sm:$0xf]
      %v476 = vld [vmem:[%s323 + $0x40] sm:$0xf]
      %v477 = vld [vmem:[%s323 + $0x44] sm:$0xf]
      %v478 = vld [vmem:[%s323 + $0x48] sm:$0xf]
      %v479 = vld [vmem:[%s323 + $0x4c] sm:$0xf]
      %v480 = vld [vmem:[%s323 + $0x50] sm:$0xf]
      %v481 = vld [vmem:[%s323 + $0x54] sm:$0xf]
      %v482 = vld [vmem:[%s323 + $0x58] sm:$0xf]
      %v483 = vld [vmem:[%s323 + $0x5c] sm:$0xf]
      %v484 = vld [vmem:[%s323 + $0x60] sm:$0xf]
      %v485 = vld [vmem:[%s323 + $0x64] sm:$0xf]
      %v486 = vld [vmem:[%s323 + $0x68] sm:$0xf]
      %v487 = vld [vmem:[%s323 + $0x6c] sm:$0xf]
      %v488 = vld [vmem:[%s323 + $0x70] sm:$0xf]
      %v489 = vld [vmem:[%s323 + $0x74] sm:$0xf]
      %v490 = vld [vmem:[%s323 + $0x78] sm:$0xf]
      %v491 = vld [vmem:[%s323 + $0x7c] sm:$0xf]
      %v492 = vld [vmem:[%s323 + $0x80] sm:$0xf]
      %v493 = vld [vmem:[%s323 + $0x84] sm:$0xf]
      %v494 = vld [vmem:[%s323 + $0x88] sm:$0xf]
      %v495 = vld [vmem:[%s323 + $0x8c] sm:$0xf]
      %v496 = vld [vmem:[%s323 + $0x90] sm:$0xf]
      %v497 = vld [vmem:[%s323 + $0x94] sm:$0xf]
      %v498 = vld [vmem:[%s323 + $0x98] sm:$0xf]
      %v499 = vld [vmem:[%s323 + $0x9c] sm:$0xf]
      %v500 = vld [vmem:[%s323 + $0xa0] sm:$0xf]
      %v501 = vld [vmem:[%s323 + $0xa4] sm:$0xf]
      %v502 = vld [vmem:[%s323 + $0xa8] sm:$0xf]
      %v503 = vld [vmem:[%s323 + $0xac] sm:$0xf]
      %v504 = vld [vmem:[%s323 + $0xb0] sm:$0xf]
      %v505 = vld [vmem:[%s323 + $0xb4] sm:$0xf]
      %v506 = vld [vmem:[%s323 + $0xb8] sm:$0xf]
      %v507 = vld [vmem:[%s323 + $0xbc] sm:$0xf]
      %v508 = vld [vmem:[%s323 + $0xc0] sm:$0xf]
      %v509 = vld [vmem:[%s323 + $0xc4] sm:$0xf]
      %v510 = vld [vmem:[%s323 + $0xc8] sm:$0xf]
      %v511 = vld [vmem:[%s323 + $0xcc] sm:$0xf]
      %v512 = vld [vmem:[%s323 + $0xd0] sm:$0xf]
      %v513 = vld [vmem:[%s323 + $0xd4] sm:$0xf]
      %v514 = vld [vmem:[%s323 + $0xd8] sm:$0xf]
      %v515 = vld [vmem:[%s323 + $0xdc] sm:$0xf]
      %v516 = vld [vmem:[%s323 + $0xe0] sm:$0xf]
      %v517 = vld [vmem:[%s323 + $0xe4] sm:$0xf]
      %v518 = vld [vmem:[%s323 + $0xe8] sm:$0xf]
      %v519 = vld [vmem:[%s323 + $0xec] sm:$0xf]
      %v520 = vld [vmem:[%s323 + $0xf0] sm:$0xf]
      %v521 = vld [vmem:[%s323 + $0xf4] sm:$0xf]
      %v522 = vld [vmem:[%s323 + $0xf8] sm:$0xf]
      %v523 = vld [vmem:[%s323 + $0xfc] sm:$0xf]
      %v524 = vld [vmem:[%s323 + $0x100] sm:$0xf]
      %v525 = vld [vmem:[%s323 + $0x104] sm:$0xf]
      %v526 = vld [vmem:[%s323 + $0x108] sm:$0xf]
      %v527 = vld [vmem:[%s323 + $0x10c] sm:$0xf]
      %v528 = vld [vmem:[%s323 + $0x110] sm:$0xf]
      %v529 = vld [vmem:[%s323 + $0x114] sm:$0xf]
      %v530 = vld [vmem:[%s323 + $0x118] sm:$0xf]
      %v531 = vld [vmem:[%s323 + $0x11c] sm:$0xf]
      %v532 = vld [vmem:[%s323 + $0x120] sm:$0xf]
      %v533 = vld [vmem:[%s323 + $0x124] sm:$0xf]
      %v534 = vld [vmem:[%s323 + $0x128] sm:$0xf]
      %v535 = vld [vmem:[%s323 + $0x12c] sm:$0xf]
      %v536 = vld [vmem:[%s323 + $0x130] sm:$0xf]
      %v537 = vld [vmem:[%s323 + $0x134] sm:$0xf]
      %v538 = vld [vmem:[%s323 + $0x138] sm:$0xf]
      %v539 = vld [vmem:[%s323 + $0x13c] sm:$0xf]
      %v540 = vld [vmem:[%s323 + $0x140] sm:$0xf]
      %v541 = vld [vmem:[%s323 + $0x144] sm:$0xf]
      %v542 = vld [vmem:[%s323 + $0x148] sm:$0xf]
      %v543 = vld [vmem:[%s323 + $0x14c] sm:$0xf]
      %v544 = vld [vmem:[%s323 + $0x150] sm:$0xf]
      %v545 = vld [vmem:[%s323 + $0x154] sm:$0xf]
      %v546 = vld [vmem:[%s323 + $0x158] sm:$0xf]
      %v547 = vld [vmem:[%s323 + $0x15c] sm:$0xf]
      %v548 = vld [vmem:[%s323 + $0x160] sm:$0xf]
      %v549 = vld [vmem:[%s323 + $0x164] sm:$0xf]
      %v550 = vld [vmem:[%s323 + $0x168] sm:$0xf]
      %v551 = vld [vmem:[%s323 + $0x16c] sm:$0xf]
      %v552 = vld [vmem:[%s323 + $0x170] sm:$0xf]
      %v553 = vld [vmem:[%s323 + $0x174] sm:$0xf]
      %v554 = vld [vmem:[%s323 + $0x178] sm:$0xf]
      %v555 = vld [vmem:[%s323 + $0x17c] sm:$0xf]
      %v556 = vld [vmem:[%s323 + $0x180] sm:$0xf]
      %v557 = vld [vmem:[%s323 + $0x184] sm:$0xf]
      %v558 = vld [vmem:[%s323 + $0x188] sm:$0xf]
      %v559 = vld [vmem:[%s323 + $0x18c] sm:$0xf]
      %v560 = vld [vmem:[%s323 + $0x190] sm:$0xf]
      %v561 = vld [vmem:[%s323 + $0x194] sm:$0xf]
      %v562 = vld [vmem:[%s323 + $0x198] sm:$0xf]
      %v563 = vld [vmem:[%s323 + $0x19c] sm:$0xf]
      %v564 = vld [vmem:[%s323 + $0x1a0] sm:$0xf]
      %v565 = vld [vmem:[%s323 + $0x1a4] sm:$0xf]
      %v566 = vld [vmem:[%s323 + $0x1a8] sm:$0xf]
      %v567 = vld [vmem:[%s323 + $0x1ac] sm:$0xf]
      %v568 = vld [vmem:[%s323 + $0x1b0] sm:$0xf]
      %v569 = vld [vmem:[%s323 + $0x1b4] sm:$0xf]
      %v570 = vld [vmem:[%s323 + $0x1b8] sm:$0xf]
      %v571 = vld [vmem:[%s323 + $0x1bc] sm:$0xf]
      %v572 = vld [vmem:[%s323 + $0x1c0] sm:$0xf]
      %v573 = vld [vmem:[%s323 + $0x1c4] sm:$0xf]
      %v574 = vld [vmem:[%s323 + $0x1c8] sm:$0xf]
      %v575 = vld [vmem:[%s323 + $0x1cc] sm:$0xf]
      %v576 = vld [vmem:[%s323 + $0x1d0] sm:$0xf]
      %v577 = vld [vmem:[%s323 + $0x1d4] sm:$0xf]
      %v578 = vld [vmem:[%s323 + $0x1d8] sm:$0xf]
      %v579 = vld [vmem:[%s323 + $0x1dc] sm:$0xf]
      %v580 = vld [vmem:[%s323 + $0x1e0] sm:$0xf]
      %v581 = vld [vmem:[%s323 + $0x1e4] sm:$0xf]
      %v582 = vld [vmem:[%s323 + $0x1e8] sm:$0xf]
      %v583 = vld [vmem:[%s323 + $0x1ec] sm:$0xf]
      %v584 = vld [vmem:[%s323 + $0x1f0] sm:$0xf]
      %v585 = vld [vmem:[%s323 + $0x1f4] sm:$0xf]
      %v586 = vld [vmem:[%s323 + $0x1f8] sm:$0xf]
      %v587 = vld [vmem:[%s323 + $0x1fc] sm:$0xf]
      %v716 = vunpack.c.l.b16 %v332
      %v717 = vunpack.c.l.b16 %v333
      %v718 = vunpack.c.l.b16 %v334
      %v719 = vunpack.c.l.b16 %v335
      %v720 = vunpack.c.l.b16 %v336
      %v721 = vunpack.c.l.b16 %v337
      %v722 = vunpack.c.l.b16 %v338
      %v723 = vunpack.c.l.b16 %v339
      %v724 = vunpack.c.l.b16 %v340
      %v725 = vunpack.c.l.b16 %v341
      %v726 = vunpack.c.l.b16 %v342
      %v727 = vunpack.c.l.b16 %v343
      %v728 = vunpack.c.l.b16 %v344
      %v729 = vunpack.c.l.b16 %v345
      %v730 = vunpack.c.l.b16 %v346
      %v731 = vunpack.c.l.b16 %v347
      %v732 = vunpack.c.l.b16 %v348
      %v733 = vunpack.c.l.b16 %v349
      %v734 = vunpack.c.l.b16 %v350
      %v735 = vunpack.c.l.b16 %v351
      %v736 = vunpack.c.l.b16 %v352
      %v737 = vunpack.c.l.b16 %v353
      %v738 = vunpack.c.l.b16 %v354
      %v739 = vunpack.c.l.b16 %v355
      %v740 = vunpack.c.l.b16 %v356
      %v741 = vunpack.c.l.b16 %v357
      %v742 = vunpack.c.l.b16 %v358
      %v743 = vunpack.c.l.b16 %v359
      %v744 = vunpack.c.l.b16 %v360
      %v745 = vunpack.c.l.b16 %v361
      %v746 = vunpack.c.l.b16 %v362
      %v747 = vunpack.c.l.b16 %v363
      %v748 = vunpack.c.l.b16 %v364
      %v749 = vunpack.c.l.b16 %v365
      %v750 = vunpack.c.l.b16 %v366
      %v751 = vunpack.c.l.b16 %v367
      %v752 = vunpack.c.l.b16 %v368
      %v753 = vunpack.c.l.b16 %v369
      %v754 = vunpack.c.l.b16 %v370
      %v755 = vunpack.c.l.b16 %v371
      %v756 = vunpack.c.l.b16 %v372
      %v757 = vunpack.c.l.b16 %v373
      %v758 = vunpack.c.l.b16 %v374
      %v759 = vunpack.c.l.b16 %v375
      %v760 = vunpack.c.l.b16 %v376
      %v761 = vunpack.c.l.b16 %v377
      %v762 = vunpack.c.l.b16 %v378
      %v763 = vunpack.c.l.b16 %v379
      %v764 = vunpack.c.l.b16 %v380
      %v765 = vunpack.c.l.b16 %v381
      %v766 = vunpack.c.l.b16 %v382
      %v767 = vunpack.c.l.b16 %v383
      %v768 = vunpack.c.l.b16 %v384
      %v769 = vunpack.c.l.b16 %v385
      %v770 = vunpack.c.l.b16 %v386
      %v771 = vunpack.c.l.b16 %v387
      %v772 = vunpack.c.l.b16 %v388
      %v773 = vunpack.c.l.b16 %v389
      %v774 = vunpack.c.l.b16 %v390
      %v775 = vunpack.c.l.b16 %v391
      %v776 = vunpack.c.l.b16 %v392
      %v777 = vunpack.c.l.b16 %v393
      %v778 = vunpack.c.l.b16 %v394
      %v779 = vunpack.c.l.b16 %v395
      %v780 = vunpack.c.l.b16 %v396
      %v781 = vunpack.c.l.b16 %v397
      %v782 = vunpack.c.l.b16 %v398
      %v783 = vunpack.c.l.b16 %v399
      %v784 = vunpack.c.l.b16 %v400
      %v785 = vunpack.c.l.b16 %v401
      %v786 = vunpack.c.l.b16 %v402
      %v787 = vunpack.c.l.b16 %v403
      %v788 = vunpack.c.l.b16 %v404
      %v789 = vunpack.c.l.b16 %v405
      %v790 = vunpack.c.l.b16 %v406
      %v791 = vunpack.c.l.b16 %v407
      %v792 = vunpack.c.l.b16 %v408
      %v793 = vunpack.c.l.b16 %v409
      %v794 = vunpack.c.l.b16 %v410
      %v795 = vunpack.c.l.b16 %v411
      %v796 = vunpack.c.l.b16 %v412
      %v797 = vunpack.c.l.b16 %v413
      %v798 = vunpack.c.l.b16 %v414
      %v799 = vunpack.c.l.b16 %v415
      %v800 = vunpack.c.l.b16 %v416
      %v801 = vunpack.c.l.b16 %v417
      %v802 = vunpack.c.l.b16 %v418
      %v803 = vunpack.c.l.b16 %v419
      %v804 = vunpack.c.l.b16 %v420
      %v805 = vunpack.c.l.b16 %v421
      %v806 = vunpack.c.l.b16 %v422
      %v807 = vunpack.c.l.b16 %v423
      %v808 = vunpack.c.l.b16 %v424
      %v809 = vunpack.c.l.b16 %v425
      %v810 = vunpack.c.l.b16 %v426
      %v811 = vunpack.c.l.b16 %v427
      %v812 = vunpack.c.l.b16 %v428
      %v813 = vunpack.c.l.b16 %v429
      %v814 = vunpack.c.l.b16 %v430
      %v815 = vunpack.c.l.b16 %v431
      %v816 = vunpack.c.l.b16 %v432
      %v817 = vunpack.c.l.b16 %v433
      %v818 = vunpack.c.l.b16 %v434
      %v819 = vunpack.c.l.b16 %v435
      %v820 = vunpack.c.l.b16 %v436
      %v821 = vunpack.c.l.b16 %v437
      %v822 = vunpack.c.l.b16 %v438
      %v823 = vunpack.c.l.b16 %v439
      %v824 = vunpack.c.l.b16 %v440
      %v825 = vunpack.c.l.b16 %v441
      %v826 = vunpack.c.l.b16 %v442
      %v827 = vunpack.c.l.b16 %v443
      %v828 = vunpack.c.l.b16 %v444
      %v829 = vunpack.c.l.b16 %v445
      %v830 = vunpack.c.l.b16 %v446
      %v831 = vunpack.c.l.b16 %v447
      %v832 = vunpack.c.l.b16 %v448
      %v833 = vunpack.c.l.b16 %v449
      %v834 = vunpack.c.l.b16 %v450
      %v835 = vunpack.c.l.b16 %v451
      %v836 = vunpack.c.l.b16 %v452
      %v837 = vunpack.c.l.b16 %v453
      %v838 = vunpack.c.l.b16 %v454
      %v839 = vunpack.c.l.b16 %v455
      %v840 = vunpack.c.l.b16 %v456
      %v841 = vunpack.c.l.b16 %v457
      %v842 = vunpack.c.l.b16 %v458
      %v843 = vunpack.c.l.b16 %v459
      %v844 = vpack.c.b16 %v717, %v716
      %v845 = vpack.c.b16 %v719, %v718
      %v846 = vpack.c.b16 %v721, %v720
      %v847 = vpack.c.b16 %v723, %v722
      %v848 = vpack.c.b16 %v725, %v724
      %v849 = vpack.c.b16 %v727, %v726
      %v850 = vpack.c.b16 %v729, %v728
      %v851 = vpack.c.b16 %v731, %v730
      %v852 = vpack.c.b16 %v733, %v732
      %v853 = vpack.c.b16 %v735, %v734
      %v854 = vpack.c.b16 %v737, %v736
      %v855 = vpack.c.b16 %v739, %v738
      %v856 = vpack.c.b16 %v741, %v740
      %v857 = vpack.c.b16 %v743, %v742
      %v858 = vpack.c.b16 %v745, %v744
      %v859 = vpack.c.b16 %v747, %v746
      %v860 = vpack.c.b16 %v749, %v748
      %v861 = vpack.c.b16 %v751, %v750
      %v862 = vpack.c.b16 %v753, %v752
      %v863 = vpack.c.b16 %v755, %v754
      %v864 = vpack.c.b16 %v757, %v756
      %v865 = vpack.c.b16 %v759, %v758
      %v866 = vpack.c.b16 %v761, %v760
      %v867 = vpack.c.b16 %v763, %v762
      %v868 = vpack.c.b16 %v765, %v764
      %v869 = vpack.c.b16 %v767, %v766
      %v870 = vpack.c.b16 %v769, %v768
      %v871 = vpack.c.b16 %v771, %v770
      %v872 = vpack.c.b16 %v773, %v772
      %v873 = vpack.c.b16 %v775, %v774
      %v874 = vpack.c.b16 %v777, %v776
      %v875 = vpack.c.b16 %v779, %v778
      %v876 = vpack.c.b16 %v781, %v780
      %v877 = vpack.c.b16 %v783, %v782
      %v878 = vpack.c.b16 %v785, %v784
      %v879 = vpack.c.b16 %v787, %v786
      %v880 = vpack.c.b16 %v789, %v788
      %v881 = vpack.c.b16 %v791, %v790
      %v882 = vpack.c.b16 %v793, %v792
      %v883 = vpack.c.b16 %v795, %v794
      %v884 = vpack.c.b16 %v797, %v796
      %v885 = vpack.c.b16 %v799, %v798
      %v886 = vpack.c.b16 %v801, %v800
      %v887 = vpack.c.b16 %v803, %v802
      %v888 = vpack.c.b16 %v805, %v804
      %v889 = vpack.c.b16 %v807, %v806
      %v890 = vpack.c.b16 %v809, %v808
      %v891 = vpack.c.b16 %v811, %v810
      %v892 = vpack.c.b16 %v813, %v812
      %v893 = vpack.c.b16 %v815, %v814
      %v894 = vpack.c.b16 %v817, %v816
      %v895 = vpack.c.b16 %v819, %v818
      %v896 = vpack.c.b16 %v821, %v820
      %v897 = vpack.c.b16 %v823, %v822
      %v898 = vpack.c.b16 %v825, %v824
      %v899 = vpack.c.b16 %v827, %v826
      %v900 = vpack.c.b16 %v829, %v828
      %v901 = vpack.c.b16 %v831, %v830
      %v902 = vpack.c.b16 %v833, %v832
      %v903 = vpack.c.b16 %v835, %v834
      %v904 = vpack.c.b16 %v837, %v836
      %v905 = vpack.c.b16 %v839, %v838
      %v906 = vpack.c.b16 %v841, %v840
      %v907 = vpack.c.b16 %v843, %v842
      %v1036 = vunpack.c.l.b16 %v460
      %v1037 = vunpack.c.l.b16 %v461
      %v1038 = vunpack.c.l.b16 %v462
      %v1039 = vunpack.c.l.b16 %v463
      %v1040 = vunpack.c.l.b16 %v464
      %v1041 = vunpack.c.l.b16 %v465
      %v1042 = vunpack.c.l.b16 %v466
      %v1043 = vunpack.c.l.b16 %v467
      %v1044 = vunpack.c.l.b16 %v468
      %v1045 = vunpack.c.l.b16 %v469
      %v1046 = vunpack.c.l.b16 %v470
      %v1047 = vunpack.c.l.b16 %v471
      %v1048 = vunpack.c.l.b16 %v472
      %v1049 = vunpack.c.l.b16 %v473
      %v1050 = vunpack.c.l.b16 %v474
      %v1051 = vunpack.c.l.b16 %v475
      %v1052 = vunpack.c.l.b16 %v476
      %v1053 = vunpack.c.l.b16 %v477
      %v1054 = vunpack.c.l.b16 %v478
      %v1055 = vunpack.c.l.b16 %v479
      %v1056 = vunpack.c.l.b16 %v480
      %v1057 = vunpack.c.l.b16 %v481
      %v1058 = vunpack.c.l.b16 %v482
      %v1059 = vunpack.c.l.b16 %v483
      %v1060 = vunpack.c.l.b16 %v484
      %v1061 = vunpack.c.l.b16 %v485
      %v1062 = vunpack.c.l.b16 %v486
      %v1063 = vunpack.c.l.b16 %v487
      %v1064 = vunpack.c.l.b16 %v488
      %v1065 = vunpack.c.l.b16 %v489
      %v1066 = vunpack.c.l.b16 %v490
      %v1067 = vunpack.c.l.b16 %v491
      %v1068 = vunpack.c.l.b16 %v492
      %v1069 = vunpack.c.l.b16 %v493
      %v1070 = vunpack.c.l.b16 %v494
      %v1071 = vunpack.c.l.b16 %v495
      %v1072 = vunpack.c.l.b16 %v496
      %v1073 = vunpack.c.l.b16 %v497
      %v1074 = vunpack.c.l.b16 %v498
      %v1075 = vunpack.c.l.b16 %v499
      %v1076 = vunpack.c.l.b16 %v500
      %v1077 = vunpack.c.l.b16 %v501
      %v1078 = vunpack.c.l.b16 %v502
      %v1079 = vunpack.c.l.b16 %v503
      %v1080 = vunpack.c.l.b16 %v504
      %v1081 = vunpack.c.l.b16 %v505
      %v1082 = vunpack.c.l.b16 %v506
      %v1083 = vunpack.c.l.b16 %v507
      %v1084 = vunpack.c.l.b16 %v508
      %v1085 = vunpack.c.l.b16 %v509
      %v1086 = vunpack.c.l.b16 %v510
      %v1087 = vunpack.c.l.b16 %v511
      %v1088 = vunpack.c.l.b16 %v512
      %v1089 = vunpack.c.l.b16 %v513
      %v1090 = vunpack.c.l.b16 %v514
      %v1091 = vunpack.c.l.b16 %v515
      %v1092 = vunpack.c.l.b16 %v516
      %v1093 = vunpack.c.l.b16 %v517
      %v1094 = vunpack.c.l.b16 %v518
      %v1095 = vunpack.c.l.b16 %v519
      %v1096 = vunpack.c.l.b16 %v520
      %v1097 = vunpack.c.l.b16 %v521
      %v1098 = vunpack.c.l.b16 %v522
      %v1099 = vunpack.c.l.b16 %v523
      %v1100 = vunpack.c.l.b16 %v524
      %v1101 = vunpack.c.l.b16 %v525
      %v1102 = vunpack.c.l.b16 %v526
      %v1103 = vunpack.c.l.b16 %v527
      %v1104 = vunpack.c.l.b16 %v528
      %v1105 = vunpack.c.l.b16 %v529
      %v1106 = vunpack.c.l.b16 %v530
      %v1107 = vunpack.c.l.b16 %v531
      %v1108 = vunpack.c.l.b16 %v532
      %v1109 = vunpack.c.l.b16 %v533
      %v1110 = vunpack.c.l.b16 %v534
      %v1111 = vunpack.c.l.b16 %v535
      %v1112 = vunpack.c.l.b16 %v536
      %v1113 = vunpack.c.l.b16 %v537
      %v1114 = vunpack.c.l.b16 %v538
      %v1115 = vunpack.c.l.b16 %v539
      %v1116 = vunpack.c.l.b16 %v540
      %v1117 = vunpack.c.l.b16 %v541
      %v1118 = vunpack.c.l.b16 %v542
      %v1119 = vunpack.c.l.b16 %v543
      %v1120 = vunpack.c.l.b16 %v544
      %v1121 = vunpack.c.l.b16 %v545
      %v1122 = vunpack.c.l.b16 %v546
      %v1123 = vunpack.c.l.b16 %v547
      %v1124 = vunpack.c.l.b16 %v548
      %v1125 = vunpack.c.l.b16 %v549
      %v1126 = vunpack.c.l.b16 %v550
      %v1127 = vunpack.c.l.b16 %v551
      %v1128 = vunpack.c.l.b16 %v552
      %v1129 = vunpack.c.l.b16 %v553
      %v1130 = vunpack.c.l.b16 %v554
      %v1131 = vunpack.c.l.b16 %v555
      %v1132 = vunpack.c.l.b16 %v556
      %v1133 = vunpack.c.l.b16 %v557
      %v1134 = vunpack.c.l.b16 %v558
      %v1135 = vunpack.c.l.b16 %v559
      %v1136 = vunpack.c.l.b16 %v560
      %v1137 = vunpack.c.l.b16 %v561
      %v1138 = vunpack.c.l.b16 %v562
      %v1139 = vunpack.c.l.b16 %v563
      %v1140 = vunpack.c.l.b16 %v564
      %v1141 = vunpack.c.l.b16 %v565
      %v1142 = vunpack.c.l.b16 %v566
      %v1143 = vunpack.c.l.b16 %v567
      %v1144 = vunpack.c.l.b16 %v568
      %v1145 = vunpack.c.l.b16 %v569
      %v1146 = vunpack.c.l.b16 %v570
      %v1147 = vunpack.c.l.b16 %v571
      %v1148 = vunpack.c.l.b16 %v572
      %v1149 = vunpack.c.l.b16 %v573
      %v1150 = vunpack.c.l.b16 %v574
      %v1151 = vunpack.c.l.b16 %v575
      %v1152 = vunpack.c.l.b16 %v576
      %v1153 = vunpack.c.l.b16 %v577
      %v1154 = vunpack.c.l.b16 %v578
      %v1155 = vunpack.c.l.b16 %v579
      %v1156 = vunpack.c.l.b16 %v580
      %v1157 = vunpack.c.l.b16 %v581
      %v1158 = vunpack.c.l.b16 %v582
      %v1159 = vunpack.c.l.b16 %v583
      %v1160 = vunpack.c.l.b16 %v584
      %v1161 = vunpack.c.l.b16 %v585
      %v1162 = vunpack.c.l.b16 %v586
      %v1163 = vunpack.c.l.b16 %v587
      %v1164 = vpack.c.b16 %v1037, %v1036
      %v1165 = vpack.c.b16 %v1039, %v1038
      %v1166 = vpack.c.b16 %v1041, %v1040
      %v1167 = vpack.c.b16 %v1043, %v1042
      %v1168 = vpack.c.b16 %v1045, %v1044
      %v1169 = vpack.c.b16 %v1047, %v1046
      %v1170 = vpack.c.b16 %v1049, %v1048
      %v1171 = vpack.c.b16 %v1051, %v1050
      %v1172 = vpack.c.b16 %v1053, %v1052
      %v1173 = vpack.c.b16 %v1055, %v1054
      %v1174 = vpack.c.b16 %v1057, %v1056
      %v1175 = vpack.c.b16 %v1059, %v1058
      %v1176 = vpack.c.b16 %v1061, %v1060
      %v1177 = vpack.c.b16 %v1063, %v1062
      %v1178 = vpack.c.b16 %v1065, %v1064
      %v1179 = vpack.c.b16 %v1067, %v1066
      %v1180 = vpack.c.b16 %v1069, %v1068
      %v1181 = vpack.c.b16 %v1071, %v1070
      %v1182 = vpack.c.b16 %v1073, %v1072
      %v1183 = vpack.c.b16 %v1075, %v1074
      %v1184 = vpack.c.b16 %v1077, %v1076
      %v1185 = vpack.c.b16 %v1079, %v1078
      %v1186 = vpack.c.b16 %v1081, %v1080
      %v1187 = vpack.c.b16 %v1083, %v1082
      %v1188 = vpack.c.b16 %v1085, %v1084
      %v1189 = vpack.c.b16 %v1087, %v1086
      %v1190 = vpack.c.b16 %v1089, %v1088
      %v1191 = vpack.c.b16 %v1091, %v1090
      %v1192 = vpack.c.b16 %v1093, %v1092
      %v1193 = vpack.c.b16 %v1095, %v1094
      %v1194 = vpack.c.b16 %v1097, %v1096
      %v1195 = vpack.c.b16 %v1099, %v1098
      %v1196 = vpack.c.b16 %v1101, %v1100
      %v1197 = vpack.c.b16 %v1103, %v1102
      %v1198 = vpack.c.b16 %v1105, %v1104
      %v1199 = vpack.c.b16 %v1107, %v1106
      %v1200 = vpack.c.b16 %v1109, %v1108
      %v1201 = vpack.c.b16 %v1111, %v1110
      %v1202 = vpack.c.b16 %v1113, %v1112
      %v1203 = vpack.c.b16 %v1115, %v1114
      %v1204 = vpack.c.b16 %v1117, %v1116
      %v1205 = vpack.c.b16 %v1119, %v1118
      %v1206 = vpack.c.b16 %v1121, %v1120
      %v1207 = vpack.c.b16 %v1123, %v1122
      %v1208 = vpack.c.b16 %v1125, %v1124
      %v1209 = vpack.c.b16 %v1127, %v1126
      %v1210 = vpack.c.b16 %v1129, %v1128
      %v1211 = vpack.c.b16 %v1131, %v1130
      %v1212 = vpack.c.b16 %v1133, %v1132
      %v1213 = vpack.c.b16 %v1135, %v1134
      %v1214 = vpack.c.b16 %v1137, %v1136
      %v1215 = vpack.c.b16 %v1139, %v1138
      %v1216 = vpack.c.b16 %v1141, %v1140
      %v1217 = vpack.c.b16 %v1143, %v1142
      %v1218 = vpack.c.b16 %v1145, %v1144
      %v1219 = vpack.c.b16 %v1147, %v1146
      %v1220 = vpack.c.b16 %v1149, %v1148
      %v1221 = vpack.c.b16 %v1151, %v1150
      %v1222 = vpack.c.b16 %v1153, %v1152
      %v1223 = vpack.c.b16 %v1155, %v1154
      %v1224 = vpack.c.b16 %v1157, %v1156
      %v1225 = vpack.c.b16 %v1159, %v1158
      %v1226 = vpack.c.b16 %v1161, %v1160
      %v1227 = vpack.c.b16 %v1163, %v1162
      %1228 = vrot.lane.b32.xlu0 %v1164, 64
      %v1229 = vpop.permute.xlu0 %1228
      %1230 = vrot.lane.b32.xlu0 %v1165, 64
      %v1231 = vpop.permute.xlu0 %1230
      %1232 = vrot.lane.b32.xlu0 %v1166, 64
      %v1233 = vpop.permute.xlu0 %1232
      %1234 = vrot.lane.b32.xlu0 %v1167, 64
      %v1235 = vpop.permute.xlu0 %1234
      %1236 = vrot.lane.b32.xlu0 %v1168, 64
      %v1237 = vpop.permute.xlu0 %1236
      %1238 = vrot.lane.b32.xlu0 %v1169, 64
      %v1239 = vpop.permute.xlu0 %1238
      %1240 = vrot.lane.b32.xlu0 %v1170, 64
      %v1241 = vpop.permute.xlu0 %1240
      %1242 = vrot.lane.b32.xlu0 %v1171, 64
      %v1243 = vpop.permute.xlu0 %1242
      %1244 = vrot.lane.b32.xlu0 %v1172, 64
      %v1245 = vpop.permute.xlu0 %1244
      %1246 = vrot.lane.b32.xlu0 %v1173, 64
      %v1247 = vpop.permute.xlu0 %1246
      %1248 = vrot.lane.b32.xlu0 %v1174, 64
      %v1249 = vpop.permute.xlu0 %1248
      %1250 = vrot.lane.b32.xlu0 %v1175, 64
      %v1251 = vpop.permute.xlu0 %1250
      %1252 = vrot.lane.b32.xlu0 %v1176, 64
      %v1253 = vpop.permute.xlu0 %1252
      %1254 = vrot.lane.b32.xlu0 %v1177, 64
      %v1255 = vpop.permute.xlu0 %1254
      %1256 = vrot.lane.b32.xlu0 %v1178, 64
      %v1257 = vpop.permute.xlu0 %1256
      %1258 = vrot.lane.b32.xlu0 %v1179, 64
      %v1259 = vpop.permute.xlu0 %1258
      %1260 = vrot.lane.b32.xlu0 %v1180, 64
      %v1261 = vpop.permute.xlu0 %1260
      %1262 = vrot.lane.b32.xlu0 %v1181, 64
      %v1263 = vpop.permute.xlu0 %1262
      %1264 = vrot.lane.b32.xlu0 %v1182, 64
      %v1265 = vpop.permute.xlu0 %1264
      %1266 = vrot.lane.b32.xlu0 %v1183, 64
      %v1267 = vpop.permute.xlu0 %1266
      %1268 = vrot.lane.b32.xlu0 %v1184, 64
      %v1269 = vpop.permute.xlu0 %1268
      %1270 = vrot.lane.b32.xlu0 %v1185, 64
      %v1271 = vpop.permute.xlu0 %1270
      %1272 = vrot.lane.b32.xlu0 %v1186, 64
      %v1273 = vpop.permute.xlu0 %1272
      %1274 = vrot.lane.b32.xlu0 %v1187, 64
      %v1275 = vpop.permute.xlu0 %1274
      %1276 = vrot.lane.b32.xlu0 %v1188, 64
      %v1277 = vpop.permute.xlu0 %1276
      %1278 = vrot.lane.b32.xlu0 %v1189, 64
      %v1279 = vpop.permute.xlu0 %1278
      %1280 = vrot.lane.b32.xlu0 %v1190, 64
      %v1281 = vpop.permute.xlu0 %1280
      %1282 = vrot.lane.b32.xlu0 %v1191, 64
      %v1283 = vpop.permute.xlu0 %1282
      %1284 = vrot.lane.b32.xlu0 %v1192, 64
      %v1285 = vpop.permute.xlu0 %1284
      %1286 = vrot.lane.b32.xlu0 %v1193, 64
      %v1287 = vpop.permute.xlu0 %1286
      %1288 = vrot.lane.b32.xlu0 %v1194, 64
      %v1289 = vpop.permute.xlu0 %1288
      %1290 = vrot.lane.b32.xlu0 %v1195, 64
      %v1291 = vpop.permute.xlu0 %1290
      %1292 = vrot.lane.b32.xlu0 %v1196, 64
      %v1293 = vpop.permute.xlu0 %1292
      %1294 = vrot.lane.b32.xlu0 %v1197, 64
      %v1295 = vpop.permute.xlu0 %1294
      %1296 = vrot.lane.b32.xlu0 %v1198, 64
      %v1297 = vpop.permute.xlu0 %1296
      %1298 = vrot.lane.b32.xlu0 %v1199, 64
      %v1299 = vpop.permute.xlu0 %1298
      %1300 = vrot.lane.b32.xlu0 %v1200, 64
      %v1301 = vpop.permute.xlu0 %1300
      %1302 = vrot.lane.b32.xlu0 %v1201, 64
      %v1303 = vpop.permute.xlu0 %1302
      %1304 = vrot.lane.b32.xlu0 %v1202, 64
      %v1305 = vpop.permute.xlu0 %1304
      %1306 = vrot.lane.b32.xlu0 %v1203, 64
      %v1307 = vpop.permute.xlu0 %1306
      %1308 = vrot.lane.b32.xlu0 %v1204, 64
      %v1309 = vpop.permute.xlu0 %1308
      %1310 = vrot.lane.b32.xlu0 %v1205, 64
      %v1311 = vpop.permute.xlu0 %1310
      %1312 = vrot.lane.b32.xlu0 %v1206, 64
      %v1313 = vpop.permute.xlu0 %1312
      %1314 = vrot.lane.b32.xlu0 %v1207, 64
      %v1315 = vpop.permute.xlu0 %1314
      %1316 = vrot.lane.b32.xlu0 %v1208, 64
      %v1317 = vpop.permute.xlu0 %1316
      %1318 = vrot.lane.b32.xlu0 %v1209, 64
      %v1319 = vpop.permute.xlu0 %1318
      %1320 = vrot.lane.b32.xlu0 %v1210, 64
      %v1321 = vpop.permute.xlu0 %1320
      %1322 = vrot.lane.b32.xlu0 %v1211, 64
      %v1323 = vpop.permute.xlu0 %1322
      %1324 = vrot.lane.b32.xlu0 %v1212, 64
      %v1325 = vpop.permute.xlu0 %1324
      %1326 = vrot.lane.b32.xlu0 %v1213, 64
      %v1327 = vpop.permute.xlu0 %1326
      %1328 = vrot.lane.b32.xlu0 %v1214, 64
      %v1329 = vpop.permute.xlu0 %1328
      %1330 = vrot.lane.b32.xlu0 %v1215, 64
      %v1331 = vpop.permute.xlu0 %1330
      %1332 = vrot.lane.b32.xlu0 %v1216, 64
      %v1333 = vpop.permute.xlu0 %1332
      %1334 = vrot.lane.b32.xlu0 %v1217, 64
      %v1335 = vpop.permute.xlu0 %1334
      %1336 = vrot.lane.b32.xlu0 %v1218, 64
      %v1337 = vpop.permute.xlu0 %1336
      %1338 = vrot.lane.b32.xlu0 %v1219, 64
      %v1339 = vpop.permute.xlu0 %1338
      %1340 = vrot.lane.b32.xlu0 %v1220, 64
      %v1341 = vpop.permute.xlu0 %1340
      %1342 = vrot.lane.b32.xlu0 %v1221, 64
      %v1343 = vpop.permute.xlu0 %1342
      %1344 = vrot.lane.b32.xlu0 %v1222, 64
      %v1345 = vpop.permute.xlu0 %1344
      %1346 = vrot.lane.b32.xlu0 %v1223, 64
      %v1347 = vpop.permute.xlu0 %1346
      %1348 = vrot.lane.b32.xlu0 %v1224, 64
      %v1349 = vpop.permute.xlu0 %1348
      %1350 = vrot.lane.b32.xlu0 %v1225, 64
      %v1351 = vpop.permute.xlu0 %1350
      %1352 = vrot.lane.b32.xlu0 %v1226, 64
      %v1353 = vpop.permute.xlu0 %1352
      %1354 = vrot.lane.b32.xlu0 %v1227, 64
      %v1355 = vpop.permute.xlu0 %1354
      %vm1356 = vcmask 523264
      %v1359 = vsel %vm1356, %v844, %v1229
      %v1363 = vsel %vm1356, %v845, %v1231
      %v1367 = vsel %vm1356, %v846, %v1233
      %v1371 = vsel %vm1356, %v847, %v1235
      %v1375 = vsel %vm1356, %v848, %v1237
      %v1379 = vsel %vm1356, %v849, %v1239
      %v1383 = vsel %vm1356, %v850, %v1241
      %v1387 = vsel %vm1356, %v851, %v1243
      %v1391 = vsel %vm1356, %v852, %v1245
      %v1395 = vsel %vm1356, %v853, %v1247
      %v1399 = vsel %vm1356, %v854, %v1249
      %v1403 = vsel %vm1356, %v855, %v1251
      %v1407 = vsel %vm1356, %v856, %v1253
      %v1411 = vsel %vm1356, %v857, %v1255
      %v1415 = vsel %vm1356, %v858, %v1257
      %v1419 = vsel %vm1356, %v859, %v1259
      %v1423 = vsel %vm1356, %v860, %v1261
      %v1427 = vsel %vm1356, %v861, %v1263
      %v1431 = vsel %vm1356, %v862, %v1265
      %v1435 = vsel %vm1356, %v863, %v1267
      %v1439 = vsel %vm1356, %v864, %v1269
      %v1443 = vsel %vm1356, %v865, %v1271
      %v1447 = vsel %vm1356, %v866, %v1273
      %v1451 = vsel %vm1356, %v867, %v1275
      %v1455 = vsel %vm1356, %v868, %v1277
      %v1459 = vsel %vm1356, %v869, %v1279
      %v1463 = vsel %vm1356, %v870, %v1281
      %v1467 = vsel %vm1356, %v871, %v1283
      %v1471 = vsel %vm1356, %v872, %v1285
      %v1475 = vsel %vm1356, %v873, %v1287
      %v1479 = vsel %vm1356, %v874, %v1289
      %v1483 = vsel %vm1356, %v875, %v1291
      %v1487 = vsel %vm1356, %v876, %v1293
      %v1491 = vsel %vm1356, %v877, %v1295
      %v1495 = vsel %vm1356, %v878, %v1297
      %v1499 = vsel %vm1356, %v879, %v1299
      %v1503 = vsel %vm1356, %v880, %v1301
      %v1507 = vsel %vm1356, %v881, %v1303
      %v1511 = vsel %vm1356, %v882, %v1305
      %v1515 = vsel %vm1356, %v883, %v1307
      %v1519 = vsel %vm1356, %v884, %v1309
      %v1523 = vsel %vm1356, %v885, %v1311
      %v1527 = vsel %vm1356, %v886, %v1313
      %v1531 = vsel %vm1356, %v887, %v1315
      %v1535 = vsel %vm1356, %v888, %v1317
      %v1539 = vsel %vm1356, %v889, %v1319
      %v1543 = vsel %vm1356, %v890, %v1321
      %v1547 = vsel %vm1356, %v891, %v1323
      %v1551 = vsel %vm1356, %v892, %v1325
      %v1555 = vsel %vm1356, %v893, %v1327
      %v1559 = vsel %vm1356, %v894, %v1329
      %v1563 = vsel %vm1356, %v895, %v1331
      %v1567 = vsel %vm1356, %v896, %v1333
      %v1571 = vsel %vm1356, %v897, %v1335
      %v1575 = vsel %vm1356, %v898, %v1337
      %v1579 = vsel %vm1356, %v899, %v1339
      %v1583 = vsel %vm1356, %v900, %v1341
      %v1587 = vsel %vm1356, %v901, %v1343
      %v1591 = vsel %vm1356, %v902, %v1345
      %v1595 = vsel %vm1356, %v903, %v1347
      %v1599 = vsel %vm1356, %v904, %v1349
      %v1603 = vsel %vm1356, %v905, %v1351
      %v1607 = vsel %vm1356, %v906, %v1353
      %v1611 = vsel %vm1356, %v907, %v1355
      %v1613 = vunpack.c.l.bf16 %v1359
      %v1614 = vunpack.c.h.bf16 %v1359
      %v1615 = vunpack.c.l.bf16 %v1363
      %v1616 = vunpack.c.h.bf16 %v1363
      %v1617 = vunpack.c.l.bf16 %v1367
      %v1618 = vunpack.c.h.bf16 %v1367
      %v1619 = vunpack.c.l.bf16 %v1371
      %v1620 = vunpack.c.h.bf16 %v1371
      %v1621 = vunpack.c.l.bf16 %v1375
      %v1622 = vunpack.c.h.bf16 %v1375
      %v1623 = vunpack.c.l.bf16 %v1379
      %v1624 = vunpack.c.h.bf16 %v1379
      %v1625 = vunpack.c.l.bf16 %v1383
      %v1626 = vunpack.c.h.bf16 %v1383
      %v1627 = vunpack.c.l.bf16 %v1387
      %v1628 = vunpack.c.h.bf16 %v1387
      %v1629 = vunpack.c.l.bf16 %v1391
      %v1630 = vunpack.c.h.bf16 %v1391
      %v1631 = vunpack.c.l.bf16 %v1395
      %v1632 = vunpack.c.h.bf16 %v1395
      %v1633 = vunpack.c.l.bf16 %v1399
      %v1634 = vunpack.c.h.bf16 %v1399
      %v1635 = vunpack.c.l.bf16 %v1403
      %v1636 = vunpack.c.h.bf16 %v1403
      %v1637 = vunpack.c.l.bf16 %v1407
      %v1638 = vunpack.c.h.bf16 %v1407
      %v1639 = vunpack.c.l.bf16 %v1411
      %v1640 = vunpack.c.h.bf16 %v1411
      %v1641 = vunpack.c.l.bf16 %v1415
      %v1642 = vunpack.c.h.bf16 %v1415
      %v1643 = vunpack.c.l.bf16 %v1419
      %v1644 = vunpack.c.h.bf16 %v1419
      %v1645 = vunpack.c.l.bf16 %v1423
      %v1646 = vunpack.c.h.bf16 %v1423
      %v1647 = vunpack.c.l.bf16 %v1427
      %v1648 = vunpack.c.h.bf16 %v1427
      %v1649 = vunpack.c.l.bf16 %v1431
      %v1650 = vunpack.c.h.bf16 %v1431
      %v1651 = vunpack.c.l.bf16 %v1435
      %v1652 = vunpack.c.h.bf16 %v1435
      %v1653 = vunpack.c.l.bf16 %v1439
      %v1654 = vunpack.c.h.bf16 %v1439
      %v1655 = vunpack.c.l.bf16 %v1443
      %v1656 = vunpack.c.h.bf16 %v1443
      %v1657 = vunpack.c.l.bf16 %v1447
      %v1658 = vunpack.c.h.bf16 %v1447
      %v1659 = vunpack.c.l.bf16 %v1451
      %v1660 = vunpack.c.h.bf16 %v1451
      %v1661 = vunpack.c.l.bf16 %v1455
      %v1662 = vunpack.c.h.bf16 %v1455
      %v1663 = vunpack.c.l.bf16 %v1459
      %v1664 = vunpack.c.h.bf16 %v1459
      %v1665 = vunpack.c.l.bf16 %v1463
      %v1666 = vunpack.c.h.bf16 %v1463
      %v1667 = vunpack.c.l.bf16 %v1467
      %v1668 = vunpack.c.h.bf16 %v1467
      %v1669 = vunpack.c.l.bf16 %v1471
      %v1670 = vunpack.c.h.bf16 %v1471
      %v1671 = vunpack.c.l.bf16 %v1475
      %v1672 = vunpack.c.h.bf16 %v1475
      %v1673 = vunpack.c.l.bf16 %v1479
      %v1674 = vunpack.c.h.bf16 %v1479
      %v1675 = vunpack.c.l.bf16 %v1483
      %v1676 = vunpack.c.h.bf16 %v1483
      %v1677 = vunpack.c.l.bf16 %v1487
      %v1678 = vunpack.c.h.bf16 %v1487
      %v1679 = vunpack.c.l.bf16 %v1491
      %v1680 = vunpack.c.h.bf16 %v1491
      %v1681 = vunpack.c.l.bf16 %v1495
      %v1682 = vunpack.c.h.bf16 %v1495
      %v1683 = vunpack.c.l.bf16 %v1499
      %v1684 = vunpack.c.h.bf16 %v1499
      %v1685 = vunpack.c.l.bf16 %v1503
      %v1686 = vunpack.c.h.bf16 %v1503
      %v1687 = vunpack.c.l.bf16 %v1507
      %v1688 = vunpack.c.h.bf16 %v1507
      %v1689 = vunpack.c.l.bf16 %v1511
      %v1690 = vunpack.c.h.bf16 %v1511
      %v1691 = vunpack.c.l.bf16 %v1515
      %v1692 = vunpack.c.h.bf16 %v1515
      %v1693 = vunpack.c.l.bf16 %v1519
      %v1694 = vunpack.c.h.bf16 %v1519
      %v1695 = vunpack.c.l.bf16 %v1523
      %v1696 = vunpack.c.h.bf16 %v1523
      %v1697 = vunpack.c.l.bf16 %v1527
      %v1698 = vunpack.c.h.bf16 %v1527
      %v1699 = vunpack.c.l.bf16 %v1531
      %v1700 = vunpack.c.h.bf16 %v1531
      %v1701 = vunpack.c.l.bf16 %v1535
      %v1702 = vunpack.c.h.bf16 %v1535
      %v1703 = vunpack.c.l.bf16 %v1539
      %v1704 = vunpack.c.h.bf16 %v1539
      %v1705 = vunpack.c.l.bf16 %v1543
      %v1706 = vunpack.c.h.bf16 %v1543
      %v1707 = vunpack.c.l.bf16 %v1547
      %v1708 = vunpack.c.h.bf16 %v1547
      %v1709 = vunpack.c.l.bf16 %v1551
      %v1710 = vunpack.c.h.bf16 %v1551
      %v1711 = vunpack.c.l.bf16 %v1555
      %v1712 = vunpack.c.h.bf16 %v1555
      %v1713 = vunpack.c.l.bf16 %v1559
      %v1714 = vunpack.c.h.bf16 %v1559
      %v1715 = vunpack.c.l.bf16 %v1563
      %v1716 = vunpack.c.h.bf16 %v1563
      %v1717 = vunpack.c.l.bf16 %v1567
      %v1718 = vunpack.c.h.bf16 %v1567
      %v1719 = vunpack.c.l.bf16 %v1571
      %v1720 = vunpack.c.h.bf16 %v1571
      %v1721 = vunpack.c.l.bf16 %v1575
      %v1722 = vunpack.c.h.bf16 %v1575
      %v1723 = vunpack.c.l.bf16 %v1579
      %v1724 = vunpack.c.h.bf16 %v1579
      %v1725 = vunpack.c.l.bf16 %v1583
      %v1726 = vunpack.c.h.bf16 %v1583
      %v1727 = vunpack.c.l.bf16 %v1587
      %v1728 = vunpack.c.h.bf16 %v1587
      %v1729 = vunpack.c.l.bf16 %v1591
      %v1730 = vunpack.c.h.bf16 %v1591
      %v1731 = vunpack.c.l.bf16 %v1595
      %v1732 = vunpack.c.h.bf16 %v1595
      %v1733 = vunpack.c.l.bf16 %v1599
      %v1734 = vunpack.c.h.bf16 %v1599
      %v1735 = vunpack.c.l.bf16 %v1603
      %v1736 = vunpack.c.h.bf16 %v1603
      %v1737 = vunpack.c.l.bf16 %v1607
      %v1738 = vunpack.c.h.bf16 %v1607
      %v1739 = vunpack.c.l.bf16 %v1611
      %v1740 = vunpack.c.h.bf16 %v1611
      %v1741 = vld [vmem:[%s2] sm:$0xf]
      %v1742 = vld [vmem:[%s2 + $0x4] sm:$0xf]
      %v1743 = vld [vmem:[%s2 + $0x8] sm:$0xf]
      %v1744 = vld [vmem:[%s2 + $0xc] sm:$0xf]
      %v1745 = vld [vmem:[%s2 + $0x10] sm:$0xf]
      %v1746 = vld [vmem:[%s2 + $0x14] sm:$0xf]
      %v1747 = vld [vmem:[%s2 + $0x18] sm:$0xf]
      %v1748 = vld [vmem:[%s2 + $0x1c] sm:$0xf]
      %v1749 = vld [vmem:[%s2 + $0x20] sm:$0xf]
      %v1750 = vld [vmem:[%s2 + $0x24] sm:$0xf]
      %v1751 = vld [vmem:[%s2 + $0x28] sm:$0xf]
      %v1752 = vld [vmem:[%s2 + $0x2c] sm:$0xf]
      %v1753 = vld [vmem:[%s2 + $0x30] sm:$0xf]
      %v1754 = vld [vmem:[%s2 + $0x34] sm:$0xf]
      %v1755 = vld [vmem:[%s2 + $0x38] sm:$0xf]
      %v1756 = vld [vmem:[%s2 + $0x3c] sm:$0xf]
      %v1757 = vld [vmem:[%s3] sm:$0x1]
      %v1758 = vlaneseq
      %v1759 = vshrl.u32 %v1758, 7
      %v1760 = vsub.s32 0, %v1759
      %v1761 = vrot.slane %v1757, %v1760
      %v1778 = vunpack.c.l.b16 %v1741
      %v1779 = vunpack.c.l.b16 %v1742
      %v1780 = vunpack.c.l.b16 %v1743
      %v1781 = vunpack.c.l.b16 %v1744
      %v1782 = vunpack.c.l.b16 %v1745
      %v1783 = vunpack.c.l.b16 %v1746
      %v1784 = vunpack.c.l.b16 %v1747
      %v1785 = vunpack.c.l.b16 %v1748
      %v1786 = vunpack.c.l.b16 %v1749
      %v1787 = vunpack.c.l.b16 %v1750
      %v1788 = vunpack.c.l.b16 %v1751
      %v1789 = vunpack.c.l.b16 %v1752
      %v1790 = vunpack.c.l.b16 %v1753
      %v1791 = vunpack.c.l.b16 %v1754
      %v1792 = vunpack.c.l.b16 %v1755
      %v1793 = vunpack.c.l.b16 %v1756
      %v1794 = vpack.c.b16 %v1779, %v1778
      %v1795 = vpack.c.b16 %v1781, %v1780
      %v1796 = vpack.c.b16 %v1783, %v1782
      %v1797 = vpack.c.b16 %v1785, %v1784
      %v1798 = vpack.c.b16 %v1787, %v1786
      %v1799 = vpack.c.b16 %v1789, %v1788
      %v1800 = vpack.c.b16 %v1791, %v1790
      %v1801 = vpack.c.b16 %v1793, %v1792
      %1810 = vmatprep.subr.bf16.mxu0 0
      %1811 = vmatpush1.bf16.msra.mxu0 %v1794
      %1812 = vmatprep.subr.bf16.mxu0 0
      %1813 = vmatpush1.bf16.msra.mxu0 %v1795
      %1814 = vmatprep.subr.bf16.mxu0 0
      %1815 = vmatpush1.bf16.msra.mxu0 %v1796
      %1816 = vmatprep.subr.bf16.mxu0 0
      %1817 = vmatpush1.bf16.msra.mxu0 %v1797
      %1818 = vmatprep.subr.bf16.mxu0 0
      %1819 = vmatpush1.bf16.msra.mxu0 %v1798
      %1820 = vmatprep.subr.bf16.mxu0 0
      %1821 = vmatpush1.bf16.msra.mxu0 %v1799
      %1822 = vmatprep.subr.bf16.mxu0 0
      %1823 = vmatpush1.bf16.msra.mxu0 %v1800
      %1824 = vmatprep.subr.bf16.mxu0 0
      %1825 = vmatpush1.bf16.msra.mxu0 %v1801
      %1826 = vmatprep.subr.bf16.mxu0 0
      %1827 = vmatpush1.bf16.msra.mxu0 0
      %1828 = vmatprep.subr.bf16.mxu0 0
      %1829 = vmatpush1.bf16.msra.mxu0 0
      %1830 = vmatprep.subr.bf16.mxu0 0
      %1831 = vmatpush1.bf16.msra.mxu0 0
      %1832 = vmatprep.subr.bf16.mxu0 0
      %1833 = vmatpush1.bf16.msra.mxu0 0
      %1834 = vmatprep.subr.bf16.mxu0 0
      %1835 = vmatpush1.bf16.msra.mxu0 0
      %1836 = vmatprep.subr.bf16.mxu0 0
      %1837 = vmatpush1.bf16.msra.mxu0 0
      %1838 = vmatprep.subr.bf16.mxu0 0
      %1839 = vmatpush1.bf16.msra.mxu0 0
      %1840 = vmatprep.subr.bf16.mxu0 0
      %1841 = vmatpush1.bf16.msra.mxu0 0
      %1842 = vmatprep.mubr.bf16.mxu0 0
      %1843 = vmatmul.mubr.bf16.gmra.mrb[0].mxu0 %v1359
      %v1844 = vpop.f32.mrb[0].mxu0
      %v1845 = vadd.f32 %v1761, %v1844
      %v1846 = vpop.f32.mrb[0].mxu0
      %v1847 = vpop.f32.mrb[0].mxu0
      %v1848 = vadd.f32 %v1761, %v1847
      %v1849 = vpop.f32.mrb[0].mxu0
      %1850 = vmatprep.mubr.bf16.mxu0 0
      %1851 = vmatmul.mubr.bf16.gmra.mrb[0].mxu0 %v1363
      %v1852 = vpop.f32.mrb[0].mxu0
      %v1853 = vadd.f32 %v1761, %v1852
      %v1854 = vpop.f32.mrb[0].mxu0
      %v1855 = vpop.f32.mrb[0].mxu0
      %v1856 = vadd.f32 %v1761, %v1855
      %v1857 = vpop.f32.mrb[0].mxu0
      %1858 = vmatprep.mubr.bf16.mxu0 0
      %1859 = vmatmul.mubr.bf16.gmra.mrb[0].mxu0 %v1367
      %v1860 = vpop.f32.mrb[0].mxu0
      %v1861 = vadd.f32 %v1761, %v1860
      %v1862 = vpop.f32.mrb[0].mxu0
      %v1863 = vpop.f32.mrb[0].mxu0
      %v1864 = vadd.f32 %v1761, %v1863
      %v1865 = vpop.f32.mrb[0].mxu0
      %1866 = vmatprep.mubr.bf16.mxu0 0
      %1867 = vmatmul.mubr.bf16.gmra.mrb[0].mxu0 %v1371
      %v1868 = vpop.f32.mrb[0].mxu0
      %v1869 = vadd.f32 %v1761, %v1868
      %v1870 = vpop.f32.mrb[0].mxu0
      %v1871 = vpop.f32.mrb[0].mxu0
      %v1872 = vadd.f32 %v1761, %v1871
      %v1873 = vpop.f32.mrb[0].mxu0
      %1874 = vmatprep.mubr.bf16.mxu0 0
      %1875 = vmatmul.mubr.bf16.gmra.mrb[0].mxu0 %v1375
      %v1876 = vpop.f32.mrb[0].mxu0
      %v1877 = vadd.f32 %v1761, %v1876
      %v1878 = vpop.f32.mrb[0].mxu0
      %v1879 = vpop.f32.mrb[0].mxu0
      %v1880 = vadd.f32 %v1761, %v1879
      %v1881 = vpop.f32.mrb[0].mxu0
      %1882 = vmatprep.mubr.bf16.mxu0 0
      %1883 = vmatmul.mubr.bf16.gmra.mrb[0].mxu0 %v1379
      %v1884 = vpop.f32.mrb[0].mxu0
      %v1885 = vadd.f32 %v1761, %v1884
      %v1886 = vpop.f32.mrb[0].mxu0
      %v1887 = vpop.f32.mrb[0].mxu0
      %v1888 = vadd.f32 %v1761, %v1887
      %v1889 = vpop.f32.mrb[0].mxu0
      %1890 = vmatprep.mubr.bf16.mxu0 0
      %1891 = vmatmul.mubr.bf16.gmra.mrb[0].mxu0 %v1383
      %v1892 = vpop.f32.mrb[0].mxu0
      %v1893 = vadd.f32 %v1761, %v1892
      %v1894 = vpop.f32.mrb[0].mxu0
      %v1895 = vpop.f32.mrb[0].mxu0
      %v1896 = vadd.f32 %v1761, %v1895
      %v1897 = vpop.f32.mrb[0].mxu0
      %1898 = vmatprep.mubr.bf16.mxu0 0
      %1899 = vmatmul.mubr.bf16.gmra.mrb[0].mxu0 %v1387
      %v1900 = vpop.f32.mrb[0].mxu0
      %v1901 = vadd.f32 %v1761, %v1900
      %v1902 = vpop.f32.mrb[0].mxu0
      %v1903 = vpop.f32.mrb[0].mxu0
      %v1904 = vadd.f32 %v1761, %v1903
      %v1905 = vpop.f32.mrb[0].mxu0
      %1906 = vmatprep.mubr.bf16.mxu0 0
      %1907 = vmatmul.mubr.bf16.gmra.mrb[0].mxu0 %v1391
      %v1908 = vpop.f32.mrb[0].mxu0
      %v1909 = vadd.f32 %v1761, %v1908
      %v1910 = vpop.f32.mrb[0].mxu0
      %v1911 = vpop.f32.mrb[0].mxu0
      %v1912 = vadd.f32 %v1761, %v1911
      %v1913 = vpop.f32.mrb[0].mxu0
      %1914 = vmatprep.mubr.bf16.mxu0 0
      %1915 = vmatmul.mubr.bf16.gmra.mrb[0].mxu0 %v1395
      %v1916 = vpop.f32.mrb[0].mxu0
      %v1917 = vadd.f32 %v1761, %v1916
      %v1918 = vpop.f32.mrb[0].mxu0
      %v1919 = vpop.f32.mrb[0].mxu0
      %v1920 = vadd.f32 %v1761, %v1919
      %v1921 = vpop.f32.mrb[0].mxu0
      %1922 = vmatprep.mubr.bf16.mxu0 0
      %1923 = vmatmul.mubr.bf16.gmra.mrb[0].mxu0 %v1399
      %v1924 = vpop.f32.mrb[0].mxu0
      %v1925 = vadd.f32 %v1761, %v1924
      %v1926 = vpop.f32.mrb[0].mxu0
      %v1927 = vpop.f32.mrb[0].mxu0
      %v1928 = vadd.f32 %v1761, %v1927
      %v1929 = vpop.f32.mrb[0].mxu0
      %1930 = vmatprep.mubr.bf16.mxu0 0
      %1931 = vmatmul.mubr.bf16.gmra.mrb[0].mxu0 %v1403
      %v1932 = vpop.f32.mrb[0].mxu0
      %v1933 = vadd.f32 %v1761, %v1932
      %v1934 = vpop.f32.mrb[0].mxu0
      %v1935 = vpop.f32.mrb[0].mxu0
      %v1936 = vadd.f32 %v1761, %v1935
      %v1937 = vpop.f32.mrb[0].mxu0
      %1938 = vmatprep.mubr.bf16.mxu0 0
      %1939 = vmatmul.mubr.bf16.gmra.mrb[0].mxu0 %v1407
      %v1940 = vpop.f32.mrb[0].mxu0
      %v1941 = vadd.f32 %v1761, %v1940
      %v1942 = vpop.f32.mrb[0].mxu0
      %v1943 = vpop.f32.mrb[0].mxu0
      %v1944 = vadd.f32 %v1761, %v1943
      %v1945 = vpop.f32.mrb[0].mxu0
      %1946 = vmatprep.mubr.bf16.mxu0 0
      %1947 = vmatmul.mubr.bf16.gmra.mrb[0].mxu0 %v1411
      %v1948 = vpop.f32.mrb[0].mxu0
      %v1949 = vadd.f32 %v1761, %v1948
      %v1950 = vpop.f32.mrb[0].mxu0
      %v1951 = vpop.f32.mrb[0].mxu0
      %v1952 = vadd.f32 %v1761, %v1951
      %v1953 = vpop.f32.mrb[0].mxu0
      %1954 = vmatprep.mubr.bf16.mxu0 0
      %1955 = vmatmul.mubr.bf16.gmra.mrb[0].mxu0 %v1415
      %v1956 = vpop.f32.mrb[0].mxu0
      %v1957 = vadd.f32 %v1761, %v1956
      %v1958 = vpop.f32.mrb[0].mxu0
      %v1959 = vpop.f32.mrb[0].mxu0
      %v1960 = vadd.f32 %v1761, %v1959
      %v1961 = vpop.f32.mrb[0].mxu0
      %1962 = vmatprep.mubr.bf16.mxu0 0
      %1963 = vmatmul.mubr.bf16.gmra.mrb[0].mxu0 %v1419
      %v1964 = vpop.f32.mrb[0].mxu0
      %v1965 = vadd.f32 %v1761, %v1964
      %v1966 = vpop.f32.mrb[0].mxu0
      %v1967 = vpop.f32.mrb[0].mxu0
      %v1968 = vadd.f32 %v1761, %v1967
      %v1969 = vpop.f32.mrb[0].mxu0
      %1970 = vmatprep.mubr.bf16.mxu0 0
      %1971 = vmatmul.mubr.bf16.gmra.mrb[0].mxu0 %v1423
      %v1972 = vpop.f32.mrb[0].mxu0
      %v1973 = vadd.f32 %v1761, %v1972
      %v1974 = vpop.f32.mrb[0].mxu0
      %v1975 = vpop.f32.mrb[0].mxu0
      %v1976 = vadd.f32 %v1761, %v1975
      %v1977 = vpop.f32.mrb[0].mxu0
      %1978 = vmatprep.mubr.bf16.mxu0 0
      %1979 = vmatmul.mubr.bf16.gmra.mrb[0].mxu0 %v1427
      %v1980 = vpop.f32.mrb[0].mxu0
      %v1981 = vadd.f32 %v1761, %v1980
      %v1982 = vpop.f32.mrb[0].mxu0
      %v1983 = vpop.f32.mrb[0].mxu0
      %v1984 = vadd.f32 %v1761, %v1983
      %v1985 = vpop.f32.mrb[0].mxu0
      %1986 = vmatprep.mubr.bf16.mxu0 0
      %1987 = vmatmul.mubr.bf16.gmra.mrb[0].mxu0 %v1431
      %v1988 = vpop.f32.mrb[0].mxu0
      %v1989 = vadd.f32 %v1761, %v1988
      %v1990 = vpop.f32.mrb[0].mxu0
      %v1991 = vpop.f32.mrb[0].mxu0
      %v1992 = vadd.f32 %v1761, %v1991
      %v1993 = vpop.f32.mrb[0].mxu0
      %1994 = vmatprep.mubr.bf16.mxu0 0
      %1995 = vmatmul.mubr.bf16.gmra.mrb[0].mxu0 %v1435
      %v1996 = vpop.f32.mrb[0].mxu0
      %v1997 = vadd.f32 %v1761, %v1996
      %v1998 = vpop.f32.mrb[0].mxu0
      %v1999 = vpop.f32.mrb[0].mxu0
      %v2000 = vadd.f32 %v1761, %v1999
      %v2001 = vpop.f32.mrb[0].mxu0
      %2002 = vmatprep.mubr.bf16.mxu0 0
      %2003 = vmatmul.mubr.bf16.gmra.mrb[0].mxu0 %v1439
      %v2004 = vpop.f32.mrb[0].mxu0
      %v2005 = vadd.f32 %v1761, %v2004
      %v2006 = vpop.f32.mrb[0].mxu0
      %v2007 = vpop.f32.mrb[0].mxu0
      %v2008 = vadd.f32 %v1761, %v2007
      %v2009 = vpop.f32.mrb[0].mxu0
      %2010 = vmatprep.mubr.bf16.mxu0 0
      %2011 = vmatmul.mubr.bf16.gmra.mrb[0].mxu0 %v1443
      %v2012 = vpop.f32.mrb[0].mxu0
      %v2013 = vadd.f32 %v1761, %v2012
      %v2014 = vpop.f32.mrb[0].mxu0
      %v2015 = vpop.f32.mrb[0].mxu0
      %v2016 = vadd.f32 %v1761, %v2015
      %v2017 = vpop.f32.mrb[0].mxu0
      %2018 = vmatprep.mubr.bf16.mxu0 0
      %2019 = vmatmul.mubr.bf16.gmra.mrb[0].mxu0 %v1447
      %v2020 = vpop.f32.mrb[0].mxu0
      %v2021 = vadd.f32 %v1761, %v2020
      %v2022 = vpop.f32.mrb[0].mxu0
      %v2023 = vpop.f32.mrb[0].mxu0
      %v2024 = vadd.f32 %v1761, %v2023
      %v2025 = vpop.f32.mrb[0].mxu0
      %2026 = vmatprep.mubr.bf16.mxu0 0
      %2027 = vmatmul.mubr.bf16.gmra.mrb[0].mxu0 %v1451
      %v2028 = vpop.f32.mrb[0].mxu0
      %v2029 = vadd.f32 %v1761, %v2028
      %v2030 = vpop.f32.mrb[0].mxu0
      %v2031 = vpop.f32.mrb[0].mxu0
      %v2032 = vadd.f32 %v1761, %v2031
      %v2033 = vpop.f32.mrb[0].mxu0
      %2034 = vmatprep.mubr.bf16.mxu0 0
      %2035 = vmatmul.mubr.bf16.gmra.mrb[0].mxu0 %v1455
      %v2036 = vpop.f32.mrb[0].mxu0
      %v2037 = vadd.f32 %v1761, %v2036
      %v2038 = vpop.f32.mrb[0].mxu0
      %v2039 = vpop.f32.mrb[0].mxu0
      %v2040 = vadd.f32 %v1761, %v2039
      %v2041 = vpop.f32.mrb[0].mxu0
      %2042 = vmatprep.mubr.bf16.mxu0 0
      %2043 = vmatmul.mubr.bf16.gmra.mrb[0].mxu0 %v1459
      %v2044 = vpop.f32.mrb[0].mxu0
      %v2045 = vadd.f32 %v1761, %v2044
      %v2046 = vpop.f32.mrb[0].mxu0
      %v2047 = vpop.f32.mrb[0].mxu0
      %v2048 = vadd.f32 %v1761, %v2047
      %v2049 = vpop.f32.mrb[0].mxu0
      %2050 = vmatprep.mubr.bf16.mxu0 0
      %2051 = vmatmul.mubr.bf16.gmra.mrb[0].mxu0 %v1463
      %v2052 = vpop.f32.mrb[0].mxu0
      %v2053 = vadd.f32 %v1761, %v2052
      %v2054 = vpop.f32.mrb[0].mxu0
      %v2055 = vpop.f32.mrb[0].mxu0
      %v2056 = vadd.f32 %v1761, %v2055
      %v2057 = vpop.f32.mrb[0].mxu0
      %2058 = vmatprep.mubr.bf16.mxu0 0
      %2059 = vmatmul.mubr.bf16.gmra.mrb[0].mxu0 %v1467
      %v2060 = vpop.f32.mrb[0].mxu0
      %v2061 = vadd.f32 %v1761, %v2060
      %v2062 = vpop.f32.mrb[0].mxu0
      %v2063 = vpop.f32.mrb[0].mxu0
      %v2064 = vadd.f32 %v1761, %v2063
      %v2065 = vpop.f32.mrb[0].mxu0
      %2066 = vmatprep.mubr.bf16.mxu0 0
      %2067 = vmatmul.mubr.bf16.gmra.mrb[0].mxu0 %v1471
      %v2068 = vpop.f32.mrb[0].mxu0
      %v2069 = vadd.f32 %v1761, %v2068
      %v2070 = vpop.f32.mrb[0].mxu0
      %v2071 = vpop.f32.mrb[0].mxu0
      %v2072 = vadd.f32 %v1761, %v2071
      %v2073 = vpop.f32.mrb[0].mxu0
      %2074 = vmatprep.mubr.bf16.mxu0 0
      %2075 = vmatmul.mubr.bf16.gmra.mrb[0].mxu0 %v1475
      %v2076 = vpop.f32.mrb[0].mxu0
      %v2077 = vadd.f32 %v1761, %v2076
      %v2078 = vpop.f32.mrb[0].mxu0
      %v2079 = vpop.f32.mrb[0].mxu0
      %v2080 = vadd.f32 %v1761, %v2079
      %v2081 = vpop.f32.mrb[0].mxu0
      %2082 = vmatprep.mubr.bf16.mxu0 0
      %2083 = vmatmul.mubr.bf16.gmra.mrb[0].mxu0 %v1479
      %v2084 = vpop.f32.mrb[0].mxu0
      %v2085 = vadd.f32 %v1761, %v2084
      %v2086 = vpop.f32.mrb[0].mxu0
      %v2087 = vpop.f32.mrb[0].mxu0
      %v2088 = vadd.f32 %v1761, %v2087
      %v2089 = vpop.f32.mrb[0].mxu0
      %2090 = vmatprep.mubr.bf16.mxu0 0
      %2091 = vmatmul.mubr.bf16.gmra.mrb[0].mxu0 %v1483
      %v2092 = vpop.f32.mrb[0].mxu0
      %v2093 = vadd.f32 %v1761, %v2092
      %v2094 = vpop.f32.mrb[0].mxu0
      %v2095 = vpop.f32.mrb[0].mxu0
      %v2096 = vadd.f32 %v1761, %v2095
      %v2097 = vpop.f32.mrb[0].mxu0
      %2098 = vmatprep.mubr.bf16.mxu0 0
      %2099 = vmatmul.mubr.bf16.gmra.mrb[0].mxu0 %v1487
      %v2100 = vpop.f32.mrb[0].mxu0
      %v2101 = vadd.f32 %v1761, %v2100
      %v2102 = vpop.f32.mrb[0].mxu0
      %v2103 = vpop.f32.mrb[0].mxu0
      %v2104 = vadd.f32 %v1761, %v2103
      %v2105 = vpop.f32.mrb[0].mxu0
      %2106 = vmatprep.mubr.bf16.mxu0 0
      %2107 = vmatmul.mubr.bf16.gmra.mrb[0].mxu0 %v1491
      %v2108 = vpop.f32.mrb[0].mxu0
      %v2109 = vadd.f32 %v1761, %v2108
      %v2110 = vpop.f32.mrb[0].mxu0
      %v2111 = vpop.f32.mrb[0].mxu0
      %v2112 = vadd.f32 %v1761, %v2111
      %v2113 = vpop.f32.mrb[0].mxu0
      %2114 = vmatprep.mubr.bf16.mxu0 0
      %2115 = vmatmul.mubr.bf16.gmra.mrb[0].mxu0 %v1495
      %v2116 = vpop.f32.mrb[0].mxu0
      %v2117 = vadd.f32 %v1761, %v2116
      %v2118 = vpop.f32.mrb[0].mxu0
      %v2119 = vpop.f32.mrb[0].mxu0
      %v2120 = vadd.f32 %v1761, %v2119
      %v2121 = vpop.f32.mrb[0].mxu0
      %2122 = vmatprep.mubr.bf16.mxu0 0
      %2123 = vmatmul.mubr.bf16.gmra.mrb[0].mxu0 %v1499
      %v2124 = vpop.f32.mrb[0].mxu0
      %v2125 = vadd.f32 %v1761, %v2124
      %v2126 = vpop.f32.mrb[0].mxu0
      %v2127 = vpop.f32.mrb[0].mxu0
      %v2128 = vadd.f32 %v1761, %v2127
      %v2129 = vpop.f32.mrb[0].mxu0
      %2130 = vmatprep.mubr.bf16.mxu0 0
      %2131 = vmatmul.mubr.bf16.gmra.mrb[0].mxu0 %v1503
      %v2132 = vpop.f32.mrb[0].mxu0
      %v2133 = vadd.f32 %v1761, %v2132
      %v2134 = vpop.f32.mrb[0].mxu0
      %v2135 = vpop.f32.mrb[0].mxu0
      %v2136 = vadd.f32 %v1761, %v2135
      %v2137 = vpop.f32.mrb[0].mxu0
      %2138 = vmatprep.mubr.bf16.mxu0 0
      %2139 = vmatmul.mubr.bf16.gmra.mrb[0].mxu0 %v1507
      %v2140 = vpop.f32.mrb[0].mxu0
      %v2141 = vadd.f32 %v1761, %v2140
      %v2142 = vpop.f32.mrb[0].mxu0
      %v2143 = vpop.f32.mrb[0].mxu0
      %v2144 = vadd.f32 %v1761, %v2143
      %v2145 = vpop.f32.mrb[0].mxu0
      %2146 = vmatprep.mubr.bf16.mxu0 0
      %2147 = vmatmul.mubr.bf16.gmra.mrb[0].mxu0 %v1511
      %v2148 = vpop.f32.mrb[0].mxu0
      %v2149 = vadd.f32 %v1761, %v2148
      %v2150 = vpop.f32.mrb[0].mxu0
      %v2151 = vpop.f32.mrb[0].mxu0
      %v2152 = vadd.f32 %v1761, %v2151
      %v2153 = vpop.f32.mrb[0].mxu0
      %2154 = vmatprep.mubr.bf16.mxu0 0
      %2155 = vmatmul.mubr.bf16.gmra.mrb[0].mxu0 %v1515
      %v2156 = vpop.f32.mrb[0].mxu0
      %v2157 = vadd.f32 %v1761, %v2156
      %v2158 = vpop.f32.mrb[0].mxu0
      %v2159 = vpop.f32.mrb[0].mxu0
      %v2160 = vadd.f32 %v1761, %v2159
      %v2161 = vpop.f32.mrb[0].mxu0
      %2162 = vmatprep.mubr.bf16.mxu0 0
      %2163 = vmatmul.mubr.bf16.gmra.mrb[0].mxu0 %v1519
      %v2164 = vpop.f32.mrb[0].mxu0
      %v2165 = vadd.f32 %v1761, %v2164
      %v2166 = vpop.f32.mrb[0].mxu0
      %v2167 = vpop.f32.mrb[0].mxu0
      %v2168 = vadd.f32 %v1761, %v2167
      %v2169 = vpop.f32.mrb[0].mxu0
      %2170 = vmatprep.mubr.bf16.mxu0 0
      %2171 = vmatmul.mubr.bf16.gmra.mrb[0].mxu0 %v1523
      %v2172 = vpop.f32.mrb[0].mxu0
      %v2173 = vadd.f32 %v1761, %v2172
      %v2174 = vpop.f32.mrb[0].mxu0
      %v2175 = vpop.f32.mrb[0].mxu0
      %v2176 = vadd.f32 %v1761, %v2175
      %v2177 = vpop.f32.mrb[0].mxu0
      %2178 = vmatprep.mubr.bf16.mxu0 0
      %2179 = vmatmul.mubr.bf16.gmra.mrb[0].mxu0 %v1527
      %v2180 = vpop.f32.mrb[0].mxu0
      %v2181 = vadd.f32 %v1761, %v2180
      %v2182 = vpop.f32.mrb[0].mxu0
      %v2183 = vpop.f32.mrb[0].mxu0
      %v2184 = vadd.f32 %v1761, %v2183
      %v2185 = vpop.f32.mrb[0].mxu0
      %2186 = vmatprep.mubr.bf16.mxu0 0
      %2187 = vmatmul.mubr.bf16.gmra.mrb[0].mxu0 %v1531
      %v2188 = vpop.f32.mrb[0].mxu0
      %v2189 = vadd.f32 %v1761, %v2188
      %v2190 = vpop.f32.mrb[0].mxu0
      %v2191 = vpop.f32.mrb[0].mxu0
      %v2192 = vadd.f32 %v1761, %v2191
      %v2193 = vpop.f32.mrb[0].mxu0
      %2194 = vmatprep.mubr.bf16.mxu0 0
      %2195 = vmatmul.mubr.bf16.gmra.mrb[0].mxu0 %v1535
      %v2196 = vpop.f32.mrb[0].mxu0
      %v2197 = vadd.f32 %v1761, %v2196
      %v2198 = vpop.f32.mrb[0].mxu0
      %v2199 = vpop.f32.mrb[0].mxu0
      %v2200 = vadd.f32 %v1761, %v2199
      %v2201 = vpop.f32.mrb[0].mxu0
      %2202 = vmatprep.mubr.bf16.mxu0 0
      %2203 = vmatmul.mubr.bf16.gmra.mrb[0].mxu0 %v1539
      %v2204 = vpop.f32.mrb[0].mxu0
      %v2205 = vadd.f32 %v1761, %v2204
      %v2206 = vpop.f32.mrb[0].mxu0
      %v2207 = vpop.f32.mrb[0].mxu0
      %v2208 = vadd.f32 %v1761, %v2207
      %v2209 = vpop.f32.mrb[0].mxu0
      %2210 = vmatprep.mubr.bf16.mxu0 0
      %2211 = vmatmul.mubr.bf16.gmra.mrb[0].mxu0 %v1543
      %v2212 = vpop.f32.mrb[0].mxu0
      %v2213 = vadd.f32 %v1761, %v2212
      %v2214 = vpop.f32.mrb[0].mxu0
      %v2215 = vpop.f32.mrb[0].mxu0
      %v2216 = vadd.f32 %v1761, %v2215
      %v2217 = vpop.f32.mrb[0].mxu0
      %2218 = vmatprep.mubr.bf16.mxu0 0
      %2219 = vmatmul.mubr.bf16.gmra.mrb[0].mxu0 %v1547
      %v2220 = vpop.f32.mrb[0].mxu0
      %v2221 = vadd.f32 %v1761, %v2220
      %v2222 = vpop.f32.mrb[0].mxu0
      %v2223 = vpop.f32.mrb[0].mxu0
      %v2224 = vadd.f32 %v1761, %v2223
      %v2225 = vpop.f32.mrb[0].mxu0
      %2226 = vmatprep.mubr.bf16.mxu0 0
      %2227 = vmatmul.mubr.bf16.gmra.mrb[0].mxu0 %v1551
      %v2228 = vpop.f32.mrb[0].mxu0
      %v2229 = vadd.f32 %v1761, %v2228
      %v2230 = vpop.f32.mrb[0].mxu0
      %v2231 = vpop.f32.mrb[0].mxu0
      %v2232 = vadd.f32 %v1761, %v2231
      %v2233 = vpop.f32.mrb[0].mxu0
      %2234 = vmatprep.mubr.bf16.mxu0 0
      %2235 = vmatmul.mubr.bf16.gmra.mrb[0].mxu0 %v1555
      %v2236 = vpop.f32.mrb[0].mxu0
      %v2237 = vadd.f32 %v1761, %v2236
      %v2238 = vpop.f32.mrb[0].mxu0
      %v2239 = vpop.f32.mrb[0].mxu0
      %v2240 = vadd.f32 %v1761, %v2239
      %v2241 = vpop.f32.mrb[0].mxu0
      %2242 = vmatprep.mubr.bf16.mxu0 0
      %2243 = vmatmul.mubr.bf16.gmra.mrb[0].mxu0 %v1559
      %v2244 = vpop.f32.mrb[0].mxu0
      %v2245 = vadd.f32 %v1761, %v2244
      %v2246 = vpop.f32.mrb[0].mxu0
      %v2247 = vpop.f32.mrb[0].mxu0
      %v2248 = vadd.f32 %v1761, %v2247
      %v2249 = vpop.f32.mrb[0].mxu0
      %2250 = vmatprep.mubr.bf16.mxu0 0
      %2251 = vmatmul.mubr.bf16.gmra.mrb[0].mxu0 %v1563
      %v2252 = vpop.f32.mrb[0].mxu0
      %v2253 = vadd.f32 %v1761, %v2252
      %v2254 = vpop.f32.mrb[0].mxu0
      %v2255 = vpop.f32.mrb[0].mxu0
      %v2256 = vadd.f32 %v1761, %v2255
      %v2257 = vpop.f32.mrb[0].mxu0
      %2258 = vmatprep.mubr.bf16.mxu0 0
      %2259 = vmatmul.mubr.bf16.gmra.mrb[0].mxu0 %v1567
      %v2260 = vpop.f32.mrb[0].mxu0
      %v2261 = vadd.f32 %v1761, %v2260
      %v2262 = vpop.f32.mrb[0].mxu0
      %v2263 = vpop.f32.mrb[0].mxu0
      %v2264 = vadd.f32 %v1761, %v2263
      %v2265 = vpop.f32.mrb[0].mxu0
      %2266 = vmatprep.mubr.bf16.mxu0 0
      %2267 = vmatmul.mubr.bf16.gmra.mrb[0].mxu0 %v1571
      %v2268 = vpop.f32.mrb[0].mxu0
      %v2269 = vadd.f32 %v1761, %v2268
      %v2270 = vpop.f32.mrb[0].mxu0
      %v2271 = vpop.f32.mrb[0].mxu0
      %v2272 = vadd.f32 %v1761, %v2271
      %v2273 = vpop.f32.mrb[0].mxu0
      %2274 = vmatprep.mubr.bf16.mxu0 0
      %2275 = vmatmul.mubr.bf16.gmra.mrb[0].mxu0 %v1575
      %v2276 = vpop.f32.mrb[0].mxu0
      %v2277 = vadd.f32 %v1761, %v2276
      %v2278 = vpop.f32.mrb[0].mxu0
      %v2279 = vpop.f32.mrb[0].mxu0
      %v2280 = vadd.f32 %v1761, %v2279
      %v2281 = vpop.f32.mrb[0].mxu0
      %2282 = vmatprep.mubr.bf16.mxu0 0
      %2283 = vmatmul.mubr.bf16.gmra.mrb[0].mxu0 %v1579
      %v2284 = vpop.f32.mrb[0].mxu0
      %v2285 = vadd.f32 %v1761, %v2284
      %v2286 = vpop.f32.mrb[0].mxu0
      %v2287 = vpop.f32.mrb[0].mxu0
      %v2288 = vadd.f32 %v1761, %v2287
      %v2289 = vpop.f32.mrb[0].mxu0
      %2290 = vmatprep.mubr.bf16.mxu0 0
      %2291 = vmatmul.mubr.bf16.gmra.mrb[0].mxu0 %v1583
      %v2292 = vpop.f32.mrb[0].mxu0
      %v2293 = vadd.f32 %v1761, %v2292
      %v2294 = vpop.f32.mrb[0].mxu0
      %v2295 = vpop.f32.mrb[0].mxu0
      %v2296 = vadd.f32 %v1761, %v2295
      %v2297 = vpop.f32.mrb[0].mxu0
      %2298 = vmatprep.mubr.bf16.mxu0 0
      %2299 = vmatmul.mubr.bf16.gmra.mrb[0].mxu0 %v1587
      %v2300 = vpop.f32.mrb[0].mxu0
      %v2301 = vadd.f32 %v1761, %v2300
      %v2302 = vpop.f32.mrb[0].mxu0
      %v2303 = vpop.f32.mrb[0].mxu0
      %v2304 = vadd.f32 %v1761, %v2303
      %v2305 = vpop.f32.mrb[0].mxu0
      %2306 = vmatprep.mubr.bf16.mxu0 0
      %2307 = vmatmul.mubr.bf16.gmra.mrb[0].mxu0 %v1591
      %v2308 = vpop.f32.mrb[0].mxu0
      %v2309 = vadd.f32 %v1761, %v2308
      %v2310 = vpop.f32.mrb[0].mxu0
      %v2311 = vpop.f32.mrb[0].mxu0
      %v2312 = vadd.f32 %v1761, %v2311
      %v2313 = vpop.f32.mrb[0].mxu0
      %2314 = vmatprep.mubr.bf16.mxu0 0
      %2315 = vmatmul.mubr.bf16.gmra.mrb[0].mxu0 %v1595
      %v2316 = vpop.f32.mrb[0].mxu0
      %v2317 = vadd.f32 %v1761, %v2316
      %v2318 = vpop.f32.mrb[0].mxu0
      %v2319 = vpop.f32.mrb[0].mxu0
      %v2320 = vadd.f32 %v1761, %v2319
      %v2321 = vpop.f32.mrb[0].mxu0
      %2322 = vmatprep.mubr.bf16.mxu0 0
      %2323 = vmatmul.mubr.bf16.gmra.mrb[0].mxu0 %v1599
      %v2324 = vpop.f32.mrb[0].mxu0
      %v2325 = vadd.f32 %v1761, %v2324
      %v2326 = vpop.f32.mrb[0].mxu0
      %v2327 = vpop.f32.mrb[0].mxu0
      %v2328 = vadd.f32 %v1761, %v2327
      %v2329 = vpop.f32.mrb[0].mxu0
      %2330 = vmatprep.mubr.bf16.mxu0 0
      %2331 = vmatmul.mubr.bf16.gmra.mrb[0].mxu0 %v1603
      %v2332 = vpop.f32.mrb[0].mxu0
      %v2333 = vadd.f32 %v1761, %v2332
      %v2334 = vpop.f32.mrb[0].mxu0
      %v2335 = vpop.f32.mrb[0].mxu0
      %v2336 = vadd.f32 %v1761, %v2335
      %v2337 = vpop.f32.mrb[0].mxu0
      %2338 = vmatprep.mubr.bf16.mxu0 0
      %2339 = vmatmul.mubr.bf16.gmra.mrb[0].mxu0 %v1607
      %v2340 = vpop.f32.mrb[0].mxu0
      %v2341 = vadd.f32 %v1761, %v2340
      %v2342 = vpop.f32.mrb[0].mxu0
      %v2343 = vpop.f32.mrb[0].mxu0
      %v2344 = vadd.f32 %v1761, %v2343
      %v2345 = vpop.f32.mrb[0].mxu0
      %2346 = vmatprep.mubr.bf16.mxu0 0
      %2347 = vmatmul.mubr.bf16.gmra.mrb[0].mxu0 %v1611
      %v2348 = vpop.f32.mrb[0].mxu0
      %v2349 = vadd.f32 %v1761, %v2348
      %v2350 = vpop.f32.mrb[0].mxu0
      %v2351 = vpop.f32.mrb[0].mxu0
      %v2352 = vadd.f32 %v1761, %v2351
      %v2353 = vpop.f32.mrb[0].mxu0
      %2354 = vdwg.mxu0
      %v2355 = vmax.f32 %v1845, 0.0
      %v2356 = vmax.f32 %v1848, 0.0
      %v2357 = vmax.f32 %v1853, 0.0
      %v2358 = vmax.f32 %v1856, 0.0
      %v2359 = vmax.f32 %v1861, 0.0
      %v2360 = vmax.f32 %v1864, 0.0
      %v2361 = vmax.f32 %v1869, 0.0
      %v2362 = vmax.f32 %v1872, 0.0
      %v2363 = vmax.f32 %v1877, 0.0
      %v2364 = vmax.f32 %v1880, 0.0
      %v2365 = vmax.f32 %v1885, 0.0
      %v2366 = vmax.f32 %v1888, 0.0
      %v2367 = vmax.f32 %v1893, 0.0
      %v2368 = vmax.f32 %v1896, 0.0
      %v2369 = vmax.f32 %v1901, 0.0
      %v2370 = vmax.f32 %v1904, 0.0
      %v2371 = vmax.f32 %v1909, 0.0
      %v2372 = vmax.f32 %v1912, 0.0
      %v2373 = vmax.f32 %v1917, 0.0
      %v2374 = vmax.f32 %v1920, 0.0
      %v2375 = vmax.f32 %v1925, 0.0
      %v2376 = vmax.f32 %v1928, 0.0
      %v2377 = vmax.f32 %v1933, 0.0
      %v2378 = vmax.f32 %v1936, 0.0
      %v2379 = vmax.f32 %v1941, 0.0
      %v2380 = vmax.f32 %v1944, 0.0
      %v2381 = vmax.f32 %v1949, 0.0
      %v2382 = vmax.f32 %v1952, 0.0
      %v2383 = vmax.f32 %v1957, 0.0
      %v2384 = vmax.f32 %v1960, 0.0
      %v2385 = vmax.f32 %v1965, 0.0
      %v2386 = vmax.f32 %v1968, 0.0
      %v2387 = vmax.f32 %v1973, 0.0
      %v2388 = vmax.f32 %v1976, 0.0
      %v2389 = vmax.f32 %v1981, 0.0
      %v2390 = vmax.f32 %v1984, 0.0
      %v2391 = vmax.f32 %v1989, 0.0
      %v2392 = vmax.f32 %v1992, 0.0
      %v2393 = vmax.f32 %v1997, 0.0
      %v2394 = vmax.f32 %v2000, 0.0
      %v2395 = vmax.f32 %v2005, 0.0
      %v2396 = vmax.f32 %v2008, 0.0
      %v2397 = vmax.f32 %v2013, 0.0
      %v2398 = vmax.f32 %v2016, 0.0
      %v2399 = vmax.f32 %v2021, 0.0
      %v2400 = vmax.f32 %v2024, 0.0
      %v2401 = vmax.f32 %v2029, 0.0
      %v2402 = vmax.f32 %v2032, 0.0
      %v2403 = vmax.f32 %v2037, 0.0
      %v2404 = vmax.f32 %v2040, 0.0
      %v2405 = vmax.f32 %v2045, 0.0
      %v2406 = vmax.f32 %v2048, 0.0
      %v2407 = vmax.f32 %v2053, 0.0
      %v2408 = vmax.f32 %v2056, 0.0
      %v2409 = vmax.f32 %v2061, 0.0
      %v2410 = vmax.f32 %v2064, 0.0
      %v2411 = vmax.f32 %v2069, 0.0
      %v2412 = vmax.f32 %v2072, 0.0
      %v2413 = vmax.f32 %v2077, 0.0
      %v2414 = vmax.f32 %v2080, 0.0
      %v2415 = vmax.f32 %v2085, 0.0
      %v2416 = vmax.f32 %v2088, 0.0
      %v2417 = vmax.f32 %v2093, 0.0
      %v2418 = vmax.f32 %v2096, 0.0
      %v2419 = vmax.f32 %v2101, 0.0
      %v2420 = vmax.f32 %v2104, 0.0
      %v2421 = vmax.f32 %v2109, 0.0
      %v2422 = vmax.f32 %v2112, 0.0
      %v2423 = vmax.f32 %v2117, 0.0
      %v2424 = vmax.f32 %v2120, 0.0
      %v2425 = vmax.f32 %v2125, 0.0
      %v2426 = vmax.f32 %v2128, 0.0
      %v2427 = vmax.f32 %v2133, 0.0
      %v2428 = vmax.f32 %v2136, 0.0
      %v2429 = vmax.f32 %v2141, 0.0
      %v2430 = vmax.f32 %v2144, 0.0
      %v2431 = vmax.f32 %v2149, 0.0
      %v2432 = vmax.f32 %v2152, 0.0
      %v2433 = vmax.f32 %v2157, 0.0
      %v2434 = vmax.f32 %v2160, 0.0
      %v2435 = vmax.f32 %v2165, 0.0
      %v2436 = vmax.f32 %v2168, 0.0
      %v2437 = vmax.f32 %v2173, 0.0
      %v2438 = vmax.f32 %v2176, 0.0
      %v2439 = vmax.f32 %v2181, 0.0
      %v2440 = vmax.f32 %v2184, 0.0
      %v2441 = vmax.f32 %v2189, 0.0
      %v2442 = vmax.f32 %v2192, 0.0
      %v2443 = vmax.f32 %v2197, 0.0
      %v2444 = vmax.f32 %v2200, 0.0
      %v2445 = vmax.f32 %v2205, 0.0
      %v2446 = vmax.f32 %v2208, 0.0
      %v2447 = vmax.f32 %v2213, 0.0
      %v2448 = vmax.f32 %v2216, 0.0
      %v2449 = vmax.f32 %v2221, 0.0
      %v2450 = vmax.f32 %v2224, 0.0
      %v2451 = vmax.f32 %v2229, 0.0
      %v2452 = vmax.f32 %v2232, 0.0
      %v2453 = vmax.f32 %v2237, 0.0
      %v2454 = vmax.f32 %v2240, 0.0
      %v2455 = vmax.f32 %v2245, 0.0
      %v2456 = vmax.f32 %v2248, 0.0
      %v2457 = vmax.f32 %v2253, 0.0
      %v2458 = vmax.f32 %v2256, 0.0
      %v2459 = vmax.f32 %v2261, 0.0
      %v2460 = vmax.f32 %v2264, 0.0
      %v2461 = vmax.f32 %v2269, 0.0
      %v2462 = vmax.f32 %v2272, 0.0
      %v2463 = vmax.f32 %v2277, 0.0
      %v2464 = vmax.f32 %v2280, 0.0
      %v2465 = vmax.f32 %v2285, 0.0
      %v2466 = vmax.f32 %v2288, 0.0
      %v2467 = vmax.f32 %v2293, 0.0
      %v2468 = vmax.f32 %v2296, 0.0
      %v2469 = vmax.f32 %v2301, 0.0
      %v2470 = vmax.f32 %v2304, 0.0
      %v2471 = vmax.f32 %v2309, 0.0
      %v2472 = vmax.f32 %v2312, 0.0
      %v2473 = vmax.f32 %v2317, 0.0
      %v2474 = vmax.f32 %v2320, 0.0
      %v2475 = vmax.f32 %v2325, 0.0
      %v2476 = vmax.f32 %v2328, 0.0
      %v2477 = vmax.f32 %v2333, 0.0
      %v2478 = vmax.f32 %v2336, 0.0
      %v2479 = vmax.f32 %v2341, 0.0
      %v2480 = vmax.f32 %v2344, 0.0
      %v2481 = vmax.f32 %v2349, 0.0
      %v2482 = vmax.f32 %v2352, 0.0
      %v2483 = vpack.c.bf16 %v2356, %v2355
      %v2484 = vpack.c.bf16 %v2358, %v2357
      %v2485 = vpack.c.bf16 %v2360, %v2359
      %v2486 = vpack.c.bf16 %v2362, %v2361
      %v2487 = vpack.c.bf16 %v2364, %v2363
      %v2488 = vpack.c.bf16 %v2366, %v2365
      %v2489 = vpack.c.bf16 %v2368, %v2367
      %v2490 = vpack.c.bf16 %v2370, %v2369
      %v2491 = vpack.c.bf16 %v2372, %v2371
      %v2492 = vpack.c.bf16 %v2374, %v2373
      %v2493 = vpack.c.bf16 %v2376, %v2375
      %v2494 = vpack.c.bf16 %v2378, %v2377
      %v2495 = vpack.c.bf16 %v2380, %v2379
      %v2496 = vpack.c.bf16 %v2382, %v2381
      %v2497 = vpack.c.bf16 %v2384, %v2383
      %v2498 = vpack.c.bf16 %v2386, %v2385
      %v2499 = vpack.c.bf16 %v2388, %v2387
      %v2500 = vpack.c.bf16 %v2390, %v2389
      %v2501 = vpack.c.bf16 %v2392, %v2391
      %v2502 = vpack.c.bf16 %v2394, %v2393
      %v2503 = vpack.c.bf16 %v2396, %v2395
      %v2504 = vpack.c.bf16 %v2398, %v2397
      %v2505 = vpack.c.bf16 %v2400, %v2399
      %v2506 = vpack.c.bf16 %v2402, %v2401
      %v2507 = vpack.c.bf16 %v2404, %v2403
      %v2508 = vpack.c.bf16 %v2406, %v2405
      %v2509 = vpack.c.bf16 %v2408, %v2407
      %v2510 = vpack.c.bf16 %v2410, %v2409
      %v2511 = vpack.c.bf16 %v2412, %v2411
      %v2512 = vpack.c.bf16 %v2414, %v2413
      %v2513 = vpack.c.bf16 %v2416, %v2415
      %v2514 = vpack.c.bf16 %v2418, %v2417
      %v2515 = vpack.c.bf16 %v2420, %v2419
      %v2516 = vpack.c.bf16 %v2422, %v2421
      %v2517 = vpack.c.bf16 %v2424, %v2423
      %v2518 = vpack.c.bf16 %v2426, %v2425
      %v2519 = vpack.c.bf16 %v2428, %v2427
      %v2520 = vpack.c.bf16 %v2430, %v2429
      %v2521 = vpack.c.bf16 %v2432, %v2431
      %v2522 = vpack.c.bf16 %v2434, %v2433
      %v2523 = vpack.c.bf16 %v2436, %v2435
      %v2524 = vpack.c.bf16 %v2438, %v2437
      %v2525 = vpack.c.bf16 %v2440, %v2439
      %v2526 = vpack.c.bf16 %v2442, %v2441
      %v2527 = vpack.c.bf16 %v2444, %v2443
      %v2528 = vpack.c.bf16 %v2446, %v2445
      %v2529 = vpack.c.bf16 %v2448, %v2447
      %v2530 = vpack.c.bf16 %v2450, %v2449
      %v2531 = vpack.c.bf16 %v2452, %v2451
      %v2532 = vpack.c.bf16 %v2454, %v2453
      %v2533 = vpack.c.bf16 %v2456, %v2455
      %v2534 = vpack.c.bf16 %v2458, %v2457
      %v2535 = vpack.c.bf16 %v2460, %v2459
      %v2536 = vpack.c.bf16 %v2462, %v2461
      %v2537 = vpack.c.bf16 %v2464, %v2463
      %v2538 = vpack.c.bf16 %v2466, %v2465
      %v2539 = vpack.c.bf16 %v2468, %v2467
      %v2540 = vpack.c.bf16 %v2470, %v2469
      %v2541 = vpack.c.bf16 %v2472, %v2471
      %v2542 = vpack.c.bf16 %v2474, %v2473
      %v2543 = vpack.c.bf16 %v2476, %v2475
      %v2544 = vpack.c.bf16 %v2478, %v2477
      %v2545 = vpack.c.bf16 %v2480, %v2479
      %v2546 = vpack.c.bf16 %v2482, %v2481
      %v2547 = vld [vmem:[%s4] sm:$0xf]
      %v2548 = vld [vmem:[%s4 + $0x4] sm:$0xf]
      %v2549 = vld [vmem:[%s4 + $0x8] sm:$0xf]
      %v2550 = vld [vmem:[%s4 + $0xc] sm:$0xf]
      %v2551 = vld [vmem:[%s4 + $0x10] sm:$0xf]
      %v2552 = vld [vmem:[%s4 + $0x14] sm:$0xf]
      %v2553 = vld [vmem:[%s4 + $0x18] sm:$0xf]
      %v2554 = vld [vmem:[%s4 + $0x1c] sm:$0xf]
      %v2555 = vld [vmem:[%s4 + $0x20] sm:$0xf]
      %v2556 = vld [vmem:[%s4 + $0x24] sm:$0xf]
      %v2557 = vld [vmem:[%s4 + $0x28] sm:$0xf]
      %v2558 = vld [vmem:[%s4 + $0x2c] sm:$0xf]
      %v2559 = vld [vmem:[%s4 + $0x30] sm:$0xf]
      %v2560 = vld [vmem:[%s4 + $0x34] sm:$0xf]
      %v2561 = vld [vmem:[%s4 + $0x38] sm:$0xf]
      %v2562 = vld [vmem:[%s4 + $0x3c] sm:$0xf]
      %v2563 = vld [vmem:[%s5] sm:$0x1]
      %v2564 = vlaneseq
      %v2565 = vshrl.u32 %v2564, 7
      %v2566 = vsub.s32 0, %v2565
      %v2567 = vrot.slane %v2563, %v2566
      %v2584 = vunpack.c.l.b16 %v2547
      %v2585 = vunpack.c.l.b16 %v2548
      %v2586 = vunpack.c.l.b16 %v2549
      %v2587 = vunpack.c.l.b16 %v2550
      %v2588 = vunpack.c.l.b16 %v2551
      %v2589 = vunpack.c.l.b16 %v2552
      %v2590 = vunpack.c.l.b16 %v2553
      %v2591 = vunpack.c.l.b16 %v2554
      %v2592 = vunpack.c.l.b16 %v2555
      %v2593 = vunpack.c.l.b16 %v2556
      %v2594 = vunpack.c.l.b16 %v2557
      %v2595 = vunpack.c.l.b16 %v2558
      %v2596 = vunpack.c.l.b16 %v2559
      %v2597 = vunpack.c.l.b16 %v2560
      %v2598 = vunpack.c.l.b16 %v2561
      %v2599 = vunpack.c.l.b16 %v2562
      %v2600 = vpack.c.b16 %v2585, %v2584
      %v2601 = vpack.c.b16 %v2587, %v2586
      %v2602 = vpack.c.b16 %v2589, %v2588
      %v2603 = vpack.c.b16 %v2591, %v2590
      %v2604 = vpack.c.b16 %v2593, %v2592
      %v2605 = vpack.c.b16 %v2595, %v2594
      %v2606 = vpack.c.b16 %v2597, %v2596
      %v2607 = vpack.c.b16 %v2599, %v2598
      %2616 = vmatprep.subr.bf16.mxu0 0
      %2617 = vmatpush1.bf16.msra.mxu0 %v2600
      %2618 = vmatprep.subr.bf16.mxu0 0
      %2619 = vmatpush1.bf16.msra.mxu0 %v2601
      %2620 = vmatprep.subr.bf16.mxu0 0
      %2621 = vmatpush1.bf16.msra.mxu0 %v2602
      %2622 = vmatprep.subr.bf16.mxu0 0
      %2623 = vmatpush1.bf16.msra.mxu0 %v2603
      %2624 = vmatprep.subr.bf16.mxu0 0
      %2625 = vmatpush1.bf16.msra.mxu0 %v2604
      %2626 = vmatprep.subr.bf16.mxu0 0
      %2627 = vmatpush1.bf16.msra.mxu0 %v2605
      %2628 = vmatprep.subr.bf16.mxu0 0
      %2629 = vmatpush1.bf16.msra.mxu0 %v2606
      %2630 = vmatprep.subr.bf16.mxu0 0
      %2631 = vmatpush1.bf16.msra.mxu0 %v2607
      %2632 = vmatprep.subr.bf16.mxu0 0
      %2633 = vmatpush1.bf16.msra.mxu0 0
      %2634 = vmatprep.subr.bf16.mxu0 0
      %2635 = vmatpush1.bf16.msra.mxu0 0
      %2636 = vmatprep.subr.bf16.mxu0 0
      %2637 = vmatpush1.bf16.msra.mxu0 0
      %2638 = vmatprep.subr.bf16.mxu0 0
      %2639 = vmatpush1.bf16.msra.mxu0 0
      %2640 = vmatprep.subr.bf16.mxu0 0
      %2641 = vmatpush1.bf16.msra.mxu0 0
      %2642 = vmatprep.subr.bf16.mxu0 0
      %2643 = vmatpush1.bf16.msra.mxu0 0
      %2644 = vmatprep.subr.bf16.mxu0 0
      %2645 = vmatpush1.bf16.msra.mxu0 0
      %2646 = vmatprep.subr.bf16.mxu0 0
      %2647 = vmatpush1.bf16.msra.mxu0 0
      %2648 = vmatprep.mubr.bf16.mxu0 0
      %2649 = vmatmul.mubr.bf16.gmra.mrb[0].mxu0 %v2483
      %v2650 = vpop.f32.mrb[0].mxu0
      %v2651 = vadd.f32 %v2567, %v2650
      %v2652 = vpop.f32.mrb[0].mxu0
      %v2653 = vpop.f32.mrb[0].mxu0
      %v2654 = vadd.f32 %v2567, %v2653
      %v2655 = vpop.f32.mrb[0].mxu0
      %2656 = vmatprep.mubr.bf16.mxu0 0
      %2657 = vmatmul.mubr.bf16.gmra.mrb[0].mxu0 %v2484
      %v2658 = vpop.f32.mrb[0].mxu0
      %v2659 = vadd.f32 %v2567, %v2658
      %v2660 = vpop.f32.mrb[0].mxu0
      %v2661 = vpop.f32.mrb[0].mxu0
      %v2662 = vadd.f32 %v2567, %v2661
      %v2663 = vpop.f32.mrb[0].mxu0
      %2664 = vmatprep.mubr.bf16.mxu0 0
      %2665 = vmatmul.mubr.bf16.gmra.mrb[0].mxu0 %v2485
      %v2666 = vpop.f32.mrb[0].mxu0
      %v2667 = vadd.f32 %v2567, %v2666
      %v2668 = vpop.f32.mrb[0].mxu0
      %v2669 = vpop.f32.mrb[0].mxu0
      %v2670 = vadd.f32 %v2567, %v2669
      %v2671 = vpop.f32.mrb[0].mxu0
      %2672 = vmatprep.mubr.bf16.mxu0 0
      %2673 = vmatmul.mubr.bf16.gmra.mrb[0].mxu0 %v2486
      %v2674 = vpop.f32.mrb[0].mxu0
      %v2675 = vadd.f32 %v2567, %v2674
      %v2676 = vpop.f32.mrb[0].mxu0
      %v2677 = vpop.f32.mrb[0].mxu0
      %v2678 = vadd.f32 %v2567, %v2677
      %v2679 = vpop.f32.mrb[0].mxu0
      %2680 = vmatprep.mubr.bf16.mxu0 0
      %2681 = vmatmul.mubr.bf16.gmra.mrb[0].mxu0 %v2487
      %v2682 = vpop.f32.mrb[0].mxu0
      %v2683 = vadd.f32 %v2567, %v2682
      %v2684 = vpop.f32.mrb[0].mxu0
      %v2685 = vpop.f32.mrb[0].mxu0
      %v2686 = vadd.f32 %v2567, %v2685
      %v2687 = vpop.f32.mrb[0].mxu0
      %2688 = vmatprep.mubr.bf16.mxu0 0
      %2689 = vmatmul.mubr.bf16.gmra.mrb[0].mxu0 %v2488
      %v2690 = vpop.f32.mrb[0].mxu0
      %v2691 = vadd.f32 %v2567, %v2690
      %v2692 = vpop.f32.mrb[0].mxu0
      %v2693 = vpop.f32.mrb[0].mxu0
      %v2694 = vadd.f32 %v2567, %v2693
      %v2695 = vpop.f32.mrb[0].mxu0
      %2696 = vmatprep.mubr.bf16.mxu0 0
      %2697 = vmatmul.mubr.bf16.gmra.mrb[0].mxu0 %v2489
      %v2698 = vpop.f32.mrb[0].mxu0
      %v2699 = vadd.f32 %v2567, %v2698
      %v2700 = vpop.f32.mrb[0].mxu0
      %v2701 = vpop.f32.mrb[0].mxu0
      %v2702 = vadd.f32 %v2567, %v2701
      %v2703 = vpop.f32.mrb[0].mxu0
      %2704 = vmatprep.mubr.bf16.mxu0 0
      %2705 = vmatmul.mubr.bf16.gmra.mrb[0].mxu0 %v2490
      %v2706 = vpop.f32.mrb[0].mxu0
      %v2707 = vadd.f32 %v2567, %v2706
      %v2708 = vpop.f32.mrb[0].mxu0
      %v2709 = vpop.f32.mrb[0].mxu0
      %v2710 = vadd.f32 %v2567, %v2709
      %v2711 = vpop.f32.mrb[0].mxu0
      %2712 = vmatprep.mubr.bf16.mxu0 0
      %2713 = vmatmul.mubr.bf16.gmra.mrb[0].mxu0 %v2491
      %v2714 = vpop.f32.mrb[0].mxu0
      %v2715 = vadd.f32 %v2567, %v2714
      %v2716 = vpop.f32.mrb[0].mxu0
      %v2717 = vpop.f32.mrb[0].mxu0
      %v2718 = vadd.f32 %v2567, %v2717
      %v2719 = vpop.f32.mrb[0].mxu0
      %2720 = vmatprep.mubr.bf16.mxu0 0
      %2721 = vmatmul.mubr.bf16.gmra.mrb[0].mxu0 %v2492
      %v2722 = vpop.f32.mrb[0].mxu0
      %v2723 = vadd.f32 %v2567, %v2722
      %v2724 = vpop.f32.mrb[0].mxu0
      %v2725 = vpop.f32.mrb[0].mxu0
      %v2726 = vadd.f32 %v2567, %v2725
      %v2727 = vpop.f32.mrb[0].mxu0
      %2728 = vmatprep.mubr.bf16.mxu0 0
      %2729 = vmatmul.mubr.bf16.gmra.mrb[0].mxu0 %v2493
      %v2730 = vpop.f32.mrb[0].mxu0
      %v2731 = vadd.f32 %v2567, %v2730
      %v2732 = vpop.f32.mrb[0].mxu0
      %v2733 = vpop.f32.mrb[0].mxu0
      %v2734 = vadd.f32 %v2567, %v2733
      %v2735 = vpop.f32.mrb[0].mxu0
      %2736 = vmatprep.mubr.bf16.mxu0 0
      %2737 = vmatmul.mubr.bf16.gmra.mrb[0].mxu0 %v2494
      %v2738 = vpop.f32.mrb[0].mxu0
      %v2739 = vadd.f32 %v2567, %v2738
      %v2740 = vpop.f32.mrb[0].mxu0
      %v2741 = vpop.f32.mrb[0].mxu0
      %v2742 = vadd.f32 %v2567, %v2741
      %v2743 = vpop.f32.mrb[0].mxu0
      %2744 = vmatprep.mubr.bf16.mxu0 0
      %2745 = vmatmul.mubr.bf16.gmra.mrb[0].mxu0 %v2495
      %v2746 = vpop.f32.mrb[0].mxu0
      %v2747 = vadd.f32 %v2567, %v2746
      %v2748 = vpop.f32.mrb[0].mxu0
      %v2749 = vpop.f32.mrb[0].mxu0
      %v2750 = vadd.f32 %v2567, %v2749
      %v2751 = vpop.f32.mrb[0].mxu0
      %2752 = vmatprep.mubr.bf16.mxu0 0
      %2753 = vmatmul.mubr.bf16.gmra.mrb[0].mxu0 %v2496
      %v2754 = vpop.f32.mrb[0].mxu0
      %v2755 = vadd.f32 %v2567, %v2754
      %v2756 = vpop.f32.mrb[0].mxu0
      %v2757 = vpop.f32.mrb[0].mxu0
      %v2758 = vadd.f32 %v2567, %v2757
      %v2759 = vpop.f32.mrb[0].mxu0
      %2760 = vmatprep.mubr.bf16.mxu0 0
      %2761 = vmatmul.mubr.bf16.gmra.mrb[0].mxu0 %v2497
      %v2762 = vpop.f32.mrb[0].mxu0
      %v2763 = vadd.f32 %v2567, %v2762
      %v2764 = vpop.f32.mrb[0].mxu0
      %v2765 = vpop.f32.mrb[0].mxu0
      %v2766 = vadd.f32 %v2567, %v2765
      %v2767 = vpop.f32.mrb[0].mxu0
      %2768 = vmatprep.mubr.bf16.mxu0 0
      %2769 = vmatmul.mubr.bf16.gmra.mrb[0].mxu0 %v2498
      %v2770 = vpop.f32.mrb[0].mxu0
      %v2771 = vadd.f32 %v2567, %v2770
      %v2772 = vpop.f32.mrb[0].mxu0
      %v2773 = vpop.f32.mrb[0].mxu0
      %v2774 = vadd.f32 %v2567, %v2773
      %v2775 = vpop.f32.mrb[0].mxu0
      %2776 = vmatprep.mubr.bf16.mxu0 0
      %2777 = vmatmul.mubr.bf16.gmra.mrb[0].mxu0 %v2499
      %v2778 = vpop.f32.mrb[0].mxu0
      %v2779 = vadd.f32 %v2567, %v2778
      %v2780 = vpop.f32.mrb[0].mxu0
      %v2781 = vpop.f32.mrb[0].mxu0
      %v2782 = vadd.f32 %v2567, %v2781
      %v2783 = vpop.f32.mrb[0].mxu0
      %2784 = vmatprep.mubr.bf16.mxu0 0
      %2785 = vmatmul.mubr.bf16.gmra.mrb[0].mxu0 %v2500
      %v2786 = vpop.f32.mrb[0].mxu0
      %v2787 = vadd.f32 %v2567, %v2786
      %v2788 = vpop.f32.mrb[0].mxu0
      %v2789 = vpop.f32.mrb[0].mxu0
      %v2790 = vadd.f32 %v2567, %v2789
      %v2791 = vpop.f32.mrb[0].mxu0
      %2792 = vmatprep.mubr.bf16.mxu0 0
      %2793 = vmatmul.mubr.bf16.gmra.mrb[0].mxu0 %v2501
      %v2794 = vpop.f32.mrb[0].mxu0
      %v2795 = vadd.f32 %v2567, %v2794
      %v2796 = vpop.f32.mrb[0].mxu0
      %v2797 = vpop.f32.mrb[0].mxu0
      %v2798 = vadd.f32 %v2567, %v2797
      %v2799 = vpop.f32.mrb[0].mxu0
      %2800 = vmatprep.mubr.bf16.mxu0 0
      %2801 = vmatmul.mubr.bf16.gmra.mrb[0].mxu0 %v2502
      %v2802 = vpop.f32.mrb[0].mxu0
      %v2803 = vadd.f32 %v2567, %v2802
      %v2804 = vpop.f32.mrb[0].mxu0
      %v2805 = vpop.f32.mrb[0].mxu0
      %v2806 = vadd.f32 %v2567, %v2805
      %v2807 = vpop.f32.mrb[0].mxu0
      %2808 = vmatprep.mubr.bf16.mxu0 0
      %2809 = vmatmul.mubr.bf16.gmra.mrb[0].mxu0 %v2503
      %v2810 = vpop.f32.mrb[0].mxu0
      %v2811 = vadd.f32 %v2567, %v2810
      %v2812 = vpop.f32.mrb[0].mxu0
      %v2813 = vpop.f32.mrb[0].mxu0
      %v2814 = vadd.f32 %v2567, %v2813
      %v2815 = vpop.f32.mrb[0].mxu0
      %2816 = vmatprep.mubr.bf16.mxu0 0
      %2817 = vmatmul.mubr.bf16.gmra.mrb[0].mxu0 %v2504
      %v2818 = vpop.f32.mrb[0].mxu0
      %v2819 = vadd.f32 %v2567, %v2818
      %v2820 = vpop.f32.mrb[0].mxu0
      %v2821 = vpop.f32.mrb[0].mxu0
      %v2822 = vadd.f32 %v2567, %v2821
      %v2823 = vpop.f32.mrb[0].mxu0
      %2824 = vmatprep.mubr.bf16.mxu0 0
      %2825 = vmatmul.mubr.bf16.gmra.mrb[0].mxu0 %v2505
      %v2826 = vpop.f32.mrb[0].mxu0
      %v2827 = vadd.f32 %v2567, %v2826
      %v2828 = vpop.f32.mrb[0].mxu0
      %v2829 = vpop.f32.mrb[0].mxu0
      %v2830 = vadd.f32 %v2567, %v2829
      %v2831 = vpop.f32.mrb[0].mxu0
      %2832 = vmatprep.mubr.bf16.mxu0 0
      %2833 = vmatmul.mubr.bf16.gmra.mrb[0].mxu0 %v2506
      %v2834 = vpop.f32.mrb[0].mxu0
      %v2835 = vadd.f32 %v2567, %v2834
      %v2836 = vpop.f32.mrb[0].mxu0
      %v2837 = vpop.f32.mrb[0].mxu0
      %v2838 = vadd.f32 %v2567, %v2837
      %v2839 = vpop.f32.mrb[0].mxu0
      %2840 = vmatprep.mubr.bf16.mxu0 0
      %2841 = vmatmul.mubr.bf16.gmra.mrb[0].mxu0 %v2507
      %v2842 = vpop.f32.mrb[0].mxu0
      %v2843 = vadd.f32 %v2567, %v2842
      %v2844 = vpop.f32.mrb[0].mxu0
      %v2845 = vpop.f32.mrb[0].mxu0
      %v2846 = vadd.f32 %v2567, %v2845
      %v2847 = vpop.f32.mrb[0].mxu0
      %2848 = vmatprep.mubr.bf16.mxu0 0
      %2849 = vmatmul.mubr.bf16.gmra.mrb[0].mxu0 %v2508
      %v2850 = vpop.f32.mrb[0].mxu0
      %v2851 = vadd.f32 %v2567, %v2850
      %v2852 = vpop.f32.mrb[0].mxu0
      %v2853 = vpop.f32.mrb[0].mxu0
      %v2854 = vadd.f32 %v2567, %v2853
      %v2855 = vpop.f32.mrb[0].mxu0
      %2856 = vmatprep.mubr.bf16.mxu0 0
      %2857 = vmatmul.mubr.bf16.gmra.mrb[0].mxu0 %v2509
      %v2858 = vpop.f32.mrb[0].mxu0
      %v2859 = vadd.f32 %v2567, %v2858
      %v2860 = vpop.f32.mrb[0].mxu0
      %v2861 = vpop.f32.mrb[0].mxu0
      %v2862 = vadd.f32 %v2567, %v2861
      %v2863 = vpop.f32.mrb[0].mxu0
      %2864 = vmatprep.mubr.bf16.mxu0 0
      %2865 = vmatmul.mubr.bf16.gmra.mrb[0].mxu0 %v2510
      %v2866 = vpop.f32.mrb[0].mxu0
      %v2867 = vadd.f32 %v2567, %v2866
      %v2868 = vpop.f32.mrb[0].mxu0
      %v2869 = vpop.f32.mrb[0].mxu0
      %v2870 = vadd.f32 %v2567, %v2869
      %v2871 = vpop.f32.mrb[0].mxu0
      %2872 = vmatprep.mubr.bf16.mxu0 0
      %2873 = vmatmul.mubr.bf16.gmra.mrb[0].mxu0 %v2511
      %v2874 = vpop.f32.mrb[0].mxu0
      %v2875 = vadd.f32 %v2567, %v2874
      %v2876 = vpop.f32.mrb[0].mxu0
      %v2877 = vpop.f32.mrb[0].mxu0
      %v2878 = vadd.f32 %v2567, %v2877
      %v2879 = vpop.f32.mrb[0].mxu0
      %2880 = vmatprep.mubr.bf16.mxu0 0
      %2881 = vmatmul.mubr.bf16.gmra.mrb[0].mxu0 %v2512
      %v2882 = vpop.f32.mrb[0].mxu0
      %v2883 = vadd.f32 %v2567, %v2882
      %v2884 = vpop.f32.mrb[0].mxu0
      %v2885 = vpop.f32.mrb[0].mxu0
      %v2886 = vadd.f32 %v2567, %v2885
      %v2887 = vpop.f32.mrb[0].mxu0
      %2888 = vmatprep.mubr.bf16.mxu0 0
      %2889 = vmatmul.mubr.bf16.gmra.mrb[0].mxu0 %v2513
      %v2890 = vpop.f32.mrb[0].mxu0
      %v2891 = vadd.f32 %v2567, %v2890
      %v2892 = vpop.f32.mrb[0].mxu0
      %v2893 = vpop.f32.mrb[0].mxu0
      %v2894 = vadd.f32 %v2567, %v2893
      %v2895 = vpop.f32.mrb[0].mxu0
      %2896 = vmatprep.mubr.bf16.mxu0 0
      %2897 = vmatmul.mubr.bf16.gmra.mrb[0].mxu0 %v2514
      %v2898 = vpop.f32.mrb[0].mxu0
      %v2899 = vadd.f32 %v2567, %v2898
      %v2900 = vpop.f32.mrb[0].mxu0
      %v2901 = vpop.f32.mrb[0].mxu0
      %v2902 = vadd.f32 %v2567, %v2901
      %v2903 = vpop.f32.mrb[0].mxu0
      %2904 = vmatprep.mubr.bf16.mxu0 0
      %2905 = vmatmul.mubr.bf16.gmra.mrb[0].mxu0 %v2515
      %v2906 = vpop.f32.mrb[0].mxu0
      %v2907 = vadd.f32 %v2567, %v2906
      %v2908 = vpop.f32.mrb[0].mxu0
      %v2909 = vpop.f32.mrb[0].mxu0
      %v2910 = vadd.f32 %v2567, %v2909
      %v2911 = vpop.f32.mrb[0].mxu0
      %2912 = vmatprep.mubr.bf16.mxu0 0
      %2913 = vmatmul.mubr.bf16.gmra.mrb[0].mxu0 %v2516
      %v2914 = vpop.f32.mrb[0].mxu0
      %v2915 = vadd.f32 %v2567, %v2914
      %v2916 = vpop.f32.mrb[0].mxu0
      %v2917 = vpop.f32.mrb[0].mxu0
      %v2918 = vadd.f32 %v2567, %v2917
      %v2919 = vpop.f32.mrb[0].mxu0
      %2920 = vmatprep.mubr.bf16.mxu0 0
      %2921 = vmatmul.mubr.bf16.gmra.mrb[0].mxu0 %v2517
      %v2922 = vpop.f32.mrb[0].mxu0
      %v2923 = vadd.f32 %v2567, %v2922
      %v2924 = vpop.f32.mrb[0].mxu0
      %v2925 = vpop.f32.mrb[0].mxu0
      %v2926 = vadd.f32 %v2567, %v2925
      %v2927 = vpop.f32.mrb[0].mxu0
      %2928 = vmatprep.mubr.bf16.mxu0 0
      %2929 = vmatmul.mubr.bf16.gmra.mrb[0].mxu0 %v2518
      %v2930 = vpop.f32.mrb[0].mxu0
      %v2931 = vadd.f32 %v2567, %v2930
      %v2932 = vpop.f32.mrb[0].mxu0
      %v2933 = vpop.f32.mrb[0].mxu0
      %v2934 = vadd.f32 %v2567, %v2933
      %v2935 = vpop.f32.mrb[0].mxu0
      %2936 = vmatprep.mubr.bf16.mxu0 0
      %2937 = vmatmul.mubr.bf16.gmra.mrb[0].mxu0 %v2519
      %v2938 = vpop.f32.mrb[0].mxu0
      %v2939 = vadd.f32 %v2567, %v2938
      %v2940 = vpop.f32.mrb[0].mxu0
      %v2941 = vpop.f32.mrb[0].mxu0
      %v2942 = vadd.f32 %v2567, %v2941
      %v2943 = vpop.f32.mrb[0].mxu0
      %2944 = vmatprep.mubr.bf16.mxu0 0
      %2945 = vmatmul.mubr.bf16.gmra.mrb[0].mxu0 %v2520
      %v2946 = vpop.f32.mrb[0].mxu0
      %v2947 = vadd.f32 %v2567, %v2946
      %v2948 = vpop.f32.mrb[0].mxu0
      %v2949 = vpop.f32.mrb[0].mxu0
      %v2950 = vadd.f32 %v2567, %v2949
      %v2951 = vpop.f32.mrb[0].mxu0
      %2952 = vmatprep.mubr.bf16.mxu0 0
      %2953 = vmatmul.mubr.bf16.gmra.mrb[0].mxu0 %v2521
      %v2954 = vpop.f32.mrb[0].mxu0
      %v2955 = vadd.f32 %v2567, %v2954
      %v2956 = vpop.f32.mrb[0].mxu0
      %v2957 = vpop.f32.mrb[0].mxu0
      %v2958 = vadd.f32 %v2567, %v2957
      %v2959 = vpop.f32.mrb[0].mxu0
      %2960 = vmatprep.mubr.bf16.mxu0 0
      %2961 = vmatmul.mubr.bf16.gmra.mrb[0].mxu0 %v2522
      %v2962 = vpop.f32.mrb[0].mxu0
      %v2963 = vadd.f32 %v2567, %v2962
      %v2964 = vpop.f32.mrb[0].mxu0
      %v2965 = vpop.f32.mrb[0].mxu0
      %v2966 = vadd.f32 %v2567, %v2965
      %v2967 = vpop.f32.mrb[0].mxu0
      %2968 = vmatprep.mubr.bf16.mxu0 0
      %2969 = vmatmul.mubr.bf16.gmra.mrb[0].mxu0 %v2523
      %v2970 = vpop.f32.mrb[0].mxu0
      %v2971 = vadd.f32 %v2567, %v2970
      %v2972 = vpop.f32.mrb[0].mxu0
      %v2973 = vpop.f32.mrb[0].mxu0
      %v2974 = vadd.f32 %v2567, %v2973
      %v2975 = vpop.f32.mrb[0].mxu0
      %2976 = vmatprep.mubr.bf16.mxu0 0
      %2977 = vmatmul.mubr.bf16.gmra.mrb[0].mxu0 %v2524
      %v2978 = vpop.f32.mrb[0].mxu0
      %v2979 = vadd.f32 %v2567, %v2978
      %v2980 = vpop.f32.mrb[0].mxu0
      %v2981 = vpop.f32.mrb[0].mxu0
      %v2982 = vadd.f32 %v2567, %v2981
      %v2983 = vpop.f32.mrb[0].mxu0
      %2984 = vmatprep.mubr.bf16.mxu0 0
      %2985 = vmatmul.mubr.bf16.gmra.mrb[0].mxu0 %v2525
      %v2986 = vpop.f32.mrb[0].mxu0
      %v2987 = vadd.f32 %v2567, %v2986
      %v2988 = vpop.f32.mrb[0].mxu0
      %v2989 = vpop.f32.mrb[0].mxu0
      %v2990 = vadd.f32 %v2567, %v2989
      %v2991 = vpop.f32.mrb[0].mxu0
      %2992 = vmatprep.mubr.bf16.mxu0 0
      %2993 = vmatmul.mubr.bf16.gmra.mrb[0].mxu0 %v2526
      %v2994 = vpop.f32.mrb[0].mxu0
      %v2995 = vadd.f32 %v2567, %v2994
      %v2996 = vpop.f32.mrb[0].mxu0
      %v2997 = vpop.f32.mrb[0].mxu0
      %v2998 = vadd.f32 %v2567, %v2997
      %v2999 = vpop.f32.mrb[0].mxu0
      %3000 = vmatprep.mubr.bf16.mxu0 0
      %3001 = vmatmul.mubr.bf16.gmra.mrb[0].mxu0 %v2527
      %v3002 = vpop.f32.mrb[0].mxu0
      %v3003 = vadd.f32 %v2567, %v3002
      %v3004 = vpop.f32.mrb[0].mxu0
      %v3005 = vpop.f32.mrb[0].mxu0
      %v3006 = vadd.f32 %v2567, %v3005
      %v3007 = vpop.f32.mrb[0].mxu0
      %3008 = vmatprep.mubr.bf16.mxu0 0
      %3009 = vmatmul.mubr.bf16.gmra.mrb[0].mxu0 %v2528
      %v3010 = vpop.f32.mrb[0].mxu0
      %v3011 = vadd.f32 %v2567, %v3010
      %v3012 = vpop.f32.mrb[0].mxu0
      %v3013 = vpop.f32.mrb[0].mxu0
      %v3014 = vadd.f32 %v2567, %v3013
      %v3015 = vpop.f32.mrb[0].mxu0
      %3016 = vmatprep.mubr.bf16.mxu0 0
      %3017 = vmatmul.mubr.bf16.gmra.mrb[0].mxu0 %v2529
      %v3018 = vpop.f32.mrb[0].mxu0
      %v3019 = vadd.f32 %v2567, %v3018
      %v3020 = vpop.f32.mrb[0].mxu0
      %v3021 = vpop.f32.mrb[0].mxu0
      %v3022 = vadd.f32 %v2567, %v3021
      %v3023 = vpop.f32.mrb[0].mxu0
      %3024 = vmatprep.mubr.bf16.mxu0 0
      %3025 = vmatmul.mubr.bf16.gmra.mrb[0].mxu0 %v2530
      %v3026 = vpop.f32.mrb[0].mxu0
      %v3027 = vadd.f32 %v2567, %v3026
      %v3028 = vpop.f32.mrb[0].mxu0
      %v3029 = vpop.f32.mrb[0].mxu0
      %v3030 = vadd.f32 %v2567, %v3029
      %v3031 = vpop.f32.mrb[0].mxu0
      %3032 = vmatprep.mubr.bf16.mxu0 0
      %3033 = vmatmul.mubr.bf16.gmra.mrb[0].mxu0 %v2531
      %v3034 = vpop.f32.mrb[0].mxu0
      %v3035 = vadd.f32 %v2567, %v3034
      %v3036 = vpop.f32.mrb[0].mxu0
      %v3037 = vpop.f32.mrb[0].mxu0
      %v3038 = vadd.f32 %v2567, %v3037
      %v3039 = vpop.f32.mrb[0].mxu0
      %3040 = vmatprep.mubr.bf16.mxu0 0
      %3041 = vmatmul.mubr.bf16.gmra.mrb[0].mxu0 %v2532
      %v3042 = vpop.f32.mrb[0].mxu0
      %v3043 = vadd.f32 %v2567, %v3042
      %v3044 = vpop.f32.mrb[0].mxu0
      %v3045 = vpop.f32.mrb[0].mxu0
      %v3046 = vadd.f32 %v2567, %v3045
      %v3047 = vpop.f32.mrb[0].mxu0
      %3048 = vmatprep.mubr.bf16.mxu0 0
      %3049 = vmatmul.mubr.bf16.gmra.mrb[0].mxu0 %v2533
      %v3050 = vpop.f32.mrb[0].mxu0
      %v3051 = vadd.f32 %v2567, %v3050
      %v3052 = vpop.f32.mrb[0].mxu0
      %v3053 = vpop.f32.mrb[0].mxu0
      %v3054 = vadd.f32 %v2567, %v3053
      %v3055 = vpop.f32.mrb[0].mxu0
      %3056 = vmatprep.mubr.bf16.mxu0 0
      %3057 = vmatmul.mubr.bf16.gmra.mrb[0].mxu0 %v2534
      %v3058 = vpop.f32.mrb[0].mxu0
      %v3059 = vadd.f32 %v2567, %v3058
      %v3060 = vpop.f32.mrb[0].mxu0
      %v3061 = vpop.f32.mrb[0].mxu0
      %v3062 = vadd.f32 %v2567, %v3061
      %v3063 = vpop.f32.mrb[0].mxu0
      %3064 = vmatprep.mubr.bf16.mxu0 0
      %3065 = vmatmul.mubr.bf16.gmra.mrb[0].mxu0 %v2535
      %v3066 = vpop.f32.mrb[0].mxu0
      %v3067 = vadd.f32 %v2567, %v3066
      %v3068 = vpop.f32.mrb[0].mxu0
      %v3069 = vpop.f32.mrb[0].mxu0
      %v3070 = vadd.f32 %v2567, %v3069
      %v3071 = vpop.f32.mrb[0].mxu0
      %3072 = vmatprep.mubr.bf16.mxu0 0
      %3073 = vmatmul.mubr.bf16.gmra.mrb[0].mxu0 %v2536
      %v3074 = vpop.f32.mrb[0].mxu0
      %v3075 = vadd.f32 %v2567, %v3074
      %v3076 = vpop.f32.mrb[0].mxu0
      %v3077 = vpop.f32.mrb[0].mxu0
      %v3078 = vadd.f32 %v2567, %v3077
      %v3079 = vpop.f32.mrb[0].mxu0
      %3080 = vmatprep.mubr.bf16.mxu0 0
      %3081 = vmatmul.mubr.bf16.gmra.mrb[0].mxu0 %v2537
      %v3082 = vpop.f32.mrb[0].mxu0
      %v3083 = vadd.f32 %v2567, %v3082
      %v3084 = vpop.f32.mrb[0].mxu0
      %v3085 = vpop.f32.mrb[0].mxu0
      %v3086 = vadd.f32 %v2567, %v3085
      %v3087 = vpop.f32.mrb[0].mxu0
      %3088 = vmatprep.mubr.bf16.mxu0 0
      %3089 = vmatmul.mubr.bf16.gmra.mrb[0].mxu0 %v2538
      %v3090 = vpop.f32.mrb[0].mxu0
      %v3091 = vadd.f32 %v2567, %v3090
      %v3092 = vpop.f32.mrb[0].mxu0
      %v3093 = vpop.f32.mrb[0].mxu0
      %v3094 = vadd.f32 %v2567, %v3093
      %v3095 = vpop.f32.mrb[0].mxu0
      %3096 = vmatprep.mubr.bf16.mxu0 0
      %3097 = vmatmul.mubr.bf16.gmra.mrb[0].mxu0 %v2539
      %v3098 = vpop.f32.mrb[0].mxu0
      %v3099 = vadd.f32 %v2567, %v3098
      %v3100 = vpop.f32.mrb[0].mxu0
      %v3101 = vpop.f32.mrb[0].mxu0
      %v3102 = vadd.f32 %v2567, %v3101
      %v3103 = vpop.f32.mrb[0].mxu0
      %3104 = vmatprep.mubr.bf16.mxu0 0
      %3105 = vmatmul.mubr.bf16.gmra.mrb[0].mxu0 %v2540
      %v3106 = vpop.f32.mrb[0].mxu0
      %v3107 = vadd.f32 %v2567, %v3106
      %v3108 = vpop.f32.mrb[0].mxu0
      %v3109 = vpop.f32.mrb[0].mxu0
      %v3110 = vadd.f32 %v2567, %v3109
      %v3111 = vpop.f32.mrb[0].mxu0
      %3112 = vmatprep.mubr.bf16.mxu0 0
      %3113 = vmatmul.mubr.bf16.gmra.mrb[0].mxu0 %v2541
      %v3114 = vpop.f32.mrb[0].mxu0
      %v3115 = vadd.f32 %v2567, %v3114
      %v3116 = vpop.f32.mrb[0].mxu0
      %v3117 = vpop.f32.mrb[0].mxu0
      %v3118 = vadd.f32 %v2567, %v3117
      %v3119 = vpop.f32.mrb[0].mxu0
      %3120 = vmatprep.mubr.bf16.mxu0 0
      %3121 = vmatmul.mubr.bf16.gmra.mrb[0].mxu0 %v2542
      %v3122 = vpop.f32.mrb[0].mxu0
      %v3123 = vadd.f32 %v2567, %v3122
      %v3124 = vpop.f32.mrb[0].mxu0
      %v3125 = vpop.f32.mrb[0].mxu0
      %v3126 = vadd.f32 %v2567, %v3125
      %v3127 = vpop.f32.mrb[0].mxu0
      %3128 = vmatprep.mubr.bf16.mxu0 0
      %3129 = vmatmul.mubr.bf16.gmra.mrb[0].mxu0 %v2543
      %v3130 = vpop.f32.mrb[0].mxu0
      %v3131 = vadd.f32 %v2567, %v3130
      %v3132 = vpop.f32.mrb[0].mxu0
      %v3133 = vpop.f32.mrb[0].mxu0
      %v3134 = vadd.f32 %v2567, %v3133
      %v3135 = vpop.f32.mrb[0].mxu0
      %3136 = vmatprep.mubr.bf16.mxu0 0
      %3137 = vmatmul.mubr.bf16.gmra.mrb[0].mxu0 %v2544
      %v3138 = vpop.f32.mrb[0].mxu0
      %v3139 = vadd.f32 %v2567, %v3138
      %v3140 = vpop.f32.mrb[0].mxu0
      %v3141 = vpop.f32.mrb[0].mxu0
      %v3142 = vadd.f32 %v2567, %v3141
      %v3143 = vpop.f32.mrb[0].mxu0
      %3144 = vmatprep.mubr.bf16.mxu0 0
      %3145 = vmatmul.mubr.bf16.gmra.mrb[0].mxu0 %v2545
      %v3146 = vpop.f32.mrb[0].mxu0
      %v3147 = vadd.f32 %v2567, %v3146
      %v3148 = vpop.f32.mrb[0].mxu0
      %v3149 = vpop.f32.mrb[0].mxu0
      %v3150 = vadd.f32 %v2567, %v3149
      %v3151 = vpop.f32.mrb[0].mxu0
      %3152 = vmatprep.mubr.bf16.mxu0 0
      %3153 = vmatmul.mubr.bf16.gmra.mrb[0].mxu0 %v2546
      %v3154 = vpop.f32.mrb[0].mxu0
      %v3155 = vadd.f32 %v2567, %v3154
      %v3156 = vpop.f32.mrb[0].mxu0
      %v3157 = vpop.f32.mrb[0].mxu0
      %v3158 = vadd.f32 %v2567, %v3157
      %v3159 = vpop.f32.mrb[0].mxu0
      %3160 = vdwg.mxu0
      %v3161 = vpack.c.bf16 %v2654, %v2651
      %v3162 = vpack.c.bf16 %v2662, %v2659
      %v3163 = vpack.c.bf16 %v2670, %v2667
      %v3164 = vpack.c.bf16 %v2678, %v2675
      %v3165 = vpack.c.bf16 %v2686, %v2683
      %v3166 = vpack.c.bf16 %v2694, %v2691
      %v3167 = vpack.c.bf16 %v2702, %v2699
      %v3168 = vpack.c.bf16 %v2710, %v2707
      %v3169 = vpack.c.bf16 %v2718, %v2715
      %v3170 = vpack.c.bf16 %v2726, %v2723
      %v3171 = vpack.c.bf16 %v2734, %v2731
      %v3172 = vpack.c.bf16 %v2742, %v2739
      %v3173 = vpack.c.bf16 %v2750, %v2747
      %v3174 = vpack.c.bf16 %v2758, %v2755
      %v3175 = vpack.c.bf16 %v2766, %v2763
      %v3176 = vpack.c.bf16 %v2774, %v2771
      %v3177 = vpack.c.bf16 %v2782, %v2779
      %v3178 = vpack.c.bf16 %v2790, %v2787
      %v3179 = vpack.c.bf16 %v2798, %v2795
      %v3180 = vpack.c.bf16 %v2806, %v2803
      %v3181 = vpack.c.bf16 %v2814, %v2811
      %v3182 = vpack.c.bf16 %v2822, %v2819
      %v3183 = vpack.c.bf16 %v2830, %v2827
      %v3184 = vpack.c.bf16 %v2838, %v2835
      %v3185 = vpack.c.bf16 %v2846, %v2843
      %v3186 = vpack.c.bf16 %v2854, %v2851
      %v3187 = vpack.c.bf16 %v2862, %v2859
      %v3188 = vpack.c.bf16 %v2870, %v2867
      %v3189 = vpack.c.bf16 %v2878, %v2875
      %v3190 = vpack.c.bf16 %v2886, %v2883
      %v3191 = vpack.c.bf16 %v2894, %v2891
      %v3192 = vpack.c.bf16 %v2902, %v2899
      %v3193 = vpack.c.bf16 %v2910, %v2907
      %v3194 = vpack.c.bf16 %v2918, %v2915
      %v3195 = vpack.c.bf16 %v2926, %v2923
      %v3196 = vpack.c.bf16 %v2934, %v2931
      %v3197 = vpack.c.bf16 %v2942, %v2939
      %v3198 = vpack.c.bf16 %v2950, %v2947
      %v3199 = vpack.c.bf16 %v2958, %v2955
      %v3200 = vpack.c.bf16 %v2966, %v2963
      %v3201 = vpack.c.bf16 %v2974, %v2971
      %v3202 = vpack.c.bf16 %v2982, %v2979
      %v3203 = vpack.c.bf16 %v2990, %v2987
      %v3204 = vpack.c.bf16 %v2998, %v2995
      %v3205 = vpack.c.bf16 %v3006, %v3003
      %v3206 = vpack.c.bf16 %v3014, %v3011
      %v3207 = vpack.c.bf16 %v3022, %v3019
      %v3208 = vpack.c.bf16 %v3030, %v3027
      %v3209 = vpack.c.bf16 %v3038, %v3035
      %v3210 = vpack.c.bf16 %v3046, %v3043
      %v3211 = vpack.c.bf16 %v3054, %v3051
      %v3212 = vpack.c.bf16 %v3062, %v3059
      %v3213 = vpack.c.bf16 %v3070, %v3067
      %v3214 = vpack.c.bf16 %v3078, %v3075
      %v3215 = vpack.c.bf16 %v3086, %v3083
      %v3216 = vpack.c.bf16 %v3094, %v3091
      %v3217 = vpack.c.bf16 %v3102, %v3099
      %v3218 = vpack.c.bf16 %v3110, %v3107
      %v3219 = vpack.c.bf16 %v3118, %v3115
      %v3220 = vpack.c.bf16 %v3126, %v3123
      %v3221 = vpack.c.bf16 %v3134, %v3131
      %v3222 = vpack.c.bf16 %v3142, %v3139
      %v3223 = vpack.c.bf16 %v3150, %v3147
      %v3224 = vpack.c.bf16 %v3158, %v3155
      %s3225 = scalar_lea.vmem %s2, 64
      %v3226 = vld [vmem:[%s3225] sm:$0xf]
      %v3227 = vld [vmem:[%s3225 + $0x4] sm:$0xf]
      %v3228 = vld [vmem:[%s3225 + $0x8] sm:$0xf]
      %v3229 = vld [vmem:[%s3225 + $0xc] sm:$0xf]
      %v3230 = vld [vmem:[%s3225 + $0x10] sm:$0xf]
      %v3231 = vld [vmem:[%s3225 + $0x14] sm:$0xf]
      %v3232 = vld [vmem:[%s3225 + $0x18] sm:$0xf]
      %v3233 = vld [vmem:[%s3225 + $0x1c] sm:$0xf]
      %v3234 = vld [vmem:[%s3225 + $0x20] sm:$0xf]
      %v3235 = vld [vmem:[%s3225 + $0x24] sm:$0xf]
      %v3236 = vld [vmem:[%s3225 + $0x28] sm:$0xf]
      %v3237 = vld [vmem:[%s3225 + $0x2c] sm:$0xf]
      %v3238 = vld [vmem:[%s3225 + $0x30] sm:$0xf]
      %v3239 = vld [vmem:[%s3225 + $0x34] sm:$0xf]
      %v3240 = vld [vmem:[%s3225 + $0x38] sm:$0xf]
      %v3241 = vld [vmem:[%s3225 + $0x3c] sm:$0xf]
      %v3242 = vld [vmem:[%s3 + $0x1] sm:$0x1]
      %v3243 = vlaneseq
      %v3244 = vshrl.u32 %v3243, 7
      %v3245 = vsub.s32 0, %v3244
      %v3246 = vrot.slane %v3242, %v3245
      %v3263 = vunpack.c.l.b16 %v3226
      %v3264 = vunpack.c.l.b16 %v3227
      %v3265 = vunpack.c.l.b16 %v3228
      %v3266 = vunpack.c.l.b16 %v3229
      %v3267 = vunpack.c.l.b16 %v3230
      %v3268 = vunpack.c.l.b16 %v3231
      %v3269 = vunpack.c.l.b16 %v3232
      %v3270 = vunpack.c.l.b16 %v3233
      %v3271 = vunpack.c.l.b16 %v3234
      %v3272 = vunpack.c.l.b16 %v3235
      %v3273 = vunpack.c.l.b16 %v3236
      %v3274 = vunpack.c.l.b16 %v3237
      %v3275 = vunpack.c.l.b16 %v3238
      %v3276 = vunpack.c.l.b16 %v3239
      %v3277 = vunpack.c.l.b16 %v3240
      %v3278 = vunpack.c.l.b16 %v3241
      %v3279 = vpack.c.b16 %v3264, %v3263
      %v3280 = vpack.c.b16 %v3266, %v3265
      %v3281 = vpack.c.b16 %v3268, %v3267
      %v3282 = vpack.c.b16 %v3270, %v3269
      %v3283 = vpack.c.b16 %v3272, %v3271
      %v3284 = vpack.c.b16 %v3274, %v3273
      %v3285 = vpack.c.b16 %v3276, %v3275
      %v3286 = vpack.c.b16 %v3278, %v3277
      %3295 = vmatprep.subr.bf16.mxu0 0
      %3296 = vmatpush1.bf16.msra.mxu0 %v3279
      %3297 = vmatprep.subr.bf16.mxu0 0
      %3298 = vmatpush1.bf16.msra.mxu0 %v3280
      %3299 = vmatprep.subr.bf16.mxu0 0
      %3300 = vmatpush1.bf16.msra.mxu0 %v3281
      %3301 = vmatprep.subr.bf16.mxu0 0
      %3302 = vmatpush1.bf16.msra.mxu0 %v3282
      %3303 = vmatprep.subr.bf16.mxu0 0
      %3304 = vmatpush1.bf16.msra.mxu0 %v3283
      %3305 = vmatprep.subr.bf16.mxu0 0
      %3306 = vmatpush1.bf16.msra.mxu0 %v3284
      %3307 = vmatprep.subr.bf16.mxu0 0
      %3308 = vmatpush1.bf16.msra.mxu0 %v3285
      %3309 = vmatprep.subr.bf16.mxu0 0
      %3310 = vmatpush1.bf16.msra.mxu0 %v3286
      %3311 = vmatprep.subr.bf16.mxu0 0
      %3312 = vmatpush1.bf16.msra.mxu0 0
      %3313 = vmatprep.subr.bf16.mxu0 0
      %3314 = vmatpush1.bf16.msra.mxu0 0
      %3315 = vmatprep.subr.bf16.mxu0 0
      %3316 = vmatpush1.bf16.msra.mxu0 0
      %3317 = vmatprep.subr.bf16.mxu0 0
      %3318 = vmatpush1.bf16.msra.mxu0 0
      %3319 = vmatprep.subr.bf16.mxu0 0
      %3320 = vmatpush1.bf16.msra.mxu0 0
      %3321 = vmatprep.subr.bf16.mxu0 0
      %3322 = vmatpush1.bf16.msra.mxu0 0
      %3323 = vmatprep.subr.bf16.mxu0 0
      %3324 = vmatpush1.bf16.msra.mxu0 0
      %3325 = vmatprep.subr.bf16.mxu0 0
      %3326 = vmatpush1.bf16.msra.mxu0 0
      %3327 = vmatprep.mubr.bf16.mxu0 0
      %3328 = vmatmul.mubr.bf16.gmra.mrb[0].mxu0 %v3161
      %v3329 = vpop.f32.mrb[0].mxu0
      %v3330 = vadd.f32 %v3246, %v3329
      %v3331 = vpop.f32.mrb[0].mxu0
      %v3332 = vpop.f32.mrb[0].mxu0
      %v3333 = vadd.f32 %v3246, %v3332
      %v3334 = vpop.f32.mrb[0].mxu0
      %3335 = vmatprep.mubr.bf16.mxu0 0
      %3336 = vmatmul.mubr.bf16.gmra.mrb[0].mxu0 %v3162
      %v3337 = vpop.f32.mrb[0].mxu0
      %v3338 = vadd.f32 %v3246, %v3337
      %v3339 = vpop.f32.mrb[0].mxu0
      %v3340 = vpop.f32.mrb[0].mxu0
      %v3341 = vadd.f32 %v3246, %v3340
      %v3342 = vpop.f32.mrb[0].mxu0
      %3343 = vmatprep.mubr.bf16.mxu0 0
      %3344 = vmatmul.mubr.bf16.gmra.mrb[0].mxu0 %v3163
      %v3345 = vpop.f32.mrb[0].mxu0
      %v3346 = vadd.f32 %v3246, %v3345
      %v3347 = vpop.f32.mrb[0].mxu0
      %v3348 = vpop.f32.mrb[0].mxu0
      %v3349 = vadd.f32 %v3246, %v3348
      %v3350 = vpop.f32.mrb[0].mxu0
      %3351 = vmatprep.mubr.bf16.mxu0 0
      %3352 = vmatmul.mubr.bf16.gmra.mrb[0].mxu0 %v3164
      %v3353 = vpop.f32.mrb[0].mxu0
      %v3354 = vadd.f32 %v3246, %v3353
      %v3355 = vpop.f32.mrb[0].mxu0
      %v3356 = vpop.f32.mrb[0].mxu0
      %v3357 = vadd.f32 %v3246, %v3356
      %v3358 = vpop.f32.mrb[0].mxu0
      %3359 = vmatprep.mubr.bf16.mxu0 0
      %3360 = vmatmul.mubr.bf16.gmra.mrb[0].mxu0 %v3165
      %v3361 = vpop.f32.mrb[0].mxu0
      %v3362 = vadd.f32 %v3246, %v3361
      %v3363 = vpop.f32.mrb[0].mxu0
      %v3364 = vpop.f32.mrb[0].mxu0
      %v3365 = vadd.f32 %v3246, %v3364
      %v3366 = vpop.f32.mrb[0].mxu0
      %3367 = vmatprep.mubr.bf16.mxu0 0
      %3368 = vmatmul.mubr.bf16.gmra.mrb[0].mxu0 %v3166
      %v3369 = vpop.f32.mrb[0].mxu0
      %v3370 = vadd.f32 %v3246, %v3369
      %v3371 = vpop.f32.mrb[0].mxu0
      %v3372 = vpop.f32.mrb[0].mxu0
      %v3373 = vadd.f32 %v3246, %v3372
      %v3374 = vpop.f32.mrb[0].mxu0
      %3375 = vmatprep.mubr.bf16.mxu0 0
      %3376 = vmatmul.mubr.bf16.gmra.mrb[0].mxu0 %v3167
      %v3377 = vpop.f32.mrb[0].mxu0
      %v3378 = vadd.f32 %v3246, %v3377
      %v3379 = vpop.f32.mrb[0].mxu0
      %v3380 = vpop.f32.mrb[0].mxu0
      %v3381 = vadd.f32 %v3246, %v3380
      %v3382 = vpop.f32.mrb[0].mxu0
      %3383 = vmatprep.mubr.bf16.mxu0 0
      %3384 = vmatmul.mubr.bf16.gmra.mrb[0].mxu0 %v3168
      %v3385 = vpop.f32.mrb[0].mxu0
      %v3386 = vadd.f32 %v3246, %v3385
      %v3387 = vpop.f32.mrb[0].mxu0
      %v3388 = vpop.f32.mrb[0].mxu0
      %v3389 = vadd.f32 %v3246, %v3388
      %v3390 = vpop.f32.mrb[0].mxu0
      %3391 = vmatprep.mubr.bf16.mxu0 0
      %3392 = vmatmul.mubr.bf16.gmra.mrb[0].mxu0 %v3169
      %v3393 = vpop.f32.mrb[0].mxu0
      %v3394 = vadd.f32 %v3246, %v3393
      %v3395 = vpop.f32.mrb[0].mxu0
      %v3396 = vpop.f32.mrb[0].mxu0
      %v3397 = vadd.f32 %v3246, %v3396
      %v3398 = vpop.f32.mrb[0].mxu0
      %3399 = vmatprep.mubr.bf16.mxu0 0
      %3400 = vmatmul.mubr.bf16.gmra.mrb[0].mxu0 %v3170
      %v3401 = vpop.f32.mrb[0].mxu0
      %v3402 = vadd.f32 %v3246, %v3401
      %v3403 = vpop.f32.mrb[0].mxu0
      %v3404 = vpop.f32.mrb[0].mxu0
      %v3405 = vadd.f32 %v3246, %v3404
      %v3406 = vpop.f32.mrb[0].mxu0
      %3407 = vmatprep.mubr.bf16.mxu0 0
      %3408 = vmatmul.mubr.bf16.gmra.mrb[0].mxu0 %v3171
      %v3409 = vpop.f32.mrb[0].mxu0
      %v3410 = vadd.f32 %v3246, %v3409
      %v3411 = vpop.f32.mrb[0].mxu0
      %v3412 = vpop.f32.mrb[0].mxu0
      %v3413 = vadd.f32 %v3246, %v3412
      %v3414 = vpop.f32.mrb[0].mxu0
      %3415 = vmatprep.mubr.bf16.mxu0 0
      %3416 = vmatmul.mubr.bf16.gmra.mrb[0].mxu0 %v3172
      %v3417 = vpop.f32.mrb[0].mxu0
      %v3418 = vadd.f32 %v3246, %v3417
      %v3419 = vpop.f32.mrb[0].mxu0
      %v3420 = vpop.f32.mrb[0].mxu0
      %v3421 = vadd.f32 %v3246, %v3420
      %v3422 = vpop.f32.mrb[0].mxu0
      %3423 = vmatprep.mubr.bf16.mxu0 0
      %3424 = vmatmul.mubr.bf16.gmra.mrb[0].mxu0 %v3173
      %v3425 = vpop.f32.mrb[0].mxu0
      %v3426 = vadd.f32 %v3246, %v3425
      %v3427 = vpop.f32.mrb[0].mxu0
      %v3428 = vpop.f32.mrb[0].mxu0
      %v3429 = vadd.f32 %v3246, %v3428
      %v3430 = vpop.f32.mrb[0].mxu0
      %3431 = vmatprep.mubr.bf16.mxu0 0
      %3432 = vmatmul.mubr.bf16.gmra.mrb[0].mxu0 %v3174
      %v3433 = vpop.f32.mrb[0].mxu0
      %v3434 = vadd.f32 %v3246, %v3433
      %v3435 = vpop.f32.mrb[0].mxu0
      %v3436 = vpop.f32.mrb[0].mxu0
      %v3437 = vadd.f32 %v3246, %v3436
      %v3438 = vpop.f32.mrb[0].mxu0
      %3439 = vmatprep.mubr.bf16.mxu0 0
      %3440 = vmatmul.mubr.bf16.gmra.mrb[0].mxu0 %v3175
      %v3441 = vpop.f32.mrb[0].mxu0
      %v3442 = vadd.f32 %v3246, %v3441
      %v3443 = vpop.f32.mrb[0].mxu0
      %v3444 = vpop.f32.mrb[0].mxu0
      %v3445 = vadd.f32 %v3246, %v3444
      %v3446 = vpop.f32.mrb[0].mxu0
      %3447 = vmatprep.mubr.bf16.mxu0 0
      %3448 = vmatmul.mubr.bf16.gmra.mrb[0].mxu0 %v3176
      %v3449 = vpop.f32.mrb[0].mxu0
      %v3450 = vadd.f32 %v3246, %v3449
      %v3451 = vpop.f32.mrb[0].mxu0
      %v3452 = vpop.f32.mrb[0].mxu0
      %v3453 = vadd.f32 %v3246, %v3452
      %v3454 = vpop.f32.mrb[0].mxu0
      %3455 = vmatprep.mubr.bf16.mxu0 0
      %3456 = vmatmul.mubr.bf16.gmra.mrb[0].mxu0 %v3177
      %v3457 = vpop.f32.mrb[0].mxu0
      %v3458 = vadd.f32 %v3246, %v3457
      %v3459 = vpop.f32.mrb[0].mxu0
      %v3460 = vpop.f32.mrb[0].mxu0
      %v3461 = vadd.f32 %v3246, %v3460
      %v3462 = vpop.f32.mrb[0].mxu0
      %3463 = vmatprep.mubr.bf16.mxu0 0
      %3464 = vmatmul.mubr.bf16.gmra.mrb[0].mxu0 %v3178
      %v3465 = vpop.f32.mrb[0].mxu0
      %v3466 = vadd.f32 %v3246, %v3465
      %v3467 = vpop.f32.mrb[0].mxu0
      %v3468 = vpop.f32.mrb[0].mxu0
      %v3469 = vadd.f32 %v3246, %v3468
      %v3470 = vpop.f32.mrb[0].mxu0
      %3471 = vmatprep.mubr.bf16.mxu0 0
      %3472 = vmatmul.mubr.bf16.gmra.mrb[0].mxu0 %v3179
      %v3473 = vpop.f32.mrb[0].mxu0
      %v3474 = vadd.f32 %v3246, %v3473
      %v3475 = vpop.f32.mrb[0].mxu0
      %v3476 = vpop.f32.mrb[0].mxu0
      %v3477 = vadd.f32 %v3246, %v3476
      %v3478 = vpop.f32.mrb[0].mxu0
      %3479 = vmatprep.mubr.bf16.mxu0 0
      %3480 = vmatmul.mubr.bf16.gmra.mrb[0].mxu0 %v3180
      %v3481 = vpop.f32.mrb[0].mxu0
      %v3482 = vadd.f32 %v3246, %v3481
      %v3483 = vpop.f32.mrb[0].mxu0
      %v3484 = vpop.f32.mrb[0].mxu0
      %v3485 = vadd.f32 %v3246, %v3484
      %v3486 = vpop.f32.mrb[0].mxu0
      %3487 = vmatprep.mubr.bf16.mxu0 0
      %3488 = vmatmul.mubr.bf16.gmra.mrb[0].mxu0 %v3181
      %v3489 = vpop.f32.mrb[0].mxu0
      %v3490 = vadd.f32 %v3246, %v3489
      %v3491 = vpop.f32.mrb[0].mxu0
      %v3492 = vpop.f32.mrb[0].mxu0
      %v3493 = vadd.f32 %v3246, %v3492
      %v3494 = vpop.f32.mrb[0].mxu0
      %3495 = vmatprep.mubr.bf16.mxu0 0
      %3496 = vmatmul.mubr.bf16.gmra.mrb[0].mxu0 %v3182
      %v3497 = vpop.f32.mrb[0].mxu0
      %v3498 = vadd.f32 %v3246, %v3497
      %v3499 = vpop.f32.mrb[0].mxu0
      %v3500 = vpop.f32.mrb[0].mxu0
      %v3501 = vadd.f32 %v3246, %v3500
      %v3502 = vpop.f32.mrb[0].mxu0
      %3503 = vmatprep.mubr.bf16.mxu0 0
      %3504 = vmatmul.mubr.bf16.gmra.mrb[0].mxu0 %v3183
      %v3505 = vpop.f32.mrb[0].mxu0
      %v3506 = vadd.f32 %v3246, %v3505
      %v3507 = vpop.f32.mrb[0].mxu0
      %v3508 = vpop.f32.mrb[0].mxu0
      %v3509 = vadd.f32 %v3246, %v3508
      %v3510 = vpop.f32.mrb[0].mxu0
      %3511 = vmatprep.mubr.bf16.mxu0 0
      %3512 = vmatmul.mubr.bf16.gmra.mrb[0].mxu0 %v3184
      %v3513 = vpop.f32.mrb[0].mxu0
      %v3514 = vadd.f32 %v3246, %v3513
      %v3515 = vpop.f32.mrb[0].mxu0
      %v3516 = vpop.f32.mrb[0].mxu0
      %v3517 = vadd.f32 %v3246, %v3516
      %v3518 = vpop.f32.mrb[0].mxu0
      %3519 = vmatprep.mubr.bf16.mxu0 0
      %3520 = vmatmul.mubr.bf16.gmra.mrb[0].mxu0 %v3185
      %v3521 = vpop.f32.mrb[0].mxu0
      %v3522 = vadd.f32 %v3246, %v3521
      %v3523 = vpop.f32.mrb[0].mxu0
      %v3524 = vpop.f32.mrb[0].mxu0
      %v3525 = vadd.f32 %v3246, %v3524
      %v3526 = vpop.f32.mrb[0].mxu0
      %3527 = vmatprep.mubr.bf16.mxu0 0
      %3528 = vmatmul.mubr.bf16.gmra.mrb[0].mxu0 %v3186
      %v3529 = vpop.f32.mrb[0].mxu0
      %v3530 = vadd.f32 %v3246, %v3529
      %v3531 = vpop.f32.mrb[0].mxu0
      %v3532 = vpop.f32.mrb[0].mxu0
      %v3533 = vadd.f32 %v3246, %v3532
      %v3534 = vpop.f32.mrb[0].mxu0
      %3535 = vmatprep.mubr.bf16.mxu0 0
      %3536 = vmatmul.mubr.bf16.gmra.mrb[0].mxu0 %v3187
      %v3537 = vpop.f32.mrb[0].mxu0
      %v3538 = vadd.f32 %v3246, %v3537
      %v3539 = vpop.f32.mrb[0].mxu0
      %v3540 = vpop.f32.mrb[0].mxu0
      %v3541 = vadd.f32 %v3246, %v3540
      %v3542 = vpop.f32.mrb[0].mxu0
      %3543 = vmatprep.mubr.bf16.mxu0 0
      %3544 = vmatmul.mubr.bf16.gmra.mrb[0].mxu0 %v3188
      %v3545 = vpop.f32.mrb[0].mxu0
      %v3546 = vadd.f32 %v3246, %v3545
      %v3547 = vpop.f32.mrb[0].mxu0
      %v3548 = vpop.f32.mrb[0].mxu0
      %v3549 = vadd.f32 %v3246, %v3548
      %v3550 = vpop.f32.mrb[0].mxu0
      %3551 = vmatprep.mubr.bf16.mxu0 0
      %3552 = vmatmul.mubr.bf16.gmra.mrb[0].mxu0 %v3189
      %v3553 = vpop.f32.mrb[0].mxu0
      %v3554 = vadd.f32 %v3246, %v3553
      %v3555 = vpop.f32.mrb[0].mxu0
      %v3556 = vpop.f32.mrb[0].mxu0
      %v3557 = vadd.f32 %v3246, %v3556
      %v3558 = vpop.f32.mrb[0].mxu0
      %3559 = vmatprep.mubr.bf16.mxu0 0
      %3560 = vmatmul.mubr.bf16.gmra.mrb[0].mxu0 %v3190
      %v3561 = vpop.f32.mrb[0].mxu0
      %v3562 = vadd.f32 %v3246, %v3561
      %v3563 = vpop.f32.mrb[0].mxu0
      %v3564 = vpop.f32.mrb[0].mxu0
      %v3565 = vadd.f32 %v3246, %v3564
      %v3566 = vpop.f32.mrb[0].mxu0
      %3567 = vmatprep.mubr.bf16.mxu0 0
      %3568 = vmatmul.mubr.bf16.gmra.mrb[0].mxu0 %v3191
      %v3569 = vpop.f32.mrb[0].mxu0
      %v3570 = vadd.f32 %v3246, %v3569
      %v3571 = vpop.f32.mrb[0].mxu0
      %v3572 = vpop.f32.mrb[0].mxu0
      %v3573 = vadd.f32 %v3246, %v3572
      %v3574 = vpop.f32.mrb[0].mxu0
      %3575 = vmatprep.mubr.bf16.mxu0 0
      %3576 = vmatmul.mubr.bf16.gmra.mrb[0].mxu0 %v3192
      %v3577 = vpop.f32.mrb[0].mxu0
      %v3578 = vadd.f32 %v3246, %v3577
      %v3579 = vpop.f32.mrb[0].mxu0
      %v3580 = vpop.f32.mrb[0].mxu0
      %v3581 = vadd.f32 %v3246, %v3580
      %v3582 = vpop.f32.mrb[0].mxu0
      %3583 = vmatprep.mubr.bf16.mxu0 0
      %3584 = vmatmul.mubr.bf16.gmra.mrb[0].mxu0 %v3193
      %v3585 = vpop.f32.mrb[0].mxu0
      %v3586 = vadd.f32 %v3246, %v3585
      %v3587 = vpop.f32.mrb[0].mxu0
      %v3588 = vpop.f32.mrb[0].mxu0
      %v3589 = vadd.f32 %v3246, %v3588
      %v3590 = vpop.f32.mrb[0].mxu0
      %3591 = vmatprep.mubr.bf16.mxu0 0
      %3592 = vmatmul.mubr.bf16.gmra.mrb[0].mxu0 %v3194
      %v3593 = vpop.f32.mrb[0].mxu0
      %v3594 = vadd.f32 %v3246, %v3593
      %v3595 = vpop.f32.mrb[0].mxu0
      %v3596 = vpop.f32.mrb[0].mxu0
      %v3597 = vadd.f32 %v3246, %v3596
      %v3598 = vpop.f32.mrb[0].mxu0
      %3599 = vmatprep.mubr.bf16.mxu0 0
      %3600 = vmatmul.mubr.bf16.gmra.mrb[0].mxu0 %v3195
      %v3601 = vpop.f32.mrb[0].mxu0
      %v3602 = vadd.f32 %v3246, %v3601
      %v3603 = vpop.f32.mrb[0].mxu0
      %v3604 = vpop.f32.mrb[0].mxu0
      %v3605 = vadd.f32 %v3246, %v3604
      %v3606 = vpop.f32.mrb[0].mxu0
      %3607 = vmatprep.mubr.bf16.mxu0 0
      %3608 = vmatmul.mubr.bf16.gmra.mrb[0].mxu0 %v3196
      %v3609 = vpop.f32.mrb[0].mxu0
      %v3610 = vadd.f32 %v3246, %v3609
      %v3611 = vpop.f32.mrb[0].mxu0
      %v3612 = vpop.f32.mrb[0].mxu0
      %v3613 = vadd.f32 %v3246, %v3612
      %v3614 = vpop.f32.mrb[0].mxu0
      %3615 = vmatprep.mubr.bf16.mxu0 0
      %3616 = vmatmul.mubr.bf16.gmra.mrb[0].mxu0 %v3197
      %v3617 = vpop.f32.mrb[0].mxu0
      %v3618 = vadd.f32 %v3246, %v3617
      %v3619 = vpop.f32.mrb[0].mxu0
      %v3620 = vpop.f32.mrb[0].mxu0
      %v3621 = vadd.f32 %v3246, %v3620
      %v3622 = vpop.f32.mrb[0].mxu0
      %3623 = vmatprep.mubr.bf16.mxu0 0
      %3624 = vmatmul.mubr.bf16.gmra.mrb[0].mxu0 %v3198
      %v3625 = vpop.f32.mrb[0].mxu0
      %v3626 = vadd.f32 %v3246, %v3625
      %v3627 = vpop.f32.mrb[0].mxu0
      %v3628 = vpop.f32.mrb[0].mxu0
      %v3629 = vadd.f32 %v3246, %v3628
      %v3630 = vpop.f32.mrb[0].mxu0
      %3631 = vmatprep.mubr.bf16.mxu0 0
      %3632 = vmatmul.mubr.bf16.gmra.mrb[0].mxu0 %v3199
      %v3633 = vpop.f32.mrb[0].mxu0
      %v3634 = vadd.f32 %v3246, %v3633
      %v3635 = vpop.f32.mrb[0].mxu0
      %v3636 = vpop.f32.mrb[0].mxu0
      %v3637 = vadd.f32 %v3246, %v3636
      %v3638 = vpop.f32.mrb[0].mxu0
      %3639 = vmatprep.mubr.bf16.mxu0 0
      %3640 = vmatmul.mubr.bf16.gmra.mrb[0].mxu0 %v3200
      %v3641 = vpop.f32.mrb[0].mxu0
      %v3642 = vadd.f32 %v3246, %v3641
      %v3643 = vpop.f32.mrb[0].mxu0
      %v3644 = vpop.f32.mrb[0].mxu0
      %v3645 = vadd.f32 %v3246, %v3644
      %v3646 = vpop.f32.mrb[0].mxu0
      %3647 = vmatprep.mubr.bf16.mxu0 0
      %3648 = vmatmul.mubr.bf16.gmra.mrb[0].mxu0 %v3201
      %v3649 = vpop.f32.mrb[0].mxu0
      %v3650 = vadd.f32 %v3246, %v3649
      %v3651 = vpop.f32.mrb[0].mxu0
      %v3652 = vpop.f32.mrb[0].mxu0
      %v3653 = vadd.f32 %v3246, %v3652
      %v3654 = vpop.f32.mrb[0].mxu0
      %3655 = vmatprep.mubr.bf16.mxu0 0
      %3656 = vmatmul.mubr.bf16.gmra.mrb[0].mxu0 %v3202
      %v3657 = vpop.f32.mrb[0].mxu0
      %v3658 = vadd.f32 %v3246, %v3657
      %v3659 = vpop.f32.mrb[0].mxu0
      %v3660 = vpop.f32.mrb[0].mxu0
      %v3661 = vadd.f32 %v3246, %v3660
      %v3662 = vpop.f32.mrb[0].mxu0
      %3663 = vmatprep.mubr.bf16.mxu0 0
      %3664 = vmatmul.mubr.bf16.gmra.mrb[0].mxu0 %v3203
      %v3665 = vpop.f32.mrb[0].mxu0
      %v3666 = vadd.f32 %v3246, %v3665
      %v3667 = vpop.f32.mrb[0].mxu0
      %v3668 = vpop.f32.mrb[0].mxu0
      %v3669 = vadd.f32 %v3246, %v3668
      %v3670 = vpop.f32.mrb[0].mxu0
      %3671 = vmatprep.mubr.bf16.mxu0 0
      %3672 = vmatmul.mubr.bf16.gmra.mrb[0].mxu0 %v3204
      %v3673 = vpop.f32.mrb[0].mxu0
      %v3674 = vadd.f32 %v3246, %v3673
      %v3675 = vpop.f32.mrb[0].mxu0
      %v3676 = vpop.f32.mrb[0].mxu0
      %v3677 = vadd.f32 %v3246, %v3676
      %v3678 = vpop.f32.mrb[0].mxu0
      %3679 = vmatprep.mubr.bf16.mxu0 0
      %3680 = vmatmul.mubr.bf16.gmra.mrb[0].mxu0 %v3205
      %v3681 = vpop.f32.mrb[0].mxu0
      %v3682 = vadd.f32 %v3246, %v3681
      %v3683 = vpop.f32.mrb[0].mxu0
      %v3684 = vpop.f32.mrb[0].mxu0
      %v3685 = vadd.f32 %v3246, %v3684
      %v3686 = vpop.f32.mrb[0].mxu0
      %3687 = vmatprep.mubr.bf16.mxu0 0
      %3688 = vmatmul.mubr.bf16.gmra.mrb[0].mxu0 %v3206
      %v3689 = vpop.f32.mrb[0].mxu0
      %v3690 = vadd.f32 %v3246, %v3689
      %v3691 = vpop.f32.mrb[0].mxu0
      %v3692 = vpop.f32.mrb[0].mxu0
      %v3693 = vadd.f32 %v3246, %v3692
      %v3694 = vpop.f32.mrb[0].mxu0
      %3695 = vmatprep.mubr.bf16.mxu0 0
      %3696 = vmatmul.mubr.bf16.gmra.mrb[0].mxu0 %v3207
      %v3697 = vpop.f32.mrb[0].mxu0
      %v3698 = vadd.f32 %v3246, %v3697
      %v3699 = vpop.f32.mrb[0].mxu0
      %v3700 = vpop.f32.mrb[0].mxu0
      %v3701 = vadd.f32 %v3246, %v3700
      %v3702 = vpop.f32.mrb[0].mxu0
      %3703 = vmatprep.mubr.bf16.mxu0 0
      %3704 = vmatmul.mubr.bf16.gmra.mrb[0].mxu0 %v3208
      %v3705 = vpop.f32.mrb[0].mxu0
      %v3706 = vadd.f32 %v3246, %v3705
      %v3707 = vpop.f32.mrb[0].mxu0
      %v3708 = vpop.f32.mrb[0].mxu0
      %v3709 = vadd.f32 %v3246, %v3708
      %v3710 = vpop.f32.mrb[0].mxu0
      %3711 = vmatprep.mubr.bf16.mxu0 0
      %3712 = vmatmul.mubr.bf16.gmra.mrb[0].mxu0 %v3209
      %v3713 = vpop.f32.mrb[0].mxu0
      %v3714 = vadd.f32 %v3246, %v3713
      %v3715 = vpop.f32.mrb[0].mxu0
      %v3716 = vpop.f32.mrb[0].mxu0
      %v3717 = vadd.f32 %v3246, %v3716
      %v3718 = vpop.f32.mrb[0].mxu0
      %3719 = vmatprep.mubr.bf16.mxu0 0
      %3720 = vmatmul.mubr.bf16.gmra.mrb[0].mxu0 %v3210
      %v3721 = vpop.f32.mrb[0].mxu0
      %v3722 = vadd.f32 %v3246, %v3721
      %v3723 = vpop.f32.mrb[0].mxu0
      %v3724 = vpop.f32.mrb[0].mxu0
      %v3725 = vadd.f32 %v3246, %v3724
      %v3726 = vpop.f32.mrb[0].mxu0
      %3727 = vmatprep.mubr.bf16.mxu0 0
      %3728 = vmatmul.mubr.bf16.gmra.mrb[0].mxu0 %v3211
      %v3729 = vpop.f32.mrb[0].mxu0
      %v3730 = vadd.f32 %v3246, %v3729
      %v3731 = vpop.f32.mrb[0].mxu0
      %v3732 = vpop.f32.mrb[0].mxu0
      %v3733 = vadd.f32 %v3246, %v3732
      %v3734 = vpop.f32.mrb[0].mxu0
      %3735 = vmatprep.mubr.bf16.mxu0 0
      %3736 = vmatmul.mubr.bf16.gmra.mrb[0].mxu0 %v3212
      %v3737 = vpop.f32.mrb[0].mxu0
      %v3738 = vadd.f32 %v3246, %v3737
      %v3739 = vpop.f32.mrb[0].mxu0
      %v3740 = vpop.f32.mrb[0].mxu0
      %v3741 = vadd.f32 %v3246, %v3740
      %v3742 = vpop.f32.mrb[0].mxu0
      %3743 = vmatprep.mubr.bf16.mxu0 0
      %3744 = vmatmul.mubr.bf16.gmra.mrb[0].mxu0 %v3213
      %v3745 = vpop.f32.mrb[0].mxu0
      %v3746 = vadd.f32 %v3246, %v3745
      %v3747 = vpop.f32.mrb[0].mxu0
      %v3748 = vpop.f32.mrb[0].mxu0
      %v3749 = vadd.f32 %v3246, %v3748
      %v3750 = vpop.f32.mrb[0].mxu0
      %3751 = vmatprep.mubr.bf16.mxu0 0
      %3752 = vmatmul.mubr.bf16.gmra.mrb[0].mxu0 %v3214
      %v3753 = vpop.f32.mrb[0].mxu0
      %v3754 = vadd.f32 %v3246, %v3753
      %v3755 = vpop.f32.mrb[0].mxu0
      %v3756 = vpop.f32.mrb[0].mxu0
      %v3757 = vadd.f32 %v3246, %v3756
      %v3758 = vpop.f32.mrb[0].mxu0
      %3759 = vmatprep.mubr.bf16.mxu0 0
      %3760 = vmatmul.mubr.bf16.gmra.mrb[0].mxu0 %v3215
      %v3761 = vpop.f32.mrb[0].mxu0
      %v3762 = vadd.f32 %v3246, %v3761
      %v3763 = vpop.f32.mrb[0].mxu0
      %v3764 = vpop.f32.mrb[0].mxu0
      %v3765 = vadd.f32 %v3246, %v3764
      %v3766 = vpop.f32.mrb[0].mxu0
      %3767 = vmatprep.mubr.bf16.mxu0 0
      %3768 = vmatmul.mubr.bf16.gmra.mrb[0].mxu0 %v3216
      %v3769 = vpop.f32.mrb[0].mxu0
      %v3770 = vadd.f32 %v3246, %v3769
      %v3771 = vpop.f32.mrb[0].mxu0
      %v3772 = vpop.f32.mrb[0].mxu0
      %v3773 = vadd.f32 %v3246, %v3772
      %v3774 = vpop.f32.mrb[0].mxu0
      %3775 = vmatprep.mubr.bf16.mxu0 0
      %3776 = vmatmul.mubr.bf16.gmra.mrb[0].mxu0 %v3217
      %v3777 = vpop.f32.mrb[0].mxu0
      %v3778 = vadd.f32 %v3246, %v3777
      %v3779 = vpop.f32.mrb[0].mxu0
      %v3780 = vpop.f32.mrb[0].mxu0
      %v3781 = vadd.f32 %v3246, %v3780
      %v3782 = vpop.f32.mrb[0].mxu0
      %3783 = vmatprep.mubr.bf16.mxu0 0
      %3784 = vmatmul.mubr.bf16.gmra.mrb[0].mxu0 %v3218
      %v3785 = vpop.f32.mrb[0].mxu0
      %v3786 = vadd.f32 %v3246, %v3785
      %v3787 = vpop.f32.mrb[0].mxu0
      %v3788 = vpop.f32.mrb[0].mxu0
      %v3789 = vadd.f32 %v3246, %v3788
      %v3790 = vpop.f32.mrb[0].mxu0
      %3791 = vmatprep.mubr.bf16.mxu0 0
      %3792 = vmatmul.mubr.bf16.gmra.mrb[0].mxu0 %v3219
      %v3793 = vpop.f32.mrb[0].mxu0
      %v3794 = vadd.f32 %v3246, %v3793
      %v3795 = vpop.f32.mrb[0].mxu0
      %v3796 = vpop.f32.mrb[0].mxu0
      %v3797 = vadd.f32 %v3246, %v3796
      %v3798 = vpop.f32.mrb[0].mxu0
      %3799 = vmatprep.mubr.bf16.mxu0 0
      %3800 = vmatmul.mubr.bf16.gmra.mrb[0].mxu0 %v3220
      %v3801 = vpop.f32.mrb[0].mxu0
      %v3802 = vadd.f32 %v3246, %v3801
      %v3803 = vpop.f32.mrb[0].mxu0
      %v3804 = vpop.f32.mrb[0].mxu0
      %v3805 = vadd.f32 %v3246, %v3804
      %v3806 = vpop.f32.mrb[0].mxu0
      %3807 = vmatprep.mubr.bf16.mxu0 0
      %3808 = vmatmul.mubr.bf16.gmra.mrb[0].mxu0 %v3221
      %v3809 = vpop.f32.mrb[0].mxu0
      %v3810 = vadd.f32 %v3246, %v3809
      %v3811 = vpop.f32.mrb[0].mxu0
      %v3812 = vpop.f32.mrb[0].mxu0
      %v3813 = vadd.f32 %v3246, %v3812
      %v3814 = vpop.f32.mrb[0].mxu0
      %3815 = vmatprep.mubr.bf16.mxu0 0
      %3816 = vmatmul.mubr.bf16.gmra.mrb[0].mxu0 %v3222
      %v3817 = vpop.f32.mrb[0].mxu0
      %v3818 = vadd.f32 %v3246, %v3817
      %v3819 = vpop.f32.mrb[0].mxu0
      %v3820 = vpop.f32.mrb[0].mxu0
      %v3821 = vadd.f32 %v3246, %v3820
      %v3822 = vpop.f32.mrb[0].mxu0
      %3823 = vmatprep.mubr.bf16.mxu0 0
      %3824 = vmatmul.mubr.bf16.gmra.mrb[0].mxu0 %v3223
      %v3825 = vpop.f32.mrb[0].mxu0
      %v3826 = vadd.f32 %v3246, %v3825
      %v3827 = vpop.f32.mrb[0].mxu0
      %v3828 = vpop.f32.mrb[0].mxu0
      %v3829 = vadd.f32 %v3246, %v3828
      %v3830 = vpop.f32.mrb[0].mxu0
      %3831 = vmatprep.mubr.bf16.mxu0 0
      %3832 = vmatmul.mubr.bf16.gmra.mrb[0].mxu0 %v3224
      %v3833 = vpop.f32.mrb[0].mxu0
      %v3834 = vadd.f32 %v3246, %v3833
      %v3835 = vpop.f32.mrb[0].mxu0
      %v3836 = vpop.f32.mrb[0].mxu0
      %v3837 = vadd.f32 %v3246, %v3836
      %v3838 = vpop.f32.mrb[0].mxu0
      %3839 = vdwg.mxu0
      %v3840 = vmax.f32 %v3330, 0.0
      %v3841 = vmax.f32 %v3333, 0.0
      %v3842 = vmax.f32 %v3338, 0.0
      %v3843 = vmax.f32 %v3341, 0.0
      %v3844 = vmax.f32 %v3346, 0.0
      %v3845 = vmax.f32 %v3349, 0.0
      %v3846 = vmax.f32 %v3354, 0.0
      %v3847 = vmax.f32 %v3357, 0.0
      %v3848 = vmax.f32 %v3362, 0.0
      %v3849 = vmax.f32 %v3365, 0.0
      %v3850 = vmax.f32 %v3370, 0.0
      %v3851 = vmax.f32 %v3373, 0.0
      %v3852 = vmax.f32 %v3378, 0.0
      %v3853 = vmax.f32 %v3381, 0.0
      %v3854 = vmax.f32 %v3386, 0.0
      %v3855 = vmax.f32 %v3389, 0.0
      %v3856 = vmax.f32 %v3394, 0.0
      %v3857 = vmax.f32 %v3397, 0.0
      %v3858 = vmax.f32 %v3402, 0.0
      %v3859 = vmax.f32 %v3405, 0.0
      %v3860 = vmax.f32 %v3410, 0.0
      %v3861 = vmax.f32 %v3413, 0.0
      %v3862 = vmax.f32 %v3418, 0.0
      %v3863 = vmax.f32 %v3421, 0.0
      %v3864 = vmax.f32 %v3426, 0.0
      %v3865 = vmax.f32 %v3429, 0.0
      %v3866 = vmax.f32 %v3434, 0.0
      %v3867 = vmax.f32 %v3437, 0.0
      %v3868 = vmax.f32 %v3442, 0.0
      %v3869 = vmax.f32 %v3445, 0.0
      %v3870 = vmax.f32 %v3450, 0.0
      %v3871 = vmax.f32 %v3453, 0.0
      %v3872 = vmax.f32 %v3458, 0.0
      %v3873 = vmax.f32 %v3461, 0.0
      %v3874 = vmax.f32 %v3466, 0.0
      %v3875 = vmax.f32 %v3469, 0.0
      %v3876 = vmax.f32 %v3474, 0.0
      %v3877 = vmax.f32 %v3477, 0.0
      %v3878 = vmax.f32 %v3482, 0.0
      %v3879 = vmax.f32 %v3485, 0.0
      %v3880 = vmax.f32 %v3490, 0.0
      %v3881 = vmax.f32 %v3493, 0.0
      %v3882 = vmax.f32 %v3498, 0.0
      %v3883 = vmax.f32 %v3501, 0.0
      %v3884 = vmax.f32 %v3506, 0.0
      %v3885 = vmax.f32 %v3509, 0.0
      %v3886 = vmax.f32 %v3514, 0.0
      %v3887 = vmax.f32 %v3517, 0.0
      %v3888 = vmax.f32 %v3522, 0.0
      %v3889 = vmax.f32 %v3525, 0.0
      %v3890 = vmax.f32 %v3530, 0.0
      %v3891 = vmax.f32 %v3533, 0.0
      %v3892 = vmax.f32 %v3538, 0.0
      %v3893 = vmax.f32 %v3541, 0.0
      %v3894 = vmax.f32 %v3546, 0.0
      %v3895 = vmax.f32 %v3549, 0.0
      %v3896 = vmax.f32 %v3554, 0.0
      %v3897 = vmax.f32 %v3557, 0.0
      %v3898 = vmax.f32 %v3562, 0.0
      %v3899 = vmax.f32 %v3565, 0.0
      %v3900 = vmax.f32 %v3570, 0.0
      %v3901 = vmax.f32 %v3573, 0.0
      %v3902 = vmax.f32 %v3578, 0.0
      %v3903 = vmax.f32 %v3581, 0.0
      %v3904 = vmax.f32 %v3586, 0.0
      %v3905 = vmax.f32 %v3589, 0.0
      %v3906 = vmax.f32 %v3594, 0.0
      %v3907 = vmax.f32 %v3597, 0.0
      %v3908 = vmax.f32 %v3602, 0.0
      %v3909 = vmax.f32 %v3605, 0.0
      %v3910 = vmax.f32 %v3610, 0.0
      %v3911 = vmax.f32 %v3613, 0.0
      %v3912 = vmax.f32 %v3618, 0.0
      %v3913 = vmax.f32 %v3621, 0.0
      %v3914 = vmax.f32 %v3626, 0.0
      %v3915 = vmax.f32 %v3629, 0.0
      %v3916 = vmax.f32 %v3634, 0.0
      %v3917 = vmax.f32 %v3637, 0.0
      %v3918 = vmax.f32 %v3642, 0.0
      %v3919 = vmax.f32 %v3645, 0.0
      %v3920 = vmax.f32 %v3650, 0.0
      %v3921 = vmax.f32 %v3653, 0.0
      %v3922 = vmax.f32 %v3658, 0.0
      %v3923 = vmax.f32 %v3661, 0.0
      %v3924 = vmax.f32 %v3666, 0.0
      %v3925 = vmax.f32 %v3669, 0.0
      %v3926 = vmax.f32 %v3674, 0.0
      %v3927 = vmax.f32 %v3677, 0.0
      %v3928 = vmax.f32 %v3682, 0.0
      %v3929 = vmax.f32 %v3685, 0.0
      %v3930 = vmax.f32 %v3690, 0.0
      %v3931 = vmax.f32 %v3693, 0.0
      %v3932 = vmax.f32 %v3698, 0.0
      %v3933 = vmax.f32 %v3701, 0.0
      %v3934 = vmax.f32 %v3706, 0.0
      %v3935 = vmax.f32 %v3709, 0.0
      %v3936 = vmax.f32 %v3714, 0.0
      %v3937 = vmax.f32 %v3717, 0.0
      %v3938 = vmax.f32 %v3722, 0.0
      %v3939 = vmax.f32 %v3725, 0.0
      %v3940 = vmax.f32 %v3730, 0.0
      %v3941 = vmax.f32 %v3733, 0.0
      %v3942 = vmax.f32 %v3738, 0.0
      %v3943 = vmax.f32 %v3741, 0.0
      %v3944 = vmax.f32 %v3746, 0.0
      %v3945 = vmax.f32 %v3749, 0.0
      %v3946 = vmax.f32 %v3754, 0.0
      %v3947 = vmax.f32 %v3757, 0.0
      %v3948 = vmax.f32 %v3762, 0.0
      %v3949 = vmax.f32 %v3765, 0.0
      %v3950 = vmax.f32 %v3770, 0.0
      %v3951 = vmax.f32 %v3773, 0.0
      %v3952 = vmax.f32 %v3778, 0.0
      %v3953 = vmax.f32 %v3781, 0.0
      %v3954 = vmax.f32 %v3786, 0.0
      %v3955 = vmax.f32 %v3789, 0.0
      %v3956 = vmax.f32 %v3794, 0.0
      %v3957 = vmax.f32 %v3797, 0.0
      %v3958 = vmax.f32 %v3802, 0.0
      %v3959 = vmax.f32 %v3805, 0.0
      %v3960 = vmax.f32 %v3810, 0.0
      %v3961 = vmax.f32 %v3813, 0.0
      %v3962 = vmax.f32 %v3818, 0.0
      %v3963 = vmax.f32 %v3821, 0.0
      %v3964 = vmax.f32 %v3826, 0.0
      %v3965 = vmax.f32 %v3829, 0.0
      %v3966 = vmax.f32 %v3834, 0.0
      %v3967 = vmax.f32 %v3837, 0.0
      %v3968 = vpack.c.bf16 %v3841, %v3840
      %v3969 = vpack.c.bf16 %v3843, %v3842
      %v3970 = vpack.c.bf16 %v3845, %v3844
      %v3971 = vpack.c.bf16 %v3847, %v3846
      %v3972 = vpack.c.bf16 %v3849, %v3848
      %v3973 = vpack.c.bf16 %v3851, %v3850
      %v3974 = vpack.c.bf16 %v3853, %v3852
      %v3975 = vpack.c.bf16 %v3855, %v3854
      %v3976 = vpack.c.bf16 %v3857, %v3856
      %v3977 = vpack.c.bf16 %v3859, %v3858
      %v3978 = vpack.c.bf16 %v3861, %v3860
      %v3979 = vpack.c.bf16 %v3863, %v3862
      %v3980 = vpack.c.bf16 %v3865, %v3864
      %v3981 = vpack.c.bf16 %v3867, %v3866
      %v3982 = vpack.c.bf16 %v3869, %v3868
      %v3983 = vpack.c.bf16 %v3871, %v3870
      %v3984 = vpack.c.bf16 %v3873, %v3872
      %v3985 = vpack.c.bf16 %v3875, %v3874
      %v3986 = vpack.c.bf16 %v3877, %v3876
      %v3987 = vpack.c.bf16 %v3879, %v3878
      %v3988 = vpack.c.bf16 %v3881, %v3880
      %v3989 = vpack.c.bf16 %v3883, %v3882
      %v3990 = vpack.c.bf16 %v3885, %v3884
      %v3991 = vpack.c.bf16 %v3887, %v3886
      %v3992 = vpack.c.bf16 %v3889, %v3888
      %v3993 = vpack.c.bf16 %v3891, %v3890
      %v3994 = vpack.c.bf16 %v3893, %v3892
      %v3995 = vpack.c.bf16 %v3895, %v3894
      %v3996 = vpack.c.bf16 %v3897, %v3896
      %v3997 = vpack.c.bf16 %v3899, %v3898
      %v3998 = vpack.c.bf16 %v3901, %v3900
      %v3999 = vpack.c.bf16 %v3903, %v3902
      %v4000 = vpack.c.bf16 %v3905, %v3904
      %v4001 = vpack.c.bf16 %v3907, %v3906
      %v4002 = vpack.c.bf16 %v3909, %v3908
      %v4003 = vpack.c.bf16 %v3911, %v3910
      %v4004 = vpack.c.bf16 %v3913, %v3912
      %v4005 = vpack.c.bf16 %v3915, %v3914
      %v4006 = vpack.c.bf16 %v3917, %v3916
      %v4007 = vpack.c.bf16 %v3919, %v3918
      %v4008 = vpack.c.bf16 %v3921, %v3920
      %v4009 = vpack.c.bf16 %v3923, %v3922
      %v4010 = vpack.c.bf16 %v3925, %v3924
      %v4011 = vpack.c.bf16 %v3927, %v3926
      %v4012 = vpack.c.bf16 %v3929, %v3928
      %v4013 = vpack.c.bf16 %v3931, %v3930
      %v4014 = vpack.c.bf16 %v3933, %v3932
      %v4015 = vpack.c.bf16 %v3935, %v3934
      %v4016 = vpack.c.bf16 %v3937, %v3936
      %v4017 = vpack.c.bf16 %v3939, %v3938
      %v4018 = vpack.c.bf16 %v3941, %v3940
      %v4019 = vpack.c.bf16 %v3943, %v3942
      %v4020 = vpack.c.bf16 %v3945, %v3944
      %v4021 = vpack.c.bf16 %v3947, %v3946
      %v4022 = vpack.c.bf16 %v3949, %v3948
      %v4023 = vpack.c.bf16 %v3951, %v3950
      %v4024 = vpack.c.bf16 %v3953, %v3952
      %v4025 = vpack.c.bf16 %v3955, %v3954
      %v4026 = vpack.c.bf16 %v3957, %v3956
      %v4027 = vpack.c.bf16 %v3959, %v3958
      %v4028 = vpack.c.bf16 %v3961, %v3960
      %v4029 = vpack.c.bf16 %v3963, %v3962
      %v4030 = vpack.c.bf16 %v3965, %v3964
      %v4031 = vpack.c.bf16 %v3967, %v3966
      %s4032 = scalar_lea.vmem %s4, 64
      %v4033 = vld [vmem:[%s4032] sm:$0xf]
      %v4034 = vld [vmem:[%s4032 + $0x4] sm:$0xf]
      %v4035 = vld [vmem:[%s4032 + $0x8] sm:$0xf]
      %v4036 = vld [vmem:[%s4032 + $0xc] sm:$0xf]
      %v4037 = vld [vmem:[%s4032 + $0x10] sm:$0xf]
      %v4038 = vld [vmem:[%s4032 + $0x14] sm:$0xf]
      %v4039 = vld [vmem:[%s4032 + $0x18] sm:$0xf]
      %v4040 = vld [vmem:[%s4032 + $0x1c] sm:$0xf]
      %v4041 = vld [vmem:[%s4032 + $0x20] sm:$0xf]
      %v4042 = vld [vmem:[%s4032 + $0x24] sm:$0xf]
      %v4043 = vld [vmem:[%s4032 + $0x28] sm:$0xf]
      %v4044 = vld [vmem:[%s4032 + $0x2c] sm:$0xf]
      %v4045 = vld [vmem:[%s4032 + $0x30] sm:$0xf]
      %v4046 = vld [vmem:[%s4032 + $0x34] sm:$0xf]
      %v4047 = vld [vmem:[%s4032 + $0x38] sm:$0xf]
      %v4048 = vld [vmem:[%s4032 + $0x3c] sm:$0xf]
      %v4049 = vld [vmem:[%s5 + $0x1] sm:$0x1]
      %v4050 = vlaneseq
      %v4051 = vshrl.u32 %v4050, 7
      %v4052 = vsub.s32 0, %v4051
      %v4053 = vrot.slane %v4049, %v4052
      %v4070 = vunpack.c.l.b16 %v4033
      %v4071 = vunpack.c.l.b16 %v4034
      %v4072 = vunpack.c.l.b16 %v4035
      %v4073 = vunpack.c.l.b16 %v4036
      %v4074 = vunpack.c.l.b16 %v4037
      %v4075 = vunpack.c.l.b16 %v4038
      %v4076 = vunpack.c.l.b16 %v4039
      %v4077 = vunpack.c.l.b16 %v4040
      %v4078 = vunpack.c.l.b16 %v4041
      %v4079 = vunpack.c.l.b16 %v4042
      %v4080 = vunpack.c.l.b16 %v4043
      %v4081 = vunpack.c.l.b16 %v4044
      %v4082 = vunpack.c.l.b16 %v4045
      %v4083 = vunpack.c.l.b16 %v4046
      %v4084 = vunpack.c.l.b16 %v4047
      %v4085 = vunpack.c.l.b16 %v4048
      %v4086 = vpack.c.b16 %v4071, %v4070
      %v4087 = vpack.c.b16 %v4073, %v4072
      %v4088 = vpack.c.b16 %v4075, %v4074
      %v4089 = vpack.c.b16 %v4077, %v4076
      %v4090 = vpack.c.b16 %v4079, %v4078
      %v4091 = vpack.c.b16 %v4081, %v4080
      %v4092 = vpack.c.b16 %v4083, %v4082
      %v4093 = vpack.c.b16 %v4085, %v4084
      %4102 = vmatprep.subr.bf16.mxu0 0
      %4103 = vmatpush1.bf16.msra.mxu0 %v4086
      %4104 = vmatprep.subr.bf16.mxu0 0
      %4105 = vmatpush1.bf16.msra.mxu0 %v4087
      %4106 = vmatprep.subr.bf16.mxu0 0
      %4107 = vmatpush1.bf16.msra.mxu0 %v4088
      %4108 = vmatprep.subr.bf16.mxu0 0
      %4109 = vmatpush1.bf16.msra.mxu0 %v4089
      %4110 = vmatprep.subr.bf16.mxu0 0
      %4111 = vmatpush1.bf16.msra.mxu0 %v4090
      %4112 = vmatprep.subr.bf16.mxu0 0
      %4113 = vmatpush1.bf16.msra.mxu0 %v4091
      %4114 = vmatprep.subr.bf16.mxu0 0
      %4115 = vmatpush1.bf16.msra.mxu0 %v4092
      %4116 = vmatprep.subr.bf16.mxu0 0
      %4117 = vmatpush1.bf16.msra.mxu0 %v4093
      %4118 = vmatprep.subr.bf16.mxu0 0
      %4119 = vmatpush1.bf16.msra.mxu0 0
      %4120 = vmatprep.subr.bf16.mxu0 0
      %4121 = vmatpush1.bf16.msra.mxu0 0
      %4122 = vmatprep.subr.bf16.mxu0 0
      %4123 = vmatpush1.bf16.msra.mxu0 0
      %4124 = vmatprep.subr.bf16.mxu0 0
      %4125 = vmatpush1.bf16.msra.mxu0 0
      %4126 = vmatprep.subr.bf16.mxu0 0
      %4127 = vmatpush1.bf16.msra.mxu0 0
      %4128 = vmatprep.subr.bf16.mxu0 0
      %4129 = vmatpush1.bf16.msra.mxu0 0
      %4130 = vmatprep.subr.bf16.mxu0 0
      %4131 = vmatpush1.bf16.msra.mxu0 0
      %4132 = vmatprep.subr.bf16.mxu0 0
      %4133 = vmatpush1.bf16.msra.mxu0 0
      %4134 = vmatprep.mubr.bf16.mxu0 0
      %4135 = vmatmul.mubr.bf16.gmra.mrb[0].mxu0 %v3968
      %v4136 = vpop.f32.mrb[0].mxu0
      %v4137 = vadd.f32 %v4053, %v4136
      %v4138 = vpop.f32.mrb[0].mxu0
      %v4139 = vpop.f32.mrb[0].mxu0
      %v4140 = vadd.f32 %v4053, %v4139
      %v4141 = vpop.f32.mrb[0].mxu0
      %4142 = vmatprep.mubr.bf16.mxu0 0
      %4143 = vmatmul.mubr.bf16.gmra.mrb[0].mxu0 %v3969
      %v4144 = vpop.f32.mrb[0].mxu0
      %v4145 = vadd.f32 %v4053, %v4144
      %v4146 = vpop.f32.mrb[0].mxu0
      %v4147 = vpop.f32.mrb[0].mxu0
      %v4148 = vadd.f32 %v4053, %v4147
      %v4149 = vpop.f32.mrb[0].mxu0
      %4150 = vmatprep.mubr.bf16.mxu0 0
      %4151 = vmatmul.mubr.bf16.gmra.mrb[0].mxu0 %v3970
      %v4152 = vpop.f32.mrb[0].mxu0
      %v4153 = vadd.f32 %v4053, %v4152
      %v4154 = vpop.f32.mrb[0].mxu0
      %v4155 = vpop.f32.mrb[0].mxu0
      %v4156 = vadd.f32 %v4053, %v4155
      %v4157 = vpop.f32.mrb[0].mxu0
      %4158 = vmatprep.mubr.bf16.mxu0 0
      %4159 = vmatmul.mubr.bf16.gmra.mrb[0].mxu0 %v3971
      %v4160 = vpop.f32.mrb[0].mxu0
      %v4161 = vadd.f32 %v4053, %v4160
      %v4162 = vpop.f32.mrb[0].mxu0
      %v4163 = vpop.f32.mrb[0].mxu0
      %v4164 = vadd.f32 %v4053, %v4163
      %v4165 = vpop.f32.mrb[0].mxu0
      %4166 = vmatprep.mubr.bf16.mxu0 0
      %4167 = vmatmul.mubr.bf16.gmra.mrb[0].mxu0 %v3972
      %v4168 = vpop.f32.mrb[0].mxu0
      %v4169 = vadd.f32 %v4053, %v4168
      %v4170 = vpop.f32.mrb[0].mxu0
      %v4171 = vpop.f32.mrb[0].mxu0
      %v4172 = vadd.f32 %v4053, %v4171
      %v4173 = vpop.f32.mrb[0].mxu0
      %4174 = vmatprep.mubr.bf16.mxu0 0
      %4175 = vmatmul.mubr.bf16.gmra.mrb[0].mxu0 %v3973
      %v4176 = vpop.f32.mrb[0].mxu0
      %v4177 = vadd.f32 %v4053, %v4176
      %v4178 = vpop.f32.mrb[0].mxu0
      %v4179 = vpop.f32.mrb[0].mxu0
      %v4180 = vadd.f32 %v4053, %v4179
      %v4181 = vpop.f32.mrb[0].mxu0
      %4182 = vmatprep.mubr.bf16.mxu0 0
      %4183 = vmatmul.mubr.bf16.gmra.mrb[0].mxu0 %v3974
      %v4184 = vpop.f32.mrb[0].mxu0
      %v4185 = vadd.f32 %v4053, %v4184
      %v4186 = vpop.f32.mrb[0].mxu0
      %v4187 = vpop.f32.mrb[0].mxu0
      %v4188 = vadd.f32 %v4053, %v4187
      %v4189 = vpop.f32.mrb[0].mxu0
      %4190 = vmatprep.mubr.bf16.mxu0 0
      %4191 = vmatmul.mubr.bf16.gmra.mrb[0].mxu0 %v3975
      %v4192 = vpop.f32.mrb[0].mxu0
      %v4193 = vadd.f32 %v4053, %v4192
      %v4194 = vpop.f32.mrb[0].mxu0
      %v4195 = vpop.f32.mrb[0].mxu0
      %v4196 = vadd.f32 %v4053, %v4195
      %v4197 = vpop.f32.mrb[0].mxu0
      %4198 = vmatprep.mubr.bf16.mxu0 0
      %4199 = vmatmul.mubr.bf16.gmra.mrb[0].mxu0 %v3976
      %v4200 = vpop.f32.mrb[0].mxu0
      %v4201 = vadd.f32 %v4053, %v4200
      %v4202 = vpop.f32.mrb[0].mxu0
      %v4203 = vpop.f32.mrb[0].mxu0
      %v4204 = vadd.f32 %v4053, %v4203
      %v4205 = vpop.f32.mrb[0].mxu0
      %4206 = vmatprep.mubr.bf16.mxu0 0
      %4207 = vmatmul.mubr.bf16.gmra.mrb[0].mxu0 %v3977
      %v4208 = vpop.f32.mrb[0].mxu0
      %v4209 = vadd.f32 %v4053, %v4208
      %v4210 = vpop.f32.mrb[0].mxu0
      %v4211 = vpop.f32.mrb[0].mxu0
      %v4212 = vadd.f32 %v4053, %v4211
      %v4213 = vpop.f32.mrb[0].mxu0
      %4214 = vmatprep.mubr.bf16.mxu0 0
      %4215 = vmatmul.mubr.bf16.gmra.mrb[0].mxu0 %v3978
      %v4216 = vpop.f32.mrb[0].mxu0
      %v4217 = vadd.f32 %v4053, %v4216
      %v4218 = vpop.f32.mrb[0].mxu0
      %v4219 = vpop.f32.mrb[0].mxu0
      %v4220 = vadd.f32 %v4053, %v4219
      %v4221 = vpop.f32.mrb[0].mxu0
      %4222 = vmatprep.mubr.bf16.mxu0 0
      %4223 = vmatmul.mubr.bf16.gmra.mrb[0].mxu0 %v3979
      %v4224 = vpop.f32.mrb[0].mxu0
      %v4225 = vadd.f32 %v4053, %v4224
      %v4226 = vpop.f32.mrb[0].mxu0
      %v4227 = vpop.f32.mrb[0].mxu0
      %v4228 = vadd.f32 %v4053, %v4227
      %v4229 = vpop.f32.mrb[0].mxu0
      %4230 = vmatprep.mubr.bf16.mxu0 0
      %4231 = vmatmul.mubr.bf16.gmra.mrb[0].mxu0 %v3980
      %v4232 = vpop.f32.mrb[0].mxu0
      %v4233 = vadd.f32 %v4053, %v4232
      %v4234 = vpop.f32.mrb[0].mxu0
      %v4235 = vpop.f32.mrb[0].mxu0
      %v4236 = vadd.f32 %v4053, %v4235
      %v4237 = vpop.f32.mrb[0].mxu0
      %4238 = vmatprep.mubr.bf16.mxu0 0
      %4239 = vmatmul.mubr.bf16.gmra.mrb[0].mxu0 %v3981
      %v4240 = vpop.f32.mrb[0].mxu0
      %v4241 = vadd.f32 %v4053, %v4240
      %v4242 = vpop.f32.mrb[0].mxu0
      %v4243 = vpop.f32.mrb[0].mxu0
      %v4244 = vadd.f32 %v4053, %v4243
      %v4245 = vpop.f32.mrb[0].mxu0
      %4246 = vmatprep.mubr.bf16.mxu0 0
      %4247 = vmatmul.mubr.bf16.gmra.mrb[0].mxu0 %v3982
      %v4248 = vpop.f32.mrb[0].mxu0
      %v4249 = vadd.f32 %v4053, %v4248
      %v4250 = vpop.f32.mrb[0].mxu0
      %v4251 = vpop.f32.mrb[0].mxu0
      %v4252 = vadd.f32 %v4053, %v4251
      %v4253 = vpop.f32.mrb[0].mxu0
      %4254 = vmatprep.mubr.bf16.mxu0 0
      %4255 = vmatmul.mubr.bf16.gmra.mrb[0].mxu0 %v3983
      %v4256 = vpop.f32.mrb[0].mxu0
      %v4257 = vadd.f32 %v4053, %v4256
      %v4258 = vpop.f32.mrb[0].mxu0
      %v4259 = vpop.f32.mrb[0].mxu0
      %v4260 = vadd.f32 %v4053, %v4259
      %v4261 = vpop.f32.mrb[0].mxu0
      %4262 = vmatprep.mubr.bf16.mxu0 0
      %4263 = vmatmul.mubr.bf16.gmra.mrb[0].mxu0 %v3984
      %v4264 = vpop.f32.mrb[0].mxu0
      %v4265 = vadd.f32 %v4053, %v4264
      %v4266 = vpop.f32.mrb[0].mxu0
      %v4267 = vpop.f32.mrb[0].mxu0
      %v4268 = vadd.f32 %v4053, %v4267
      %v4269 = vpop.f32.mrb[0].mxu0
      %4270 = vmatprep.mubr.bf16.mxu0 0
      %4271 = vmatmul.mubr.bf16.gmra.mrb[0].mxu0 %v3985
      %v4272 = vpop.f32.mrb[0].mxu0
      %v4273 = vadd.f32 %v4053, %v4272
      %v4274 = vpop.f32.mrb[0].mxu0
      %v4275 = vpop.f32.mrb[0].mxu0
      %v4276 = vadd.f32 %v4053, %v4275
      %v4277 = vpop.f32.mrb[0].mxu0
      %4278 = vmatprep.mubr.bf16.mxu0 0
      %4279 = vmatmul.mubr.bf16.gmra.mrb[0].mxu0 %v3986
      %v4280 = vpop.f32.mrb[0].mxu0
      %v4281 = vadd.f32 %v4053, %v4280
      %v4282 = vpop.f32.mrb[0].mxu0
      %v4283 = vpop.f32.mrb[0].mxu0
      %v4284 = vadd.f32 %v4053, %v4283
      %v4285 = vpop.f32.mrb[0].mxu0
      %4286 = vmatprep.mubr.bf16.mxu0 0
      %4287 = vmatmul.mubr.bf16.gmra.mrb[0].mxu0 %v3987
      %v4288 = vpop.f32.mrb[0].mxu0
      %v4289 = vadd.f32 %v4053, %v4288
      %v4290 = vpop.f32.mrb[0].mxu0
      %v4291 = vpop.f32.mrb[0].mxu0
      %v4292 = vadd.f32 %v4053, %v4291
      %v4293 = vpop.f32.mrb[0].mxu0
      %4294 = vmatprep.mubr.bf16.mxu0 0
      %4295 = vmatmul.mubr.bf16.gmra.mrb[0].mxu0 %v3988
      %v4296 = vpop.f32.mrb[0].mxu0
      %v4297 = vadd.f32 %v4053, %v4296
      %v4298 = vpop.f32.mrb[0].mxu0
      %v4299 = vpop.f32.mrb[0].mxu0
      %v4300 = vadd.f32 %v4053, %v4299
      %v4301 = vpop.f32.mrb[0].mxu0
      %4302 = vmatprep.mubr.bf16.mxu0 0
      %4303 = vmatmul.mubr.bf16.gmra.mrb[0].mxu0 %v3989
      %v4304 = vpop.f32.mrb[0].mxu0
      %v4305 = vadd.f32 %v4053, %v4304
      %v4306 = vpop.f32.mrb[0].mxu0
      %v4307 = vpop.f32.mrb[0].mxu0
      %v4308 = vadd.f32 %v4053, %v4307
      %v4309 = vpop.f32.mrb[0].mxu0
      %4310 = vmatprep.mubr.bf16.mxu0 0
      %4311 = vmatmul.mubr.bf16.gmra.mrb[0].mxu0 %v3990
      %v4312 = vpop.f32.mrb[0].mxu0
      %v4313 = vadd.f32 %v4053, %v4312
      %v4314 = vpop.f32.mrb[0].mxu0
      %v4315 = vpop.f32.mrb[0].mxu0
      %v4316 = vadd.f32 %v4053, %v4315
      %v4317 = vpop.f32.mrb[0].mxu0
      %4318 = vmatprep.mubr.bf16.mxu0 0
      %4319 = vmatmul.mubr.bf16.gmra.mrb[0].mxu0 %v3991
      %v4320 = vpop.f32.mrb[0].mxu0
      %v4321 = vadd.f32 %v4053, %v4320
      %v4322 = vpop.f32.mrb[0].mxu0
      %v4323 = vpop.f32.mrb[0].mxu0
      %v4324 = vadd.f32 %v4053, %v4323
      %v4325 = vpop.f32.mrb[0].mxu0
      %4326 = vmatprep.mubr.bf16.mxu0 0
      %4327 = vmatmul.mubr.bf16.gmra.mrb[0].mxu0 %v3992
      %v4328 = vpop.f32.mrb[0].mxu0
      %v4329 = vadd.f32 %v4053, %v4328
      %v4330 = vpop.f32.mrb[0].mxu0
      %v4331 = vpop.f32.mrb[0].mxu0
      %v4332 = vadd.f32 %v4053, %v4331
      %v4333 = vpop.f32.mrb[0].mxu0
      %4334 = vmatprep.mubr.bf16.mxu0 0
      %4335 = vmatmul.mubr.bf16.gmra.mrb[0].mxu0 %v3993
      %v4336 = vpop.f32.mrb[0].mxu0
      %v4337 = vadd.f32 %v4053, %v4336
      %v4338 = vpop.f32.mrb[0].mxu0
      %v4339 = vpop.f32.mrb[0].mxu0
      %v4340 = vadd.f32 %v4053, %v4339
      %v4341 = vpop.f32.mrb[0].mxu0
      %4342 = vmatprep.mubr.bf16.mxu0 0
      %4343 = vmatmul.mubr.bf16.gmra.mrb[0].mxu0 %v3994
      %v4344 = vpop.f32.mrb[0].mxu0
      %v4345 = vadd.f32 %v4053, %v4344
      %v4346 = vpop.f32.mrb[0].mxu0
      %v4347 = vpop.f32.mrb[0].mxu0
      %v4348 = vadd.f32 %v4053, %v4347
      %v4349 = vpop.f32.mrb[0].mxu0
      %4350 = vmatprep.mubr.bf16.mxu0 0
      %4351 = vmatmul.mubr.bf16.gmra.mrb[0].mxu0 %v3995
      %v4352 = vpop.f32.mrb[0].mxu0
      %v4353 = vadd.f32 %v4053, %v4352
      %v4354 = vpop.f32.mrb[0].mxu0
      %v4355 = vpop.f32.mrb[0].mxu0
      %v4356 = vadd.f32 %v4053, %v4355
      %v4357 = vpop.f32.mrb[0].mxu0
      %4358 = vmatprep.mubr.bf16.mxu0 0
      %4359 = vmatmul.mubr.bf16.gmra.mrb[0].mxu0 %v3996
      %v4360 = vpop.f32.mrb[0].mxu0
      %v4361 = vadd.f32 %v4053, %v4360
      %v4362 = vpop.f32.mrb[0].mxu0
      %v4363 = vpop.f32.mrb[0].mxu0
      %v4364 = vadd.f32 %v4053, %v4363
      %v4365 = vpop.f32.mrb[0].mxu0
      %4366 = vmatprep.mubr.bf16.mxu0 0
      %4367 = vmatmul.mubr.bf16.gmra.mrb[0].mxu0 %v3997
      %v4368 = vpop.f32.mrb[0].mxu0
      %v4369 = vadd.f32 %v4053, %v4368
      %v4370 = vpop.f32.mrb[0].mxu0
      %v4371 = vpop.f32.mrb[0].mxu0
      %v4372 = vadd.f32 %v4053, %v4371
      %v4373 = vpop.f32.mrb[0].mxu0
      %4374 = vmatprep.mubr.bf16.mxu0 0
      %4375 = vmatmul.mubr.bf16.gmra.mrb[0].mxu0 %v3998
      %v4376 = vpop.f32.mrb[0].mxu0
      %v4377 = vadd.f32 %v4053, %v4376
      %v4378 = vpop.f32.mrb[0].mxu0
      %v4379 = vpop.f32.mrb[0].mxu0
      %v4380 = vadd.f32 %v4053, %v4379
      %v4381 = vpop.f32.mrb[0].mxu0
      %4382 = vmatprep.mubr.bf16.mxu0 0
      %4383 = vmatmul.mubr.bf16.gmra.mrb[0].mxu0 %v3999
      %v4384 = vpop.f32.mrb[0].mxu0
      %v4385 = vadd.f32 %v4053, %v4384
      %v4386 = vpop.f32.mrb[0].mxu0
      %v4387 = vpop.f32.mrb[0].mxu0
      %v4388 = vadd.f32 %v4053, %v4387
      %v4389 = vpop.f32.mrb[0].mxu0
      %4390 = vmatprep.mubr.bf16.mxu0 0
      %4391 = vmatmul.mubr.bf16.gmra.mrb[0].mxu0 %v4000
      %v4392 = vpop.f32.mrb[0].mxu0
      %v4393 = vadd.f32 %v4053, %v4392
      %v4394 = vpop.f32.mrb[0].mxu0
      %v4395 = vpop.f32.mrb[0].mxu0
      %v4396 = vadd.f32 %v4053, %v4395
      %v4397 = vpop.f32.mrb[0].mxu0
      %4398 = vmatprep.mubr.bf16.mxu0 0
      %4399 = vmatmul.mubr.bf16.gmra.mrb[0].mxu0 %v4001
      %v4400 = vpop.f32.mrb[0].mxu0
      %v4401 = vadd.f32 %v4053, %v4400
      %v4402 = vpop.f32.mrb[0].mxu0
      %v4403 = vpop.f32.mrb[0].mxu0
      %v4404 = vadd.f32 %v4053, %v4403
      %v4405 = vpop.f32.mrb[0].mxu0
      %4406 = vmatprep.mubr.bf16.mxu0 0
      %4407 = vmatmul.mubr.bf16.gmra.mrb[0].mxu0 %v4002
      %v4408 = vpop.f32.mrb[0].mxu0
      %v4409 = vadd.f32 %v4053, %v4408
      %v4410 = vpop.f32.mrb[0].mxu0
      %v4411 = vpop.f32.mrb[0].mxu0
      %v4412 = vadd.f32 %v4053, %v4411
      %v4413 = vpop.f32.mrb[0].mxu0
      %4414 = vmatprep.mubr.bf16.mxu0 0
      %4415 = vmatmul.mubr.bf16.gmra.mrb[0].mxu0 %v4003
      %v4416 = vpop.f32.mrb[0].mxu0
      %v4417 = vadd.f32 %v4053, %v4416
      %v4418 = vpop.f32.mrb[0].mxu0
      %v4419 = vpop.f32.mrb[0].mxu0
      %v4420 = vadd.f32 %v4053, %v4419
      %v4421 = vpop.f32.mrb[0].mxu0
      %4422 = vmatprep.mubr.bf16.mxu0 0
      %4423 = vmatmul.mubr.bf16.gmra.mrb[0].mxu0 %v4004
      %v4424 = vpop.f32.mrb[0].mxu0
      %v4425 = vadd.f32 %v4053, %v4424
      %v4426 = vpop.f32.mrb[0].mxu0
      %v4427 = vpop.f32.mrb[0].mxu0
      %v4428 = vadd.f32 %v4053, %v4427
      %v4429 = vpop.f32.mrb[0].mxu0
      %4430 = vmatprep.mubr.bf16.mxu0 0
      %4431 = vmatmul.mubr.bf16.gmra.mrb[0].mxu0 %v4005
      %v4432 = vpop.f32.mrb[0].mxu0
      %v4433 = vadd.f32 %v4053, %v4432
      %v4434 = vpop.f32.mrb[0].mxu0
      %v4435 = vpop.f32.mrb[0].mxu0
      %v4436 = vadd.f32 %v4053, %v4435
      %v4437 = vpop.f32.mrb[0].mxu0
      %4438 = vmatprep.mubr.bf16.mxu0 0
      %4439 = vmatmul.mubr.bf16.gmra.mrb[0].mxu0 %v4006
      %v4440 = vpop.f32.mrb[0].mxu0
      %v4441 = vadd.f32 %v4053, %v4440
      %v4442 = vpop.f32.mrb[0].mxu0
      %v4443 = vpop.f32.mrb[0].mxu0
      %v4444 = vadd.f32 %v4053, %v4443
      %v4445 = vpop.f32.mrb[0].mxu0
      %4446 = vmatprep.mubr.bf16.mxu0 0
      %4447 = vmatmul.mubr.bf16.gmra.mrb[0].mxu0 %v4007
      %v4448 = vpop.f32.mrb[0].mxu0
      %v4449 = vadd.f32 %v4053, %v4448
      %v4450 = vpop.f32.mrb[0].mxu0
      %v4451 = vpop.f32.mrb[0].mxu0
      %v4452 = vadd.f32 %v4053, %v4451
      %v4453 = vpop.f32.mrb[0].mxu0
      %4454 = vmatprep.mubr.bf16.mxu0 0
      %4455 = vmatmul.mubr.bf16.gmra.mrb[0].mxu0 %v4008
      %v4456 = vpop.f32.mrb[0].mxu0
      %v4457 = vadd.f32 %v4053, %v4456
      %v4458 = vpop.f32.mrb[0].mxu0
      %v4459 = vpop.f32.mrb[0].mxu0
      %v4460 = vadd.f32 %v4053, %v4459
      %v4461 = vpop.f32.mrb[0].mxu0
      %4462 = vmatprep.mubr.bf16.mxu0 0
      %4463 = vmatmul.mubr.bf16.gmra.mrb[0].mxu0 %v4009
      %v4464 = vpop.f32.mrb[0].mxu0
      %v4465 = vadd.f32 %v4053, %v4464
      %v4466 = vpop.f32.mrb[0].mxu0
      %v4467 = vpop.f32.mrb[0].mxu0
      %v4468 = vadd.f32 %v4053, %v4467
      %v4469 = vpop.f32.mrb[0].mxu0
      %4470 = vmatprep.mubr.bf16.mxu0 0
      %4471 = vmatmul.mubr.bf16.gmra.mrb[0].mxu0 %v4010
      %v4472 = vpop.f32.mrb[0].mxu0
      %v4473 = vadd.f32 %v4053, %v4472
      %v4474 = vpop.f32.mrb[0].mxu0
      %v4475 = vpop.f32.mrb[0].mxu0
      %v4476 = vadd.f32 %v4053, %v4475
      %v4477 = vpop.f32.mrb[0].mxu0
      %4478 = vmatprep.mubr.bf16.mxu0 0
      %4479 = vmatmul.mubr.bf16.gmra.mrb[0].mxu0 %v4011
      %v4480 = vpop.f32.mrb[0].mxu0
      %v4481 = vadd.f32 %v4053, %v4480
      %v4482 = vpop.f32.mrb[0].mxu0
      %v4483 = vpop.f32.mrb[0].mxu0
      %v4484 = vadd.f32 %v4053, %v4483
      %v4485 = vpop.f32.mrb[0].mxu0
      %4486 = vmatprep.mubr.bf16.mxu0 0
      %4487 = vmatmul.mubr.bf16.gmra.mrb[0].mxu0 %v4012
      %v4488 = vpop.f32.mrb[0].mxu0
      %v4489 = vadd.f32 %v4053, %v4488
      %v4490 = vpop.f32.mrb[0].mxu0
      %v4491 = vpop.f32.mrb[0].mxu0
      %v4492 = vadd.f32 %v4053, %v4491
      %v4493 = vpop.f32.mrb[0].mxu0
      %4494 = vmatprep.mubr.bf16.mxu0 0
      %4495 = vmatmul.mubr.bf16.gmra.mrb[0].mxu0 %v4013
      %v4496 = vpop.f32.mrb[0].mxu0
      %v4497 = vadd.f32 %v4053, %v4496
      %v4498 = vpop.f32.mrb[0].mxu0
      %v4499 = vpop.f32.mrb[0].mxu0
      %v4500 = vadd.f32 %v4053, %v4499
      %v4501 = vpop.f32.mrb[0].mxu0
      %4502 = vmatprep.mubr.bf16.mxu0 0
      %4503 = vmatmul.mubr.bf16.gmra.mrb[0].mxu0 %v4014
      %v4504 = vpop.f32.mrb[0].mxu0
      %v4505 = vadd.f32 %v4053, %v4504
      %v4506 = vpop.f32.mrb[0].mxu0
      %v4507 = vpop.f32.mrb[0].mxu0
      %v4508 = vadd.f32 %v4053, %v4507
      %v4509 = vpop.f32.mrb[0].mxu0
      %4510 = vmatprep.mubr.bf16.mxu0 0
      %4511 = vmatmul.mubr.bf16.gmra.mrb[0].mxu0 %v4015
      %v4512 = vpop.f32.mrb[0].mxu0
      %v4513 = vadd.f32 %v4053, %v4512
      %v4514 = vpop.f32.mrb[0].mxu0
      %v4515 = vpop.f32.mrb[0].mxu0
      %v4516 = vadd.f32 %v4053, %v4515
      %v4517 = vpop.f32.mrb[0].mxu0
      %4518 = vmatprep.mubr.bf16.mxu0 0
      %4519 = vmatmul.mubr.bf16.gmra.mrb[0].mxu0 %v4016
      %v4520 = vpop.f32.mrb[0].mxu0
      %v4521 = vadd.f32 %v4053, %v4520
      %v4522 = vpop.f32.mrb[0].mxu0
      %v4523 = vpop.f32.mrb[0].mxu0
      %v4524 = vadd.f32 %v4053, %v4523
      %v4525 = vpop.f32.mrb[0].mxu0
      %4526 = vmatprep.mubr.bf16.mxu0 0
      %4527 = vmatmul.mubr.bf16.gmra.mrb[0].mxu0 %v4017
      %v4528 = vpop.f32.mrb[0].mxu0
      %v4529 = vadd.f32 %v4053, %v4528
      %v4530 = vpop.f32.mrb[0].mxu0
      %v4531 = vpop.f32.mrb[0].mxu0
      %v4532 = vadd.f32 %v4053, %v4531
      %v4533 = vpop.f32.mrb[0].mxu0
      %4534 = vmatprep.mubr.bf16.mxu0 0
      %4535 = vmatmul.mubr.bf16.gmra.mrb[0].mxu0 %v4018
      %v4536 = vpop.f32.mrb[0].mxu0
      %v4537 = vadd.f32 %v4053, %v4536
      %v4538 = vpop.f32.mrb[0].mxu0
      %v4539 = vpop.f32.mrb[0].mxu0
      %v4540 = vadd.f32 %v4053, %v4539
      %v4541 = vpop.f32.mrb[0].mxu0
      %4542 = vmatprep.mubr.bf16.mxu0 0
      %4543 = vmatmul.mubr.bf16.gmra.mrb[0].mxu0 %v4019
      %v4544 = vpop.f32.mrb[0].mxu0
      %v4545 = vadd.f32 %v4053, %v4544
      %v4546 = vpop.f32.mrb[0].mxu0
      %v4547 = vpop.f32.mrb[0].mxu0
      %v4548 = vadd.f32 %v4053, %v4547
      %v4549 = vpop.f32.mrb[0].mxu0
      %4550 = vmatprep.mubr.bf16.mxu0 0
      %4551 = vmatmul.mubr.bf16.gmra.mrb[0].mxu0 %v4020
      %v4552 = vpop.f32.mrb[0].mxu0
      %v4553 = vadd.f32 %v4053, %v4552
      %v4554 = vpop.f32.mrb[0].mxu0
      %v4555 = vpop.f32.mrb[0].mxu0
      %v4556 = vadd.f32 %v4053, %v4555
      %v4557 = vpop.f32.mrb[0].mxu0
      %4558 = vmatprep.mubr.bf16.mxu0 0
      %4559 = vmatmul.mubr.bf16.gmra.mrb[0].mxu0 %v4021
      %v4560 = vpop.f32.mrb[0].mxu0
      %v4561 = vadd.f32 %v4053, %v4560
      %v4562 = vpop.f32.mrb[0].mxu0
      %v4563 = vpop.f32.mrb[0].mxu0
      %v4564 = vadd.f32 %v4053, %v4563
      %v4565 = vpop.f32.mrb[0].mxu0
      %4566 = vmatprep.mubr.bf16.mxu0 0
      %4567 = vmatmul.mubr.bf16.gmra.mrb[0].mxu0 %v4022
      %v4568 = vpop.f32.mrb[0].mxu0
      %v4569 = vadd.f32 %v4053, %v4568
      %v4570 = vpop.f32.mrb[0].mxu0
      %v4571 = vpop.f32.mrb[0].mxu0
      %v4572 = vadd.f32 %v4053, %v4571
      %v4573 = vpop.f32.mrb[0].mxu0
      %4574 = vmatprep.mubr.bf16.mxu0 0
      %4575 = vmatmul.mubr.bf16.gmra.mrb[0].mxu0 %v4023
      %v4576 = vpop.f32.mrb[0].mxu0
      %v4577 = vadd.f32 %v4053, %v4576
      %v4578 = vpop.f32.mrb[0].mxu0
      %v4579 = vpop.f32.mrb[0].mxu0
      %v4580 = vadd.f32 %v4053, %v4579
      %v4581 = vpop.f32.mrb[0].mxu0
      %4582 = vmatprep.mubr.bf16.mxu0 0
      %4583 = vmatmul.mubr.bf16.gmra.mrb[0].mxu0 %v4024
      %v4584 = vpop.f32.mrb[0].mxu0
      %v4585 = vadd.f32 %v4053, %v4584
      %v4586 = vpop.f32.mrb[0].mxu0
      %v4587 = vpop.f32.mrb[0].mxu0
      %v4588 = vadd.f32 %v4053, %v4587
      %v4589 = vpop.f32.mrb[0].mxu0
      %4590 = vmatprep.mubr.bf16.mxu0 0
      %4591 = vmatmul.mubr.bf16.gmra.mrb[0].mxu0 %v4025
      %v4592 = vpop.f32.mrb[0].mxu0
      %v4593 = vadd.f32 %v4053, %v4592
      %v4594 = vpop.f32.mrb[0].mxu0
      %v4595 = vpop.f32.mrb[0].mxu0
      %v4596 = vadd.f32 %v4053, %v4595
      %v4597 = vpop.f32.mrb[0].mxu0
      %4598 = vmatprep.mubr.bf16.mxu0 0
      %4599 = vmatmul.mubr.bf16.gmra.mrb[0].mxu0 %v4026
      %v4600 = vpop.f32.mrb[0].mxu0
      %v4601 = vadd.f32 %v4053, %v4600
      %v4602 = vpop.f32.mrb[0].mxu0
      %v4603 = vpop.f32.mrb[0].mxu0
      %v4604 = vadd.f32 %v4053, %v4603
      %v4605 = vpop.f32.mrb[0].mxu0
      %4606 = vmatprep.mubr.bf16.mxu0 0
      %4607 = vmatmul.mubr.bf16.gmra.mrb[0].mxu0 %v4027
      %v4608 = vpop.f32.mrb[0].mxu0
      %v4609 = vadd.f32 %v4053, %v4608
      %v4610 = vpop.f32.mrb[0].mxu0
      %v4611 = vpop.f32.mrb[0].mxu0
      %v4612 = vadd.f32 %v4053, %v4611
      %v4613 = vpop.f32.mrb[0].mxu0
      %4614 = vmatprep.mubr.bf16.mxu0 0
      %4615 = vmatmul.mubr.bf16.gmra.mrb[0].mxu0 %v4028
      %v4616 = vpop.f32.mrb[0].mxu0
      %v4617 = vadd.f32 %v4053, %v4616
      %v4618 = vpop.f32.mrb[0].mxu0
      %v4619 = vpop.f32.mrb[0].mxu0
      %v4620 = vadd.f32 %v4053, %v4619
      %v4621 = vpop.f32.mrb[0].mxu0
      %4622 = vmatprep.mubr.bf16.mxu0 0
      %4623 = vmatmul.mubr.bf16.gmra.mrb[0].mxu0 %v4029
      %v4624 = vpop.f32.mrb[0].mxu0
      %v4625 = vadd.f32 %v4053, %v4624
      %v4626 = vpop.f32.mrb[0].mxu0
      %v4627 = vpop.f32.mrb[0].mxu0
      %v4628 = vadd.f32 %v4053, %v4627
      %v4629 = vpop.f32.mrb[0].mxu0
      %4630 = vmatprep.mubr.bf16.mxu0 0
      %4631 = vmatmul.mubr.bf16.gmra.mrb[0].mxu0 %v4030
      %v4632 = vpop.f32.mrb[0].mxu0
      %v4633 = vadd.f32 %v4053, %v4632
      %v4634 = vpop.f32.mrb[0].mxu0
      %v4635 = vpop.f32.mrb[0].mxu0
      %v4636 = vadd.f32 %v4053, %v4635
      %v4637 = vpop.f32.mrb[0].mxu0
      %4638 = vmatprep.mubr.bf16.mxu0 0
      %4639 = vmatmul.mubr.bf16.gmra.mrb[0].mxu0 %v4031
      %v4640 = vpop.f32.mrb[0].mxu0
      %v4641 = vadd.f32 %v4053, %v4640
      %v4642 = vpop.f32.mrb[0].mxu0
      %v4643 = vpop.f32.mrb[0].mxu0
      %v4644 = vadd.f32 %v4053, %v4643
      %v4645 = vpop.f32.mrb[0].mxu0
      %4646 = vdwg.mxu0
      %v4647 = vadd.f32 %v4137, %v1613
      %v4648 = vadd.f32 %v4140, %v1614
      %v4649 = vadd.f32 %v4145, %v1615
      %v4650 = vadd.f32 %v4148, %v1616
      %v4651 = vadd.f32 %v4153, %v1617
      %v4652 = vadd.f32 %v4156, %v1618
      %v4653 = vadd.f32 %v4161, %v1619
      %v4654 = vadd.f32 %v4164, %v1620
      %v4655 = vadd.f32 %v4169, %v1621
      %v4656 = vadd.f32 %v4172, %v1622
      %v4657 = vadd.f32 %v4177, %v1623
      %v4658 = vadd.f32 %v4180, %v1624
      %v4659 = vadd.f32 %v4185, %v1625
      %v4660 = vadd.f32 %v4188, %v1626
      %v4661 = vadd.f32 %v4193, %v1627
      %v4662 = vadd.f32 %v4196, %v1628
      %v4663 = vadd.f32 %v4201, %v1629
      %v4664 = vadd.f32 %v4204, %v1630
      %v4665 = vadd.f32 %v4209, %v1631
      %v4666 = vadd.f32 %v4212, %v1632
      %v4667 = vadd.f32 %v4217, %v1633
      %v4668 = vadd.f32 %v4220, %v1634
      %v4669 = vadd.f32 %v4225, %v1635
      %v4670 = vadd.f32 %v4228, %v1636
      %v4671 = vadd.f32 %v4233, %v1637
      %v4672 = vadd.f32 %v4236, %v1638
      %v4673 = vadd.f32 %v4241, %v1639
      %v4674 = vadd.f32 %v4244, %v1640
      %v4675 = vadd.f32 %v4249, %v1641
      %v4676 = vadd.f32 %v4252, %v1642
      %v4677 = vadd.f32 %v4257, %v1643
      %v4678 = vadd.f32 %v4260, %v1644
      %v4679 = vadd.f32 %v4265, %v1645
      %v4680 = vadd.f32 %v4268, %v1646
      %v4681 = vadd.f32 %v4273, %v1647
      %v4682 = vadd.f32 %v4276, %v1648
      %v4683 = vadd.f32 %v4281, %v1649
      %v4684 = vadd.f32 %v4284, %v1650
      %v4685 = vadd.f32 %v4289, %v1651
      %v4686 = vadd.f32 %v4292, %v1652
      %v4687 = vadd.f32 %v4297, %v1653
      %v4688 = vadd.f32 %v4300, %v1654
      %v4689 = vadd.f32 %v4305, %v1655
      %v4690 = vadd.f32 %v4308, %v1656
      %v4691 = vadd.f32 %v4313, %v1657
      %v4692 = vadd.f32 %v4316, %v1658
      %v4693 = vadd.f32 %v4321, %v1659
      %v4694 = vadd.f32 %v4324, %v1660
      %v4695 = vadd.f32 %v4329, %v1661
      %v4696 = vadd.f32 %v4332, %v1662
      %v4697 = vadd.f32 %v4337, %v1663
      %v4698 = vadd.f32 %v4340, %v1664
      %v4699 = vadd.f32 %v4345, %v1665
      %v4700 = vadd.f32 %v4348, %v1666
      %v4701 = vadd.f32 %v4353, %v1667
      %v4702 = vadd.f32 %v4356, %v1668
      %v4703 = vadd.f32 %v4361, %v1669
      %v4704 = vadd.f32 %v4364, %v1670
      %v4705 = vadd.f32 %v4369, %v1671
      %v4706 = vadd.f32 %v4372, %v1672
      %v4707 = vadd.f32 %v4377, %v1673
      %v4708 = vadd.f32 %v4380, %v1674
      %v4709 = vadd.f32 %v4385, %v1675
      %v4710 = vadd.f32 %v4388, %v1676
      %v4711 = vadd.f32 %v4393, %v1677
      %v4712 = vadd.f32 %v4396, %v1678
      %v4713 = vadd.f32 %v4401, %v1679
      %v4714 = vadd.f32 %v4404, %v1680
      %v4715 = vadd.f32 %v4409, %v1681
      %v4716 = vadd.f32 %v4412, %v1682
      %v4717 = vadd.f32 %v4417, %v1683
      %v4718 = vadd.f32 %v4420, %v1684
      %v4719 = vadd.f32 %v4425, %v1685
      %v4720 = vadd.f32 %v4428, %v1686
      %v4721 = vadd.f32 %v4433, %v1687
      %v4722 = vadd.f32 %v4436, %v1688
      %v4723 = vadd.f32 %v4441, %v1689
      %v4724 = vadd.f32 %v4444, %v1690
      %v4725 = vadd.f32 %v4449, %v1691
      %v4726 = vadd.f32 %v4452, %v1692
      %v4727 = vadd.f32 %v4457, %v1693
      %v4728 = vadd.f32 %v4460, %v1694
      %v4729 = vadd.f32 %v4465, %v1695
      %v4730 = vadd.f32 %v4468, %v1696
      %v4731 = vadd.f32 %v4473, %v1697
      %v4732 = vadd.f32 %v4476, %v1698
      %v4733 = vadd.f32 %v4481, %v1699
      %v4734 = vadd.f32 %v4484, %v1700
      %v4735 = vadd.f32 %v4489, %v1701
      %v4736 = vadd.f32 %v4492, %v1702
      %v4737 = vadd.f32 %v4497, %v1703
      %v4738 = vadd.f32 %v4500, %v1704
      %v4739 = vadd.f32 %v4505, %v1705
      %v4740 = vadd.f32 %v4508, %v1706
      %v4741 = vadd.f32 %v4513, %v1707
      %v4742 = vadd.f32 %v4516, %v1708
      %v4743 = vadd.f32 %v4521, %v1709
      %v4744 = vadd.f32 %v4524, %v1710
      %v4745 = vadd.f32 %v4529, %v1711
      %v4746 = vadd.f32 %v4532, %v1712
      %v4747 = vadd.f32 %v4537, %v1713
      %v4748 = vadd.f32 %v4540, %v1714
      %v4749 = vadd.f32 %v4545, %v1715
      %v4750 = vadd.f32 %v4548, %v1716
      %v4751 = vadd.f32 %v4553, %v1717
      %v4752 = vadd.f32 %v4556, %v1718
      %v4753 = vadd.f32 %v4561, %v1719
      %v4754 = vadd.f32 %v4564, %v1720
      %v4755 = vadd.f32 %v4569, %v1721
      %v4756 = vadd.f32 %v4572, %v1722
      %v4757 = vadd.f32 %v4577, %v1723
      %v4758 = vadd.f32 %v4580, %v1724
      %v4759 = vadd.f32 %v4585, %v1725
      %v4760 = vadd.f32 %v4588, %v1726
      %v4761 = vadd.f32 %v4593, %v1727
      %v4762 = vadd.f32 %v4596, %v1728
      %v4763 = vadd.f32 %v4601, %v1729
      %v4764 = vadd.f32 %v4604, %v1730
      %v4765 = vadd.f32 %v4609, %v1731
      %v4766 = vadd.f32 %v4612, %v1732
      %v4767 = vadd.f32 %v4617, %v1733
      %v4768 = vadd.f32 %v4620, %v1734
      %v4769 = vadd.f32 %v4625, %v1735
      %v4770 = vadd.f32 %v4628, %v1736
      %v4771 = vadd.f32 %v4633, %v1737
      %v4772 = vadd.f32 %v4636, %v1738
      %v4773 = vadd.f32 %v4641, %v1739
      %v4774 = vadd.f32 %v4644, %v1740
      %v4775 = vpack.c.bf16 %v4648, %v4647
      %v4776 = vpack.c.bf16 %v4650, %v4649
      %v4777 = vpack.c.bf16 %v4652, %v4651
      %v4778 = vpack.c.bf16 %v4654, %v4653
      %v4779 = vpack.c.bf16 %v4656, %v4655
      %v4780 = vpack.c.bf16 %v4658, %v4657
      %v4781 = vpack.c.bf16 %v4660, %v4659
      %v4782 = vpack.c.bf16 %v4662, %v4661
      %v4783 = vpack.c.bf16 %v4664, %v4663
      %v4784 = vpack.c.bf16 %v4666, %v4665
      %v4785 = vpack.c.bf16 %v4668, %v4667
      %v4786 = vpack.c.bf16 %v4670, %v4669
      %v4787 = vpack.c.bf16 %v4672, %v4671
      %v4788 = vpack.c.bf16 %v4674, %v4673
      %v4789 = vpack.c.bf16 %v4676, %v4675
      %v4790 = vpack.c.bf16 %v4678, %v4677
      %v4791 = vpack.c.bf16 %v4680, %v4679
      %v4792 = vpack.c.bf16 %v4682, %v4681
      %v4793 = vpack.c.bf16 %v4684, %v4683
      %v4794 = vpack.c.bf16 %v4686, %v4685
      %v4795 = vpack.c.bf16 %v4688, %v4687
      %v4796 = vpack.c.bf16 %v4690, %v4689
      %v4797 = vpack.c.bf16 %v4692, %v4691
      %v4798 = vpack.c.bf16 %v4694, %v4693
      %v4799 = vpack.c.bf16 %v4696, %v4695
      %v4800 = vpack.c.bf16 %v4698, %v4697
      %v4801 = vpack.c.bf16 %v4700, %v4699
      %v4802 = vpack.c.bf16 %v4702, %v4701
      %v4803 = vpack.c.bf16 %v4704, %v4703
      %v4804 = vpack.c.bf16 %v4706, %v4705
      %v4805 = vpack.c.bf16 %v4708, %v4707
      %v4806 = vpack.c.bf16 %v4710, %v4709
      %v4807 = vpack.c.bf16 %v4712, %v4711
      %v4808 = vpack.c.bf16 %v4714, %v4713
      %v4809 = vpack.c.bf16 %v4716, %v4715
      %v4810 = vpack.c.bf16 %v4718, %v4717
      %v4811 = vpack.c.bf16 %v4720, %v4719
      %v4812 = vpack.c.bf16 %v4722, %v4721
      %v4813 = vpack.c.bf16 %v4724, %v4723
      %v4814 = vpack.c.bf16 %v4726, %v4725
      %v4815 = vpack.c.bf16 %v4728, %v4727
      %v4816 = vpack.c.bf16 %v4730, %v4729
      %v4817 = vpack.c.bf16 %v4732, %v4731
      %v4818 = vpack.c.bf16 %v4734, %v4733
      %v4819 = vpack.c.bf16 %v4736, %v4735
      %v4820 = vpack.c.bf16 %v4738, %v4737
      %v4821 = vpack.c.bf16 %v4740, %v4739
      %v4822 = vpack.c.bf16 %v4742, %v4741
      %v4823 = vpack.c.bf16 %v4744, %v4743
      %v4824 = vpack.c.bf16 %v4746, %v4745
      %v4825 = vpack.c.bf16 %v4748, %v4747
      %v4826 = vpack.c.bf16 %v4750, %v4749
      %v4827 = vpack.c.bf16 %v4752, %v4751
      %v4828 = vpack.c.bf16 %v4754, %v4753
      %v4829 = vpack.c.bf16 %v4756, %v4755
      %v4830 = vpack.c.bf16 %v4758, %v4757
      %v4831 = vpack.c.bf16 %v4760, %v4759
      %v4832 = vpack.c.bf16 %v4762, %v4761
      %v4833 = vpack.c.bf16 %v4764, %v4763
      %v4834 = vpack.c.bf16 %v4766, %v4765
      %v4835 = vpack.c.bf16 %v4768, %v4767
      %v4836 = vpack.c.bf16 %v4770, %v4769
      %v4837 = vpack.c.bf16 %v4772, %v4771
      %v4838 = vpack.c.bf16 %v4774, %v4773
      %s4839 = scalar_lea.vmem %s2, 128
      %v4840 = vld [vmem:[%s4839] sm:$0xf]
      %v4841 = vld [vmem:[%s4839 + $0x4] sm:$0xf]
      %v4842 = vld [vmem:[%s4839 + $0x8] sm:$0xf]
      %v4843 = vld [vmem:[%s4839 + $0xc] sm:$0xf]
      %v4844 = vld [vmem:[%s4839 + $0x10] sm:$0xf]
      %v4845 = vld [vmem:[%s4839 + $0x14] sm:$0xf]
      %v4846 = vld [vmem:[%s4839 + $0x18] sm:$0xf]
      %v4847 = vld [vmem:[%s4839 + $0x1c] sm:$0xf]
      %v4848 = vld [vmem:[%s4839 + $0x20] sm:$0xf]
      %v4849 = vld [vmem:[%s4839 + $0x24] sm:$0xf]
      %v4850 = vld [vmem:[%s4839 + $0x28] sm:$0xf]
      %v4851 = vld [vmem:[%s4839 + $0x2c] sm:$0xf]
      %v4852 = vld [vmem:[%s4839 + $0x30] sm:$0xf]
      %v4853 = vld [vmem:[%s4839 + $0x34] sm:$0xf]
      %v4854 = vld [vmem:[%s4839 + $0x38] sm:$0xf]
      %v4855 = vld [vmem:[%s4839 + $0x3c] sm:$0xf]
      %v4856 = vld [vmem:[%s3 + $0x2] sm:$0x1]
      %v4857 = vlaneseq
      %v4858 = vshrl.u32 %v4857, 7
      %v4859 = vsub.s32 0, %v4858
      %v4860 = vrot.slane %v4856, %v4859
      %v4877 = vunpack.c.l.b16 %v4840
      %v4878 = vunpack.c.l.b16 %v4841
      %v4879 = vunpack.c.l.b16 %v4842
      %v4880 = vunpack.c.l.b16 %v4843
      %v4881 = vunpack.c.l.b16 %v4844
      %v4882 = vunpack.c.l.b16 %v4845
      %v4883 = vunpack.c.l.b16 %v4846
      %v4884 = vunpack.c.l.b16 %v4847
      %v4885 = vunpack.c.l.b16 %v4848
      %v4886 = vunpack.c.l.b16 %v4849
      %v4887 = vunpack.c.l.b16 %v4850
      %v4888 = vunpack.c.l.b16 %v4851
      %v4889 = vunpack.c.l.b16 %v4852
      %v4890 = vunpack.c.l.b16 %v4853
      %v4891 = vunpack.c.l.b16 %v4854
      %v4892 = vunpack.c.l.b16 %v4855
      %v4893 = vpack.c.b16 %v4878, %v4877
      %v4894 = vpack.c.b16 %v4880, %v4879
      %v4895 = vpack.c.b16 %v4882, %v4881
      %v4896 = vpack.c.b16 %v4884, %v4883
      %v4897 = vpack.c.b16 %v4886, %v4885
      %v4898 = vpack.c.b16 %v4888, %v4887
      %v4899 = vpack.c.b16 %v4890, %v4889
      %v4900 = vpack.c.b16 %v4892, %v4891
      %4909 = vmatprep.subr.bf16.mxu0 0
      %4910 = vmatpush1.bf16.msra.mxu0 %v4893
      %4911 = vmatprep.subr.bf16.mxu0 0
      %4912 = vmatpush1.bf16.msra.mxu0 %v4894
      %4913 = vmatprep.subr.bf16.mxu0 0
      %4914 = vmatpush1.bf16.msra.mxu0 %v4895
      %4915 = vmatprep.subr.bf16.mxu0 0
      %4916 = vmatpush1.bf16.msra.mxu0 %v4896
      %4917 = vmatprep.subr.bf16.mxu0 0
      %4918 = vmatpush1.bf16.msra.mxu0 %v4897
      %4919 = vmatprep.subr.bf16.mxu0 0
      %4920 = vmatpush1.bf16.msra.mxu0 %v4898
      %4921 = vmatprep.subr.bf16.mxu0 0
      %4922 = vmatpush1.bf16.msra.mxu0 %v4899
      %4923 = vmatprep.subr.bf16.mxu0 0
      %4924 = vmatpush1.bf16.msra.mxu0 %v4900
      %4925 = vmatprep.subr.bf16.mxu0 0
      %4926 = vmatpush1.bf16.msra.mxu0 0
      %4927 = vmatprep.subr.bf16.mxu0 0
      %4928 = vmatpush1.bf16.msra.mxu0 0
      %4929 = vmatprep.subr.bf16.mxu0 0
      %4930 = vmatpush1.bf16.msra.mxu0 0
      %4931 = vmatprep.subr.bf16.mxu0 0
      %4932 = vmatpush1.bf16.msra.mxu0 0
      %4933 = vmatprep.subr.bf16.mxu0 0
      %4934 = vmatpush1.bf16.msra.mxu0 0
      %4935 = vmatprep.subr.bf16.mxu0 0
      %4936 = vmatpush1.bf16.msra.mxu0 0
      %4937 = vmatprep.subr.bf16.mxu0 0
      %4938 = vmatpush1.bf16.msra.mxu0 0
      %4939 = vmatprep.subr.bf16.mxu0 0
      %4940 = vmatpush1.bf16.msra.mxu0 0
      %4941 = vmatprep.mubr.bf16.mxu0 0
      %4942 = vmatmul.mubr.bf16.gmra.mrb[0].mxu0 %v4775
      %v4943 = vpop.f32.mrb[0].mxu0
      %v4944 = vadd.f32 %v4860, %v4943
      %v4945 = vpop.f32.mrb[0].mxu0
      %v4946 = vpop.f32.mrb[0].mxu0
      %v4947 = vadd.f32 %v4860, %v4946
      %v4948 = vpop.f32.mrb[0].mxu0
      %4949 = vmatprep.mubr.bf16.mxu0 0
      %4950 = vmatmul.mubr.bf16.gmra.mrb[0].mxu0 %v4776
      %v4951 = vpop.f32.mrb[0].mxu0
      %v4952 = vadd.f32 %v4860, %v4951
      %v4953 = vpop.f32.mrb[0].mxu0
      %v4954 = vpop.f32.mrb[0].mxu0
      %v4955 = vadd.f32 %v4860, %v4954
      %v4956 = vpop.f32.mrb[0].mxu0
      %4957 = vmatprep.mubr.bf16.mxu0 0
      %4958 = vmatmul.mubr.bf16.gmra.mrb[0].mxu0 %v4777
      %v4959 = vpop.f32.mrb[0].mxu0
      %v4960 = vadd.f32 %v4860, %v4959
      %v4961 = vpop.f32.mrb[0].mxu0
      %v4962 = vpop.f32.mrb[0].mxu0
      %v4963 = vadd.f32 %v4860, %v4962
      %v4964 = vpop.f32.mrb[0].mxu0
      %4965 = vmatprep.mubr.bf16.mxu0 0
      %4966 = vmatmul.mubr.bf16.gmra.mrb[0].mxu0 %v4778
      %v4967 = vpop.f32.mrb[0].mxu0
      %v4968 = vadd.f32 %v4860, %v4967
      %v4969 = vpop.f32.mrb[0].mxu0
      %v4970 = vpop.f32.mrb[0].mxu0
      %v4971 = vadd.f32 %v4860, %v4970
      %v4972 = vpop.f32.mrb[0].mxu0
      %4973 = vmatprep.mubr.bf16.mxu0 0
      %4974 = vmatmul.mubr.bf16.gmra.mrb[0].mxu0 %v4779
      %v4975 = vpop.f32.mrb[0].mxu0
      %v4976 = vadd.f32 %v4860, %v4975
      %v4977 = vpop.f32.mrb[0].mxu0
      %v4978 = vpop.f32.mrb[0].mxu0
      %v4979 = vadd.f32 %v4860, %v4978
      %v4980 = vpop.f32.mrb[0].mxu0
      %4981 = vmatprep.mubr.bf16.mxu0 0
      %4982 = vmatmul.mubr.bf16.gmra.mrb[0].mxu0 %v4780
      %v4983 = vpop.f32.mrb[0].mxu0
      %v4984 = vadd.f32 %v4860, %v4983
      %v4985 = vpop.f32.mrb[0].mxu0
      %v4986 = vpop.f32.mrb[0].mxu0
      %v4987 = vadd.f32 %v4860, %v4986
      %v4988 = vpop.f32.mrb[0].mxu0
      %4989 = vmatprep.mubr.bf16.mxu0 0
      %4990 = vmatmul.mubr.bf16.gmra.mrb[0].mxu0 %v4781
      %v4991 = vpop.f32.mrb[0].mxu0
      %v4992 = vadd.f32 %v4860, %v4991
      %v4993 = vpop.f32.mrb[0].mxu0
      %v4994 = vpop.f32.mrb[0].mxu0
      %v4995 = vadd.f32 %v4860, %v4994
      %v4996 = vpop.f32.mrb[0].mxu0
      %4997 = vmatprep.mubr.bf16.mxu0 0
      %4998 = vmatmul.mubr.bf16.gmra.mrb[0].mxu0 %v4782
      %v4999 = vpop.f32.mrb[0].mxu0
      %v5000 = vadd.f32 %v4860, %v4999
      %v5001 = vpop.f32.mrb[0].mxu0
      %v5002 = vpop.f32.mrb[0].mxu0
      %v5003 = vadd.f32 %v4860, %v5002
      %v5004 = vpop.f32.mrb[0].mxu0
      %5005 = vmatprep.mubr.bf16.mxu0 0
      %5006 = vmatmul.mubr.bf16.gmra.mrb[0].mxu0 %v4783
      %v5007 = vpop.f32.mrb[0].mxu0
      %v5008 = vadd.f32 %v4860, %v5007
      %v5009 = vpop.f32.mrb[0].mxu0
      %v5010 = vpop.f32.mrb[0].mxu0
      %v5011 = vadd.f32 %v4860, %v5010
      %v5012 = vpop.f32.mrb[0].mxu0
      %5013 = vmatprep.mubr.bf16.mxu0 0
      %5014 = vmatmul.mubr.bf16.gmra.mrb[0].mxu0 %v4784
      %v5015 = vpop.f32.mrb[0].mxu0
      %v5016 = vadd.f32 %v4860, %v5015
      %v5017 = vpop.f32.mrb[0].mxu0
      %v5018 = vpop.f32.mrb[0].mxu0
      %v5019 = vadd.f32 %v4860, %v5018
      %v5020 = vpop.f32.mrb[0].mxu0
      %5021 = vmatprep.mubr.bf16.mxu0 0
      %5022 = vmatmul.mubr.bf16.gmra.mrb[0].mxu0 %v4785
      %v5023 = vpop.f32.mrb[0].mxu0
      %v5024 = vadd.f32 %v4860, %v5023
      %v5025 = vpop.f32.mrb[0].mxu0
      %v5026 = vpop.f32.mrb[0].mxu0
      %v5027 = vadd.f32 %v4860, %v5026
      %v5028 = vpop.f32.mrb[0].mxu0
      %5029 = vmatprep.mubr.bf16.mxu0 0
      %5030 = vmatmul.mubr.bf16.gmra.mrb[0].mxu0 %v4786
      %v5031 = vpop.f32.mrb[0].mxu0
      %v5032 = vadd.f32 %v4860, %v5031
      %v5033 = vpop.f32.mrb[0].mxu0
      %v5034 = vpop.f32.mrb[0].mxu0
      %v5035 = vadd.f32 %v4860, %v5034
      %v5036 = vpop.f32.mrb[0].mxu0
      %5037 = vmatprep.mubr.bf16.mxu0 0
      %5038 = vmatmul.mubr.bf16.gmra.mrb[0].mxu0 %v4787
      %v5039 = vpop.f32.mrb[0].mxu0
      %v5040 = vadd.f32 %v4860, %v5039
      %v5041 = vpop.f32.mrb[0].mxu0
      %v5042 = vpop.f32.mrb[0].mxu0
      %v5043 = vadd.f32 %v4860, %v5042
      %v5044 = vpop.f32.mrb[0].mxu0
      %5045 = vmatprep.mubr.bf16.mxu0 0
      %5046 = vmatmul.mubr.bf16.gmra.mrb[0].mxu0 %v4788
      %v5047 = vpop.f32.mrb[0].mxu0
      %v5048 = vadd.f32 %v4860, %v5047
      %v5049 = vpop.f32.mrb[0].mxu0
      %v5050 = vpop.f32.mrb[0].mxu0
      %v5051 = vadd.f32 %v4860, %v5050
      %v5052 = vpop.f32.mrb[0].mxu0
      %5053 = vmatprep.mubr.bf16.mxu0 0
      %5054 = vmatmul.mubr.bf16.gmra.mrb[0].mxu0 %v4789
      %v5055 = vpop.f32.mrb[0].mxu0
      %v5056 = vadd.f32 %v4860, %v5055
      %v5057 = vpop.f32.mrb[0].mxu0
      %v5058 = vpop.f32.mrb[0].mxu0
      %v5059 = vadd.f32 %v4860, %v5058
      %v5060 = vpop.f32.mrb[0].mxu0
      %5061 = vmatprep.mubr.bf16.mxu0 0
      %5062 = vmatmul.mubr.bf16.gmra.mrb[0].mxu0 %v4790
      %v5063 = vpop.f32.mrb[0].mxu0
      %v5064 = vadd.f32 %v4860, %v5063
      %v5065 = vpop.f32.mrb[0].mxu0
      %v5066 = vpop.f32.mrb[0].mxu0
      %v5067 = vadd.f32 %v4860, %v5066
      %v5068 = vpop.f32.mrb[0].mxu0
      %5069 = vmatprep.mubr.bf16.mxu0 0
      %5070 = vmatmul.mubr.bf16.gmra.mrb[0].mxu0 %v4791
      %v5071 = vpop.f32.mrb[0].mxu0
      %v5072 = vadd.f32 %v4860, %v5071
      %v5073 = vpop.f32.mrb[0].mxu0
      %v5074 = vpop.f32.mrb[0].mxu0
      %v5075 = vadd.f32 %v4860, %v5074
      %v5076 = vpop.f32.mrb[0].mxu0
      %5077 = vmatprep.mubr.bf16.mxu0 0
      %5078 = vmatmul.mubr.bf16.gmra.mrb[0].mxu0 %v4792
      %v5079 = vpop.f32.mrb[0].mxu0
      %v5080 = vadd.f32 %v4860, %v5079
      %v5081 = vpop.f32.mrb[0].mxu0
      %v5082 = vpop.f32.mrb[0].mxu0
      %v5083 = vadd.f32 %v4860, %v5082
      %v5084 = vpop.f32.mrb[0].mxu0
      %5085 = vmatprep.mubr.bf16.mxu0 0
      %5086 = vmatmul.mubr.bf16.gmra.mrb[0].mxu0 %v4793
      %v5087 = vpop.f32.mrb[0].mxu0
      %v5088 = vadd.f32 %v4860, %v5087
      %v5089 = vpop.f32.mrb[0].mxu0
      %v5090 = vpop.f32.mrb[0].mxu0
      %v5091 = vadd.f32 %v4860, %v5090
      %v5092 = vpop.f32.mrb[0].mxu0
      %5093 = vmatprep.mubr.bf16.mxu0 0
      %5094 = vmatmul.mubr.bf16.gmra.mrb[0].mxu0 %v4794
      %v5095 = vpop.f32.mrb[0].mxu0
      %v5096 = vadd.f32 %v4860, %v5095
      %v5097 = vpop.f32.mrb[0].mxu0
      %v5098 = vpop.f32.mrb[0].mxu0
      %v5099 = vadd.f32 %v4860, %v5098
      %v5100 = vpop.f32.mrb[0].mxu0
      %5101 = vmatprep.mubr.bf16.mxu0 0
      %5102 = vmatmul.mubr.bf16.gmra.mrb[0].mxu0 %v4795
      %v5103 = vpop.f32.mrb[0].mxu0
      %v5104 = vadd.f32 %v4860, %v5103
      %v5105 = vpop.f32.mrb[0].mxu0
      %v5106 = vpop.f32.mrb[0].mxu0
      %v5107 = vadd.f32 %v4860, %v5106
      %v5108 = vpop.f32.mrb[0].mxu0
      %5109 = vmatprep.mubr.bf16.mxu0 0
      %5110 = vmatmul.mubr.bf16.gmra.mrb[0].mxu0 %v4796
      %v5111 = vpop.f32.mrb[0].mxu0
      %v5112 = vadd.f32 %v4860, %v5111
      %v5113 = vpop.f32.mrb[0].mxu0
      %v5114 = vpop.f32.mrb[0].mxu0
      %v5115 = vadd.f32 %v4860, %v5114
      %v5116 = vpop.f32.mrb[0].mxu0
      %5117 = vmatprep.mubr.bf16.mxu0 0
      %5118 = vmatmul.mubr.bf16.gmra.mrb[0].mxu0 %v4797
      %v5119 = vpop.f32.mrb[0].mxu0
      %v5120 = vadd.f32 %v4860, %v5119
      %v5121 = vpop.f32.mrb[0].mxu0
      %v5122 = vpop.f32.mrb[0].mxu0
      %v5123 = vadd.f32 %v4860, %v5122
      %v5124 = vpop.f32.mrb[0].mxu0
      %5125 = vmatprep.mubr.bf16.mxu0 0
      %5126 = vmatmul.mubr.bf16.gmra.mrb[0].mxu0 %v4798
      %v5127 = vpop.f32.mrb[0].mxu0
      %v5128 = vadd.f32 %v4860, %v5127
      %v5129 = vpop.f32.mrb[0].mxu0
      %v5130 = vpop.f32.mrb[0].mxu0
      %v5131 = vadd.f32 %v4860, %v5130
      %v5132 = vpop.f32.mrb[0].mxu0
      %5133 = vmatprep.mubr.bf16.mxu0 0
      %5134 = vmatmul.mubr.bf16.gmra.mrb[0].mxu0 %v4799
      %v5135 = vpop.f32.mrb[0].mxu0
      %v5136 = vadd.f32 %v4860, %v5135
      %v5137 = vpop.f32.mrb[0].mxu0
      %v5138 = vpop.f32.mrb[0].mxu0
      %v5139 = vadd.f32 %v4860, %v5138
      %v5140 = vpop.f32.mrb[0].mxu0
      %5141 = vmatprep.mubr.bf16.mxu0 0
      %5142 = vmatmul.mubr.bf16.gmra.mrb[0].mxu0 %v4800
      %v5143 = vpop.f32.mrb[0].mxu0
      %v5144 = vadd.f32 %v4860, %v5143
      %v5145 = vpop.f32.mrb[0].mxu0
      %v5146 = vpop.f32.mrb[0].mxu0
      %v5147 = vadd.f32 %v4860, %v5146
      %v5148 = vpop.f32.mrb[0].mxu0
      %5149 = vmatprep.mubr.bf16.mxu0 0
      %5150 = vmatmul.mubr.bf16.gmra.mrb[0].mxu0 %v4801
      %v5151 = vpop.f32.mrb[0].mxu0
      %v5152 = vadd.f32 %v4860, %v5151
      %v5153 = vpop.f32.mrb[0].mxu0
      %v5154 = vpop.f32.mrb[0].mxu0
      %v5155 = vadd.f32 %v4860, %v5154
      %v5156 = vpop.f32.mrb[0].mxu0
      %5157 = vmatprep.mubr.bf16.mxu0 0
      %5158 = vmatmul.mubr.bf16.gmra.mrb[0].mxu0 %v4802
      %v5159 = vpop.f32.mrb[0].mxu0
      %v5160 = vadd.f32 %v4860, %v5159
      %v5161 = vpop.f32.mrb[0].mxu0
      %v5162 = vpop.f32.mrb[0].mxu0
      %v5163 = vadd.f32 %v4860, %v5162
      %v5164 = vpop.f32.mrb[0].mxu0
      %5165 = vmatprep.mubr.bf16.mxu0 0
      %5166 = vmatmul.mubr.bf16.gmra.mrb[0].mxu0 %v4803
      %v5167 = vpop.f32.mrb[0].mxu0
      %v5168 = vadd.f32 %v4860, %v5167
      %v5169 = vpop.f32.mrb[0].mxu0
      %v5170 = vpop.f32.mrb[0].mxu0
      %v5171 = vadd.f32 %v4860, %v5170
      %v5172 = vpop.f32.mrb[0].mxu0
      %5173 = vmatprep.mubr.bf16.mxu0 0
      %5174 = vmatmul.mubr.bf16.gmra.mrb[0].mxu0 %v4804
      %v5175 = vpop.f32.mrb[0].mxu0
      %v5176 = vadd.f32 %v4860, %v5175
      %v5177 = vpop.f32.mrb[0].mxu0
      %v5178 = vpop.f32.mrb[0].mxu0
      %v5179 = vadd.f32 %v4860, %v5178
      %v5180 = vpop.f32.mrb[0].mxu0
      %5181 = vmatprep.mubr.bf16.mxu0 0
      %5182 = vmatmul.mubr.bf16.gmra.mrb[0].mxu0 %v4805
      %v5183 = vpop.f32.mrb[0].mxu0
      %v5184 = vadd.f32 %v4860, %v5183
      %v5185 = vpop.f32.mrb[0].mxu0
      %v5186 = vpop.f32.mrb[0].mxu0
      %v5187 = vadd.f32 %v4860, %v5186
      %v5188 = vpop.f32.mrb[0].mxu0
      %5189 = vmatprep.mubr.bf16.mxu0 0
      %5190 = vmatmul.mubr.bf16.gmra.mrb[0].mxu0 %v4806
      %v5191 = vpop.f32.mrb[0].mxu0
      %v5192 = vadd.f32 %v4860, %v5191
      %v5193 = vpop.f32.mrb[0].mxu0
      %v5194 = vpop.f32.mrb[0].mxu0
      %v5195 = vadd.f32 %v4860, %v5194
      %v5196 = vpop.f32.mrb[0].mxu0
      %5197 = vmatprep.mubr.bf16.mxu0 0
      %5198 = vmatmul.mubr.bf16.gmra.mrb[0].mxu0 %v4807
      %v5199 = vpop.f32.mrb[0].mxu0
      %v5200 = vadd.f32 %v4860, %v5199
      %v5201 = vpop.f32.mrb[0].mxu0
      %v5202 = vpop.f32.mrb[0].mxu0
      %v5203 = vadd.f32 %v4860, %v5202
      %v5204 = vpop.f32.mrb[0].mxu0
      %5205 = vmatprep.mubr.bf16.mxu0 0
      %5206 = vmatmul.mubr.bf16.gmra.mrb[0].mxu0 %v4808
      %v5207 = vpop.f32.mrb[0].mxu0
      %v5208 = vadd.f32 %v4860, %v5207
      %v5209 = vpop.f32.mrb[0].mxu0
      %v5210 = vpop.f32.mrb[0].mxu0
      %v5211 = vadd.f32 %v4860, %v5210
      %v5212 = vpop.f32.mrb[0].mxu0
      %5213 = vmatprep.mubr.bf16.mxu0 0
      %5214 = vmatmul.mubr.bf16.gmra.mrb[0].mxu0 %v4809
      %v5215 = vpop.f32.mrb[0].mxu0
      %v5216 = vadd.f32 %v4860, %v5215
      %v5217 = vpop.f32.mrb[0].mxu0
      %v5218 = vpop.f32.mrb[0].mxu0
      %v5219 = vadd.f32 %v4860, %v5218
      %v5220 = vpop.f32.mrb[0].mxu0
      %5221 = vmatprep.mubr.bf16.mxu0 0
      %5222 = vmatmul.mubr.bf16.gmra.mrb[0].mxu0 %v4810
      %v5223 = vpop.f32.mrb[0].mxu0
      %v5224 = vadd.f32 %v4860, %v5223
      %v5225 = vpop.f32.mrb[0].mxu0
      %v5226 = vpop.f32.mrb[0].mxu0
      %v5227 = vadd.f32 %v4860, %v5226
      %v5228 = vpop.f32.mrb[0].mxu0
      %5229 = vmatprep.mubr.bf16.mxu0 0
      %5230 = vmatmul.mubr.bf16.gmra.mrb[0].mxu0 %v4811
      %v5231 = vpop.f32.mrb[0].mxu0
      %v5232 = vadd.f32 %v4860, %v5231
      %v5233 = vpop.f32.mrb[0].mxu0
      %v5234 = vpop.f32.mrb[0].mxu0
      %v5235 = vadd.f32 %v4860, %v5234
      %v5236 = vpop.f32.mrb[0].mxu0
      %5237 = vmatprep.mubr.bf16.mxu0 0
      %5238 = vmatmul.mubr.bf16.gmra.mrb[0].mxu0 %v4812
      %v5239 = vpop.f32.mrb[0].mxu0
      %v5240 = vadd.f32 %v4860, %v5239
      %v5241 = vpop.f32.mrb[0].mxu0
      %v5242 = vpop.f32.mrb[0].mxu0
      %v5243 = vadd.f32 %v4860, %v5242
      %v5244 = vpop.f32.mrb[0].mxu0
      %5245 = vmatprep.mubr.bf16.mxu0 0
      %5246 = vmatmul.mubr.bf16.gmra.mrb[0].mxu0 %v4813
      %v5247 = vpop.f32.mrb[0].mxu0
      %v5248 = vadd.f32 %v4860, %v5247
      %v5249 = vpop.f32.mrb[0].mxu0
      %v5250 = vpop.f32.mrb[0].mxu0
      %v5251 = vadd.f32 %v4860, %v5250
      %v5252 = vpop.f32.mrb[0].mxu0
      %5253 = vmatprep.mubr.bf16.mxu0 0
      %5254 = vmatmul.mubr.bf16.gmra.mrb[0].mxu0 %v4814
      %v5255 = vpop.f32.mrb[0].mxu0
      %v5256 = vadd.f32 %v4860, %v5255
      %v5257 = vpop.f32.mrb[0].mxu0
      %v5258 = vpop.f32.mrb[0].mxu0
      %v5259 = vadd.f32 %v4860, %v5258
      %v5260 = vpop.f32.mrb[0].mxu0
      %5261 = vmatprep.mubr.bf16.mxu0 0
      %5262 = vmatmul.mubr.bf16.gmra.mrb[0].mxu0 %v4815
      %v5263 = vpop.f32.mrb[0].mxu0
      %v5264 = vadd.f32 %v4860, %v5263
      %v5265 = vpop.f32.mrb[0].mxu0
      %v5266 = vpop.f32.mrb[0].mxu0
      %v5267 = vadd.f32 %v4860, %v5266
      %v5268 = vpop.f32.mrb[0].mxu0
      %5269 = vmatprep.mubr.bf16.mxu0 0
      %5270 = vmatmul.mubr.bf16.gmra.mrb[0].mxu0 %v4816
      %v5271 = vpop.f32.mrb[0].mxu0
      %v5272 = vadd.f32 %v4860, %v5271
      %v5273 = vpop.f32.mrb[0].mxu0
      %v5274 = vpop.f32.mrb[0].mxu0
      %v5275 = vadd.f32 %v4860, %v5274
      %v5276 = vpop.f32.mrb[0].mxu0
      %5277 = vmatprep.mubr.bf16.mxu0 0
      %5278 = vmatmul.mubr.bf16.gmra.mrb[0].mxu0 %v4817
      %v5279 = vpop.f32.mrb[0].mxu0
      %v5280 = vadd.f32 %v4860, %v5279
      %v5281 = vpop.f32.mrb[0].mxu0
      %v5282 = vpop.f32.mrb[0].mxu0
      %v5283 = vadd.f32 %v4860, %v5282
      %v5284 = vpop.f32.mrb[0].mxu0
      %5285 = vmatprep.mubr.bf16.mxu0 0
      %5286 = vmatmul.mubr.bf16.gmra.mrb[0].mxu0 %v4818
      %v5287 = vpop.f32.mrb[0].mxu0
      %v5288 = vadd.f32 %v4860, %v5287
      %v5289 = vpop.f32.mrb[0].mxu0
      %v5290 = vpop.f32.mrb[0].mxu0
      %v5291 = vadd.f32 %v4860, %v5290
      %v5292 = vpop.f32.mrb[0].mxu0
      %5293 = vmatprep.mubr.bf16.mxu0 0
      %5294 = vmatmul.mubr.bf16.gmra.mrb[0].mxu0 %v4819
      %v5295 = vpop.f32.mrb[0].mxu0
      %v5296 = vadd.f32 %v4860, %v5295
      %v5297 = vpop.f32.mrb[0].mxu0
      %v5298 = vpop.f32.mrb[0].mxu0
      %v5299 = vadd.f32 %v4860, %v5298
      %v5300 = vpop.f32.mrb[0].mxu0
      %5301 = vmatprep.mubr.bf16.mxu0 0
      %5302 = vmatmul.mubr.bf16.gmra.mrb[0].mxu0 %v4820
      %v5303 = vpop.f32.mrb[0].mxu0
      %v5304 = vadd.f32 %v4860, %v5303
      %v5305 = vpop.f32.mrb[0].mxu0
      %v5306 = vpop.f32.mrb[0].mxu0
      %v5307 = vadd.f32 %v4860, %v5306
      %v5308 = vpop.f32.mrb[0].mxu0
      %5309 = vmatprep.mubr.bf16.mxu0 0
      %5310 = vmatmul.mubr.bf16.gmra.mrb[0].mxu0 %v4821
      %v5311 = vpop.f32.mrb[0].mxu0
      %v5312 = vadd.f32 %v4860, %v5311
      %v5313 = vpop.f32.mrb[0].mxu0
      %v5314 = vpop.f32.mrb[0].mxu0
      %v5315 = vadd.f32 %v4860, %v5314
      %v5316 = vpop.f32.mrb[0].mxu0
      %5317 = vmatprep.mubr.bf16.mxu0 0
      %5318 = vmatmul.mubr.bf16.gmra.mrb[0].mxu0 %v4822
      %v5319 = vpop.f32.mrb[0].mxu0
      %v5320 = vadd.f32 %v4860, %v5319
      %v5321 = vpop.f32.mrb[0].mxu0
      %v5322 = vpop.f32.mrb[0].mxu0
      %v5323 = vadd.f32 %v4860, %v5322
      %v5324 = vpop.f32.mrb[0].mxu0
      %5325 = vmatprep.mubr.bf16.mxu0 0
      %5326 = vmatmul.mubr.bf16.gmra.mrb[0].mxu0 %v4823
      %v5327 = vpop.f32.mrb[0].mxu0
      %v5328 = vadd.f32 %v4860, %v5327
      %v5329 = vpop.f32.mrb[0].mxu0
      %v5330 = vpop.f32.mrb[0].mxu0
      %v5331 = vadd.f32 %v4860, %v5330
      %v5332 = vpop.f32.mrb[0].mxu0
      %5333 = vmatprep.mubr.bf16.mxu0 0
      %5334 = vmatmul.mubr.bf16.gmra.mrb[0].mxu0 %v4824
      %v5335 = vpop.f32.mrb[0].mxu0
      %v5336 = vadd.f32 %v4860, %v5335
      %v5337 = vpop.f32.mrb[0].mxu0
      %v5338 = vpop.f32.mrb[0].mxu0
      %v5339 = vadd.f32 %v4860, %v5338
      %v5340 = vpop.f32.mrb[0].mxu0
      %5341 = vmatprep.mubr.bf16.mxu0 0
      %5342 = vmatmul.mubr.bf16.gmra.mrb[0].mxu0 %v4825
      %v5343 = vpop.f32.mrb[0].mxu0
      %v5344 = vadd.f32 %v4860, %v5343
      %v5345 = vpop.f32.mrb[0].mxu0
      %v5346 = vpop.f32.mrb[0].mxu0
      %v5347 = vadd.f32 %v4860, %v5346
      %v5348 = vpop.f32.mrb[0].mxu0
      %5349 = vmatprep.mubr.bf16.mxu0 0
      %5350 = vmatmul.mubr.bf16.gmra.mrb[0].mxu0 %v4826
      %v5351 = vpop.f32.mrb[0].mxu0
      %v5352 = vadd.f32 %v4860, %v5351
      %v5353 = vpop.f32.mrb[0].mxu0
      %v5354 = vpop.f32.mrb[0].mxu0
      %v5355 = vadd.f32 %v4860, %v5354
      %v5356 = vpop.f32.mrb[0].mxu0
      %5357 = vmatprep.mubr.bf16.mxu0 0
      %5358 = vmatmul.mubr.bf16.gmra.mrb[0].mxu0 %v4827
      %v5359 = vpop.f32.mrb[0].mxu0
      %v5360 = vadd.f32 %v4860, %v5359
      %v5361 = vpop.f32.mrb[0].mxu0
      %v5362 = vpop.f32.mrb[0].mxu0
      %v5363 = vadd.f32 %v4860, %v5362
      %v5364 = vpop.f32.mrb[0].mxu0
      %5365 = vmatprep.mubr.bf16.mxu0 0
      %5366 = vmatmul.mubr.bf16.gmra.mrb[0].mxu0 %v4828
      %v5367 = vpop.f32.mrb[0].mxu0
      %v5368 = vadd.f32 %v4860, %v5367
      %v5369 = vpop.f32.mrb[0].mxu0
      %v5370 = vpop.f32.mrb[0].mxu0
      %v5371 = vadd.f32 %v4860, %v5370
      %v5372 = vpop.f32.mrb[0].mxu0
      %5373 = vmatprep.mubr.bf16.mxu0 0
      %5374 = vmatmul.mubr.bf16.gmra.mrb[0].mxu0 %v4829
      %v5375 = vpop.f32.mrb[0].mxu0
      %v5376 = vadd.f32 %v4860, %v5375
      %v5377 = vpop.f32.mrb[0].mxu0
      %v5378 = vpop.f32.mrb[0].mxu0
      %v5379 = vadd.f32 %v4860, %v5378
      %v5380 = vpop.f32.mrb[0].mxu0
      %5381 = vmatprep.mubr.bf16.mxu0 0
      %5382 = vmatmul.mubr.bf16.gmra.mrb[0].mxu0 %v4830
      %v5383 = vpop.f32.mrb[0].mxu0
      %v5384 = vadd.f32 %v4860, %v5383
      %v5385 = vpop.f32.mrb[0].mxu0
      %v5386 = vpop.f32.mrb[0].mxu0
      %v5387 = vadd.f32 %v4860, %v5386
      %v5388 = vpop.f32.mrb[0].mxu0
      %5389 = vmatprep.mubr.bf16.mxu0 0
      %5390 = vmatmul.mubr.bf16.gmra.mrb[0].mxu0 %v4831
      %v5391 = vpop.f32.mrb[0].mxu0
      %v5392 = vadd.f32 %v4860, %v5391
      %v5393 = vpop.f32.mrb[0].mxu0
      %v5394 = vpop.f32.mrb[0].mxu0
      %v5395 = vadd.f32 %v4860, %v5394
      %v5396 = vpop.f32.mrb[0].mxu0
      %5397 = vmatprep.mubr.bf16.mxu0 0
      %5398 = vmatmul.mubr.bf16.gmra.mrb[0].mxu0 %v4832
      %v5399 = vpop.f32.mrb[0].mxu0
      %v5400 = vadd.f32 %v4860, %v5399
      %v5401 = vpop.f32.mrb[0].mxu0
      %v5402 = vpop.f32.mrb[0].mxu0
      %v5403 = vadd.f32 %v4860, %v5402
      %v5404 = vpop.f32.mrb[0].mxu0
      %5405 = vmatprep.mubr.bf16.mxu0 0
      %5406 = vmatmul.mubr.bf16.gmra.mrb[0].mxu0 %v4833
      %v5407 = vpop.f32.mrb[0].mxu0
      %v5408 = vadd.f32 %v4860, %v5407
      %v5409 = vpop.f32.mrb[0].mxu0
      %v5410 = vpop.f32.mrb[0].mxu0
      %v5411 = vadd.f32 %v4860, %v5410
      %v5412 = vpop.f32.mrb[0].mxu0
      %5413 = vmatprep.mubr.bf16.mxu0 0
      %5414 = vmatmul.mubr.bf16.gmra.mrb[0].mxu0 %v4834
      %v5415 = vpop.f32.mrb[0].mxu0
      %v5416 = vadd.f32 %v4860, %v5415
      %v5417 = vpop.f32.mrb[0].mxu0
      %v5418 = vpop.f32.mrb[0].mxu0
      %v5419 = vadd.f32 %v4860, %v5418
      %v5420 = vpop.f32.mrb[0].mxu0
      %5421 = vmatprep.mubr.bf16.mxu0 0
      %5422 = vmatmul.mubr.bf16.gmra.mrb[0].mxu0 %v4835
      %v5423 = vpop.f32.mrb[0].mxu0
      %v5424 = vadd.f32 %v4860, %v5423
      %v5425 = vpop.f32.mrb[0].mxu0
      %v5426 = vpop.f32.mrb[0].mxu0
      %v5427 = vadd.f32 %v4860, %v5426
      %v5428 = vpop.f32.mrb[0].mxu0
      %5429 = vmatprep.mubr.bf16.mxu0 0
      %5430 = vmatmul.mubr.bf16.gmra.mrb[0].mxu0 %v4836
      %v5431 = vpop.f32.mrb[0].mxu0
      %v5432 = vadd.f32 %v4860, %v5431
      %v5433 = vpop.f32.mrb[0].mxu0
      %v5434 = vpop.f32.mrb[0].mxu0
      %v5435 = vadd.f32 %v4860, %v5434
      %v5436 = vpop.f32.mrb[0].mxu0
      %5437 = vmatprep.mubr.bf16.mxu0 0
      %5438 = vmatmul.mubr.bf16.gmra.mrb[0].mxu0 %v4837
      %v5439 = vpop.f32.mrb[0].mxu0
      %v5440 = vadd.f32 %v4860, %v5439
      %v5441 = vpop.f32.mrb[0].mxu0
      %v5442 = vpop.f32.mrb[0].mxu0
      %v5443 = vadd.f32 %v4860, %v5442
      %v5444 = vpop.f32.mrb[0].mxu0
      %5445 = vmatprep.mubr.bf16.mxu0 0
      %5446 = vmatmul.mubr.bf16.gmra.mrb[0].mxu0 %v4838
      %v5447 = vpop.f32.mrb[0].mxu0
      %v5448 = vadd.f32 %v4860, %v5447
      %v5449 = vpop.f32.mrb[0].mxu0
      %v5450 = vpop.f32.mrb[0].mxu0
      %v5451 = vadd.f32 %v4860, %v5450
      %v5452 = vpop.f32.mrb[0].mxu0
      %5453 = vdwg.mxu0
      %v5454 = vmax.f32 %v4944, 0.0
      %v5455 = vmax.f32 %v4947, 0.0
      %v5456 = vmax.f32 %v4952, 0.0
      %v5457 = vmax.f32 %v4955, 0.0
      %v5458 = vmax.f32 %v4960, 0.0
      %v5459 = vmax.f32 %v4963, 0.0
      %v5460 = vmax.f32 %v4968, 0.0
      %v5461 = vmax.f32 %v4971, 0.0
      %v5462 = vmax.f32 %v4976, 0.0
      %v5463 = vmax.f32 %v4979, 0.0
      %v5464 = vmax.f32 %v4984, 0.0
      %v5465 = vmax.f32 %v4987, 0.0
      %v5466 = vmax.f32 %v4992, 0.0
      %v5467 = vmax.f32 %v4995, 0.0
      %v5468 = vmax.f32 %v5000, 0.0
      %v5469 = vmax.f32 %v5003, 0.0
      %v5470 = vmax.f32 %v5008, 0.0
      %v5471 = vmax.f32 %v5011, 0.0
      %v5472 = vmax.f32 %v5016, 0.0
      %v5473 = vmax.f32 %v5019, 0.0
      %v5474 = vmax.f32 %v5024, 0.0
      %v5475 = vmax.f32 %v5027, 0.0
      %v5476 = vmax.f32 %v5032, 0.0
      %v5477 = vmax.f32 %v5035, 0.0
      %v5478 = vmax.f32 %v5040, 0.0
      %v5479 = vmax.f32 %v5043, 0.0
      %v5480 = vmax.f32 %v5048, 0.0
      %v5481 = vmax.f32 %v5051, 0.0
      %v5482 = vmax.f32 %v5056, 0.0
      %v5483 = vmax.f32 %v5059, 0.0
      %v5484 = vmax.f32 %v5064, 0.0
      %v5485 = vmax.f32 %v5067, 0.0
      %v5486 = vmax.f32 %v5072, 0.0
      %v5487 = vmax.f32 %v5075, 0.0
      %v5488 = vmax.f32 %v5080, 0.0
      %v5489 = vmax.f32 %v5083, 0.0
      %v5490 = vmax.f32 %v5088, 0.0
      %v5491 = vmax.f32 %v5091, 0.0
      %v5492 = vmax.f32 %v5096, 0.0
      %v5493 = vmax.f32 %v5099, 0.0
      %v5494 = vmax.f32 %v5104, 0.0
      %v5495 = vmax.f32 %v5107, 0.0
      %v5496 = vmax.f32 %v5112, 0.0
      %v5497 = vmax.f32 %v5115, 0.0
      %v5498 = vmax.f32 %v5120, 0.0
      %v5499 = vmax.f32 %v5123, 0.0
      %v5500 = vmax.f32 %v5128, 0.0
      %v5501 = vmax.f32 %v5131, 0.0
      %v5502 = vmax.f32 %v5136, 0.0
      %v5503 = vmax.f32 %v5139, 0.0
      %v5504 = vmax.f32 %v5144, 0.0
      %v5505 = vmax.f32 %v5147, 0.0
      %v5506 = vmax.f32 %v5152, 0.0
      %v5507 = vmax.f32 %v5155, 0.0
      %v5508 = vmax.f32 %v5160, 0.0
      %v5509 = vmax.f32 %v5163, 0.0
      %v5510 = vmax.f32 %v5168, 0.0
      %v5511 = vmax.f32 %v5171, 0.0
      %v5512 = vmax.f32 %v5176, 0.0
      %v5513 = vmax.f32 %v5179, 0.0
      %v5514 = vmax.f32 %v5184, 0.0
      %v5515 = vmax.f32 %v5187, 0.0
      %v5516 = vmax.f32 %v5192, 0.0
      %v5517 = vmax.f32 %v5195, 0.0
      %v5518 = vmax.f32 %v5200, 0.0
      %v5519 = vmax.f32 %v5203, 0.0
      %v5520 = vmax.f32 %v5208, 0.0
      %v5521 = vmax.f32 %v5211, 0.0
      %v5522 = vmax.f32 %v5216, 0.0
      %v5523 = vmax.f32 %v5219, 0.0
      %v5524 = vmax.f32 %v5224, 0.0
      %v5525 = vmax.f32 %v5227, 0.0
      %v5526 = vmax.f32 %v5232, 0.0
      %v5527 = vmax.f32 %v5235, 0.0
      %v5528 = vmax.f32 %v5240, 0.0
      %v5529 = vmax.f32 %v5243, 0.0
      %v5530 = vmax.f32 %v5248, 0.0
      %v5531 = vmax.f32 %v5251, 0.0
      %v5532 = vmax.f32 %v5256, 0.0
      %v5533 = vmax.f32 %v5259, 0.0
      %v5534 = vmax.f32 %v5264, 0.0
      %v5535 = vmax.f32 %v5267, 0.0
      %v5536 = vmax.f32 %v5272, 0.0
      %v5537 = vmax.f32 %v5275, 0.0
      %v5538 = vmax.f32 %v5280, 0.0
      %v5539 = vmax.f32 %v5283, 0.0
      %v5540 = vmax.f32 %v5288, 0.0
      %v5541 = vmax.f32 %v5291, 0.0
      %v5542 = vmax.f32 %v5296, 0.0
      %v5543 = vmax.f32 %v5299, 0.0
      %v5544 = vmax.f32 %v5304, 0.0
      %v5545 = vmax.f32 %v5307, 0.0
      %v5546 = vmax.f32 %v5312, 0.0
      %v5547 = vmax.f32 %v5315, 0.0
      %v5548 = vmax.f32 %v5320, 0.0
      %v5549 = vmax.f32 %v5323, 0.0
      %v5550 = vmax.f32 %v5328, 0.0
      %v5551 = vmax.f32 %v5331, 0.0
      %v5552 = vmax.f32 %v5336, 0.0
      %v5553 = vmax.f32 %v5339, 0.0
      %v5554 = vmax.f32 %v5344, 0.0
      %v5555 = vmax.f32 %v5347, 0.0
      %v5556 = vmax.f32 %v5352, 0.0
      %v5557 = vmax.f32 %v5355, 0.0
      %v5558 = vmax.f32 %v5360, 0.0
      %v5559 = vmax.f32 %v5363, 0.0
      %v5560 = vmax.f32 %v5368, 0.0
      %v5561 = vmax.f32 %v5371, 0.0
      %v5562 = vmax.f32 %v5376, 0.0
      %v5563 = vmax.f32 %v5379, 0.0
      %v5564 = vmax.f32 %v5384, 0.0
      %v5565 = vmax.f32 %v5387, 0.0
      %v5566 = vmax.f32 %v5392, 0.0
      %v5567 = vmax.f32 %v5395, 0.0
      %v5568 = vmax.f32 %v5400, 0.0
      %v5569 = vmax.f32 %v5403, 0.0
      %v5570 = vmax.f32 %v5408, 0.0
      %v5571 = vmax.f32 %v5411, 0.0
      %v5572 = vmax.f32 %v5416, 0.0
      %v5573 = vmax.f32 %v5419, 0.0
      %v5574 = vmax.f32 %v5424, 0.0
      %v5575 = vmax.f32 %v5427, 0.0
      %v5576 = vmax.f32 %v5432, 0.0
      %v5577 = vmax.f32 %v5435, 0.0
      %v5578 = vmax.f32 %v5440, 0.0
      %v5579 = vmax.f32 %v5443, 0.0
      %v5580 = vmax.f32 %v5448, 0.0
      %v5581 = vmax.f32 %v5451, 0.0
      %v5582 = vpack.c.bf16 %v5455, %v5454
      %v5583 = vpack.c.bf16 %v5457, %v5456
      %v5584 = vpack.c.bf16 %v5459, %v5458
      %v5585 = vpack.c.bf16 %v5461, %v5460
      %v5586 = vpack.c.bf16 %v5463, %v5462
      %v5587 = vpack.c.bf16 %v5465, %v5464
      %v5588 = vpack.c.bf16 %v5467, %v5466
      %v5589 = vpack.c.bf16 %v5469, %v5468
      %v5590 = vpack.c.bf16 %v5471, %v5470
      %v5591 = vpack.c.bf16 %v5473, %v5472
      %v5592 = vpack.c.bf16 %v5475, %v5474
      %v5593 = vpack.c.bf16 %v5477, %v5476
      %v5594 = vpack.c.bf16 %v5479, %v5478
      %v5595 = vpack.c.bf16 %v5481, %v5480
      %v5596 = vpack.c.bf16 %v5483, %v5482
      %v5597 = vpack.c.bf16 %v5485, %v5484
      %v5598 = vpack.c.bf16 %v5487, %v5486
      %v5599 = vpack.c.bf16 %v5489, %v5488
      %v5600 = vpack.c.bf16 %v5491, %v5490
      %v5601 = vpack.c.bf16 %v5493, %v5492
      %v5602 = vpack.c.bf16 %v5495, %v5494
      %v5603 = vpack.c.bf16 %v5497, %v5496
      %v5604 = vpack.c.bf16 %v5499, %v5498
      %v5605 = vpack.c.bf16 %v5501, %v5500
      %v5606 = vpack.c.bf16 %v5503, %v5502
      %v5607 = vpack.c.bf16 %v5505, %v5504
      %v5608 = vpack.c.bf16 %v5507, %v5506
      %v5609 = vpack.c.bf16 %v5509, %v5508
      %v5610 = vpack.c.bf16 %v5511, %v5510
      %v5611 = vpack.c.bf16 %v5513, %v5512
      %v5612 = vpack.c.bf16 %v5515, %v5514
      %v5613 = vpack.c.bf16 %v5517, %v5516
      %v5614 = vpack.c.bf16 %v5519, %v5518
      %v5615 = vpack.c.bf16 %v5521, %v5520
      %v5616 = vpack.c.bf16 %v5523, %v5522
      %v5617 = vpack.c.bf16 %v5525, %v5524
      %v5618 = vpack.c.bf16 %v5527, %v5526
      %v5619 = vpack.c.bf16 %v5529, %v5528
      %v5620 = vpack.c.bf16 %v5531, %v5530
      %v5621 = vpack.c.bf16 %v5533, %v5532
      %v5622 = vpack.c.bf16 %v5535, %v5534
      %v5623 = vpack.c.bf16 %v5537, %v5536
      %v5624 = vpack.c.bf16 %v5539, %v5538
      %v5625 = vpack.c.bf16 %v5541, %v5540
      %v5626 = vpack.c.bf16 %v5543, %v5542
      %v5627 = vpack.c.bf16 %v5545, %v5544
      %v5628 = vpack.c.bf16 %v5547, %v5546
      %v5629 = vpack.c.bf16 %v5549, %v5548
      %v5630 = vpack.c.bf16 %v5551, %v5550
      %v5631 = vpack.c.bf16 %v5553, %v5552
      %v5632 = vpack.c.bf16 %v5555, %v5554
      %v5633 = vpack.c.bf16 %v5557, %v5556
      %v5634 = vpack.c.bf16 %v5559, %v5558
      %v5635 = vpack.c.bf16 %v5561, %v5560
      %v5636 = vpack.c.bf16 %v5563, %v5562
      %v5637 = vpack.c.bf16 %v5565, %v5564
      %v5638 = vpack.c.bf16 %v5567, %v5566
      %v5639 = vpack.c.bf16 %v5569, %v5568
      %v5640 = vpack.c.bf16 %v5571, %v5570
      %v5641 = vpack.c.bf16 %v5573, %v5572
      %v5642 = vpack.c.bf16 %v5575, %v5574
      %v5643 = vpack.c.bf16 %v5577, %v5576
      %v5644 = vpack.c.bf16 %v5579, %v5578
      %v5645 = vpack.c.bf16 %v5581, %v5580
      %s5646 = scalar_lea.vmem %s4, 128
      %v5647 = vld [vmem:[%s5646] sm:$0xf]
      %v5648 = vld [vmem:[%s5646 + $0x4] sm:$0xf]
      %v5649 = vld [vmem:[%s5646 + $0x8] sm:$0xf]
      %v5650 = vld [vmem:[%s5646 + $0xc] sm:$0xf]
      %v5651 = vld [vmem:[%s5646 + $0x10] sm:$0xf]
      %v5652 = vld [vmem:[%s5646 + $0x14] sm:$0xf]
      %v5653 = vld [vmem:[%s5646 + $0x18] sm:$0xf]
      %v5654 = vld [vmem:[%s5646 + $0x1c] sm:$0xf]
      %v5655 = vld [vmem:[%s5646 + $0x20] sm:$0xf]
      %v5656 = vld [vmem:[%s5646 + $0x24] sm:$0xf]
      %v5657 = vld [vmem:[%s5646 + $0x28] sm:$0xf]
      %v5658 = vld [vmem:[%s5646 + $0x2c] sm:$0xf]
      %v5659 = vld [vmem:[%s5646 + $0x30] sm:$0xf]
      %v5660 = vld [vmem:[%s5646 + $0x34] sm:$0xf]
      %v5661 = vld [vmem:[%s5646 + $0x38] sm:$0xf]
      %v5662 = vld [vmem:[%s5646 + $0x3c] sm:$0xf]
      %v5663 = vld [vmem:[%s5 + $0x2] sm:$0x1]
      %v5664 = vlaneseq
      %v5665 = vshrl.u32 %v5664, 7
      %v5666 = vsub.s32 0, %v5665
      %v5667 = vrot.slane %v5663, %v5666
      %v5684 = vunpack.c.l.b16 %v5647
      %v5685 = vunpack.c.l.b16 %v5648
      %v5686 = vunpack.c.l.b16 %v5649
      %v5687 = vunpack.c.l.b16 %v5650
      %v5688 = vunpack.c.l.b16 %v5651
      %v5689 = vunpack.c.l.b16 %v5652
      %v5690 = vunpack.c.l.b16 %v5653
      %v5691 = vunpack.c.l.b16 %v5654
      %v5692 = vunpack.c.l.b16 %v5655
      %v5693 = vunpack.c.l.b16 %v5656
      %v5694 = vunpack.c.l.b16 %v5657
      %v5695 = vunpack.c.l.b16 %v5658
      %v5696 = vunpack.c.l.b16 %v5659
      %v5697 = vunpack.c.l.b16 %v5660
      %v5698 = vunpack.c.l.b16 %v5661
      %v5699 = vunpack.c.l.b16 %v5662
      %v5700 = vpack.c.b16 %v5685, %v5684
      %v5701 = vpack.c.b16 %v5687, %v5686
      %v5702 = vpack.c.b16 %v5689, %v5688
      %v5703 = vpack.c.b16 %v5691, %v5690
      %v5704 = vpack.c.b16 %v5693, %v5692
      %v5705 = vpack.c.b16 %v5695, %v5694
      %v5706 = vpack.c.b16 %v5697, %v5696
      %v5707 = vpack.c.b16 %v5699, %v5698
      %5716 = vmatprep.subr.bf16.mxu0 0
      %5717 = vmatpush1.bf16.msra.mxu0 %v5700
      %5718 = vmatprep.subr.bf16.mxu0 0
      %5719 = vmatpush1.bf16.msra.mxu0 %v5701
      %5720 = vmatprep.subr.bf16.mxu0 0
      %5721 = vmatpush1.bf16.msra.mxu0 %v5702
      %5722 = vmatprep.subr.bf16.mxu0 0
      %5723 = vmatpush1.bf16.msra.mxu0 %v5703
      %5724 = vmatprep.subr.bf16.mxu0 0
      %5725 = vmatpush1.bf16.msra.mxu0 %v5704
      %5726 = vmatprep.subr.bf16.mxu0 0
      %5727 = vmatpush1.bf16.msra.mxu0 %v5705
      %5728 = vmatprep.subr.bf16.mxu0 0
      %5729 = vmatpush1.bf16.msra.mxu0 %v5706
      %5730 = vmatprep.subr.bf16.mxu0 0
      %5731 = vmatpush1.bf16.msra.mxu0 %v5707
      %5732 = vmatprep.subr.bf16.mxu0 0
      %5733 = vmatpush1.bf16.msra.mxu0 0
      %5734 = vmatprep.subr.bf16.mxu0 0
      %5735 = vmatpush1.bf16.msra.mxu0 0
      %5736 = vmatprep.subr.bf16.mxu0 0
      %5737 = vmatpush1.bf16.msra.mxu0 0
      %5738 = vmatprep.subr.bf16.mxu0 0
      %5739 = vmatpush1.bf16.msra.mxu0 0
      %5740 = vmatprep.subr.bf16.mxu0 0
      %5741 = vmatpush1.bf16.msra.mxu0 0
      %5742 = vmatprep.subr.bf16.mxu0 0
      %5743 = vmatpush1.bf16.msra.mxu0 0
      %5744 = vmatprep.subr.bf16.mxu0 0
      %5745 = vmatpush1.bf16.msra.mxu0 0
      %5746 = vmatprep.subr.bf16.mxu0 0
      %5747 = vmatpush1.bf16.msra.mxu0 0
      %5748 = vmatprep.mubr.bf16.mxu0 0
      %5749 = vmatmul.mubr.bf16.gmra.mrb[0].mxu0 %v5582
      %v5750 = vpop.f32.mrb[0].mxu0
      %v5751 = vadd.f32 %v5667, %v5750
      %v5752 = vpop.f32.mrb[0].mxu0
      %v5753 = vpop.f32.mrb[0].mxu0
      %v5754 = vadd.f32 %v5667, %v5753
      %v5755 = vpop.f32.mrb[0].mxu0
      %5756 = vmatprep.mubr.bf16.mxu0 0
      %5757 = vmatmul.mubr.bf16.gmra.mrb[0].mxu0 %v5583
      %v5758 = vpop.f32.mrb[0].mxu0
      %v5759 = vadd.f32 %v5667, %v5758
      %v5760 = vpop.f32.mrb[0].mxu0
      %v5761 = vpop.f32.mrb[0].mxu0
      %v5762 = vadd.f32 %v5667, %v5761
      %v5763 = vpop.f32.mrb[0].mxu0
      %5764 = vmatprep.mubr.bf16.mxu0 0
      %5765 = vmatmul.mubr.bf16.gmra.mrb[0].mxu0 %v5584
      %v5766 = vpop.f32.mrb[0].mxu0
      %v5767 = vadd.f32 %v5667, %v5766
      %v5768 = vpop.f32.mrb[0].mxu0
      %v5769 = vpop.f32.mrb[0].mxu0
      %v5770 = vadd.f32 %v5667, %v5769
      %v5771 = vpop.f32.mrb[0].mxu0
      %5772 = vmatprep.mubr.bf16.mxu0 0
      %5773 = vmatmul.mubr.bf16.gmra.mrb[0].mxu0 %v5585
      %v5774 = vpop.f32.mrb[0].mxu0
      %v5775 = vadd.f32 %v5667, %v5774
      %v5776 = vpop.f32.mrb[0].mxu0
      %v5777 = vpop.f32.mrb[0].mxu0
      %v5778 = vadd.f32 %v5667, %v5777
      %v5779 = vpop.f32.mrb[0].mxu0
      %5780 = vmatprep.mubr.bf16.mxu0 0
      %5781 = vmatmul.mubr.bf16.gmra.mrb[0].mxu0 %v5586
      %v5782 = vpop.f32.mrb[0].mxu0
      %v5783 = vadd.f32 %v5667, %v5782
      %v5784 = vpop.f32.mrb[0].mxu0
      %v5785 = vpop.f32.mrb[0].mxu0
      %v5786 = vadd.f32 %v5667, %v5785
      %v5787 = vpop.f32.mrb[0].mxu0
      %5788 = vmatprep.mubr.bf16.mxu0 0
      %5789 = vmatmul.mubr.bf16.gmra.mrb[0].mxu0 %v5587
      %v5790 = vpop.f32.mrb[0].mxu0
      %v5791 = vadd.f32 %v5667, %v5790
      %v5792 = vpop.f32.mrb[0].mxu0
      %v5793 = vpop.f32.mrb[0].mxu0
      %v5794 = vadd.f32 %v5667, %v5793
      %v5795 = vpop.f32.mrb[0].mxu0
      %5796 = vmatprep.mubr.bf16.mxu0 0
      %5797 = vmatmul.mubr.bf16.gmra.mrb[0].mxu0 %v5588
      %v5798 = vpop.f32.mrb[0].mxu0
      %v5799 = vadd.f32 %v5667, %v5798
      %v5800 = vpop.f32.mrb[0].mxu0
      %v5801 = vpop.f32.mrb[0].mxu0
      %v5802 = vadd.f32 %v5667, %v5801
      %v5803 = vpop.f32.mrb[0].mxu0
      %5804 = vmatprep.mubr.bf16.mxu0 0
      %5805 = vmatmul.mubr.bf16.gmra.mrb[0].mxu0 %v5589
      %v5806 = vpop.f32.mrb[0].mxu0
      %v5807 = vadd.f32 %v5667, %v5806
      %v5808 = vpop.f32.mrb[0].mxu0
      %v5809 = vpop.f32.mrb[0].mxu0
      %v5810 = vadd.f32 %v5667, %v5809
      %v5811 = vpop.f32.mrb[0].mxu0
      %5812 = vmatprep.mubr.bf16.mxu0 0
      %5813 = vmatmul.mubr.bf16.gmra.mrb[0].mxu0 %v5590
      %v5814 = vpop.f32.mrb[0].mxu0
      %v5815 = vadd.f32 %v5667, %v5814
      %v5816 = vpop.f32.mrb[0].mxu0
      %v5817 = vpop.f32.mrb[0].mxu0
      %v5818 = vadd.f32 %v5667, %v5817
      %v5819 = vpop.f32.mrb[0].mxu0
      %5820 = vmatprep.mubr.bf16.mxu0 0
      %5821 = vmatmul.mubr.bf16.gmra.mrb[0].mxu0 %v5591
      %v5822 = vpop.f32.mrb[0].mxu0
      %v5823 = vadd.f32 %v5667, %v5822
      %v5824 = vpop.f32.mrb[0].mxu0
      %v5825 = vpop.f32.mrb[0].mxu0
      %v5826 = vadd.f32 %v5667, %v5825
      %v5827 = vpop.f32.mrb[0].mxu0
      %5828 = vmatprep.mubr.bf16.mxu0 0
      %5829 = vmatmul.mubr.bf16.gmra.mrb[0].mxu0 %v5592
      %v5830 = vpop.f32.mrb[0].mxu0
      %v5831 = vadd.f32 %v5667, %v5830
      %v5832 = vpop.f32.mrb[0].mxu0
      %v5833 = vpop.f32.mrb[0].mxu0
      %v5834 = vadd.f32 %v5667, %v5833
      %v5835 = vpop.f32.mrb[0].mxu0
      %5836 = vmatprep.mubr.bf16.mxu0 0
      %5837 = vmatmul.mubr.bf16.gmra.mrb[0].mxu0 %v5593
      %v5838 = vpop.f32.mrb[0].mxu0
      %v5839 = vadd.f32 %v5667, %v5838
      %v5840 = vpop.f32.mrb[0].mxu0
      %v5841 = vpop.f32.mrb[0].mxu0
      %v5842 = vadd.f32 %v5667, %v5841
      %v5843 = vpop.f32.mrb[0].mxu0
      %5844 = vmatprep.mubr.bf16.mxu0 0
      %5845 = vmatmul.mubr.bf16.gmra.mrb[0].mxu0 %v5594
      %v5846 = vpop.f32.mrb[0].mxu0
      %v5847 = vadd.f32 %v5667, %v5846
      %v5848 = vpop.f32.mrb[0].mxu0
      %v5849 = vpop.f32.mrb[0].mxu0
      %v5850 = vadd.f32 %v5667, %v5849
      %v5851 = vpop.f32.mrb[0].mxu0
      %5852 = vmatprep.mubr.bf16.mxu0 0
      %5853 = vmatmul.mubr.bf16.gmra.mrb[0].mxu0 %v5595
      %v5854 = vpop.f32.mrb[0].mxu0
      %v5855 = vadd.f32 %v5667, %v5854
      %v5856 = vpop.f32.mrb[0].mxu0
      %v5857 = vpop.f32.mrb[0].mxu0
      %v5858 = vadd.f32 %v5667, %v5857
      %v5859 = vpop.f32.mrb[0].mxu0
      %5860 = vmatprep.mubr.bf16.mxu0 0
      %5861 = vmatmul.mubr.bf16.gmra.mrb[0].mxu0 %v5596
      %v5862 = vpop.f32.mrb[0].mxu0
      %v5863 = vadd.f32 %v5667, %v5862
      %v5864 = vpop.f32.mrb[0].mxu0
      %v5865 = vpop.f32.mrb[0].mxu0
      %v5866 = vadd.f32 %v5667, %v5865
      %v5867 = vpop.f32.mrb[0].mxu0
      %5868 = vmatprep.mubr.bf16.mxu0 0
      %5869 = vmatmul.mubr.bf16.gmra.mrb[0].mxu0 %v5597
      %v5870 = vpop.f32.mrb[0].mxu0
      %v5871 = vadd.f32 %v5667, %v5870
      %v5872 = vpop.f32.mrb[0].mxu0
      %v5873 = vpop.f32.mrb[0].mxu0
      %v5874 = vadd.f32 %v5667, %v5873
      %v5875 = vpop.f32.mrb[0].mxu0
      %5876 = vmatprep.mubr.bf16.mxu0 0
      %5877 = vmatmul.mubr.bf16.gmra.mrb[0].mxu0 %v5598
      %v5878 = vpop.f32.mrb[0].mxu0
      %v5879 = vadd.f32 %v5667, %v5878
      %v5880 = vpop.f32.mrb[0].mxu0
      %v5881 = vpop.f32.mrb[0].mxu0
      %v5882 = vadd.f32 %v5667, %v5881
      %v5883 = vpop.f32.mrb[0].mxu0
      %5884 = vmatprep.mubr.bf16.mxu0 0
      %5885 = vmatmul.mubr.bf16.gmra.mrb[0].mxu0 %v5599
      %v5886 = vpop.f32.mrb[0].mxu0
      %v5887 = vadd.f32 %v5667, %v5886
      %v5888 = vpop.f32.mrb[0].mxu0
      %v5889 = vpop.f32.mrb[0].mxu0
      %v5890 = vadd.f32 %v5667, %v5889
      %v5891 = vpop.f32.mrb[0].mxu0
      %5892 = vmatprep.mubr.bf16.mxu0 0
      %5893 = vmatmul.mubr.bf16.gmra.mrb[0].mxu0 %v5600
      %v5894 = vpop.f32.mrb[0].mxu0
      %v5895 = vadd.f32 %v5667, %v5894
      %v5896 = vpop.f32.mrb[0].mxu0
      %v5897 = vpop.f32.mrb[0].mxu0
      %v5898 = vadd.f32 %v5667, %v5897
      %v5899 = vpop.f32.mrb[0].mxu0
      %5900 = vmatprep.mubr.bf16.mxu0 0
      %5901 = vmatmul.mubr.bf16.gmra.mrb[0].mxu0 %v5601
      %v5902 = vpop.f32.mrb[0].mxu0
      %v5903 = vadd.f32 %v5667, %v5902
      %v5904 = vpop.f32.mrb[0].mxu0
      %v5905 = vpop.f32.mrb[0].mxu0
      %v5906 = vadd.f32 %v5667, %v5905
      %v5907 = vpop.f32.mrb[0].mxu0
      %5908 = vmatprep.mubr.bf16.mxu0 0
      %5909 = vmatmul.mubr.bf16.gmra.mrb[0].mxu0 %v5602
      %v5910 = vpop.f32.mrb[0].mxu0
      %v5911 = vadd.f32 %v5667, %v5910
      %v5912 = vpop.f32.mrb[0].mxu0
      %v5913 = vpop.f32.mrb[0].mxu0
      %v5914 = vadd.f32 %v5667, %v5913
      %v5915 = vpop.f32.mrb[0].mxu0
      %5916 = vmatprep.mubr.bf16.mxu0 0
      %5917 = vmatmul.mubr.bf16.gmra.mrb[0].mxu0 %v5603
      %v5918 = vpop.f32.mrb[0].mxu0
      %v5919 = vadd.f32 %v5667, %v5918
      %v5920 = vpop.f32.mrb[0].mxu0
      %v5921 = vpop.f32.mrb[0].mxu0
      %v5922 = vadd.f32 %v5667, %v5921
      %v5923 = vpop.f32.mrb[0].mxu0
      %5924 = vmatprep.mubr.bf16.mxu0 0
      %5925 = vmatmul.mubr.bf16.gmra.mrb[0].mxu0 %v5604
      %v5926 = vpop.f32.mrb[0].mxu0
      %v5927 = vadd.f32 %v5667, %v5926
      %v5928 = vpop.f32.mrb[0].mxu0
      %v5929 = vpop.f32.mrb[0].mxu0
      %v5930 = vadd.f32 %v5667, %v5929
      %v5931 = vpop.f32.mrb[0].mxu0
      %5932 = vmatprep.mubr.bf16.mxu0 0
      %5933 = vmatmul.mubr.bf16.gmra.mrb[0].mxu0 %v5605
      %v5934 = vpop.f32.mrb[0].mxu0
      %v5935 = vadd.f32 %v5667, %v5934
      %v5936 = vpop.f32.mrb[0].mxu0
      %v5937 = vpop.f32.mrb[0].mxu0
      %v5938 = vadd.f32 %v5667, %v5937
      %v5939 = vpop.f32.mrb[0].mxu0
      %5940 = vmatprep.mubr.bf16.mxu0 0
      %5941 = vmatmul.mubr.bf16.gmra.mrb[0].mxu0 %v5606
      %v5942 = vpop.f32.mrb[0].mxu0
      %v5943 = vadd.f32 %v5667, %v5942
      %v5944 = vpop.f32.mrb[0].mxu0
      %v5945 = vpop.f32.mrb[0].mxu0
      %v5946 = vadd.f32 %v5667, %v5945
      %v5947 = vpop.f32.mrb[0].mxu0
      %5948 = vmatprep.mubr.bf16.mxu0 0
      %5949 = vmatmul.mubr.bf16.gmra.mrb[0].mxu0 %v5607
      %v5950 = vpop.f32.mrb[0].mxu0
      %v5951 = vadd.f32 %v5667, %v5950
      %v5952 = vpop.f32.mrb[0].mxu0
      %v5953 = vpop.f32.mrb[0].mxu0
      %v5954 = vadd.f32 %v5667, %v5953
      %v5955 = vpop.f32.mrb[0].mxu0
      %5956 = vmatprep.mubr.bf16.mxu0 0
      %5957 = vmatmul.mubr.bf16.gmra.mrb[0].mxu0 %v5608
      %v5958 = vpop.f32.mrb[0].mxu0
      %v5959 = vadd.f32 %v5667, %v5958
      %v5960 = vpop.f32.mrb[0].mxu0
      %v5961 = vpop.f32.mrb[0].mxu0
      %v5962 = vadd.f32 %v5667, %v5961
      %v5963 = vpop.f32.mrb[0].mxu0
      %5964 = vmatprep.mubr.bf16.mxu0 0
      %5965 = vmatmul.mubr.bf16.gmra.mrb[0].mxu0 %v5609
      %v5966 = vpop.f32.mrb[0].mxu0
      %v5967 = vadd.f32 %v5667, %v5966
      %v5968 = vpop.f32.mrb[0].mxu0
      %v5969 = vpop.f32.mrb[0].mxu0
      %v5970 = vadd.f32 %v5667, %v5969
      %v5971 = vpop.f32.mrb[0].mxu0
      %5972 = vmatprep.mubr.bf16.mxu0 0
      %5973 = vmatmul.mubr.bf16.gmra.mrb[0].mxu0 %v5610
      %v5974 = vpop.f32.mrb[0].mxu0
      %v5975 = vadd.f32 %v5667, %v5974
      %v5976 = vpop.f32.mrb[0].mxu0
      %v5977 = vpop.f32.mrb[0].mxu0
      %v5978 = vadd.f32 %v5667, %v5977
      %v5979 = vpop.f32.mrb[0].mxu0
      %5980 = vmatprep.mubr.bf16.mxu0 0
      %5981 = vmatmul.mubr.bf16.gmra.mrb[0].mxu0 %v5611
      %v5982 = vpop.f32.mrb[0].mxu0
      %v5983 = vadd.f32 %v5667, %v5982
      %v5984 = vpop.f32.mrb[0].mxu0
      %v5985 = vpop.f32.mrb[0].mxu0
      %v5986 = vadd.f32 %v5667, %v5985
      %v5987 = vpop.f32.mrb[0].mxu0
      %5988 = vmatprep.mubr.bf16.mxu0 0
      %5989 = vmatmul.mubr.bf16.gmra.mrb[0].mxu0 %v5612
      %v5990 = vpop.f32.mrb[0].mxu0
      %v5991 = vadd.f32 %v5667, %v5990
      %v5992 = vpop.f32.mrb[0].mxu0
      %v5993 = vpop.f32.mrb[0].mxu0
      %v5994 = vadd.f32 %v5667, %v5993
      %v5995 = vpop.f32.mrb[0].mxu0
      %5996 = vmatprep.mubr.bf16.mxu0 0
      %5997 = vmatmul.mubr.bf16.gmra.mrb[0].mxu0 %v5613
      %v5998 = vpop.f32.mrb[0].mxu0
      %v5999 = vadd.f32 %v5667, %v5998
      %v6000 = vpop.f32.mrb[0].mxu0
      %v6001 = vpop.f32.mrb[0].mxu0
      %v6002 = vadd.f32 %v5667, %v6001
      %v6003 = vpop.f32.mrb[0].mxu0
      %6004 = vmatprep.mubr.bf16.mxu0 0
      %6005 = vmatmul.mubr.bf16.gmra.mrb[0].mxu0 %v5614
      %v6006 = vpop.f32.mrb[0].mxu0
      %v6007 = vadd.f32 %v5667, %v6006
      %v6008 = vpop.f32.mrb[0].mxu0
      %v6009 = vpop.f32.mrb[0].mxu0
      %v6010 = vadd.f32 %v5667, %v6009
      %v6011 = vpop.f32.mrb[0].mxu0
      %6012 = vmatprep.mubr.bf16.mxu0 0
      %6013 = vmatmul.mubr.bf16.gmra.mrb[0].mxu0 %v5615
      %v6014 = vpop.f32.mrb[0].mxu0
      %v6015 = vadd.f32 %v5667, %v6014
      %v6016 = vpop.f32.mrb[0].mxu0
      %v6017 = vpop.f32.mrb[0].mxu0
      %v6018 = vadd.f32 %v5667, %v6017
      %v6019 = vpop.f32.mrb[0].mxu0
      %6020 = vmatprep.mubr.bf16.mxu0 0
      %6021 = vmatmul.mubr.bf16.gmra.mrb[0].mxu0 %v5616
      %v6022 = vpop.f32.mrb[0].mxu0
      %v6023 = vadd.f32 %v5667, %v6022
      %v6024 = vpop.f32.mrb[0].mxu0
      %v6025 = vpop.f32.mrb[0].mxu0
      %v6026 = vadd.f32 %v5667, %v6025
      %v6027 = vpop.f32.mrb[0].mxu0
      %6028 = vmatprep.mubr.bf16.mxu0 0
      %6029 = vmatmul.mubr.bf16.gmra.mrb[0].mxu0 %v5617
      %v6030 = vpop.f32.mrb[0].mxu0
      %v6031 = vadd.f32 %v5667, %v6030
      %v6032 = vpop.f32.mrb[0].mxu0
      %v6033 = vpop.f32.mrb[0].mxu0
      %v6034 = vadd.f32 %v5667, %v6033
      %v6035 = vpop.f32.mrb[0].mxu0
      %6036 = vmatprep.mubr.bf16.mxu0 0
      %6037 = vmatmul.mubr.bf16.gmra.mrb[0].mxu0 %v5618
      %v6038 = vpop.f32.mrb[0].mxu0
      %v6039 = vadd.f32 %v5667, %v6038
      %v6040 = vpop.f32.mrb[0].mxu0
      %v6041 = vpop.f32.mrb[0].mxu0
      %v6042 = vadd.f32 %v5667, %v6041
      %v6043 = vpop.f32.mrb[0].mxu0
      %6044 = vmatprep.mubr.bf16.mxu0 0
      %6045 = vmatmul.mubr.bf16.gmra.mrb[0].mxu0 %v5619
      %v6046 = vpop.f32.mrb[0].mxu0
      %v6047 = vadd.f32 %v5667, %v6046
      %v6048 = vpop.f32.mrb[0].mxu0
      %v6049 = vpop.f32.mrb[0].mxu0
      %v6050 = vadd.f32 %v5667, %v6049
      %v6051 = vpop.f32.mrb[0].mxu0
      %6052 = vmatprep.mubr.bf16.mxu0 0
      %6053 = vmatmul.mubr.bf16.gmra.mrb[0].mxu0 %v5620
      %v6054 = vpop.f32.mrb[0].mxu0
      %v6055 = vadd.f32 %v5667, %v6054
      %v6056 = vpop.f32.mrb[0].mxu0
      %v6057 = vpop.f32.mrb[0].mxu0
      %v6058 = vadd.f32 %v5667, %v6057
      %v6059 = vpop.f32.mrb[0].mxu0
      %6060 = vmatprep.mubr.bf16.mxu0 0
      %6061 = vmatmul.mubr.bf16.gmra.mrb[0].mxu0 %v5621
      %v6062 = vpop.f32.mrb[0].mxu0
      %v6063 = vadd.f32 %v5667, %v6062
      %v6064 = vpop.f32.mrb[0].mxu0
      %v6065 = vpop.f32.mrb[0].mxu0
      %v6066 = vadd.f32 %v5667, %v6065
      %v6067 = vpop.f32.mrb[0].mxu0
      %6068 = vmatprep.mubr.bf16.mxu0 0
      %6069 = vmatmul.mubr.bf16.gmra.mrb[0].mxu0 %v5622
      %v6070 = vpop.f32.mrb[0].mxu0
      %v6071 = vadd.f32 %v5667, %v6070
      %v6072 = vpop.f32.mrb[0].mxu0
      %v6073 = vpop.f32.mrb[0].mxu0
      %v6074 = vadd.f32 %v5667, %v6073
      %v6075 = vpop.f32.mrb[0].mxu0
      %6076 = vmatprep.mubr.bf16.mxu0 0
      %6077 = vmatmul.mubr.bf16.gmra.mrb[0].mxu0 %v5623
      %v6078 = vpop.f32.mrb[0].mxu0
      %v6079 = vadd.f32 %v5667, %v6078
      %v6080 = vpop.f32.mrb[0].mxu0
      %v6081 = vpop.f32.mrb[0].mxu0
      %v6082 = vadd.f32 %v5667, %v6081
      %v6083 = vpop.f32.mrb[0].mxu0
      %6084 = vmatprep.mubr.bf16.mxu0 0
      %6085 = vmatmul.mubr.bf16.gmra.mrb[0].mxu0 %v5624
      %v6086 = vpop.f32.mrb[0].mxu0
      %v6087 = vadd.f32 %v5667, %v6086
      %v6088 = vpop.f32.mrb[0].mxu0
      %v6089 = vpop.f32.mrb[0].mxu0
      %v6090 = vadd.f32 %v5667, %v6089
      %v6091 = vpop.f32.mrb[0].mxu0
      %6092 = vmatprep.mubr.bf16.mxu0 0
      %6093 = vmatmul.mubr.bf16.gmra.mrb[0].mxu0 %v5625
      %v6094 = vpop.f32.mrb[0].mxu0
      %v6095 = vadd.f32 %v5667, %v6094
      %v6096 = vpop.f32.mrb[0].mxu0
      %v6097 = vpop.f32.mrb[0].mxu0
      %v6098 = vadd.f32 %v5667, %v6097
      %v6099 = vpop.f32.mrb[0].mxu0
      %6100 = vmatprep.mubr.bf16.mxu0 0
      %6101 = vmatmul.mubr.bf16.gmra.mrb[0].mxu0 %v5626
      %v6102 = vpop.f32.mrb[0].mxu0
      %v6103 = vadd.f32 %v5667, %v6102
      %v6104 = vpop.f32.mrb[0].mxu0
      %v6105 = vpop.f32.mrb[0].mxu0
      %v6106 = vadd.f32 %v5667, %v6105
      %v6107 = vpop.f32.mrb[0].mxu0
      %6108 = vmatprep.mubr.bf16.mxu0 0
      %6109 = vmatmul.mubr.bf16.gmra.mrb[0].mxu0 %v5627
      %v6110 = vpop.f32.mrb[0].mxu0
      %v6111 = vadd.f32 %v5667, %v6110
      %v6112 = vpop.f32.mrb[0].mxu0
      %v6113 = vpop.f32.mrb[0].mxu0
      %v6114 = vadd.f32 %v5667, %v6113
      %v6115 = vpop.f32.mrb[0].mxu0
      %6116 = vmatprep.mubr.bf16.mxu0 0
      %6117 = vmatmul.mubr.bf16.gmra.mrb[0].mxu0 %v5628
      %v6118 = vpop.f32.mrb[0].mxu0
      %v6119 = vadd.f32 %v5667, %v6118
      %v6120 = vpop.f32.mrb[0].mxu0
      %v6121 = vpop.f32.mrb[0].mxu0
      %v6122 = vadd.f32 %v5667, %v6121
      %v6123 = vpop.f32.mrb[0].mxu0
      %6124 = vmatprep.mubr.bf16.mxu0 0
      %6125 = vmatmul.mubr.bf16.gmra.mrb[0].mxu0 %v5629
      %v6126 = vpop.f32.mrb[0].mxu0
      %v6127 = vadd.f32 %v5667, %v6126
      %v6128 = vpop.f32.mrb[0].mxu0
      %v6129 = vpop.f32.mrb[0].mxu0
      %v6130 = vadd.f32 %v5667, %v6129
      %v6131 = vpop.f32.mrb[0].mxu0
      %6132 = vmatprep.mubr.bf16.mxu0 0
      %6133 = vmatmul.mubr.bf16.gmra.mrb[0].mxu0 %v5630
      %v6134 = vpop.f32.mrb[0].mxu0
      %v6135 = vadd.f32 %v5667, %v6134
      %v6136 = vpop.f32.mrb[0].mxu0
      %v6137 = vpop.f32.mrb[0].mxu0
      %v6138 = vadd.f32 %v5667, %v6137
      %v6139 = vpop.f32.mrb[0].mxu0
      %6140 = vmatprep.mubr.bf16.mxu0 0
      %6141 = vmatmul.mubr.bf16.gmra.mrb[0].mxu0 %v5631
      %v6142 = vpop.f32.mrb[0].mxu0
      %v6143 = vadd.f32 %v5667, %v6142
      %v6144 = vpop.f32.mrb[0].mxu0
      %v6145 = vpop.f32.mrb[0].mxu0
      %v6146 = vadd.f32 %v5667, %v6145
      %v6147 = vpop.f32.mrb[0].mxu0
      %6148 = vmatprep.mubr.bf16.mxu0 0
      %6149 = vmatmul.mubr.bf16.gmra.mrb[0].mxu0 %v5632
      %v6150 = vpop.f32.mrb[0].mxu0
      %v6151 = vadd.f32 %v5667, %v6150
      %v6152 = vpop.f32.mrb[0].mxu0
      %v6153 = vpop.f32.mrb[0].mxu0
      %v6154 = vadd.f32 %v5667, %v6153
      %v6155 = vpop.f32.mrb[0].mxu0
      %6156 = vmatprep.mubr.bf16.mxu0 0
      %6157 = vmatmul.mubr.bf16.gmra.mrb[0].mxu0 %v5633
      %v6158 = vpop.f32.mrb[0].mxu0
      %v6159 = vadd.f32 %v5667, %v6158
      %v6160 = vpop.f32.mrb[0].mxu0
      %v6161 = vpop.f32.mrb[0].mxu0
      %v6162 = vadd.f32 %v5667, %v6161
      %v6163 = vpop.f32.mrb[0].mxu0
      %6164 = vmatprep.mubr.bf16.mxu0 0
      %6165 = vmatmul.mubr.bf16.gmra.mrb[0].mxu0 %v5634
      %v6166 = vpop.f32.mrb[0].mxu0
      %v6167 = vadd.f32 %v5667, %v6166
      %v6168 = vpop.f32.mrb[0].mxu0
      %v6169 = vpop.f32.mrb[0].mxu0
      %v6170 = vadd.f32 %v5667, %v6169
      %v6171 = vpop.f32.mrb[0].mxu0
      %6172 = vmatprep.mubr.bf16.mxu0 0
      %6173 = vmatmul.mubr.bf16.gmra.mrb[0].mxu0 %v5635
      %v6174 = vpop.f32.mrb[0].mxu0
      %v6175 = vadd.f32 %v5667, %v6174
      %v6176 = vpop.f32.mrb[0].mxu0
      %v6177 = vpop.f32.mrb[0].mxu0
      %v6178 = vadd.f32 %v5667, %v6177
      %v6179 = vpop.f32.mrb[0].mxu0
      %6180 = vmatprep.mubr.bf16.mxu0 0
      %6181 = vmatmul.mubr.bf16.gmra.mrb[0].mxu0 %v5636
      %v6182 = vpop.f32.mrb[0].mxu0
      %v6183 = vadd.f32 %v5667, %v6182
      %v6184 = vpop.f32.mrb[0].mxu0
      %v6185 = vpop.f32.mrb[0].mxu0
      %v6186 = vadd.f32 %v5667, %v6185
      %v6187 = vpop.f32.mrb[0].mxu0
      %6188 = vmatprep.mubr.bf16.mxu0 0
      %6189 = vmatmul.mubr.bf16.gmra.mrb[0].mxu0 %v5637
      %v6190 = vpop.f32.mrb[0].mxu0
      %v6191 = vadd.f32 %v5667, %v6190
      %v6192 = vpop.f32.mrb[0].mxu0
      %v6193 = vpop.f32.mrb[0].mxu0
      %v6194 = vadd.f32 %v5667, %v6193
      %v6195 = vpop.f32.mrb[0].mxu0
      %6196 = vmatprep.mubr.bf16.mxu0 0
      %6197 = vmatmul.mubr.bf16.gmra.mrb[0].mxu0 %v5638
      %v6198 = vpop.f32.mrb[0].mxu0
      %v6199 = vadd.f32 %v5667, %v6198
      %v6200 = vpop.f32.mrb[0].mxu0
      %v6201 = vpop.f32.mrb[0].mxu0
      %v6202 = vadd.f32 %v5667, %v6201
      %v6203 = vpop.f32.mrb[0].mxu0
      %6204 = vmatprep.mubr.bf16.mxu0 0
      %6205 = vmatmul.mubr.bf16.gmra.mrb[0].mxu0 %v5639
      %v6206 = vpop.f32.mrb[0].mxu0
      %v6207 = vadd.f32 %v5667, %v6206
      %v6208 = vpop.f32.mrb[0].mxu0
      %v6209 = vpop.f32.mrb[0].mxu0
      %v6210 = vadd.f32 %v5667, %v6209
      %v6211 = vpop.f32.mrb[0].mxu0
      %6212 = vmatprep.mubr.bf16.mxu0 0
      %6213 = vmatmul.mubr.bf16.gmra.mrb[0].mxu0 %v5640
      %v6214 = vpop.f32.mrb[0].mxu0
      %v6215 = vadd.f32 %v5667, %v6214
      %v6216 = vpop.f32.mrb[0].mxu0
      %v6217 = vpop.f32.mrb[0].mxu0
      %v6218 = vadd.f32 %v5667, %v6217
      %v6219 = vpop.f32.mrb[0].mxu0
      %6220 = vmatprep.mubr.bf16.mxu0 0
      %6221 = vmatmul.mubr.bf16.gmra.mrb[0].mxu0 %v5641
      %v6222 = vpop.f32.mrb[0].mxu0
      %v6223 = vadd.f32 %v5667, %v6222
      %v6224 = vpop.f32.mrb[0].mxu0
      %v6225 = vpop.f32.mrb[0].mxu0
      %v6226 = vadd.f32 %v5667, %v6225
      %v6227 = vpop.f32.mrb[0].mxu0
      %6228 = vmatprep.mubr.bf16.mxu0 0
      %6229 = vmatmul.mubr.bf16.gmra.mrb[0].mxu0 %v5642
      %v6230 = vpop.f32.mrb[0].mxu0
      %v6231 = vadd.f32 %v5667, %v6230
      %v6232 = vpop.f32.mrb[0].mxu0
      %v6233 = vpop.f32.mrb[0].mxu0
      %v6234 = vadd.f32 %v5667, %v6233
      %v6235 = vpop.f32.mrb[0].mxu0
      %6236 = vmatprep.mubr.bf16.mxu0 0
      %6237 = vmatmul.mubr.bf16.gmra.mrb[0].mxu0 %v5643
      %v6238 = vpop.f32.mrb[0].mxu0
      %v6239 = vadd.f32 %v5667, %v6238
      %v6240 = vpop.f32.mrb[0].mxu0
      %v6241 = vpop.f32.mrb[0].mxu0
      %v6242 = vadd.f32 %v5667, %v6241
      %v6243 = vpop.f32.mrb[0].mxu0
      %6244 = vmatprep.mubr.bf16.mxu0 0
      %6245 = vmatmul.mubr.bf16.gmra.mrb[0].mxu0 %v5644
      %v6246 = vpop.f32.mrb[0].mxu0
      %v6247 = vadd.f32 %v5667, %v6246
      %v6248 = vpop.f32.mrb[0].mxu0
      %v6249 = vpop.f32.mrb[0].mxu0
      %v6250 = vadd.f32 %v5667, %v6249
      %v6251 = vpop.f32.mrb[0].mxu0
      %6252 = vmatprep.mubr.bf16.mxu0 0
      %6253 = vmatmul.mubr.bf16.gmra.mrb[0].mxu0 %v5645
      %v6254 = vpop.f32.mrb[0].mxu0
      %v6255 = vadd.f32 %v5667, %v6254
      %v6256 = vpop.f32.mrb[0].mxu0
      %v6257 = vpop.f32.mrb[0].mxu0
      %v6258 = vadd.f32 %v5667, %v6257
      %v6259 = vpop.f32.mrb[0].mxu0
      %6260 = vdwg.mxu0
      %v6261 = vpack.c.bf16 %v5754, %v5751
      %v6262 = vpack.c.bf16 %v5762, %v5759
      %v6263 = vpack.c.bf16 %v5770, %v5767
      %v6264 = vpack.c.bf16 %v5778, %v5775
      %v6265 = vpack.c.bf16 %v5786, %v5783
      %v6266 = vpack.c.bf16 %v5794, %v5791
      %v6267 = vpack.c.bf16 %v5802, %v5799
      %v6268 = vpack.c.bf16 %v5810, %v5807
      %v6269 = vpack.c.bf16 %v5818, %v5815
      %v6270 = vpack.c.bf16 %v5826, %v5823
      %v6271 = vpack.c.bf16 %v5834, %v5831
      %v6272 = vpack.c.bf16 %v5842, %v5839
      %v6273 = vpack.c.bf16 %v5850, %v5847
      %v6274 = vpack.c.bf16 %v5858, %v5855
      %v6275 = vpack.c.bf16 %v5866, %v5863
      %v6276 = vpack.c.bf16 %v5874, %v5871
      %v6277 = vpack.c.bf16 %v5882, %v5879
      %v6278 = vpack.c.bf16 %v5890, %v5887
      %v6279 = vpack.c.bf16 %v5898, %v5895
      %v6280 = vpack.c.bf16 %v5906, %v5903
      %v6281 = vpack.c.bf16 %v5914, %v5911
      %v6282 = vpack.c.bf16 %v5922, %v5919
      %v6283 = vpack.c.bf16 %v5930, %v5927
      %v6284 = vpack.c.bf16 %v5938, %v5935
      %v6285 = vpack.c.bf16 %v5946, %v5943
      %v6286 = vpack.c.bf16 %v5954, %v5951
      %v6287 = vpack.c.bf16 %v5962, %v5959
      %v6288 = vpack.c.bf16 %v5970, %v5967
      %v6289 = vpack.c.bf16 %v5978, %v5975
      %v6290 = vpack.c.bf16 %v5986, %v5983
      %v6291 = vpack.c.bf16 %v5994, %v5991
      %v6292 = vpack.c.bf16 %v6002, %v5999
      %v6293 = vpack.c.bf16 %v6010, %v6007
      %v6294 = vpack.c.bf16 %v6018, %v6015
      %v6295 = vpack.c.bf16 %v6026, %v6023
      %v6296 = vpack.c.bf16 %v6034, %v6031
      %v6297 = vpack.c.bf16 %v6042, %v6039
      %v6298 = vpack.c.bf16 %v6050, %v6047
      %v6299 = vpack.c.bf16 %v6058, %v6055
      %v6300 = vpack.c.bf16 %v6066, %v6063
      %v6301 = vpack.c.bf16 %v6074, %v6071
      %v6302 = vpack.c.bf16 %v6082, %v6079
      %v6303 = vpack.c.bf16 %v6090, %v6087
      %v6304 = vpack.c.bf16 %v6098, %v6095
      %v6305 = vpack.c.bf16 %v6106, %v6103
      %v6306 = vpack.c.bf16 %v6114, %v6111
      %v6307 = vpack.c.bf16 %v6122, %v6119
      %v6308 = vpack.c.bf16 %v6130, %v6127
      %v6309 = vpack.c.bf16 %v6138, %v6135
      %v6310 = vpack.c.bf16 %v6146, %v6143
      %v6311 = vpack.c.bf16 %v6154, %v6151
      %v6312 = vpack.c.bf16 %v6162, %v6159
      %v6313 = vpack.c.bf16 %v6170, %v6167
      %v6314 = vpack.c.bf16 %v6178, %v6175
      %v6315 = vpack.c.bf16 %v6186, %v6183
      %v6316 = vpack.c.bf16 %v6194, %v6191
      %v6317 = vpack.c.bf16 %v6202, %v6199
      %v6318 = vpack.c.bf16 %v6210, %v6207
      %v6319 = vpack.c.bf16 %v6218, %v6215
      %v6320 = vpack.c.bf16 %v6226, %v6223
      %v6321 = vpack.c.bf16 %v6234, %v6231
      %v6322 = vpack.c.bf16 %v6242, %v6239
      %v6323 = vpack.c.bf16 %v6250, %v6247
      %v6324 = vpack.c.bf16 %v6258, %v6255
      %s6325 = scalar_lea.vmem %s2, 192
      %v6326 = vld [vmem:[%s6325] sm:$0xf]
      %v6327 = vld [vmem:[%s6325 + $0x4] sm:$0xf]
      %v6328 = vld [vmem:[%s6325 + $0x8] sm:$0xf]
      %v6329 = vld [vmem:[%s6325 + $0xc] sm:$0xf]
      %v6330 = vld [vmem:[%s6325 + $0x10] sm:$0xf]
      %v6331 = vld [vmem:[%s6325 + $0x14] sm:$0xf]
      %v6332 = vld [vmem:[%s6325 + $0x18] sm:$0xf]
      %v6333 = vld [vmem:[%s6325 + $0x1c] sm:$0xf]
      %v6334 = vld [vmem:[%s6325 + $0x20] sm:$0xf]
      %v6335 = vld [vmem:[%s6325 + $0x24] sm:$0xf]
      %v6336 = vld [vmem:[%s6325 + $0x28] sm:$0xf]
      %v6337 = vld [vmem:[%s6325 + $0x2c] sm:$0xf]
      %v6338 = vld [vmem:[%s6325 + $0x30] sm:$0xf]
      %v6339 = vld [vmem:[%s6325 + $0x34] sm:$0xf]
      %v6340 = vld [vmem:[%s6325 + $0x38] sm:$0xf]
      %v6341 = vld [vmem:[%s6325 + $0x3c] sm:$0xf]
      %v6342 = vld [vmem:[%s3 + $0x3] sm:$0x1]
      %v6343 = vlaneseq
      %v6344 = vshrl.u32 %v6343, 7
      %v6345 = vsub.s32 0, %v6344
      %v6346 = vrot.slane %v6342, %v6345
      %v6363 = vunpack.c.l.b16 %v6326
      %v6364 = vunpack.c.l.b16 %v6327
      %v6365 = vunpack.c.l.b16 %v6328
      %v6366 = vunpack.c.l.b16 %v6329
      %v6367 = vunpack.c.l.b16 %v6330
      %v6368 = vunpack.c.l.b16 %v6331
      %v6369 = vunpack.c.l.b16 %v6332
      %v6370 = vunpack.c.l.b16 %v6333
      %v6371 = vunpack.c.l.b16 %v6334
      %v6372 = vunpack.c.l.b16 %v6335
      %v6373 = vunpack.c.l.b16 %v6336
      %v6374 = vunpack.c.l.b16 %v6337
      %v6375 = vunpack.c.l.b16 %v6338
      %v6376 = vunpack.c.l.b16 %v6339
      %v6377 = vunpack.c.l.b16 %v6340
      %v6378 = vunpack.c.l.b16 %v6341
      %v6379 = vpack.c.b16 %v6364, %v6363
      %v6380 = vpack.c.b16 %v6366, %v6365
      %v6381 = vpack.c.b16 %v6368, %v6367
      %v6382 = vpack.c.b16 %v6370, %v6369
      %v6383 = vpack.c.b16 %v6372, %v6371
      %v6384 = vpack.c.b16 %v6374, %v6373
      %v6385 = vpack.c.b16 %v6376, %v6375
      %v6386 = vpack.c.b16 %v6378, %v6377
      %6395 = vmatprep.subr.bf16.mxu0 0
      %6396 = vmatpush1.bf16.msra.mxu0 %v6379
      %6397 = vmatprep.subr.bf16.mxu0 0
      %6398 = vmatpush1.bf16.msra.mxu0 %v6380
      %6399 = vmatprep.subr.bf16.mxu0 0
      %6400 = vmatpush1.bf16.msra.mxu0 %v6381
      %6401 = vmatprep.subr.bf16.mxu0 0
      %6402 = vmatpush1.bf16.msra.mxu0 %v6382
      %6403 = vmatprep.subr.bf16.mxu0 0
      %6404 = vmatpush1.bf16.msra.mxu0 %v6383
      %6405 = vmatprep.subr.bf16.mxu0 0
      %6406 = vmatpush1.bf16.msra.mxu0 %v6384
      %6407 = vmatprep.subr.bf16.mxu0 0
      %6408 = vmatpush1.bf16.msra.mxu0 %v6385
      %6409 = vmatprep.subr.bf16.mxu0 0
      %6410 = vmatpush1.bf16.msra.mxu0 %v6386
      %6411 = vmatprep.subr.bf16.mxu0 0
      %6412 = vmatpush1.bf16.msra.mxu0 0
      %6413 = vmatprep.subr.bf16.mxu0 0
      %6414 = vmatpush1.bf16.msra.mxu0 0
      %6415 = vmatprep.subr.bf16.mxu0 0
      %6416 = vmatpush1.bf16.msra.mxu0 0
      %6417 = vmatprep.subr.bf16.mxu0 0
      %6418 = vmatpush1.bf16.msra.mxu0 0
      %6419 = vmatprep.subr.bf16.mxu0 0
      %6420 = vmatpush1.bf16.msra.mxu0 0
      %6421 = vmatprep.subr.bf16.mxu0 0
      %6422 = vmatpush1.bf16.msra.mxu0 0
      %6423 = vmatprep.subr.bf16.mxu0 0
      %6424 = vmatpush1.bf16.msra.mxu0 0
      %6425 = vmatprep.subr.bf16.mxu0 0
      %6426 = vmatpush1.bf16.msra.mxu0 0
      %6427 = vmatprep.mubr.bf16.mxu0 0
      %6428 = vmatmul.mubr.bf16.gmra.mrb[0].mxu0 %v6261
      %v6429 = vpop.f32.mrb[0].mxu0
      %v6430 = vadd.f32 %v6346, %v6429
      %v6431 = vpop.f32.mrb[0].mxu0
      %v6432 = vpop.f32.mrb[0].mxu0
      %v6433 = vadd.f32 %v6346, %v6432
      %v6434 = vpop.f32.mrb[0].mxu0
      %6435 = vmatprep.mubr.bf16.mxu0 0
      %6436 = vmatmul.mubr.bf16.gmra.mrb[0].mxu0 %v6262
      %v6437 = vpop.f32.mrb[0].mxu0
      %v6438 = vadd.f32 %v6346, %v6437
      %v6439 = vpop.f32.mrb[0].mxu0
      %v6440 = vpop.f32.mrb[0].mxu0
      %v6441 = vadd.f32 %v6346, %v6440
      %v6442 = vpop.f32.mrb[0].mxu0
      %6443 = vmatprep.mubr.bf16.mxu0 0
      %6444 = vmatmul.mubr.bf16.gmra.mrb[0].mxu0 %v6263
      %v6445 = vpop.f32.mrb[0].mxu0
      %v6446 = vadd.f32 %v6346, %v6445
      %v6447 = vpop.f32.mrb[0].mxu0
      %v6448 = vpop.f32.mrb[0].mxu0
      %v6449 = vadd.f32 %v6346, %v6448
      %v6450 = vpop.f32.mrb[0].mxu0
      %6451 = vmatprep.mubr.bf16.mxu0 0
      %6452 = vmatmul.mubr.bf16.gmra.mrb[0].mxu0 %v6264
      %v6453 = vpop.f32.mrb[0].mxu0
      %v6454 = vadd.f32 %v6346, %v6453
      %v6455 = vpop.f32.mrb[0].mxu0
      %v6456 = vpop.f32.mrb[0].mxu0
      %v6457 = vadd.f32 %v6346, %v6456
      %v6458 = vpop.f32.mrb[0].mxu0
      %6459 = vmatprep.mubr.bf16.mxu0 0
      %6460 = vmatmul.mubr.bf16.gmra.mrb[0].mxu0 %v6265
      %v6461 = vpop.f32.mrb[0].mxu0
      %v6462 = vadd.f32 %v6346, %v6461
      %v6463 = vpop.f32.mrb[0].mxu0
      %v6464 = vpop.f32.mrb[0].mxu0
      %v6465 = vadd.f32 %v6346, %v6464
      %v6466 = vpop.f32.mrb[0].mxu0
      %6467 = vmatprep.mubr.bf16.mxu0 0
      %6468 = vmatmul.mubr.bf16.gmra.mrb[0].mxu0 %v6266
      %v6469 = vpop.f32.mrb[0].mxu0
      %v6470 = vadd.f32 %v6346, %v6469
      %v6471 = vpop.f32.mrb[0].mxu0
      %v6472 = vpop.f32.mrb[0].mxu0
      %v6473 = vadd.f32 %v6346, %v6472
      %v6474 = vpop.f32.mrb[0].mxu0
      %6475 = vmatprep.mubr.bf16.mxu0 0
      %6476 = vmatmul.mubr.bf16.gmra.mrb[0].mxu0 %v6267
      %v6477 = vpop.f32.mrb[0].mxu0
      %v6478 = vadd.f32 %v6346, %v6477
      %v6479 = vpop.f32.mrb[0].mxu0
      %v6480 = vpop.f32.mrb[0].mxu0
      %v6481 = vadd.f32 %v6346, %v6480
      %v6482 = vpop.f32.mrb[0].mxu0
      %6483 = vmatprep.mubr.bf16.mxu0 0
      %6484 = vmatmul.mubr.bf16.gmra.mrb[0].mxu0 %v6268
      %v6485 = vpop.f32.mrb[0].mxu0
      %v6486 = vadd.f32 %v6346, %v6485
      %v6487 = vpop.f32.mrb[0].mxu0
      %v6488 = vpop.f32.mrb[0].mxu0
      %v6489 = vadd.f32 %v6346, %v6488
      %v6490 = vpop.f32.mrb[0].mxu0
      %6491 = vmatprep.mubr.bf16.mxu0 0
      %6492 = vmatmul.mubr.bf16.gmra.mrb[0].mxu0 %v6269
      %v6493 = vpop.f32.mrb[0].mxu0
      %v6494 = vadd.f32 %v6346, %v6493
      %v6495 = vpop.f32.mrb[0].mxu0
      %v6496 = vpop.f32.mrb[0].mxu0
      %v6497 = vadd.f32 %v6346, %v6496
      %v6498 = vpop.f32.mrb[0].mxu0
      %6499 = vmatprep.mubr.bf16.mxu0 0
      %6500 = vmatmul.mubr.bf16.gmra.mrb[0].mxu0 %v6270
      %v6501 = vpop.f32.mrb[0].mxu0
      %v6502 = vadd.f32 %v6346, %v6501
      %v6503 = vpop.f32.mrb[0].mxu0
      %v6504 = vpop.f32.mrb[0].mxu0
      %v6505 = vadd.f32 %v6346, %v6504
      %v6506 = vpop.f32.mrb[0].mxu0
      %6507 = vmatprep.mubr.bf16.mxu0 0
      %6508 = vmatmul.mubr.bf16.gmra.mrb[0].mxu0 %v6271
      %v6509 = vpop.f32.mrb[0].mxu0
      %v6510 = vadd.f32 %v6346, %v6509
      %v6511 = vpop.f32.mrb[0].mxu0
      %v6512 = vpop.f32.mrb[0].mxu0
      %v6513 = vadd.f32 %v6346, %v6512
      %v6514 = vpop.f32.mrb[0].mxu0
      %6515 = vmatprep.mubr.bf16.mxu0 0
      %6516 = vmatmul.mubr.bf16.gmra.mrb[0].mxu0 %v6272
      %v6517 = vpop.f32.mrb[0].mxu0
      %v6518 = vadd.f32 %v6346, %v6517
      %v6519 = vpop.f32.mrb[0].mxu0
      %v6520 = vpop.f32.mrb[0].mxu0
      %v6521 = vadd.f32 %v6346, %v6520
      %v6522 = vpop.f32.mrb[0].mxu0
      %6523 = vmatprep.mubr.bf16.mxu0 0
      %6524 = vmatmul.mubr.bf16.gmra.mrb[0].mxu0 %v6273
      %v6525 = vpop.f32.mrb[0].mxu0
      %v6526 = vadd.f32 %v6346, %v6525
      %v6527 = vpop.f32.mrb[0].mxu0
      %v6528 = vpop.f32.mrb[0].mxu0
      %v6529 = vadd.f32 %v6346, %v6528
      %v6530 = vpop.f32.mrb[0].mxu0
      %6531 = vmatprep.mubr.bf16.mxu0 0
      %6532 = vmatmul.mubr.bf16.gmra.mrb[0].mxu0 %v6274
      %v6533 = vpop.f32.mrb[0].mxu0
      %v6534 = vadd.f32 %v6346, %v6533
      %v6535 = vpop.f32.mrb[0].mxu0
      %v6536 = vpop.f32.mrb[0].mxu0
      %v6537 = vadd.f32 %v6346, %v6536
      %v6538 = vpop.f32.mrb[0].mxu0
      %6539 = vmatprep.mubr.bf16.mxu0 0
      %6540 = vmatmul.mubr.bf16.gmra.mrb[0].mxu0 %v6275
      %v6541 = vpop.f32.mrb[0].mxu0
      %v6542 = vadd.f32 %v6346, %v6541
      %v6543 = vpop.f32.mrb[0].mxu0
      %v6544 = vpop.f32.mrb[0].mxu0
      %v6545 = vadd.f32 %v6346, %v6544
      %v6546 = vpop.f32.mrb[0].mxu0
      %6547 = vmatprep.mubr.bf16.mxu0 0
      %6548 = vmatmul.mubr.bf16.gmra.mrb[0].mxu0 %v6276
      %v6549 = vpop.f32.mrb[0].mxu0
      %v6550 = vadd.f32 %v6346, %v6549
      %v6551 = vpop.f32.mrb[0].mxu0
      %v6552 = vpop.f32.mrb[0].mxu0
      %v6553 = vadd.f32 %v6346, %v6552
      %v6554 = vpop.f32.mrb[0].mxu0
      %6555 = vmatprep.mubr.bf16.mxu0 0
      %6556 = vmatmul.mubr.bf16.gmra.mrb[0].mxu0 %v6277
      %v6557 = vpop.f32.mrb[0].mxu0
      %v6558 = vadd.f32 %v6346, %v6557
      %v6559 = vpop.f32.mrb[0].mxu0
      %v6560 = vpop.f32.mrb[0].mxu0
      %v6561 = vadd.f32 %v6346, %v6560
      %v6562 = vpop.f32.mrb[0].mxu0
      %6563 = vmatprep.mubr.bf16.mxu0 0
      %6564 = vmatmul.mubr.bf16.gmra.mrb[0].mxu0 %v6278
      %v6565 = vpop.f32.mrb[0].mxu0
      %v6566 = vadd.f32 %v6346, %v6565
      %v6567 = vpop.f32.mrb[0].mxu0
      %v6568 = vpop.f32.mrb[0].mxu0
      %v6569 = vadd.f32 %v6346, %v6568
      %v6570 = vpop.f32.mrb[0].mxu0
      %6571 = vmatprep.mubr.bf16.mxu0 0
      %6572 = vmatmul.mubr.bf16.gmra.mrb[0].mxu0 %v6279
      %v6573 = vpop.f32.mrb[0].mxu0
      %v6574 = vadd.f32 %v6346, %v6573
      %v6575 = vpop.f32.mrb[0].mxu0
      %v6576 = vpop.f32.mrb[0].mxu0
      %v6577 = vadd.f32 %v6346, %v6576
      %v6578 = vpop.f32.mrb[0].mxu0
      %6579 = vmatprep.mubr.bf16.mxu0 0
      %6580 = vmatmul.mubr.bf16.gmra.mrb[0].mxu0 %v6280
      %v6581 = vpop.f32.mrb[0].mxu0
      %v6582 = vadd.f32 %v6346, %v6581
      %v6583 = vpop.f32.mrb[0].mxu0
      %v6584 = vpop.f32.mrb[0].mxu0
      %v6585 = vadd.f32 %v6346, %v6584
      %v6586 = vpop.f32.mrb[0].mxu0
      %6587 = vmatprep.mubr.bf16.mxu0 0
      %6588 = vmatmul.mubr.bf16.gmra.mrb[0].mxu0 %v6281
      %v6589 = vpop.f32.mrb[0].mxu0
      %v6590 = vadd.f32 %v6346, %v6589
      %v6591 = vpop.f32.mrb[0].mxu0
      %v6592 = vpop.f32.mrb[0].mxu0
      %v6593 = vadd.f32 %v6346, %v6592
      %v6594 = vpop.f32.mrb[0].mxu0
      %6595 = vmatprep.mubr.bf16.mxu0 0
      %6596 = vmatmul.mubr.bf16.gmra.mrb[0].mxu0 %v6282
      %v6597 = vpop.f32.mrb[0].mxu0
      %v6598 = vadd.f32 %v6346, %v6597
      %v6599 = vpop.f32.mrb[0].mxu0
      %v6600 = vpop.f32.mrb[0].mxu0
      %v6601 = vadd.f32 %v6346, %v6600
      %v6602 = vpop.f32.mrb[0].mxu0
      %6603 = vmatprep.mubr.bf16.mxu0 0
      %6604 = vmatmul.mubr.bf16.gmra.mrb[0].mxu0 %v6283
      %v6605 = vpop.f32.mrb[0].mxu0
      %v6606 = vadd.f32 %v6346, %v6605
      %v6607 = vpop.f32.mrb[0].mxu0
      %v6608 = vpop.f32.mrb[0].mxu0
      %v6609 = vadd.f32 %v6346, %v6608
      %v6610 = vpop.f32.mrb[0].mxu0
      %6611 = vmatprep.mubr.bf16.mxu0 0
      %6612 = vmatmul.mubr.bf16.gmra.mrb[0].mxu0 %v6284
      %v6613 = vpop.f32.mrb[0].mxu0
      %v6614 = vadd.f32 %v6346, %v6613
      %v6615 = vpop.f32.mrb[0].mxu0
      %v6616 = vpop.f32.mrb[0].mxu0
      %v6617 = vadd.f32 %v6346, %v6616
      %v6618 = vpop.f32.mrb[0].mxu0
      %6619 = vmatprep.mubr.bf16.mxu0 0
      %6620 = vmatmul.mubr.bf16.gmra.mrb[0].mxu0 %v6285
      %v6621 = vpop.f32.mrb[0].mxu0
      %v6622 = vadd.f32 %v6346, %v6621
      %v6623 = vpop.f32.mrb[0].mxu0
      %v6624 = vpop.f32.mrb[0].mxu0
      %v6625 = vadd.f32 %v6346, %v6624
      %v6626 = vpop.f32.mrb[0].mxu0
      %6627 = vmatprep.mubr.bf16.mxu0 0
      %6628 = vmatmul.mubr.bf16.gmra.mrb[0].mxu0 %v6286
      %v6629 = vpop.f32.mrb[0].mxu0
      %v6630 = vadd.f32 %v6346, %v6629
      %v6631 = vpop.f32.mrb[0].mxu0
      %v6632 = vpop.f32.mrb[0].mxu0
      %v6633 = vadd.f32 %v6346, %v6632
      %v6634 = vpop.f32.mrb[0].mxu0
      %6635 = vmatprep.mubr.bf16.mxu0 0
      %6636 = vmatmul.mubr.bf16.gmra.mrb[0].mxu0 %v6287
      %v6637 = vpop.f32.mrb[0].mxu0
      %v6638 = vadd.f32 %v6346, %v6637
      %v6639 = vpop.f32.mrb[0].mxu0
      %v6640 = vpop.f32.mrb[0].mxu0
      %v6641 = vadd.f32 %v6346, %v6640
      %v6642 = vpop.f32.mrb[0].mxu0
      %6643 = vmatprep.mubr.bf16.mxu0 0
      %6644 = vmatmul.mubr.bf16.gmra.mrb[0].mxu0 %v6288
      %v6645 = vpop.f32.mrb[0].mxu0
      %v6646 = vadd.f32 %v6346, %v6645
      %v6647 = vpop.f32.mrb[0].mxu0
      %v6648 = vpop.f32.mrb[0].mxu0
      %v6649 = vadd.f32 %v6346, %v6648
      %v6650 = vpop.f32.mrb[0].mxu0
      %6651 = vmatprep.mubr.bf16.mxu0 0
      %6652 = vmatmul.mubr.bf16.gmra.mrb[0].mxu0 %v6289
      %v6653 = vpop.f32.mrb[0].mxu0
      %v6654 = vadd.f32 %v6346, %v6653
      %v6655 = vpop.f32.mrb[0].mxu0
      %v6656 = vpop.f32.mrb[0].mxu0
      %v6657 = vadd.f32 %v6346, %v6656
      %v6658 = vpop.f32.mrb[0].mxu0
      %6659 = vmatprep.mubr.bf16.mxu0 0
      %6660 = vmatmul.mubr.bf16.gmra.mrb[0].mxu0 %v6290
      %v6661 = vpop.f32.mrb[0].mxu0
      %v6662 = vadd.f32 %v6346, %v6661
      %v6663 = vpop.f32.mrb[0].mxu0
      %v6664 = vpop.f32.mrb[0].mxu0
      %v6665 = vadd.f32 %v6346, %v6664
      %v6666 = vpop.f32.mrb[0].mxu0
      %6667 = vmatprep.mubr.bf16.mxu0 0
      %6668 = vmatmul.mubr.bf16.gmra.mrb[0].mxu0 %v6291
      %v6669 = vpop.f32.mrb[0].mxu0
      %v6670 = vadd.f32 %v6346, %v6669
      %v6671 = vpop.f32.mrb[0].mxu0
      %v6672 = vpop.f32.mrb[0].mxu0
      %v6673 = vadd.f32 %v6346, %v6672
      %v6674 = vpop.f32.mrb[0].mxu0
      %6675 = vmatprep.mubr.bf16.mxu0 0
      %6676 = vmatmul.mubr.bf16.gmra.mrb[0].mxu0 %v6292
      %v6677 = vpop.f32.mrb[0].mxu0
      %v6678 = vadd.f32 %v6346, %v6677
      %v6679 = vpop.f32.mrb[0].mxu0
      %v6680 = vpop.f32.mrb[0].mxu0
      %v6681 = vadd.f32 %v6346, %v6680
      %v6682 = vpop.f32.mrb[0].mxu0
      %6683 = vmatprep.mubr.bf16.mxu0 0
      %6684 = vmatmul.mubr.bf16.gmra.mrb[0].mxu0 %v6293
      %v6685 = vpop.f32.mrb[0].mxu0
      %v6686 = vadd.f32 %v6346, %v6685
      %v6687 = vpop.f32.mrb[0].mxu0
      %v6688 = vpop.f32.mrb[0].mxu0
      %v6689 = vadd.f32 %v6346, %v6688
      %v6690 = vpop.f32.mrb[0].mxu0
      %6691 = vmatprep.mubr.bf16.mxu0 0
      %6692 = vmatmul.mubr.bf16.gmra.mrb[0].mxu0 %v6294
      %v6693 = vpop.f32.mrb[0].mxu0
      %v6694 = vadd.f32 %v6346, %v6693
      %v6695 = vpop.f32.mrb[0].mxu0
      %v6696 = vpop.f32.mrb[0].mxu0
      %v6697 = vadd.f32 %v6346, %v6696
      %v6698 = vpop.f32.mrb[0].mxu0
      %6699 = vmatprep.mubr.bf16.mxu0 0
      %6700 = vmatmul.mubr.bf16.gmra.mrb[0].mxu0 %v6295
      %v6701 = vpop.f32.mrb[0].mxu0
      %v6702 = vadd.f32 %v6346, %v6701
      %v6703 = vpop.f32.mrb[0].mxu0
      %v6704 = vpop.f32.mrb[0].mxu0
      %v6705 = vadd.f32 %v6346, %v6704
      %v6706 = vpop.f32.mrb[0].mxu0
      %6707 = vmatprep.mubr.bf16.mxu0 0
      %6708 = vmatmul.mubr.bf16.gmra.mrb[0].mxu0 %v6296
      %v6709 = vpop.f32.mrb[0].mxu0
      %v6710 = vadd.f32 %v6346, %v6709
      %v6711 = vpop.f32.mrb[0].mxu0
      %v6712 = vpop.f32.mrb[0].mxu0
      %v6713 = vadd.f32 %v6346, %v6712
      %v6714 = vpop.f32.mrb[0].mxu0
      %6715 = vmatprep.mubr.bf16.mxu0 0
      %6716 = vmatmul.mubr.bf16.gmra.mrb[0].mxu0 %v6297
      %v6717 = vpop.f32.mrb[0].mxu0
      %v6718 = vadd.f32 %v6346, %v6717
      %v6719 = vpop.f32.mrb[0].mxu0
      %v6720 = vpop.f32.mrb[0].mxu0
      %v6721 = vadd.f32 %v6346, %v6720
      %v6722 = vpop.f32.mrb[0].mxu0
      %6723 = vmatprep.mubr.bf16.mxu0 0
      %6724 = vmatmul.mubr.bf16.gmra.mrb[0].mxu0 %v6298
      %v6725 = vpop.f32.mrb[0].mxu0
      %v6726 = vadd.f32 %v6346, %v6725
      %v6727 = vpop.f32.mrb[0].mxu0
      %v6728 = vpop.f32.mrb[0].mxu0
      %v6729 = vadd.f32 %v6346, %v6728
      %v6730 = vpop.f32.mrb[0].mxu0
      %6731 = vmatprep.mubr.bf16.mxu0 0
      %6732 = vmatmul.mubr.bf16.gmra.mrb[0].mxu0 %v6299
      %v6733 = vpop.f32.mrb[0].mxu0
      %v6734 = vadd.f32 %v6346, %v6733
      %v6735 = vpop.f32.mrb[0].mxu0
      %v6736 = vpop.f32.mrb[0].mxu0
      %v6737 = vadd.f32 %v6346, %v6736
      %v6738 = vpop.f32.mrb[0].mxu0
      %6739 = vmatprep.mubr.bf16.mxu0 0
      %6740 = vmatmul.mubr.bf16.gmra.mrb[0].mxu0 %v6300
      %v6741 = vpop.f32.mrb[0].mxu0
      %v6742 = vadd.f32 %v6346, %v6741
      %v6743 = vpop.f32.mrb[0].mxu0
      %v6744 = vpop.f32.mrb[0].mxu0
      %v6745 = vadd.f32 %v6346, %v6744
      %v6746 = vpop.f32.mrb[0].mxu0
      %6747 = vmatprep.mubr.bf16.mxu0 0
      %6748 = vmatmul.mubr.bf16.gmra.mrb[0].mxu0 %v6301
      %v6749 = vpop.f32.mrb[0].mxu0
      %v6750 = vadd.f32 %v6346, %v6749
      %v6751 = vpop.f32.mrb[0].mxu0
      %v6752 = vpop.f32.mrb[0].mxu0
      %v6753 = vadd.f32 %v6346, %v6752
      %v6754 = vpop.f32.mrb[0].mxu0
      %6755 = vmatprep.mubr.bf16.mxu0 0
      %6756 = vmatmul.mubr.bf16.gmra.mrb[0].mxu0 %v6302
      %v6757 = vpop.f32.mrb[0].mxu0
      %v6758 = vadd.f32 %v6346, %v6757
      %v6759 = vpop.f32.mrb[0].mxu0
      %v6760 = vpop.f32.mrb[0].mxu0
      %v6761 = vadd.f32 %v6346, %v6760
      %v6762 = vpop.f32.mrb[0].mxu0
      %6763 = vmatprep.mubr.bf16.mxu0 0
      %6764 = vmatmul.mubr.bf16.gmra.mrb[0].mxu0 %v6303
      %v6765 = vpop.f32.mrb[0].mxu0
      %v6766 = vadd.f32 %v6346, %v6765
      %v6767 = vpop.f32.mrb[0].mxu0
      %v6768 = vpop.f32.mrb[0].mxu0
      %v6769 = vadd.f32 %v6346, %v6768
      %v6770 = vpop.f32.mrb[0].mxu0
      %6771 = vmatprep.mubr.bf16.mxu0 0
      %6772 = vmatmul.mubr.bf16.gmra.mrb[0].mxu0 %v6304
      %v6773 = vpop.f32.mrb[0].mxu0
      %v6774 = vadd.f32 %v6346, %v6773
      %v6775 = vpop.f32.mrb[0].mxu0
      %v6776 = vpop.f32.mrb[0].mxu0
      %v6777 = vadd.f32 %v6346, %v6776
      %v6778 = vpop.f32.mrb[0].mxu0
      %6779 = vmatprep.mubr.bf16.mxu0 0
      %6780 = vmatmul.mubr.bf16.gmra.mrb[0].mxu0 %v6305
      %v6781 = vpop.f32.mrb[0].mxu0
      %v6782 = vadd.f32 %v6346, %v6781
      %v6783 = vpop.f32.mrb[0].mxu0
      %v6784 = vpop.f32.mrb[0].mxu0
      %v6785 = vadd.f32 %v6346, %v6784
      %v6786 = vpop.f32.mrb[0].mxu0
      %6787 = vmatprep.mubr.bf16.mxu0 0
      %6788 = vmatmul.mubr.bf16.gmra.mrb[0].mxu0 %v6306
      %v6789 = vpop.f32.mrb[0].mxu0
      %v6790 = vadd.f32 %v6346, %v6789
      %v6791 = vpop.f32.mrb[0].mxu0
      %v6792 = vpop.f32.mrb[0].mxu0
      %v6793 = vadd.f32 %v6346, %v6792
      %v6794 = vpop.f32.mrb[0].mxu0
      %6795 = vmatprep.mubr.bf16.mxu0 0
      %6796 = vmatmul.mubr.bf16.gmra.mrb[0].mxu0 %v6307
      %v6797 = vpop.f32.mrb[0].mxu0
      %v6798 = vadd.f32 %v6346, %v6797
      %v6799 = vpop.f32.mrb[0].mxu0
      %v6800 = vpop.f32.mrb[0].mxu0
      %v6801 = vadd.f32 %v6346, %v6800
      %v6802 = vpop.f32.mrb[0].mxu0
      %6803 = vmatprep.mubr.bf16.mxu0 0
      %6804 = vmatmul.mubr.bf16.gmra.mrb[0].mxu0 %v6308
      %v6805 = vpop.f32.mrb[0].mxu0
      %v6806 = vadd.f32 %v6346, %v6805
      %v6807 = vpop.f32.mrb[0].mxu0
      %v6808 = vpop.f32.mrb[0].mxu0
      %v6809 = vadd.f32 %v6346, %v6808
      %v6810 = vpop.f32.mrb[0].mxu0
      %6811 = vmatprep.mubr.bf16.mxu0 0
      %6812 = vmatmul.mubr.bf16.gmra.mrb[0].mxu0 %v6309
      %v6813 = vpop.f32.mrb[0].mxu0
      %v6814 = vadd.f32 %v6346, %v6813
      %v6815 = vpop.f32.mrb[0].mxu0
      %v6816 = vpop.f32.mrb[0].mxu0
      %v6817 = vadd.f32 %v6346, %v6816
      %v6818 = vpop.f32.mrb[0].mxu0
      %6819 = vmatprep.mubr.bf16.mxu0 0
      %6820 = vmatmul.mubr.bf16.gmra.mrb[0].mxu0 %v6310
      %v6821 = vpop.f32.mrb[0].mxu0
      %v6822 = vadd.f32 %v6346, %v6821
      %v6823 = vpop.f32.mrb[0].mxu0
      %v6824 = vpop.f32.mrb[0].mxu0
      %v6825 = vadd.f32 %v6346, %v6824
      %v6826 = vpop.f32.mrb[0].mxu0
      %6827 = vmatprep.mubr.bf16.mxu0 0
      %6828 = vmatmul.mubr.bf16.gmra.mrb[0].mxu0 %v6311
      %v6829 = vpop.f32.mrb[0].mxu0
      %v6830 = vadd.f32 %v6346, %v6829
      %v6831 = vpop.f32.mrb[0].mxu0
      %v6832 = vpop.f32.mrb[0].mxu0
      %v6833 = vadd.f32 %v6346, %v6832
      %v6834 = vpop.f32.mrb[0].mxu0
      %6835 = vmatprep.mubr.bf16.mxu0 0
      %6836 = vmatmul.mubr.bf16.gmra.mrb[0].mxu0 %v6312
      %v6837 = vpop.f32.mrb[0].mxu0
      %v6838 = vadd.f32 %v6346, %v6837
      %v6839 = vpop.f32.mrb[0].mxu0
      %v6840 = vpop.f32.mrb[0].mxu0
      %v6841 = vadd.f32 %v6346, %v6840
      %v6842 = vpop.f32.mrb[0].mxu0
      %6843 = vmatprep.mubr.bf16.mxu0 0
      %6844 = vmatmul.mubr.bf16.gmra.mrb[0].mxu0 %v6313
      %v6845 = vpop.f32.mrb[0].mxu0
      %v6846 = vadd.f32 %v6346, %v6845
      %v6847 = vpop.f32.mrb[0].mxu0
      %v6848 = vpop.f32.mrb[0].mxu0
      %v6849 = vadd.f32 %v6346, %v6848
      %v6850 = vpop.f32.mrb[0].mxu0
      %6851 = vmatprep.mubr.bf16.mxu0 0
      %6852 = vmatmul.mubr.bf16.gmra.mrb[0].mxu0 %v6314
      %v6853 = vpop.f32.mrb[0].mxu0
      %v6854 = vadd.f32 %v6346, %v6853
      %v6855 = vpop.f32.mrb[0].mxu0
      %v6856 = vpop.f32.mrb[0].mxu0
      %v6857 = vadd.f32 %v6346, %v6856
      %v6858 = vpop.f32.mrb[0].mxu0
      %6859 = vmatprep.mubr.bf16.mxu0 0
      %6860 = vmatmul.mubr.bf16.gmra.mrb[0].mxu0 %v6315
      %v6861 = vpop.f32.mrb[0].mxu0
      %v6862 = vadd.f32 %v6346, %v6861
      %v6863 = vpop.f32.mrb[0].mxu0
      %v6864 = vpop.f32.mrb[0].mxu0
      %v6865 = vadd.f32 %v6346, %v6864
      %v6866 = vpop.f32.mrb[0].mxu0
      %6867 = vmatprep.mubr.bf16.mxu0 0
      %6868 = vmatmul.mubr.bf16.gmra.mrb[0].mxu0 %v6316
      %v6869 = vpop.f32.mrb[0].mxu0
      %v6870 = vadd.f32 %v6346, %v6869
      %v6871 = vpop.f32.mrb[0].mxu0
      %v6872 = vpop.f32.mrb[0].mxu0
      %v6873 = vadd.f32 %v6346, %v6872
      %v6874 = vpop.f32.mrb[0].mxu0
      %6875 = vmatprep.mubr.bf16.mxu0 0
      %6876 = vmatmul.mubr.bf16.gmra.mrb[0].mxu0 %v6317
      %v6877 = vpop.f32.mrb[0].mxu0
      %v6878 = vadd.f32 %v6346, %v6877
      %v6879 = vpop.f32.mrb[0].mxu0
      %v6880 = vpop.f32.mrb[0].mxu0
      %v6881 = vadd.f32 %v6346, %v6880
      %v6882 = vpop.f32.mrb[0].mxu0
      %6883 = vmatprep.mubr.bf16.mxu0 0
      %6884 = vmatmul.mubr.bf16.gmra.mrb[0].mxu0 %v6318
      %v6885 = vpop.f32.mrb[0].mxu0
      %v6886 = vadd.f32 %v6346, %v6885
      %v6887 = vpop.f32.mrb[0].mxu0
      %v6888 = vpop.f32.mrb[0].mxu0
      %v6889 = vadd.f32 %v6346, %v6888
      %v6890 = vpop.f32.mrb[0].mxu0
      %6891 = vmatprep.mubr.bf16.mxu0 0
      %6892 = vmatmul.mubr.bf16.gmra.mrb[0].mxu0 %v6319
      %v6893 = vpop.f32.mrb[0].mxu0
      %v6894 = vadd.f32 %v6346, %v6893
      %v6895 = vpop.f32.mrb[0].mxu0
      %v6896 = vpop.f32.mrb[0].mxu0
      %v6897 = vadd.f32 %v6346, %v6896
      %v6898 = vpop.f32.mrb[0].mxu0
      %6899 = vmatprep.mubr.bf16.mxu0 0
      %6900 = vmatmul.mubr.bf16.gmra.mrb[0].mxu0 %v6320
      %v6901 = vpop.f32.mrb[0].mxu0
      %v6902 = vadd.f32 %v6346, %v6901
      %v6903 = vpop.f32.mrb[0].mxu0
      %v6904 = vpop.f32.mrb[0].mxu0
      %v6905 = vadd.f32 %v6346, %v6904
      %v6906 = vpop.f32.mrb[0].mxu0
      %6907 = vmatprep.mubr.bf16.mxu0 0
      %6908 = vmatmul.mubr.bf16.gmra.mrb[0].mxu0 %v6321
      %v6909 = vpop.f32.mrb[0].mxu0
      %v6910 = vadd.f32 %v6346, %v6909
      %v6911 = vpop.f32.mrb[0].mxu0
      %v6912 = vpop.f32.mrb[0].mxu0
      %v6913 = vadd.f32 %v6346, %v6912
      %v6914 = vpop.f32.mrb[0].mxu0
      %6915 = vmatprep.mubr.bf16.mxu0 0
      %6916 = vmatmul.mubr.bf16.gmra.mrb[0].mxu0 %v6322
      %v6917 = vpop.f32.mrb[0].mxu0
      %v6918 = vadd.f32 %v6346, %v6917
      %v6919 = vpop.f32.mrb[0].mxu0
      %v6920 = vpop.f32.mrb[0].mxu0
      %v6921 = vadd.f32 %v6346, %v6920
      %v6922 = vpop.f32.mrb[0].mxu0
      %6923 = vmatprep.mubr.bf16.mxu0 0
      %6924 = vmatmul.mubr.bf16.gmra.mrb[0].mxu0 %v6323
      %v6925 = vpop.f32.mrb[0].mxu0
      %v6926 = vadd.f32 %v6346, %v6925
      %v6927 = vpop.f32.mrb[0].mxu0
      %v6928 = vpop.f32.mrb[0].mxu0
      %v6929 = vadd.f32 %v6346, %v6928
      %v6930 = vpop.f32.mrb[0].mxu0
      %6931 = vmatprep.mubr.bf16.mxu0 0
      %6932 = vmatmul.mubr.bf16.gmra.mrb[0].mxu0 %v6324
      %v6933 = vpop.f32.mrb[0].mxu0
      %v6934 = vadd.f32 %v6346, %v6933
      %v6935 = vpop.f32.mrb[0].mxu0
      %v6936 = vpop.f32.mrb[0].mxu0
      %v6937 = vadd.f32 %v6346, %v6936
      %v6938 = vpop.f32.mrb[0].mxu0
      %6939 = vdwg.mxu0
      %v6940 = vmax.f32 %v6430, 0.0
      %v6941 = vmax.f32 %v6433, 0.0
      %v6942 = vmax.f32 %v6438, 0.0
      %v6943 = vmax.f32 %v6441, 0.0
      %v6944 = vmax.f32 %v6446, 0.0
      %v6945 = vmax.f32 %v6449, 0.0
      %v6946 = vmax.f32 %v6454, 0.0
      %v6947 = vmax.f32 %v6457, 0.0
      %v6948 = vmax.f32 %v6462, 0.0
      %v6949 = vmax.f32 %v6465, 0.0
      %v6950 = vmax.f32 %v6470, 0.0
      %v6951 = vmax.f32 %v6473, 0.0
      %v6952 = vmax.f32 %v6478, 0.0
      %v6953 = vmax.f32 %v6481, 0.0
      %v6954 = vmax.f32 %v6486, 0.0
      %v6955 = vmax.f32 %v6489, 0.0
      %v6956 = vmax.f32 %v6494, 0.0
      %v6957 = vmax.f32 %v6497, 0.0
      %v6958 = vmax.f32 %v6502, 0.0
      %v6959 = vmax.f32 %v6505, 0.0
      %v6960 = vmax.f32 %v6510, 0.0
      %v6961 = vmax.f32 %v6513, 0.0
      %v6962 = vmax.f32 %v6518, 0.0
      %v6963 = vmax.f32 %v6521, 0.0
      %v6964 = vmax.f32 %v6526, 0.0
      %v6965 = vmax.f32 %v6529, 0.0
      %v6966 = vmax.f32 %v6534, 0.0
      %v6967 = vmax.f32 %v6537, 0.0
      %v6968 = vmax.f32 %v6542, 0.0
      %v6969 = vmax.f32 %v6545, 0.0
      %v6970 = vmax.f32 %v6550, 0.0
      %v6971 = vmax.f32 %v6553, 0.0
      %v6972 = vmax.f32 %v6558, 0.0
      %v6973 = vmax.f32 %v6561, 0.0
      %v6974 = vmax.f32 %v6566, 0.0
      %v6975 = vmax.f32 %v6569, 0.0
      %v6976 = vmax.f32 %v6574, 0.0
      %v6977 = vmax.f32 %v6577, 0.0
      %v6978 = vmax.f32 %v6582, 0.0
      %v6979 = vmax.f32 %v6585, 0.0
      %v6980 = vmax.f32 %v6590, 0.0
      %v6981 = vmax.f32 %v6593, 0.0
      %v6982 = vmax.f32 %v6598, 0.0
      %v6983 = vmax.f32 %v6601, 0.0
      %v6984 = vmax.f32 %v6606, 0.0
      %v6985 = vmax.f32 %v6609, 0.0
      %v6986 = vmax.f32 %v6614, 0.0
      %v6987 = vmax.f32 %v6617, 0.0
      %v6988 = vmax.f32 %v6622, 0.0
      %v6989 = vmax.f32 %v6625, 0.0
      %v6990 = vmax.f32 %v6630, 0.0
      %v6991 = vmax.f32 %v6633, 0.0
      %v6992 = vmax.f32 %v6638, 0.0
      %v6993 = vmax.f32 %v6641, 0.0
      %v6994 = vmax.f32 %v6646, 0.0
      %v6995 = vmax.f32 %v6649, 0.0
      %v6996 = vmax.f32 %v6654, 0.0
      %v6997 = vmax.f32 %v6657, 0.0
      %v6998 = vmax.f32 %v6662, 0.0
      %v6999 = vmax.f32 %v6665, 0.0
      %v7000 = vmax.f32 %v6670, 0.0
      %v7001 = vmax.f32 %v6673, 0.0
      %v7002 = vmax.f32 %v6678, 0.0
      %v7003 = vmax.f32 %v6681, 0.0
      %v7004 = vmax.f32 %v6686, 0.0
      %v7005 = vmax.f32 %v6689, 0.0
      %v7006 = vmax.f32 %v6694, 0.0
      %v7007 = vmax.f32 %v6697, 0.0
      %v7008 = vmax.f32 %v6702, 0.0
      %v7009 = vmax.f32 %v6705, 0.0
      %v7010 = vmax.f32 %v6710, 0.0
      %v7011 = vmax.f32 %v6713, 0.0
      %v7012 = vmax.f32 %v6718, 0.0
      %v7013 = vmax.f32 %v6721, 0.0
      %v7014 = vmax.f32 %v6726, 0.0
      %v7015 = vmax.f32 %v6729, 0.0
      %v7016 = vmax.f32 %v6734, 0.0
      %v7017 = vmax.f32 %v6737, 0.0
      %v7018 = vmax.f32 %v6742, 0.0
      %v7019 = vmax.f32 %v6745, 0.0
      %v7020 = vmax.f32 %v6750, 0.0
      %v7021 = vmax.f32 %v6753, 0.0
      %v7022 = vmax.f32 %v6758, 0.0
      %v7023 = vmax.f32 %v6761, 0.0
      %v7024 = vmax.f32 %v6766, 0.0
      %v7025 = vmax.f32 %v6769, 0.0
      %v7026 = vmax.f32 %v6774, 0.0
      %v7027 = vmax.f32 %v6777, 0.0
      %v7028 = vmax.f32 %v6782, 0.0
      %v7029 = vmax.f32 %v6785, 0.0
      %v7030 = vmax.f32 %v6790, 0.0
      %v7031 = vmax.f32 %v6793, 0.0
      %v7032 = vmax.f32 %v6798, 0.0
      %v7033 = vmax.f32 %v6801, 0.0
      %v7034 = vmax.f32 %v6806, 0.0
      %v7035 = vmax.f32 %v6809, 0.0
      %v7036 = vmax.f32 %v6814, 0.0
      %v7037 = vmax.f32 %v6817, 0.0
      %v7038 = vmax.f32 %v6822, 0.0
      %v7039 = vmax.f32 %v6825, 0.0
      %v7040 = vmax.f32 %v6830, 0.0
      %v7041 = vmax.f32 %v6833, 0.0
      %v7042 = vmax.f32 %v6838, 0.0
      %v7043 = vmax.f32 %v6841, 0.0
      %v7044 = vmax.f32 %v6846, 0.0
      %v7045 = vmax.f32 %v6849, 0.0
      %v7046 = vmax.f32 %v6854, 0.0
      %v7047 = vmax.f32 %v6857, 0.0
      %v7048 = vmax.f32 %v6862, 0.0
      %v7049 = vmax.f32 %v6865, 0.0
      %v7050 = vmax.f32 %v6870, 0.0
      %v7051 = vmax.f32 %v6873, 0.0
      %v7052 = vmax.f32 %v6878, 0.0
      %v7053 = vmax.f32 %v6881, 0.0
      %v7054 = vmax.f32 %v6886, 0.0
      %v7055 = vmax.f32 %v6889, 0.0
      %v7056 = vmax.f32 %v6894, 0.0
      %v7057 = vmax.f32 %v6897, 0.0
      %v7058 = vmax.f32 %v6902, 0.0
      %v7059 = vmax.f32 %v6905, 0.0
      %v7060 = vmax.f32 %v6910, 0.0
      %v7061 = vmax.f32 %v6913, 0.0
      %v7062 = vmax.f32 %v6918, 0.0
      %v7063 = vmax.f32 %v6921, 0.0
      %v7064 = vmax.f32 %v6926, 0.0
      %v7065 = vmax.f32 %v6929, 0.0
      %v7066 = vmax.f32 %v6934, 0.0
      %v7067 = vmax.f32 %v6937, 0.0
      %v7068 = vpack.c.bf16 %v6941, %v6940
      %v7069 = vpack.c.bf16 %v6943, %v6942
      %v7070 = vpack.c.bf16 %v6945, %v6944
      %v7071 = vpack.c.bf16 %v6947, %v6946
      %v7072 = vpack.c.bf16 %v6949, %v6948
      %v7073 = vpack.c.bf16 %v6951, %v6950
      %v7074 = vpack.c.bf16 %v6953, %v6952
      %v7075 = vpack.c.bf16 %v6955, %v6954
      %v7076 = vpack.c.bf16 %v6957, %v6956
      %v7077 = vpack.c.bf16 %v6959, %v6958
      %v7078 = vpack.c.bf16 %v6961, %v6960
      %v7079 = vpack.c.bf16 %v6963, %v6962
      %v7080 = vpack.c.bf16 %v6965, %v6964
      %v7081 = vpack.c.bf16 %v6967, %v6966
      %v7082 = vpack.c.bf16 %v6969, %v6968
      %v7083 = vpack.c.bf16 %v6971, %v6970
      %v7084 = vpack.c.bf16 %v6973, %v6972
      %v7085 = vpack.c.bf16 %v6975, %v6974
      %v7086 = vpack.c.bf16 %v6977, %v6976
      %v7087 = vpack.c.bf16 %v6979, %v6978
      %v7088 = vpack.c.bf16 %v6981, %v6980
      %v7089 = vpack.c.bf16 %v6983, %v6982
      %v7090 = vpack.c.bf16 %v6985, %v6984
      %v7091 = vpack.c.bf16 %v6987, %v6986
      %v7092 = vpack.c.bf16 %v6989, %v6988
      %v7093 = vpack.c.bf16 %v6991, %v6990
      %v7094 = vpack.c.bf16 %v6993, %v6992
      %v7095 = vpack.c.bf16 %v6995, %v6994
      %v7096 = vpack.c.bf16 %v6997, %v6996
      %v7097 = vpack.c.bf16 %v6999, %v6998
      %v7098 = vpack.c.bf16 %v7001, %v7000
      %v7099 = vpack.c.bf16 %v7003, %v7002
      %v7100 = vpack.c.bf16 %v7005, %v7004
      %v7101 = vpack.c.bf16 %v7007, %v7006
      %v7102 = vpack.c.bf16 %v7009, %v7008
      %v7103 = vpack.c.bf16 %v7011, %v7010
      %v7104 = vpack.c.bf16 %v7013, %v7012
      %v7105 = vpack.c.bf16 %v7015, %v7014
      %v7106 = vpack.c.bf16 %v7017, %v7016
      %v7107 = vpack.c.bf16 %v7019, %v7018
      %v7108 = vpack.c.bf16 %v7021, %v7020
      %v7109 = vpack.c.bf16 %v7023, %v7022
      %v7110 = vpack.c.bf16 %v7025, %v7024
      %v7111 = vpack.c.bf16 %v7027, %v7026
      %v7112 = vpack.c.bf16 %v7029, %v7028
      %v7113 = vpack.c.bf16 %v7031, %v7030
      %v7114 = vpack.c.bf16 %v7033, %v7032
      %v7115 = vpack.c.bf16 %v7035, %v7034
      %v7116 = vpack.c.bf16 %v7037, %v7036
      %v7117 = vpack.c.bf16 %v7039, %v7038
      %v7118 = vpack.c.bf16 %v7041, %v7040
      %v7119 = vpack.c.bf16 %v7043, %v7042
      %v7120 = vpack.c.bf16 %v7045, %v7044
      %v7121 = vpack.c.bf16 %v7047, %v7046
      %v7122 = vpack.c.bf16 %v7049, %v7048
      %v7123 = vpack.c.bf16 %v7051, %v7050
      %v7124 = vpack.c.bf16 %v7053, %v7052
      %v7125 = vpack.c.bf16 %v7055, %v7054
      %v7126 = vpack.c.bf16 %v7057, %v7056
      %v7127 = vpack.c.bf16 %v7059, %v7058
      %v7128 = vpack.c.bf16 %v7061, %v7060
      %v7129 = vpack.c.bf16 %v7063, %v7062
      %v7130 = vpack.c.bf16 %v7065, %v7064
      %v7131 = vpack.c.bf16 %v7067, %v7066
      %s7132 = scalar_lea.vmem %s4, 192
      %v7133 = vld [vmem:[%s7132] sm:$0xf]
      %v7134 = vld [vmem:[%s7132 + $0x4] sm:$0xf]
      %v7135 = vld [vmem:[%s7132 + $0x8] sm:$0xf]
      %v7136 = vld [vmem:[%s7132 + $0xc] sm:$0xf]
      %v7137 = vld [vmem:[%s7132 + $0x10] sm:$0xf]
      %v7138 = vld [vmem:[%s7132 + $0x14] sm:$0xf]
      %v7139 = vld [vmem:[%s7132 + $0x18] sm:$0xf]
      %v7140 = vld [vmem:[%s7132 + $0x1c] sm:$0xf]
      %v7141 = vld [vmem:[%s7132 + $0x20] sm:$0xf]
      %v7142 = vld [vmem:[%s7132 + $0x24] sm:$0xf]
      %v7143 = vld [vmem:[%s7132 + $0x28] sm:$0xf]
      %v7144 = vld [vmem:[%s7132 + $0x2c] sm:$0xf]
      %v7145 = vld [vmem:[%s7132 + $0x30] sm:$0xf]
      %v7146 = vld [vmem:[%s7132 + $0x34] sm:$0xf]
      %v7147 = vld [vmem:[%s7132 + $0x38] sm:$0xf]
      %v7148 = vld [vmem:[%s7132 + $0x3c] sm:$0xf]
      %v7149 = vld [vmem:[%s5 + $0x3] sm:$0x1]
      %v7150 = vlaneseq
      %v7151 = vshrl.u32 %v7150, 7
      %v7152 = vsub.s32 0, %v7151
      %v7153 = vrot.slane %v7149, %v7152
      %v7170 = vunpack.c.l.b16 %v7133
      %v7171 = vunpack.c.l.b16 %v7134
      %v7172 = vunpack.c.l.b16 %v7135
      %v7173 = vunpack.c.l.b16 %v7136
      %v7174 = vunpack.c.l.b16 %v7137
      %v7175 = vunpack.c.l.b16 %v7138
      %v7176 = vunpack.c.l.b16 %v7139
      %v7177 = vunpack.c.l.b16 %v7140
      %v7178 = vunpack.c.l.b16 %v7141
      %v7179 = vunpack.c.l.b16 %v7142
      %v7180 = vunpack.c.l.b16 %v7143
      %v7181 = vunpack.c.l.b16 %v7144
      %v7182 = vunpack.c.l.b16 %v7145
      %v7183 = vunpack.c.l.b16 %v7146
      %v7184 = vunpack.c.l.b16 %v7147
      %v7185 = vunpack.c.l.b16 %v7148
      %v7186 = vpack.c.b16 %v7171, %v7170
      %v7187 = vpack.c.b16 %v7173, %v7172
      %v7188 = vpack.c.b16 %v7175, %v7174
      %v7189 = vpack.c.b16 %v7177, %v7176
      %v7190 = vpack.c.b16 %v7179, %v7178
      %v7191 = vpack.c.b16 %v7181, %v7180
      %v7192 = vpack.c.b16 %v7183, %v7182
      %v7193 = vpack.c.b16 %v7185, %v7184
      %7202 = vmatprep.subr.bf16.mxu0 0
      %7203 = vmatpush1.bf16.msra.mxu0 %v7186
      %7204 = vmatprep.subr.bf16.mxu0 0
      %7205 = vmatpush1.bf16.msra.mxu0 %v7187
      %7206 = vmatprep.subr.bf16.mxu0 0
      %7207 = vmatpush1.bf16.msra.mxu0 %v7188
      %7208 = vmatprep.subr.bf16.mxu0 0
      %7209 = vmatpush1.bf16.msra.mxu0 %v7189
      %7210 = vmatprep.subr.bf16.mxu0 0
      %7211 = vmatpush1.bf16.msra.mxu0 %v7190
      %7212 = vmatprep.subr.bf16.mxu0 0
      %7213 = vmatpush1.bf16.msra.mxu0 %v7191
      %7214 = vmatprep.subr.bf16.mxu0 0
      %7215 = vmatpush1.bf16.msra.mxu0 %v7192
      %7216 = vmatprep.subr.bf16.mxu0 0
      %7217 = vmatpush1.bf16.msra.mxu0 %v7193
      %7218 = vmatprep.subr.bf16.mxu0 0
      %7219 = vmatpush1.bf16.msra.mxu0 0
      %7220 = vmatprep.subr.bf16.mxu0 0
      %7221 = vmatpush1.bf16.msra.mxu0 0
      %7222 = vmatprep.subr.bf16.mxu0 0
      %7223 = vmatpush1.bf16.msra.mxu0 0
      %7224 = vmatprep.subr.bf16.mxu0 0
      %7225 = vmatpush1.bf16.msra.mxu0 0
      %7226 = vmatprep.subr.bf16.mxu0 0
      %7227 = vmatpush1.bf16.msra.mxu0 0
      %7228 = vmatprep.subr.bf16.mxu0 0
      %7229 = vmatpush1.bf16.msra.mxu0 0
      %7230 = vmatprep.subr.bf16.mxu0 0
      %7231 = vmatpush1.bf16.msra.mxu0 0
      %7232 = vmatprep.subr.bf16.mxu0 0
      %7233 = vmatpush1.bf16.msra.mxu0 0
      %7234 = vmatprep.mubr.bf16.mxu0 0
      %7235 = vmatmul.mubr.bf16.gmra.mrb[0].mxu0 %v7068
      %v7236 = vpop.f32.mrb[0].mxu0
      %v7237 = vadd.f32 %v7153, %v7236
      %v7238 = vpop.f32.mrb[0].mxu0
      %v7239 = vpop.f32.mrb[0].mxu0
      %v7240 = vadd.f32 %v7153, %v7239
      %v7241 = vpop.f32.mrb[0].mxu0
      %7242 = vmatprep.mubr.bf16.mxu0 0
      %7243 = vmatmul.mubr.bf16.gmra.mrb[0].mxu0 %v7069
      %v7244 = vpop.f32.mrb[0].mxu0
      %v7245 = vadd.f32 %v7153, %v7244
      %v7246 = vpop.f32.mrb[0].mxu0
      %v7247 = vpop.f32.mrb[0].mxu0
      %v7248 = vadd.f32 %v7153, %v7247
      %v7249 = vpop.f32.mrb[0].mxu0
      %7250 = vmatprep.mubr.bf16.mxu0 0
      %7251 = vmatmul.mubr.bf16.gmra.mrb[0].mxu0 %v7070
      %v7252 = vpop.f32.mrb[0].mxu0
      %v7253 = vadd.f32 %v7153, %v7252
      %v7254 = vpop.f32.mrb[0].mxu0
      %v7255 = vpop.f32.mrb[0].mxu0
      %v7256 = vadd.f32 %v7153, %v7255
      %v7257 = vpop.f32.mrb[0].mxu0
      %7258 = vmatprep.mubr.bf16.mxu0 0
      %7259 = vmatmul.mubr.bf16.gmra.mrb[0].mxu0 %v7071
      %v7260 = vpop.f32.mrb[0].mxu0
      %v7261 = vadd.f32 %v7153, %v7260
      %v7262 = vpop.f32.mrb[0].mxu0
      %v7263 = vpop.f32.mrb[0].mxu0
      %v7264 = vadd.f32 %v7153, %v7263
      %v7265 = vpop.f32.mrb[0].mxu0
      %7266 = vmatprep.mubr.bf16.mxu0 0
      %7267 = vmatmul.mubr.bf16.gmra.mrb[0].mxu0 %v7072
      %v7268 = vpop.f32.mrb[0].mxu0
      %v7269 = vadd.f32 %v7153, %v7268
      %v7270 = vpop.f32.mrb[0].mxu0
      %v7271 = vpop.f32.mrb[0].mxu0
      %v7272 = vadd.f32 %v7153, %v7271
      %v7273 = vpop.f32.mrb[0].mxu0
      %7274 = vmatprep.mubr.bf16.mxu0 0
      %7275 = vmatmul.mubr.bf16.gmra.mrb[0].mxu0 %v7073
      %v7276 = vpop.f32.mrb[0].mxu0
      %v7277 = vadd.f32 %v7153, %v7276
      %v7278 = vpop.f32.mrb[0].mxu0
      %v7279 = vpop.f32.mrb[0].mxu0
      %v7280 = vadd.f32 %v7153, %v7279
      %v7281 = vpop.f32.mrb[0].mxu0
      %7282 = vmatprep.mubr.bf16.mxu0 0
      %7283 = vmatmul.mubr.bf16.gmra.mrb[0].mxu0 %v7074
      %v7284 = vpop.f32.mrb[0].mxu0
      %v7285 = vadd.f32 %v7153, %v7284
      %v7286 = vpop.f32.mrb[0].mxu0
      %v7287 = vpop.f32.mrb[0].mxu0
      %v7288 = vadd.f32 %v7153, %v7287
      %v7289 = vpop.f32.mrb[0].mxu0
      %7290 = vmatprep.mubr.bf16.mxu0 0
      %7291 = vmatmul.mubr.bf16.gmra.mrb[0].mxu0 %v7075
      %v7292 = vpop.f32.mrb[0].mxu0
      %v7293 = vadd.f32 %v7153, %v7292
      %v7294 = vpop.f32.mrb[0].mxu0
      %v7295 = vpop.f32.mrb[0].mxu0
      %v7296 = vadd.f32 %v7153, %v7295
      %v7297 = vpop.f32.mrb[0].mxu0
      %7298 = vmatprep.mubr.bf16.mxu0 0
      %7299 = vmatmul.mubr.bf16.gmra.mrb[0].mxu0 %v7076
      %v7300 = vpop.f32.mrb[0].mxu0
      %v7301 = vadd.f32 %v7153, %v7300
      %v7302 = vpop.f32.mrb[0].mxu0
      %v7303 = vpop.f32.mrb[0].mxu0
      %v7304 = vadd.f32 %v7153, %v7303
      %v7305 = vpop.f32.mrb[0].mxu0
      %7306 = vmatprep.mubr.bf16.mxu0 0
      %7307 = vmatmul.mubr.bf16.gmra.mrb[0].mxu0 %v7077
      %v7308 = vpop.f32.mrb[0].mxu0
      %v7309 = vadd.f32 %v7153, %v7308
      %v7310 = vpop.f32.mrb[0].mxu0
      %v7311 = vpop.f32.mrb[0].mxu0
      %v7312 = vadd.f32 %v7153, %v7311
      %v7313 = vpop.f32.mrb[0].mxu0
      %7314 = vmatprep.mubr.bf16.mxu0 0
      %7315 = vmatmul.mubr.bf16.gmra.mrb[0].mxu0 %v7078
      %v7316 = vpop.f32.mrb[0].mxu0
      %v7317 = vadd.f32 %v7153, %v7316
      %v7318 = vpop.f32.mrb[0].mxu0
      %v7319 = vpop.f32.mrb[0].mxu0
      %v7320 = vadd.f32 %v7153, %v7319
      %v7321 = vpop.f32.mrb[0].mxu0
      %7322 = vmatprep.mubr.bf16.mxu0 0
      %7323 = vmatmul.mubr.bf16.gmra.mrb[0].mxu0 %v7079
      %v7324 = vpop.f32.mrb[0].mxu0
      %v7325 = vadd.f32 %v7153, %v7324
      %v7326 = vpop.f32.mrb[0].mxu0
      %v7327 = vpop.f32.mrb[0].mxu0
      %v7328 = vadd.f32 %v7153, %v7327
      %v7329 = vpop.f32.mrb[0].mxu0
      %7330 = vmatprep.mubr.bf16.mxu0 0
      %7331 = vmatmul.mubr.bf16.gmra.mrb[0].mxu0 %v7080
      %v7332 = vpop.f32.mrb[0].mxu0
      %v7333 = vadd.f32 %v7153, %v7332
      %v7334 = vpop.f32.mrb[0].mxu0
      %v7335 = vpop.f32.mrb[0].mxu0
      %v7336 = vadd.f32 %v7153, %v7335
      %v7337 = vpop.f32.mrb[0].mxu0
      %7338 = vmatprep.mubr.bf16.mxu0 0
      %7339 = vmatmul.mubr.bf16.gmra.mrb[0].mxu0 %v7081
      %v7340 = vpop.f32.mrb[0].mxu0
      %v7341 = vadd.f32 %v7153, %v7340
      %v7342 = vpop.f32.mrb[0].mxu0
      %v7343 = vpop.f32.mrb[0].mxu0
      %v7344 = vadd.f32 %v7153, %v7343
      %v7345 = vpop.f32.mrb[0].mxu0
      %7346 = vmatprep.mubr.bf16.mxu0 0
      %7347 = vmatmul.mubr.bf16.gmra.mrb[0].mxu0 %v7082
      %v7348 = vpop.f32.mrb[0].mxu0
      %v7349 = vadd.f32 %v7153, %v7348
      %v7350 = vpop.f32.mrb[0].mxu0
      %v7351 = vpop.f32.mrb[0].mxu0
      %v7352 = vadd.f32 %v7153, %v7351
      %v7353 = vpop.f32.mrb[0].mxu0
      %7354 = vmatprep.mubr.bf16.mxu0 0
      %7355 = vmatmul.mubr.bf16.gmra.mrb[0].mxu0 %v7083
      %v7356 = vpop.f32.mrb[0].mxu0
      %v7357 = vadd.f32 %v7153, %v7356
      %v7358 = vpop.f32.mrb[0].mxu0
      %v7359 = vpop.f32.mrb[0].mxu0
      %v7360 = vadd.f32 %v7153, %v7359
      %v7361 = vpop.f32.mrb[0].mxu0
      %7362 = vmatprep.mubr.bf16.mxu0 0
      %7363 = vmatmul.mubr.bf16.gmra.mrb[0].mxu0 %v7084
      %v7364 = vpop.f32.mrb[0].mxu0
      %v7365 = vadd.f32 %v7153, %v7364
      %v7366 = vpop.f32.mrb[0].mxu0
      %v7367 = vpop.f32.mrb[0].mxu0
      %v7368 = vadd.f32 %v7153, %v7367
      %v7369 = vpop.f32.mrb[0].mxu0
      %7370 = vmatprep.mubr.bf16.mxu0 0
      %7371 = vmatmul.mubr.bf16.gmra.mrb[0].mxu0 %v7085
      %v7372 = vpop.f32.mrb[0].mxu0
      %v7373 = vadd.f32 %v7153, %v7372
      %v7374 = vpop.f32.mrb[0].mxu0
      %v7375 = vpop.f32.mrb[0].mxu0
      %v7376 = vadd.f32 %v7153, %v7375
      %v7377 = vpop.f32.mrb[0].mxu0
      %7378 = vmatprep.mubr.bf16.mxu0 0
      %7379 = vmatmul.mubr.bf16.gmra.mrb[0].mxu0 %v7086
      %v7380 = vpop.f32.mrb[0].mxu0
      %v7381 = vadd.f32 %v7153, %v7380
      %v7382 = vpop.f32.mrb[0].mxu0
      %v7383 = vpop.f32.mrb[0].mxu0
      %v7384 = vadd.f32 %v7153, %v7383
      %v7385 = vpop.f32.mrb[0].mxu0
      %7386 = vmatprep.mubr.bf16.mxu0 0
      %7387 = vmatmul.mubr.bf16.gmra.mrb[0].mxu0 %v7087
      %v7388 = vpop.f32.mrb[0].mxu0
      %v7389 = vadd.f32 %v7153, %v7388
      %v7390 = vpop.f32.mrb[0].mxu0
      %v7391 = vpop.f32.mrb[0].mxu0
      %v7392 = vadd.f32 %v7153, %v7391
      %v7393 = vpop.f32.mrb[0].mxu0
      %7394 = vmatprep.mubr.bf16.mxu0 0
      %7395 = vmatmul.mubr.bf16.gmra.mrb[0].mxu0 %v7088
      %v7396 = vpop.f32.mrb[0].mxu0
      %v7397 = vadd.f32 %v7153, %v7396
      %v7398 = vpop.f32.mrb[0].mxu0
      %v7399 = vpop.f32.mrb[0].mxu0
      %v7400 = vadd.f32 %v7153, %v7399
      %v7401 = vpop.f32.mrb[0].mxu0
      %7402 = vmatprep.mubr.bf16.mxu0 0
      %7403 = vmatmul.mubr.bf16.gmra.mrb[0].mxu0 %v7089
      %v7404 = vpop.f32.mrb[0].mxu0
      %v7405 = vadd.f32 %v7153, %v7404
      %v7406 = vpop.f32.mrb[0].mxu0
      %v7407 = vpop.f32.mrb[0].mxu0
      %v7408 = vadd.f32 %v7153, %v7407
      %v7409 = vpop.f32.mrb[0].mxu0
      %7410 = vmatprep.mubr.bf16.mxu0 0
      %7411 = vmatmul.mubr.bf16.gmra.mrb[0].mxu0 %v7090
      %v7412 = vpop.f32.mrb[0].mxu0
      %v7413 = vadd.f32 %v7153, %v7412
      %v7414 = vpop.f32.mrb[0].mxu0
      %v7415 = vpop.f32.mrb[0].mxu0
      %v7416 = vadd.f32 %v7153, %v7415
      %v7417 = vpop.f32.mrb[0].mxu0
      %7418 = vmatprep.mubr.bf16.mxu0 0
      %7419 = vmatmul.mubr.bf16.gmra.mrb[0].mxu0 %v7091
      %v7420 = vpop.f32.mrb[0].mxu0
      %v7421 = vadd.f32 %v7153, %v7420
      %v7422 = vpop.f32.mrb[0].mxu0
      %v7423 = vpop.f32.mrb[0].mxu0
      %v7424 = vadd.f32 %v7153, %v7423
      %v7425 = vpop.f32.mrb[0].mxu0
      %7426 = vmatprep.mubr.bf16.mxu0 0
      %7427 = vmatmul.mubr.bf16.gmra.mrb[0].mxu0 %v7092
      %v7428 = vpop.f32.mrb[0].mxu0
      %v7429 = vadd.f32 %v7153, %v7428
      %v7430 = vpop.f32.mrb[0].mxu0
      %v7431 = vpop.f32.mrb[0].mxu0
      %v7432 = vadd.f32 %v7153, %v7431
      %v7433 = vpop.f32.mrb[0].mxu0
      %7434 = vmatprep.mubr.bf16.mxu0 0
      %7435 = vmatmul.mubr.bf16.gmra.mrb[0].mxu0 %v7093
      %v7436 = vpop.f32.mrb[0].mxu0
      %v7437 = vadd.f32 %v7153, %v7436
      %v7438 = vpop.f32.mrb[0].mxu0
      %v7439 = vpop.f32.mrb[0].mxu0
      %v7440 = vadd.f32 %v7153, %v7439
      %v7441 = vpop.f32.mrb[0].mxu0
      %7442 = vmatprep.mubr.bf16.mxu0 0
      %7443 = vmatmul.mubr.bf16.gmra.mrb[0].mxu0 %v7094
      %v7444 = vpop.f32.mrb[0].mxu0
      %v7445 = vadd.f32 %v7153, %v7444
      %v7446 = vpop.f32.mrb[0].mxu0
      %v7447 = vpop.f32.mrb[0].mxu0
      %v7448 = vadd.f32 %v7153, %v7447
      %v7449 = vpop.f32.mrb[0].mxu0
      %7450 = vmatprep.mubr.bf16.mxu0 0
      %7451 = vmatmul.mubr.bf16.gmra.mrb[0].mxu0 %v7095
      %v7452 = vpop.f32.mrb[0].mxu0
      %v7453 = vadd.f32 %v7153, %v7452
      %v7454 = vpop.f32.mrb[0].mxu0
      %v7455 = vpop.f32.mrb[0].mxu0
      %v7456 = vadd.f32 %v7153, %v7455
      %v7457 = vpop.f32.mrb[0].mxu0
      %7458 = vmatprep.mubr.bf16.mxu0 0
      %7459 = vmatmul.mubr.bf16.gmra.mrb[0].mxu0 %v7096
      %v7460 = vpop.f32.mrb[0].mxu0
      %v7461 = vadd.f32 %v7153, %v7460
      %v7462 = vpop.f32.mrb[0].mxu0
      %v7463 = vpop.f32.mrb[0].mxu0
      %v7464 = vadd.f32 %v7153, %v7463
      %v7465 = vpop.f32.mrb[0].mxu0
      %7466 = vmatprep.mubr.bf16.mxu0 0
      %7467 = vmatmul.mubr.bf16.gmra.mrb[0].mxu0 %v7097
      %v7468 = vpop.f32.mrb[0].mxu0
      %v7469 = vadd.f32 %v7153, %v7468
      %v7470 = vpop.f32.mrb[0].mxu0
      %v7471 = vpop.f32.mrb[0].mxu0
      %v7472 = vadd.f32 %v7153, %v7471
      %v7473 = vpop.f32.mrb[0].mxu0
      %7474 = vmatprep.mubr.bf16.mxu0 0
      %7475 = vmatmul.mubr.bf16.gmra.mrb[0].mxu0 %v7098
      %v7476 = vpop.f32.mrb[0].mxu0
      %v7477 = vadd.f32 %v7153, %v7476
      %v7478 = vpop.f32.mrb[0].mxu0
      %v7479 = vpop.f32.mrb[0].mxu0
      %v7480 = vadd.f32 %v7153, %v7479
      %v7481 = vpop.f32.mrb[0].mxu0
      %7482 = vmatprep.mubr.bf16.mxu0 0
      %7483 = vmatmul.mubr.bf16.gmra.mrb[0].mxu0 %v7099
      %v7484 = vpop.f32.mrb[0].mxu0
      %v7485 = vadd.f32 %v7153, %v7484
      %v7486 = vpop.f32.mrb[0].mxu0
      %v7487 = vpop.f32.mrb[0].mxu0
      %v7488 = vadd.f32 %v7153, %v7487
      %v7489 = vpop.f32.mrb[0].mxu0
      %7490 = vmatprep.mubr.bf16.mxu0 0
      %7491 = vmatmul.mubr.bf16.gmra.mrb[0].mxu0 %v7100
      %v7492 = vpop.f32.mrb[0].mxu0
      %v7493 = vadd.f32 %v7153, %v7492
      %v7494 = vpop.f32.mrb[0].mxu0
      %v7495 = vpop.f32.mrb[0].mxu0
      %v7496 = vadd.f32 %v7153, %v7495
      %v7497 = vpop.f32.mrb[0].mxu0
      %7498 = vmatprep.mubr.bf16.mxu0 0
      %7499 = vmatmul.mubr.bf16.gmra.mrb[0].mxu0 %v7101
      %v7500 = vpop.f32.mrb[0].mxu0
      %v7501 = vadd.f32 %v7153, %v7500
      %v7502 = vpop.f32.mrb[0].mxu0
      %v7503 = vpop.f32.mrb[0].mxu0
      %v7504 = vadd.f32 %v7153, %v7503
      %v7505 = vpop.f32.mrb[0].mxu0
      %7506 = vmatprep.mubr.bf16.mxu0 0
      %7507 = vmatmul.mubr.bf16.gmra.mrb[0].mxu0 %v7102
      %v7508 = vpop.f32.mrb[0].mxu0
      %v7509 = vadd.f32 %v7153, %v7508
      %v7510 = vpop.f32.mrb[0].mxu0
      %v7511 = vpop.f32.mrb[0].mxu0
      %v7512 = vadd.f32 %v7153, %v7511
      %v7513 = vpop.f32.mrb[0].mxu0
      %7514 = vmatprep.mubr.bf16.mxu0 0
      %7515 = vmatmul.mubr.bf16.gmra.mrb[0].mxu0 %v7103
      %v7516 = vpop.f32.mrb[0].mxu0
      %v7517 = vadd.f32 %v7153, %v7516
      %v7518 = vpop.f32.mrb[0].mxu0
      %v7519 = vpop.f32.mrb[0].mxu0
      %v7520 = vadd.f32 %v7153, %v7519
      %v7521 = vpop.f32.mrb[0].mxu0
      %7522 = vmatprep.mubr.bf16.mxu0 0
      %7523 = vmatmul.mubr.bf16.gmra.mrb[0].mxu0 %v7104
      %v7524 = vpop.f32.mrb[0].mxu0
      %v7525 = vadd.f32 %v7153, %v7524
      %v7526 = vpop.f32.mrb[0].mxu0
      %v7527 = vpop.f32.mrb[0].mxu0
      %v7528 = vadd.f32 %v7153, %v7527
      %v7529 = vpop.f32.mrb[0].mxu0
      %7530 = vmatprep.mubr.bf16.mxu0 0
      %7531 = vmatmul.mubr.bf16.gmra.mrb[0].mxu0 %v7105
      %v7532 = vpop.f32.mrb[0].mxu0
      %v7533 = vadd.f32 %v7153, %v7532
      %v7534 = vpop.f32.mrb[0].mxu0
      %v7535 = vpop.f32.mrb[0].mxu0
      %v7536 = vadd.f32 %v7153, %v7535
      %v7537 = vpop.f32.mrb[0].mxu0
      %7538 = vmatprep.mubr.bf16.mxu0 0
      %7539 = vmatmul.mubr.bf16.gmra.mrb[0].mxu0 %v7106
      %v7540 = vpop.f32.mrb[0].mxu0
      %v7541 = vadd.f32 %v7153, %v7540
      %v7542 = vpop.f32.mrb[0].mxu0
      %v7543 = vpop.f32.mrb[0].mxu0
      %v7544 = vadd.f32 %v7153, %v7543
      %v7545 = vpop.f32.mrb[0].mxu0
      %7546 = vmatprep.mubr.bf16.mxu0 0
      %7547 = vmatmul.mubr.bf16.gmra.mrb[0].mxu0 %v7107
      %v7548 = vpop.f32.mrb[0].mxu0
      %v7549 = vadd.f32 %v7153, %v7548
      %v7550 = vpop.f32.mrb[0].mxu0
      %v7551 = vpop.f32.mrb[0].mxu0
      %v7552 = vadd.f32 %v7153, %v7551
      %v7553 = vpop.f32.mrb[0].mxu0
      %7554 = vmatprep.mubr.bf16.mxu0 0
      %7555 = vmatmul.mubr.bf16.gmra.mrb[0].mxu0 %v7108
      %v7556 = vpop.f32.mrb[0].mxu0
      %v7557 = vadd.f32 %v7153, %v7556
      %v7558 = vpop.f32.mrb[0].mxu0
      %v7559 = vpop.f32.mrb[0].mxu0
      %v7560 = vadd.f32 %v7153, %v7559
      %v7561 = vpop.f32.mrb[0].mxu0
      %7562 = vmatprep.mubr.bf16.mxu0 0
      %7563 = vmatmul.mubr.bf16.gmra.mrb[0].mxu0 %v7109
      %v7564 = vpop.f32.mrb[0].mxu0
      %v7565 = vadd.f32 %v7153, %v7564
      %v7566 = vpop.f32.mrb[0].mxu0
      %v7567 = vpop.f32.mrb[0].mxu0
      %v7568 = vadd.f32 %v7153, %v7567
      %v7569 = vpop.f32.mrb[0].mxu0
      %7570 = vmatprep.mubr.bf16.mxu0 0
      %7571 = vmatmul.mubr.bf16.gmra.mrb[0].mxu0 %v7110
      %v7572 = vpop.f32.mrb[0].mxu0
      %v7573 = vadd.f32 %v7153, %v7572
      %v7574 = vpop.f32.mrb[0].mxu0
      %v7575 = vpop.f32.mrb[0].mxu0
      %v7576 = vadd.f32 %v7153, %v7575
      %v7577 = vpop.f32.mrb[0].mxu0
      %7578 = vmatprep.mubr.bf16.mxu0 0
      %7579 = vmatmul.mubr.bf16.gmra.mrb[0].mxu0 %v7111
      %v7580 = vpop.f32.mrb[0].mxu0
      %v7581 = vadd.f32 %v7153, %v7580
      %v7582 = vpop.f32.mrb[0].mxu0
      %v7583 = vpop.f32.mrb[0].mxu0
      %v7584 = vadd.f32 %v7153, %v7583
      %v7585 = vpop.f32.mrb[0].mxu0
      %7586 = vmatprep.mubr.bf16.mxu0 0
      %7587 = vmatmul.mubr.bf16.gmra.mrb[0].mxu0 %v7112
      %v7588 = vpop.f32.mrb[0].mxu0
      %v7589 = vadd.f32 %v7153, %v7588
      %v7590 = vpop.f32.mrb[0].mxu0
      %v7591 = vpop.f32.mrb[0].mxu0
      %v7592 = vadd.f32 %v7153, %v7591
      %v7593 = vpop.f32.mrb[0].mxu0
      %7594 = vmatprep.mubr.bf16.mxu0 0
      %7595 = vmatmul.mubr.bf16.gmra.mrb[0].mxu0 %v7113
      %v7596 = vpop.f32.mrb[0].mxu0
      %v7597 = vadd.f32 %v7153, %v7596
      %v7598 = vpop.f32.mrb[0].mxu0
      %v7599 = vpop.f32.mrb[0].mxu0
      %v7600 = vadd.f32 %v7153, %v7599
      %v7601 = vpop.f32.mrb[0].mxu0
      %7602 = vmatprep.mubr.bf16.mxu0 0
      %7603 = vmatmul.mubr.bf16.gmra.mrb[0].mxu0 %v7114
      %v7604 = vpop.f32.mrb[0].mxu0
      %v7605 = vadd.f32 %v7153, %v7604
      %v7606 = vpop.f32.mrb[0].mxu0
      %v7607 = vpop.f32.mrb[0].mxu0
      %v7608 = vadd.f32 %v7153, %v7607
      %v7609 = vpop.f32.mrb[0].mxu0
      %7610 = vmatprep.mubr.bf16.mxu0 0
      %7611 = vmatmul.mubr.bf16.gmra.mrb[0].mxu0 %v7115
      %v7612 = vpop.f32.mrb[0].mxu0
      %v7613 = vadd.f32 %v7153, %v7612
      %v7614 = vpop.f32.mrb[0].mxu0
      %v7615 = vpop.f32.mrb[0].mxu0
      %v7616 = vadd.f32 %v7153, %v7615
      %v7617 = vpop.f32.mrb[0].mxu0
      %7618 = vmatprep.mubr.bf16.mxu0 0
      %7619 = vmatmul.mubr.bf16.gmra.mrb[0].mxu0 %v7116
      %v7620 = vpop.f32.mrb[0].mxu0
      %v7621 = vadd.f32 %v7153, %v7620
      %v7622 = vpop.f32.mrb[0].mxu0
      %v7623 = vpop.f32.mrb[0].mxu0
      %v7624 = vadd.f32 %v7153, %v7623
      %v7625 = vpop.f32.mrb[0].mxu0
      %7626 = vmatprep.mubr.bf16.mxu0 0
      %7627 = vmatmul.mubr.bf16.gmra.mrb[0].mxu0 %v7117
      %v7628 = vpop.f32.mrb[0].mxu0
      %v7629 = vadd.f32 %v7153, %v7628
      %v7630 = vpop.f32.mrb[0].mxu0
      %v7631 = vpop.f32.mrb[0].mxu0
      %v7632 = vadd.f32 %v7153, %v7631
      %v7633 = vpop.f32.mrb[0].mxu0
      %7634 = vmatprep.mubr.bf16.mxu0 0
      %7635 = vmatmul.mubr.bf16.gmra.mrb[0].mxu0 %v7118
      %v7636 = vpop.f32.mrb[0].mxu0
      %v7637 = vadd.f32 %v7153, %v7636
      %v7638 = vpop.f32.mrb[0].mxu0
      %v7639 = vpop.f32.mrb[0].mxu0
      %v7640 = vadd.f32 %v7153, %v7639
      %v7641 = vpop.f32.mrb[0].mxu0
      %7642 = vmatprep.mubr.bf16.mxu0 0
      %7643 = vmatmul.mubr.bf16.gmra.mrb[0].mxu0 %v7119
      %v7644 = vpop.f32.mrb[0].mxu0
      %v7645 = vadd.f32 %v7153, %v7644
      %v7646 = vpop.f32.mrb[0].mxu0
      %v7647 = vpop.f32.mrb[0].mxu0
      %v7648 = vadd.f32 %v7153, %v7647
      %v7649 = vpop.f32.mrb[0].mxu0
      %7650 = vmatprep.mubr.bf16.mxu0 0
      %7651 = vmatmul.mubr.bf16.gmra.mrb[0].mxu0 %v7120
      %v7652 = vpop.f32.mrb[0].mxu0
      %v7653 = vadd.f32 %v7153, %v7652
      %v7654 = vpop.f32.mrb[0].mxu0
      %v7655 = vpop.f32.mrb[0].mxu0
      %v7656 = vadd.f32 %v7153, %v7655
      %v7657 = vpop.f32.mrb[0].mxu0
      %7658 = vmatprep.mubr.bf16.mxu0 0
      %7659 = vmatmul.mubr.bf16.gmra.mrb[0].mxu0 %v7121
      %v7660 = vpop.f32.mrb[0].mxu0
      %v7661 = vadd.f32 %v7153, %v7660
      %v7662 = vpop.f32.mrb[0].mxu0
      %v7663 = vpop.f32.mrb[0].mxu0
      %v7664 = vadd.f32 %v7153, %v7663
      %v7665 = vpop.f32.mrb[0].mxu0
      %7666 = vmatprep.mubr.bf16.mxu0 0
      %7667 = vmatmul.mubr.bf16.gmra.mrb[0].mxu0 %v7122
      %v7668 = vpop.f32.mrb[0].mxu0
      %v7669 = vadd.f32 %v7153, %v7668
      %v7670 = vpop.f32.mrb[0].mxu0
      %v7671 = vpop.f32.mrb[0].mxu0
      %v7672 = vadd.f32 %v7153, %v7671
      %v7673 = vpop.f32.mrb[0].mxu0
      %7674 = vmatprep.mubr.bf16.mxu0 0
      %7675 = vmatmul.mubr.bf16.gmra.mrb[0].mxu0 %v7123
      %v7676 = vpop.f32.mrb[0].mxu0
      %v7677 = vadd.f32 %v7153, %v7676
      %v7678 = vpop.f32.mrb[0].mxu0
      %v7679 = vpop.f32.mrb[0].mxu0
      %v7680 = vadd.f32 %v7153, %v7679
      %v7681 = vpop.f32.mrb[0].mxu0
      %7682 = vmatprep.mubr.bf16.mxu0 0
      %7683 = vmatmul.mubr.bf16.gmra.mrb[0].mxu0 %v7124
      %v7684 = vpop.f32.mrb[0].mxu0
      %v7685 = vadd.f32 %v7153, %v7684
      %v7686 = vpop.f32.mrb[0].mxu0
      %v7687 = vpop.f32.mrb[0].mxu0
      %v7688 = vadd.f32 %v7153, %v7687
      %v7689 = vpop.f32.mrb[0].mxu0
      %7690 = vmatprep.mubr.bf16.mxu0 0
      %7691 = vmatmul.mubr.bf16.gmra.mrb[0].mxu0 %v7125
      %v7692 = vpop.f32.mrb[0].mxu0
      %v7693 = vadd.f32 %v7153, %v7692
      %v7694 = vpop.f32.mrb[0].mxu0
      %v7695 = vpop.f32.mrb[0].mxu0
      %v7696 = vadd.f32 %v7153, %v7695
      %v7697 = vpop.f32.mrb[0].mxu0
      %7698 = vmatprep.mubr.bf16.mxu0 0
      %7699 = vmatmul.mubr.bf16.gmra.mrb[0].mxu0 %v7126
      %v7700 = vpop.f32.mrb[0].mxu0
      %v7701 = vadd.f32 %v7153, %v7700
      %v7702 = vpop.f32.mrb[0].mxu0
      %v7703 = vpop.f32.mrb[0].mxu0
      %v7704 = vadd.f32 %v7153, %v7703
      %v7705 = vpop.f32.mrb[0].mxu0
      %7706 = vmatprep.mubr.bf16.mxu0 0
      %7707 = vmatmul.mubr.bf16.gmra.mrb[0].mxu0 %v7127
      %v7708 = vpop.f32.mrb[0].mxu0
      %v7709 = vadd.f32 %v7153, %v7708
      %v7710 = vpop.f32.mrb[0].mxu0
      %v7711 = vpop.f32.mrb[0].mxu0
      %v7712 = vadd.f32 %v7153, %v7711
      %v7713 = vpop.f32.mrb[0].mxu0
      %7714 = vmatprep.mubr.bf16.mxu0 0
      %7715 = vmatmul.mubr.bf16.gmra.mrb[0].mxu0 %v7128
      %v7716 = vpop.f32.mrb[0].mxu0
      %v7717 = vadd.f32 %v7153, %v7716
      %v7718 = vpop.f32.mrb[0].mxu0
      %v7719 = vpop.f32.mrb[0].mxu0
      %v7720 = vadd.f32 %v7153, %v7719
      %v7721 = vpop.f32.mrb[0].mxu0
      %7722 = vmatprep.mubr.bf16.mxu0 0
      %7723 = vmatmul.mubr.bf16.gmra.mrb[0].mxu0 %v7129
      %v7724 = vpop.f32.mrb[0].mxu0
      %v7725 = vadd.f32 %v7153, %v7724
      %v7726 = vpop.f32.mrb[0].mxu0
      %v7727 = vpop.f32.mrb[0].mxu0
      %v7728 = vadd.f32 %v7153, %v7727
      %v7729 = vpop.f32.mrb[0].mxu0
      %7730 = vmatprep.mubr.bf16.mxu0 0
      %7731 = vmatmul.mubr.bf16.gmra.mrb[0].mxu0 %v7130
      %v7732 = vpop.f32.mrb[0].mxu0
      %v7733 = vadd.f32 %v7153, %v7732
      %v7734 = vpop.f32.mrb[0].mxu0
      %v7735 = vpop.f32.mrb[0].mxu0
      %v7736 = vadd.f32 %v7153, %v7735
      %v7737 = vpop.f32.mrb[0].mxu0
      %7738 = vmatprep.mubr.bf16.mxu0 0
      %7739 = vmatmul.mubr.bf16.gmra.mrb[0].mxu0 %v7131
      %v7740 = vpop.f32.mrb[0].mxu0
      %v7741 = vadd.f32 %v7153, %v7740
      %v7742 = vpop.f32.mrb[0].mxu0
      %v7743 = vpop.f32.mrb[0].mxu0
      %v7744 = vadd.f32 %v7153, %v7743
      %v7745 = vpop.f32.mrb[0].mxu0
      %7746 = vdwg.mxu0
      %v7747 = vadd.f32 %v7237, %v4647
      %v7748 = vadd.f32 %v7240, %v4648
      %v7749 = vadd.f32 %v7245, %v4649
      %v7750 = vadd.f32 %v7248, %v4650
      %v7751 = vadd.f32 %v7253, %v4651
      %v7752 = vadd.f32 %v7256, %v4652
      %v7753 = vadd.f32 %v7261, %v4653
      %v7754 = vadd.f32 %v7264, %v4654
      %v7755 = vadd.f32 %v7269, %v4655
      %v7756 = vadd.f32 %v7272, %v4656
      %v7757 = vadd.f32 %v7277, %v4657
      %v7758 = vadd.f32 %v7280, %v4658
      %v7759 = vadd.f32 %v7285, %v4659
      %v7760 = vadd.f32 %v7288, %v4660
      %v7761 = vadd.f32 %v7293, %v4661
      %v7762 = vadd.f32 %v7296, %v4662
      %v7763 = vadd.f32 %v7301, %v4663
      %v7764 = vadd.f32 %v7304, %v4664
      %v7765 = vadd.f32 %v7309, %v4665
      %v7766 = vadd.f32 %v7312, %v4666
      %v7767 = vadd.f32 %v7317, %v4667
      %v7768 = vadd.f32 %v7320, %v4668
      %v7769 = vadd.f32 %v7325, %v4669
      %v7770 = vadd.f32 %v7328, %v4670
      %v7771 = vadd.f32 %v7333, %v4671
      %v7772 = vadd.f32 %v7336, %v4672
      %v7773 = vadd.f32 %v7341, %v4673
      %v7774 = vadd.f32 %v7344, %v4674
      %v7775 = vadd.f32 %v7349, %v4675
      %v7776 = vadd.f32 %v7352, %v4676
      %v7777 = vadd.f32 %v7357, %v4677
      %v7778 = vadd.f32 %v7360, %v4678
      %v7779 = vadd.f32 %v7365, %v4679
      %v7780 = vadd.f32 %v7368, %v4680
      %v7781 = vadd.f32 %v7373, %v4681
      %v7782 = vadd.f32 %v7376, %v4682
      %v7783 = vadd.f32 %v7381, %v4683
      %v7784 = vadd.f32 %v7384, %v4684
      %v7785 = vadd.f32 %v7389, %v4685
      %v7786 = vadd.f32 %v7392, %v4686
      %v7787 = vadd.f32 %v7397, %v4687
      %v7788 = vadd.f32 %v7400, %v4688
      %v7789 = vadd.f32 %v7405, %v4689
      %v7790 = vadd.f32 %v7408, %v4690
      %v7791 = vadd.f32 %v7413, %v4691
      %v7792 = vadd.f32 %v7416, %v4692
      %v7793 = vadd.f32 %v7421, %v4693
      %v7794 = vadd.f32 %v7424, %v4694
      %v7795 = vadd.f32 %v7429, %v4695
      %v7796 = vadd.f32 %v7432, %v4696
      %v7797 = vadd.f32 %v7437, %v4697
      %v7798 = vadd.f32 %v7440, %v4698
      %v7799 = vadd.f32 %v7445, %v4699
      %v7800 = vadd.f32 %v7448, %v4700
      %v7801 = vadd.f32 %v7453, %v4701
      %v7802 = vadd.f32 %v7456, %v4702
      %v7803 = vadd.f32 %v7461, %v4703
      %v7804 = vadd.f32 %v7464, %v4704
      %v7805 = vadd.f32 %v7469, %v4705
      %v7806 = vadd.f32 %v7472, %v4706
      %v7807 = vadd.f32 %v7477, %v4707
      %v7808 = vadd.f32 %v7480, %v4708
      %v7809 = vadd.f32 %v7485, %v4709
      %v7810 = vadd.f32 %v7488, %v4710
      %v7811 = vadd.f32 %v7493, %v4711
      %v7812 = vadd.f32 %v7496, %v4712
      %v7813 = vadd.f32 %v7501, %v4713
      %v7814 = vadd.f32 %v7504, %v4714
      %v7815 = vadd.f32 %v7509, %v4715
      %v7816 = vadd.f32 %v7512, %v4716
      %v7817 = vadd.f32 %v7517, %v4717
      %v7818 = vadd.f32 %v7520, %v4718
      %v7819 = vadd.f32 %v7525, %v4719
      %v7820 = vadd.f32 %v7528, %v4720
      %v7821 = vadd.f32 %v7533, %v4721
      %v7822 = vadd.f32 %v7536, %v4722
      %v7823 = vadd.f32 %v7541, %v4723
      %v7824 = vadd.f32 %v7544, %v4724
      %v7825 = vadd.f32 %v7549, %v4725
      %v7826 = vadd.f32 %v7552, %v4726
      %v7827 = vadd.f32 %v7557, %v4727
      %v7828 = vadd.f32 %v7560, %v4728
      %v7829 = vadd.f32 %v7565, %v4729
      %v7830 = vadd.f32 %v7568, %v4730
      %v7831 = vadd.f32 %v7573, %v4731
      %v7832 = vadd.f32 %v7576, %v4732
      %v7833 = vadd.f32 %v7581, %v4733
      %v7834 = vadd.f32 %v7584, %v4734
      %v7835 = vadd.f32 %v7589, %v4735
      %v7836 = vadd.f32 %v7592, %v4736
      %v7837 = vadd.f32 %v7597, %v4737
      %v7838 = vadd.f32 %v7600, %v4738
      %v7839 = vadd.f32 %v7605, %v4739
      %v7840 = vadd.f32 %v7608, %v4740
      %v7841 = vadd.f32 %v7613, %v4741
      %v7842 = vadd.f32 %v7616, %v4742
      %v7843 = vadd.f32 %v7621, %v4743
      %v7844 = vadd.f32 %v7624, %v4744
      %v7845 = vadd.f32 %v7629, %v4745
      %v7846 = vadd.f32 %v7632, %v4746
      %v7847 = vadd.f32 %v7637, %v4747
      %v7848 = vadd.f32 %v7640, %v4748
      %v7849 = vadd.f32 %v7645, %v4749
      %v7850 = vadd.f32 %v7648, %v4750
      %v7851 = vadd.f32 %v7653, %v4751
      %v7852 = vadd.f32 %v7656, %v4752
      %v7853 = vadd.f32 %v7661, %v4753
      %v7854 = vadd.f32 %v7664, %v4754
      %v7855 = vadd.f32 %v7669, %v4755
      %v7856 = vadd.f32 %v7672, %v4756
      %v7857 = vadd.f32 %v7677, %v4757
      %v7858 = vadd.f32 %v7680, %v4758
      %v7859 = vadd.f32 %v7685, %v4759
      %v7860 = vadd.f32 %v7688, %v4760
      %v7861 = vadd.f32 %v7693, %v4761
      %v7862 = vadd.f32 %v7696, %v4762
      %v7863 = vadd.f32 %v7701, %v4763
      %v7864 = vadd.f32 %v7704, %v4764
      %v7865 = vadd.f32 %v7709, %v4765
      %v7866 = vadd.f32 %v7712, %v4766
      %v7867 = vadd.f32 %v7717, %v4767
      %v7868 = vadd.f32 %v7720, %v4768
      %v7869 = vadd.f32 %v7725, %v4769
      %v7870 = vadd.f32 %v7728, %v4770
      %v7871 = vadd.f32 %v7733, %v4771
      %v7872 = vadd.f32 %v7736, %v4772
      %v7873 = vadd.f32 %v7741, %v4773
      %v7874 = vadd.f32 %v7744, %v4774
      %v7875 = vpack.c.bf16 %v7748, %v7747
      %v7876 = vpack.c.bf16 %v7750, %v7749
      %v7877 = vpack.c.bf16 %v7752, %v7751
      %v7878 = vpack.c.bf16 %v7754, %v7753
      %v7879 = vpack.c.bf16 %v7756, %v7755
      %v7880 = vpack.c.bf16 %v7758, %v7757
      %v7881 = vpack.c.bf16 %v7760, %v7759
      %v7882 = vpack.c.bf16 %v7762, %v7761
      %v7883 = vpack.c.bf16 %v7764, %v7763
      %v7884 = vpack.c.bf16 %v7766, %v7765
      %v7885 = vpack.c.bf16 %v7768, %v7767
      %v7886 = vpack.c.bf16 %v7770, %v7769
      %v7887 = vpack.c.bf16 %v7772, %v7771
      %v7888 = vpack.c.bf16 %v7774, %v7773
      %v7889 = vpack.c.bf16 %v7776, %v7775
      %v7890 = vpack.c.bf16 %v7778, %v7777
      %v7891 = vpack.c.bf16 %v7780, %v7779
      %v7892 = vpack.c.bf16 %v7782, %v7781
      %v7893 = vpack.c.bf16 %v7784, %v7783
      %v7894 = vpack.c.bf16 %v7786, %v7785
      %v7895 = vpack.c.bf16 %v7788, %v7787
      %v7896 = vpack.c.bf16 %v7790, %v7789
      %v7897 = vpack.c.bf16 %v7792, %v7791
      %v7898 = vpack.c.bf16 %v7794, %v7793
      %v7899 = vpack.c.bf16 %v7796, %v7795
      %v7900 = vpack.c.bf16 %v7798, %v7797
      %v7901 = vpack.c.bf16 %v7800, %v7799
      %v7902 = vpack.c.bf16 %v7802, %v7801
      %v7903 = vpack.c.bf16 %v7804, %v7803
      %v7904 = vpack.c.bf16 %v7806, %v7805
      %v7905 = vpack.c.bf16 %v7808, %v7807
      %v7906 = vpack.c.bf16 %v7810, %v7809
      %v7907 = vpack.c.bf16 %v7812, %v7811
      %v7908 = vpack.c.bf16 %v7814, %v7813
      %v7909 = vpack.c.bf16 %v7816, %v7815
      %v7910 = vpack.c.bf16 %v7818, %v7817
      %v7911 = vpack.c.bf16 %v7820, %v7819
      %v7912 = vpack.c.bf16 %v7822, %v7821
      %v7913 = vpack.c.bf16 %v7824, %v7823
      %v7914 = vpack.c.bf16 %v7826, %v7825
      %v7915 = vpack.c.bf16 %v7828, %v7827
      %v7916 = vpack.c.bf16 %v7830, %v7829
      %v7917 = vpack.c.bf16 %v7832, %v7831
      %v7918 = vpack.c.bf16 %v7834, %v7833
      %v7919 = vpack.c.bf16 %v7836, %v7835
      %v7920 = vpack.c.bf16 %v7838, %v7837
      %v7921 = vpack.c.bf16 %v7840, %v7839
      %v7922 = vpack.c.bf16 %v7842, %v7841
      %v7923 = vpack.c.bf16 %v7844, %v7843
      %v7924 = vpack.c.bf16 %v7846, %v7845
      %v7925 = vpack.c.bf16 %v7848, %v7847
      %v7926 = vpack.c.bf16 %v7850, %v7849
      %v7927 = vpack.c.bf16 %v7852, %v7851
      %v7928 = vpack.c.bf16 %v7854, %v7853
      %v7929 = vpack.c.bf16 %v7856, %v7855
      %v7930 = vpack.c.bf16 %v7858, %v7857
      %v7931 = vpack.c.bf16 %v7860, %v7859
      %v7932 = vpack.c.bf16 %v7862, %v7861
      %v7933 = vpack.c.bf16 %v7864, %v7863
      %v7934 = vpack.c.bf16 %v7866, %v7865
      %v7935 = vpack.c.bf16 %v7868, %v7867
      %v7936 = vpack.c.bf16 %v7870, %v7869
      %v7937 = vpack.c.bf16 %v7872, %v7871
      %v7938 = vpack.c.bf16 %v7874, %v7873
      %v7939 = vld [vmem:[%s6] sm:$0xf]
      %v7940 = vld [vmem:[%s6 + $0x4] sm:$0xf]
      %v7941 = vld [vmem:[%s6 + $0x8] sm:$0xf]
      %v7942 = vld [vmem:[%s6 + $0xc] sm:$0xf]
      %v7943 = vld [vmem:[%s6 + $0x10] sm:$0xf]
      %v7944 = vld [vmem:[%s6 + $0x14] sm:$0xf]
      %v7945 = vld [vmem:[%s6 + $0x18] sm:$0xf]
      %v7946 = vld [vmem:[%s6 + $0x1c] sm:$0xf]
      %v7947 = vld [vmem:[%s6 + $0x20] sm:$0xf]
      %v7948 = vld [vmem:[%s6 + $0x24] sm:$0xf]
      %v7949 = vld [vmem:[%s6 + $0x28] sm:$0xf]
      %v7950 = vld [vmem:[%s6 + $0x2c] sm:$0xf]
      %v7951 = vld [vmem:[%s6 + $0x30] sm:$0xf]
      %v7952 = vld [vmem:[%s6 + $0x34] sm:$0xf]
      %v7953 = vld [vmem:[%s6 + $0x38] sm:$0xf]
      %v7954 = vld [vmem:[%s6 + $0x3c] sm:$0xf]
      %v7955 = vld [vmem:[%s7] sm:$0x1]
      %v7957 = vlaneseq
      %v7958 = vshrl.u32 %v7957, 7
      %v7959 = vsub.s32 0, %v7958
      %v7960 = vrot.slane %v7955, %v7959
      %v7978 = vunpack.c.l.b16 %v7939
      %v7979 = vunpack.c.l.b16 %v7940
      %v7980 = vunpack.c.l.b16 %v7941
      %v7981 = vunpack.c.l.b16 %v7942
      %v7982 = vunpack.c.l.b16 %v7943
      %v7983 = vunpack.c.l.b16 %v7944
      %v7984 = vunpack.c.l.b16 %v7945
      %v7985 = vunpack.c.l.b16 %v7946
      %v7986 = vunpack.c.l.b16 %v7947
      %v7987 = vunpack.c.l.b16 %v7948
      %v7988 = vunpack.c.l.b16 %v7949
      %v7989 = vunpack.c.l.b16 %v7950
      %v7990 = vunpack.c.l.b16 %v7951
      %v7991 = vunpack.c.l.b16 %v7952
      %v7992 = vunpack.c.l.b16 %v7953
      %v7993 = vunpack.c.l.b16 %v7954
      %v7994 = vpack.c.b16 %v7979, %v7978
      %v7995 = vpack.c.b16 %v7981, %v7980
      %v7996 = vpack.c.b16 %v7983, %v7982
      %v7997 = vpack.c.b16 %v7985, %v7984
      %v7998 = vpack.c.b16 %v7987, %v7986
      %v7999 = vpack.c.b16 %v7989, %v7988
      %v8000 = vpack.c.b16 %v7991, %v7990
      %v8001 = vpack.c.b16 %v7993, %v7992
      %8010 = vmatprep.subr.bf16.mxu0 0
      %8011 = vmatpush1.bf16.msra.mxu0 %v7994
      %8012 = vmatprep.subr.bf16.mxu0 0
      %8013 = vmatpush1.bf16.msra.mxu0 %v7995
      %8014 = vmatprep.subr.bf16.mxu0 0
      %8015 = vmatpush1.bf16.msra.mxu0 %v7996
      %8016 = vmatprep.subr.bf16.mxu0 0
      %8017 = vmatpush1.bf16.msra.mxu0 %v7997
      %8018 = vmatprep.subr.bf16.mxu0 0
      %8019 = vmatpush1.bf16.msra.mxu0 %v7998
      %8020 = vmatprep.subr.bf16.mxu0 0
      %8021 = vmatpush1.bf16.msra.mxu0 %v7999
      %8022 = vmatprep.subr.bf16.mxu0 0
      %8023 = vmatpush1.bf16.msra.mxu0 %v8000
      %8024 = vmatprep.subr.bf16.mxu0 0
      %8025 = vmatpush1.bf16.msra.mxu0 %v8001
      %8026 = vmatprep.subr.bf16.mxu0 0
      %8027 = vmatpush1.bf16.msra.mxu0 0
      %8028 = vmatprep.subr.bf16.mxu0 0
      %8029 = vmatpush1.bf16.msra.mxu0 0
      %8030 = vmatprep.subr.bf16.mxu0 0
      %8031 = vmatpush1.bf16.msra.mxu0 0
      %8032 = vmatprep.subr.bf16.mxu0 0
      %8033 = vmatpush1.bf16.msra.mxu0 0
      %8034 = vmatprep.subr.bf16.mxu0 0
      %8035 = vmatpush1.bf16.msra.mxu0 0
      %8036 = vmatprep.subr.bf16.mxu0 0
      %8037 = vmatpush1.bf16.msra.mxu0 0
      %8038 = vmatprep.subr.bf16.mxu0 0
      %8039 = vmatpush1.bf16.msra.mxu0 0
      %8040 = vmatprep.subr.bf16.mxu0 0
      %8041 = vmatpush1.bf16.msra.mxu0 0
      %8042 = vmatprep.mubr.bf16.mxu0 0
      %8043 = vmatmul.mubr.bf16.gmra.mrb[0].mxu0 %v7875
      %v8044 = vpop.f32.mrb[0].mxu0
      %v8045 = vadd.f32 %v7960, %v8044
      %v8046 = vpop.f32.mrb[0].mxu0
      %v8047 = vpop.f32.mrb[0].mxu0
      %v8048 = vadd.f32 %v7960, %v8047
      %v8049 = vpop.f32.mrb[0].mxu0
      %8050 = vmatprep.mubr.bf16.mxu0 0
      %8051 = vmatmul.mubr.bf16.gmra.mrb[0].mxu0 %v7876
      %v8052 = vpop.f32.mrb[0].mxu0
      %v8053 = vadd.f32 %v7960, %v8052
      %v8054 = vpop.f32.mrb[0].mxu0
      %v8055 = vpop.f32.mrb[0].mxu0
      %v8056 = vadd.f32 %v7960, %v8055
      %v8057 = vpop.f32.mrb[0].mxu0
      %8058 = vmatprep.mubr.bf16.mxu0 0
      %8059 = vmatmul.mubr.bf16.gmra.mrb[0].mxu0 %v7877
      %v8060 = vpop.f32.mrb[0].mxu0
      %v8061 = vadd.f32 %v7960, %v8060
      %v8062 = vpop.f32.mrb[0].mxu0
      %v8063 = vpop.f32.mrb[0].mxu0
      %v8064 = vadd.f32 %v7960, %v8063
      %v8065 = vpop.f32.mrb[0].mxu0
      %8066 = vmatprep.mubr.bf16.mxu0 0
      %8067 = vmatmul.mubr.bf16.gmra.mrb[0].mxu0 %v7878
      %v8068 = vpop.f32.mrb[0].mxu0
      %v8069 = vadd.f32 %v7960, %v8068
      %v8070 = vpop.f32.mrb[0].mxu0
      %v8071 = vpop.f32.mrb[0].mxu0
      %v8072 = vadd.f32 %v7960, %v8071
      %v8073 = vpop.f32.mrb[0].mxu0
      %8074 = vmatprep.mubr.bf16.mxu0 0
      %8075 = vmatmul.mubr.bf16.gmra.mrb[0].mxu0 %v7879
      %v8076 = vpop.f32.mrb[0].mxu0
      %v8077 = vadd.f32 %v7960, %v8076
      %v8078 = vpop.f32.mrb[0].mxu0
      %v8079 = vpop.f32.mrb[0].mxu0
      %v8080 = vadd.f32 %v7960, %v8079
      %v8081 = vpop.f32.mrb[0].mxu0
      %8082 = vmatprep.mubr.bf16.mxu0 0
      %8083 = vmatmul.mubr.bf16.gmra.mrb[0].mxu0 %v7880
      %v8084 = vpop.f32.mrb[0].mxu0
      %v8085 = vadd.f32 %v7960, %v8084
      %v8086 = vpop.f32.mrb[0].mxu0
      %v8087 = vpop.f32.mrb[0].mxu0
      %v8088 = vadd.f32 %v7960, %v8087
      %v8089 = vpop.f32.mrb[0].mxu0
      %8090 = vmatprep.mubr.bf16.mxu0 0
      %8091 = vmatmul.mubr.bf16.gmra.mrb[0].mxu0 %v7881
      %v8092 = vpop.f32.mrb[0].mxu0
      %v8093 = vadd.f32 %v7960, %v8092
      %v8094 = vpop.f32.mrb[0].mxu0
      %v8095 = vpop.f32.mrb[0].mxu0
      %v8096 = vadd.f32 %v7960, %v8095
      %v8097 = vpop.f32.mrb[0].mxu0
      %8098 = vmatprep.mubr.bf16.mxu0 0
      %8099 = vmatmul.mubr.bf16.gmra.mrb[0].mxu0 %v7882
      %v8100 = vpop.f32.mrb[0].mxu0
      %v8101 = vadd.f32 %v7960, %v8100
      %v8102 = vpop.f32.mrb[0].mxu0
      %v8103 = vpop.f32.mrb[0].mxu0
      %v8104 = vadd.f32 %v7960, %v8103
      %v8105 = vpop.f32.mrb[0].mxu0
      %8106 = vmatprep.mubr.bf16.mxu0 0
      %8107 = vmatmul.mubr.bf16.gmra.mrb[0].mxu0 %v7883
      %v8108 = vpop.f32.mrb[0].mxu0
      %v8109 = vadd.f32 %v7960, %v8108
      %v8110 = vpop.f32.mrb[0].mxu0
      %v8111 = vpop.f32.mrb[0].mxu0
      %v8112 = vadd.f32 %v7960, %v8111
      %v8113 = vpop.f32.mrb[0].mxu0
      %8114 = vmatprep.mubr.bf16.mxu0 0
      %8115 = vmatmul.mubr.bf16.gmra.mrb[0].mxu0 %v7884
      %v8116 = vpop.f32.mrb[0].mxu0
      %v8117 = vadd.f32 %v7960, %v8116
      %v8118 = vpop.f32.mrb[0].mxu0
      %v8119 = vpop.f32.mrb[0].mxu0
      %v8120 = vadd.f32 %v7960, %v8119
      %v8121 = vpop.f32.mrb[0].mxu0
      %8122 = vmatprep.mubr.bf16.mxu0 0
      %8123 = vmatmul.mubr.bf16.gmra.mrb[0].mxu0 %v7885
      %v8124 = vpop.f32.mrb[0].mxu0
      %v8125 = vadd.f32 %v7960, %v8124
      %v8126 = vpop.f32.mrb[0].mxu0
      %v8127 = vpop.f32.mrb[0].mxu0
      %v8128 = vadd.f32 %v7960, %v8127
      %v8129 = vpop.f32.mrb[0].mxu0
      %8130 = vmatprep.mubr.bf16.mxu0 0
      %8131 = vmatmul.mubr.bf16.gmra.mrb[0].mxu0 %v7886
      %v8132 = vpop.f32.mrb[0].mxu0
      %v8133 = vadd.f32 %v7960, %v8132
      %v8134 = vpop.f32.mrb[0].mxu0
      %v8135 = vpop.f32.mrb[0].mxu0
      %v8136 = vadd.f32 %v7960, %v8135
      %v8137 = vpop.f32.mrb[0].mxu0
      %8138 = vmatprep.mubr.bf16.mxu0 0
      %8139 = vmatmul.mubr.bf16.gmra.mrb[0].mxu0 %v7887
      %v8140 = vpop.f32.mrb[0].mxu0
      %v8141 = vadd.f32 %v7960, %v8140
      %v8142 = vpop.f32.mrb[0].mxu0
      %v8143 = vpop.f32.mrb[0].mxu0
      %v8144 = vadd.f32 %v7960, %v8143
      %v8145 = vpop.f32.mrb[0].mxu0
      %8146 = vmatprep.mubr.bf16.mxu0 0
      %8147 = vmatmul.mubr.bf16.gmra.mrb[0].mxu0 %v7888
      %v8148 = vpop.f32.mrb[0].mxu0
      %v8149 = vadd.f32 %v7960, %v8148
      %v8150 = vpop.f32.mrb[0].mxu0
      %v8151 = vpop.f32.mrb[0].mxu0
      %v8152 = vadd.f32 %v7960, %v8151
      %v8153 = vpop.f32.mrb[0].mxu0
      %8154 = vmatprep.mubr.bf16.mxu0 0
      %8155 = vmatmul.mubr.bf16.gmra.mrb[0].mxu0 %v7889
      %v8156 = vpop.f32.mrb[0].mxu0
      %v8157 = vadd.f32 %v7960, %v8156
      %v8158 = vpop.f32.mrb[0].mxu0
      %v8159 = vpop.f32.mrb[0].mxu0
      %v8160 = vadd.f32 %v7960, %v8159
      %v8161 = vpop.f32.mrb[0].mxu0
      %8162 = vmatprep.mubr.bf16.mxu0 0
      %8163 = vmatmul.mubr.bf16.gmra.mrb[0].mxu0 %v7890
      %v8164 = vpop.f32.mrb[0].mxu0
      %v8165 = vadd.f32 %v7960, %v8164
      %v8166 = vpop.f32.mrb[0].mxu0
      %v8167 = vpop.f32.mrb[0].mxu0
      %v8168 = vadd.f32 %v7960, %v8167
      %v8169 = vpop.f32.mrb[0].mxu0
      %8170 = vmatprep.mubr.bf16.mxu0 0
      %8171 = vmatmul.mubr.bf16.gmra.mrb[0].mxu0 %v7891
      %v8172 = vpop.f32.mrb[0].mxu0
      %v8173 = vadd.f32 %v7960, %v8172
      %v8174 = vpop.f32.mrb[0].mxu0
      %v8175 = vpop.f32.mrb[0].mxu0
      %v8176 = vadd.f32 %v7960, %v8175
      %v8177 = vpop.f32.mrb[0].mxu0
      %8178 = vmatprep.mubr.bf16.mxu0 0
      %8179 = vmatmul.mubr.bf16.gmra.mrb[0].mxu0 %v7892
      %v8180 = vpop.f32.mrb[0].mxu0
      %v8181 = vadd.f32 %v7960, %v8180
      %v8182 = vpop.f32.mrb[0].mxu0
      %v8183 = vpop.f32.mrb[0].mxu0
      %v8184 = vadd.f32 %v7960, %v8183
      %v8185 = vpop.f32.mrb[0].mxu0
      %8186 = vmatprep.mubr.bf16.mxu0 0
      %8187 = vmatmul.mubr.bf16.gmra.mrb[0].mxu0 %v7893
      %v8188 = vpop.f32.mrb[0].mxu0
      %v8189 = vadd.f32 %v7960, %v8188
      %v8190 = vpop.f32.mrb[0].mxu0
      %v8191 = vpop.f32.mrb[0].mxu0
      %v8192 = vadd.f32 %v7960, %v8191
      %v8193 = vpop.f32.mrb[0].mxu0
      %8194 = vmatprep.mubr.bf16.mxu0 0
      %8195 = vmatmul.mubr.bf16.gmra.mrb[0].mxu0 %v7894
      %v8196 = vpop.f32.mrb[0].mxu0
      %v8197 = vadd.f32 %v7960, %v8196
      %v8198 = vpop.f32.mrb[0].mxu0
      %v8199 = vpop.f32.mrb[0].mxu0
      %v8200 = vadd.f32 %v7960, %v8199
      %v8201 = vpop.f32.mrb[0].mxu0
      %8202 = vmatprep.mubr.bf16.mxu0 0
      %8203 = vmatmul.mubr.bf16.gmra.mrb[0].mxu0 %v7895
      %v8204 = vpop.f32.mrb[0].mxu0
      %v8205 = vadd.f32 %v7960, %v8204
      %v8206 = vpop.f32.mrb[0].mxu0
      %v8207 = vpop.f32.mrb[0].mxu0
      %v8208 = vadd.f32 %v7960, %v8207
      %v8209 = vpop.f32.mrb[0].mxu0
      %8210 = vmatprep.mubr.bf16.mxu0 0
      %8211 = vmatmul.mubr.bf16.gmra.mrb[0].mxu0 %v7896
      %v8212 = vpop.f32.mrb[0].mxu0
      %v8213 = vadd.f32 %v7960, %v8212
      %v8214 = vpop.f32.mrb[0].mxu0
      %v8215 = vpop.f32.mrb[0].mxu0
      %v8216 = vadd.f32 %v7960, %v8215
      %v8217 = vpop.f32.mrb[0].mxu0
      %8218 = vmatprep.mubr.bf16.mxu0 0
      %8219 = vmatmul.mubr.bf16.gmra.mrb[0].mxu0 %v7897
      %v8220 = vpop.f32.mrb[0].mxu0
      %v8221 = vadd.f32 %v7960, %v8220
      %v8222 = vpop.f32.mrb[0].mxu0
      %v8223 = vpop.f32.mrb[0].mxu0
      %v8224 = vadd.f32 %v7960, %v8223
      %v8225 = vpop.f32.mrb[0].mxu0
      %8226 = vmatprep.mubr.bf16.mxu0 0
      %8227 = vmatmul.mubr.bf16.gmra.mrb[0].mxu0 %v7898
      %v8228 = vpop.f32.mrb[0].mxu0
      %v8229 = vadd.f32 %v7960, %v8228
      %v8230 = vpop.f32.mrb[0].mxu0
      %v8231 = vpop.f32.mrb[0].mxu0
      %v8232 = vadd.f32 %v7960, %v8231
      %v8233 = vpop.f32.mrb[0].mxu0
      %8234 = vmatprep.mubr.bf16.mxu0 0
      %8235 = vmatmul.mubr.bf16.gmra.mrb[0].mxu0 %v7899
      %v8236 = vpop.f32.mrb[0].mxu0
      %v8237 = vadd.f32 %v7960, %v8236
      %v8238 = vpop.f32.mrb[0].mxu0
      %v8239 = vpop.f32.mrb[0].mxu0
      %v8240 = vadd.f32 %v7960, %v8239
      %v8241 = vpop.f32.mrb[0].mxu0
      %8242 = vmatprep.mubr.bf16.mxu0 0
      %8243 = vmatmul.mubr.bf16.gmra.mrb[0].mxu0 %v7900
      %v8244 = vpop.f32.mrb[0].mxu0
      %v8245 = vadd.f32 %v7960, %v8244
      %v8246 = vpop.f32.mrb[0].mxu0
      %v8247 = vpop.f32.mrb[0].mxu0
      %v8248 = vadd.f32 %v7960, %v8247
      %v8249 = vpop.f32.mrb[0].mxu0
      %8250 = vmatprep.mubr.bf16.mxu0 0
      %8251 = vmatmul.mubr.bf16.gmra.mrb[0].mxu0 %v7901
      %v8252 = vpop.f32.mrb[0].mxu0
      %v8253 = vadd.f32 %v7960, %v8252
      %v8254 = vpop.f32.mrb[0].mxu0
      %v8255 = vpop.f32.mrb[0].mxu0
      %v8256 = vadd.f32 %v7960, %v8255
      %v8257 = vpop.f32.mrb[0].mxu0
      %8258 = vmatprep.mubr.bf16.mxu0 0
      %8259 = vmatmul.mubr.bf16.gmra.mrb[0].mxu0 %v7902
      %v8260 = vpop.f32.mrb[0].mxu0
      %v8261 = vadd.f32 %v7960, %v8260
      %v8262 = vpop.f32.mrb[0].mxu0
      %v8263 = vpop.f32.mrb[0].mxu0
      %v8264 = vadd.f32 %v7960, %v8263
      %v8265 = vpop.f32.mrb[0].mxu0
      %8266 = vmatprep.mubr.bf16.mxu0 0
      %8267 = vmatmul.mubr.bf16.gmra.mrb[0].mxu0 %v7903
      %v8268 = vpop.f32.mrb[0].mxu0
      %v8269 = vadd.f32 %v7960, %v8268
      %v8270 = vpop.f32.mrb[0].mxu0
      %v8271 = vpop.f32.mrb[0].mxu0
      %v8272 = vadd.f32 %v7960, %v8271
      %v8273 = vpop.f32.mrb[0].mxu0
      %8274 = vmatprep.mubr.bf16.mxu0 0
      %8275 = vmatmul.mubr.bf16.gmra.mrb[0].mxu0 %v7904
      %v8276 = vpop.f32.mrb[0].mxu0
      %v8277 = vadd.f32 %v7960, %v8276
      %v8278 = vpop.f32.mrb[0].mxu0
      %v8279 = vpop.f32.mrb[0].mxu0
      %v8280 = vadd.f32 %v7960, %v8279
      %v8281 = vpop.f32.mrb[0].mxu0
      %8282 = vmatprep.mubr.bf16.mxu0 0
      %8283 = vmatmul.mubr.bf16.gmra.mrb[0].mxu0 %v7905
      %v8284 = vpop.f32.mrb[0].mxu0
      %v8285 = vadd.f32 %v7960, %v8284
      %v8286 = vpop.f32.mrb[0].mxu0
      %v8287 = vpop.f32.mrb[0].mxu0
      %v8288 = vadd.f32 %v7960, %v8287
      %v8289 = vpop.f32.mrb[0].mxu0
      %8290 = vmatprep.mubr.bf16.mxu0 0
      %8291 = vmatmul.mubr.bf16.gmra.mrb[0].mxu0 %v7906
      %v8292 = vpop.f32.mrb[0].mxu0
      %v8293 = vadd.f32 %v7960, %v8292
      %v8294 = vpop.f32.mrb[0].mxu0
      %v8295 = vpop.f32.mrb[0].mxu0
      %v8296 = vadd.f32 %v7960, %v8295
      %v8297 = vpop.f32.mrb[0].mxu0
      %8298 = vmatprep.mubr.bf16.mxu0 0
      %8299 = vmatmul.mubr.bf16.gmra.mrb[0].mxu0 %v7907
      %v8300 = vpop.f32.mrb[0].mxu0
      %v8301 = vadd.f32 %v7960, %v8300
      %v8302 = vpop.f32.mrb[0].mxu0
      %v8303 = vpop.f32.mrb[0].mxu0
      %v8304 = vadd.f32 %v7960, %v8303
      %v8305 = vpop.f32.mrb[0].mxu0
      %8306 = vmatprep.mubr.bf16.mxu0 0
      %8307 = vmatmul.mubr.bf16.gmra.mrb[0].mxu0 %v7908
      %v8308 = vpop.f32.mrb[0].mxu0
      %v8309 = vadd.f32 %v7960, %v8308
      %v8310 = vpop.f32.mrb[0].mxu0
      %v8311 = vpop.f32.mrb[0].mxu0
      %v8312 = vadd.f32 %v7960, %v8311
      %v8313 = vpop.f32.mrb[0].mxu0
      %8314 = vmatprep.mubr.bf16.mxu0 0
      %8315 = vmatmul.mubr.bf16.gmra.mrb[0].mxu0 %v7909
      %v8316 = vpop.f32.mrb[0].mxu0
      %v8317 = vadd.f32 %v7960, %v8316
      %v8318 = vpop.f32.mrb[0].mxu0
      %v8319 = vpop.f32.mrb[0].mxu0
      %v8320 = vadd.f32 %v7960, %v8319
      %v8321 = vpop.f32.mrb[0].mxu0
      %8322 = vmatprep.mubr.bf16.mxu0 0
      %8323 = vmatmul.mubr.bf16.gmra.mrb[0].mxu0 %v7910
      %v8324 = vpop.f32.mrb[0].mxu0
      %v8325 = vadd.f32 %v7960, %v8324
      %v8326 = vpop.f32.mrb[0].mxu0
      %v8327 = vpop.f32.mrb[0].mxu0
      %v8328 = vadd.f32 %v7960, %v8327
      %v8329 = vpop.f32.mrb[0].mxu0
      %8330 = vmatprep.mubr.bf16.mxu0 0
      %8331 = vmatmul.mubr.bf16.gmra.mrb[0].mxu0 %v7911
      %v8332 = vpop.f32.mrb[0].mxu0
      %v8333 = vadd.f32 %v7960, %v8332
      %v8334 = vpop.f32.mrb[0].mxu0
      %v8335 = vpop.f32.mrb[0].mxu0
      %v8336 = vadd.f32 %v7960, %v8335
      %v8337 = vpop.f32.mrb[0].mxu0
      %8338 = vmatprep.mubr.bf16.mxu0 0
      %8339 = vmatmul.mubr.bf16.gmra.mrb[0].mxu0 %v7912
      %v8340 = vpop.f32.mrb[0].mxu0
      %v8341 = vadd.f32 %v7960, %v8340
      %v8342 = vpop.f32.mrb[0].mxu0
      %v8343 = vpop.f32.mrb[0].mxu0
      %v8344 = vadd.f32 %v7960, %v8343
      %v8345 = vpop.f32.mrb[0].mxu0
      %8346 = vmatprep.mubr.bf16.mxu0 0
      %8347 = vmatmul.mubr.bf16.gmra.mrb[0].mxu0 %v7913
      %v8348 = vpop.f32.mrb[0].mxu0
      %v8349 = vadd.f32 %v7960, %v8348
      %v8350 = vpop.f32.mrb[0].mxu0
      %v8351 = vpop.f32.mrb[0].mxu0
      %v8352 = vadd.f32 %v7960, %v8351
      %v8353 = vpop.f32.mrb[0].mxu0
      %8354 = vmatprep.mubr.bf16.mxu0 0
      %8355 = vmatmul.mubr.bf16.gmra.mrb[0].mxu0 %v7914
      %v8356 = vpop.f32.mrb[0].mxu0
      %v8357 = vadd.f32 %v7960, %v8356
      %v8358 = vpop.f32.mrb[0].mxu0
      %v8359 = vpop.f32.mrb[0].mxu0
      %v8360 = vadd.f32 %v7960, %v8359
      %v8361 = vpop.f32.mrb[0].mxu0
      %8362 = vmatprep.mubr.bf16.mxu0 0
      %8363 = vmatmul.mubr.bf16.gmra.mrb[0].mxu0 %v7915
      %v8364 = vpop.f32.mrb[0].mxu0
      %v8365 = vadd.f32 %v7960, %v8364
      %v8366 = vpop.f32.mrb[0].mxu0
      %v8367 = vpop.f32.mrb[0].mxu0
      %v8368 = vadd.f32 %v7960, %v8367
      %v8369 = vpop.f32.mrb[0].mxu0
      %8370 = vmatprep.mubr.bf16.mxu0 0
      %8371 = vmatmul.mubr.bf16.gmra.mrb[0].mxu0 %v7916
      %v8372 = vpop.f32.mrb[0].mxu0
      %v8373 = vadd.f32 %v7960, %v8372
      %v8374 = vpop.f32.mrb[0].mxu0
      %v8375 = vpop.f32.mrb[0].mxu0
      %v8376 = vadd.f32 %v7960, %v8375
      %v8377 = vpop.f32.mrb[0].mxu0
      %8378 = vmatprep.mubr.bf16.mxu0 0
      %8379 = vmatmul.mubr.bf16.gmra.mrb[0].mxu0 %v7917
      %v8380 = vpop.f32.mrb[0].mxu0
      %v8381 = vadd.f32 %v7960, %v8380
      %v8382 = vpop.f32.mrb[0].mxu0
      %v8383 = vpop.f32.mrb[0].mxu0
      %v8384 = vadd.f32 %v7960, %v8383
      %v8385 = vpop.f32.mrb[0].mxu0
      %8386 = vmatprep.mubr.bf16.mxu0 0
      %8387 = vmatmul.mubr.bf16.gmra.mrb[0].mxu0 %v7918
      %v8388 = vpop.f32.mrb[0].mxu0
      %v8389 = vadd.f32 %v7960, %v8388
      %v8390 = vpop.f32.mrb[0].mxu0
      %v8391 = vpop.f32.mrb[0].mxu0
      %v8392 = vadd.f32 %v7960, %v8391
      %v8393 = vpop.f32.mrb[0].mxu0
      %8394 = vmatprep.mubr.bf16.mxu0 0
      %8395 = vmatmul.mubr.bf16.gmra.mrb[0].mxu0 %v7919
      %v8396 = vpop.f32.mrb[0].mxu0
      %v8397 = vadd.f32 %v7960, %v8396
      %v8398 = vpop.f32.mrb[0].mxu0
      %v8399 = vpop.f32.mrb[0].mxu0
      %v8400 = vadd.f32 %v7960, %v8399
      %v8401 = vpop.f32.mrb[0].mxu0
      %8402 = vmatprep.mubr.bf16.mxu0 0
      %8403 = vmatmul.mubr.bf16.gmra.mrb[0].mxu0 %v7920
      %v8404 = vpop.f32.mrb[0].mxu0
      %v8405 = vadd.f32 %v7960, %v8404
      %v8406 = vpop.f32.mrb[0].mxu0
      %v8407 = vpop.f32.mrb[0].mxu0
      %v8408 = vadd.f32 %v7960, %v8407
      %v8409 = vpop.f32.mrb[0].mxu0
      %8410 = vmatprep.mubr.bf16.mxu0 0
      %8411 = vmatmul.mubr.bf16.gmra.mrb[0].mxu0 %v7921
      %v8412 = vpop.f32.mrb[0].mxu0
      %v8413 = vadd.f32 %v7960, %v8412
      %v8414 = vpop.f32.mrb[0].mxu0
      %v8415 = vpop.f32.mrb[0].mxu0
      %v8416 = vadd.f32 %v7960, %v8415
      %v8417 = vpop.f32.mrb[0].mxu0
      %8418 = vmatprep.mubr.bf16.mxu0 0
      %8419 = vmatmul.mubr.bf16.gmra.mrb[0].mxu0 %v7922
      %v8420 = vpop.f32.mrb[0].mxu0
      %v8421 = vadd.f32 %v7960, %v8420
      %v8422 = vpop.f32.mrb[0].mxu0
      %v8423 = vpop.f32.mrb[0].mxu0
      %v8424 = vadd.f32 %v7960, %v8423
      %v8425 = vpop.f32.mrb[0].mxu0
      %8426 = vmatprep.mubr.bf16.mxu0 0
      %8427 = vmatmul.mubr.bf16.gmra.mrb[0].mxu0 %v7923
      %v8428 = vpop.f32.mrb[0].mxu0
      %v8429 = vadd.f32 %v7960, %v8428
      %v8430 = vpop.f32.mrb[0].mxu0
      %v8431 = vpop.f32.mrb[0].mxu0
      %v8432 = vadd.f32 %v7960, %v8431
      %v8433 = vpop.f32.mrb[0].mxu0
      %8434 = vmatprep.mubr.bf16.mxu0 0
      %8435 = vmatmul.mubr.bf16.gmra.mrb[0].mxu0 %v7924
      %v8436 = vpop.f32.mrb[0].mxu0
      %v8437 = vadd.f32 %v7960, %v8436
      %v8438 = vpop.f32.mrb[0].mxu0
      %v8439 = vpop.f32.mrb[0].mxu0
      %v8440 = vadd.f32 %v7960, %v8439
      %v8441 = vpop.f32.mrb[0].mxu0
      %8442 = vmatprep.mubr.bf16.mxu0 0
      %8443 = vmatmul.mubr.bf16.gmra.mrb[0].mxu0 %v7925
      %v8444 = vpop.f32.mrb[0].mxu0
      %v8445 = vadd.f32 %v7960, %v8444
      %v8446 = vpop.f32.mrb[0].mxu0
      %v8447 = vpop.f32.mrb[0].mxu0
      %v8448 = vadd.f32 %v7960, %v8447
      %v8449 = vpop.f32.mrb[0].mxu0
      %8450 = vmatprep.mubr.bf16.mxu0 0
      %8451 = vmatmul.mubr.bf16.gmra.mrb[0].mxu0 %v7926
      %v8452 = vpop.f32.mrb[0].mxu0
      %v8453 = vadd.f32 %v7960, %v8452
      %v8454 = vpop.f32.mrb[0].mxu0
      %v8455 = vpop.f32.mrb[0].mxu0
      %v8456 = vadd.f32 %v7960, %v8455
      %v8457 = vpop.f32.mrb[0].mxu0
      %8458 = vmatprep.mubr.bf16.mxu0 0
      %8459 = vmatmul.mubr.bf16.gmra.mrb[0].mxu0 %v7927
      %v8460 = vpop.f32.mrb[0].mxu0
      %v8461 = vadd.f32 %v7960, %v8460
      %v8462 = vpop.f32.mrb[0].mxu0
      %v8463 = vpop.f32.mrb[0].mxu0
      %v8464 = vadd.f32 %v7960, %v8463
      %v8465 = vpop.f32.mrb[0].mxu0
      %8466 = vmatprep.mubr.bf16.mxu0 0
      %8467 = vmatmul.mubr.bf16.gmra.mrb[0].mxu0 %v7928
      %v8468 = vpop.f32.mrb[0].mxu0
      %v8469 = vadd.f32 %v7960, %v8468
      %v8470 = vpop.f32.mrb[0].mxu0
      %v8471 = vpop.f32.mrb[0].mxu0
      %v8472 = vadd.f32 %v7960, %v8471
      %v8473 = vpop.f32.mrb[0].mxu0
      %8474 = vmatprep.mubr.bf16.mxu0 0
      %8475 = vmatmul.mubr.bf16.gmra.mrb[0].mxu0 %v7929
      %v8476 = vpop.f32.mrb[0].mxu0
      %v8477 = vadd.f32 %v7960, %v8476
      %v8478 = vpop.f32.mrb[0].mxu0
      %v8479 = vpop.f32.mrb[0].mxu0
      %v8480 = vadd.f32 %v7960, %v8479
      %v8481 = vpop.f32.mrb[0].mxu0
      %8482 = vmatprep.mubr.bf16.mxu0 0
      %8483 = vmatmul.mubr.bf16.gmra.mrb[0].mxu0 %v7930
      %v8484 = vpop.f32.mrb[0].mxu0
      %v8485 = vadd.f32 %v7960, %v8484
      %v8486 = vpop.f32.mrb[0].mxu0
      %v8487 = vpop.f32.mrb[0].mxu0
      %v8488 = vadd.f32 %v7960, %v8487
      %v8489 = vpop.f32.mrb[0].mxu0
      %8490 = vmatprep.mubr.bf16.mxu0 0
      %8491 = vmatmul.mubr.bf16.gmra.mrb[0].mxu0 %v7931
      %v8492 = vpop.f32.mrb[0].mxu0
      %v8493 = vadd.f32 %v7960, %v8492
      %v8494 = vpop.f32.mrb[0].mxu0
      %v8495 = vpop.f32.mrb[0].mxu0
      %v8496 = vadd.f32 %v7960, %v8495
      %v8497 = vpop.f32.mrb[0].mxu0
      %8498 = vmatprep.mubr.bf16.mxu0 0
      %8499 = vmatmul.mubr.bf16.gmra.mrb[0].mxu0 %v7932
      %v8500 = vpop.f32.mrb[0].mxu0
      %v8501 = vadd.f32 %v7960, %v8500
      %v8502 = vpop.f32.mrb[0].mxu0
      %v8503 = vpop.f32.mrb[0].mxu0
      %v8504 = vadd.f32 %v7960, %v8503
      %v8505 = vpop.f32.mrb[0].mxu0
      %8506 = vmatprep.mubr.bf16.mxu0 0
      %8507 = vmatmul.mubr.bf16.gmra.mrb[0].mxu0 %v7933
      %v8508 = vpop.f32.mrb[0].mxu0
      %v8509 = vadd.f32 %v7960, %v8508
      %v8510 = vpop.f32.mrb[0].mxu0
      %v8511 = vpop.f32.mrb[0].mxu0
      %v8512 = vadd.f32 %v7960, %v8511
      %v8513 = vpop.f32.mrb[0].mxu0
      %8514 = vmatprep.mubr.bf16.mxu0 0
      %8515 = vmatmul.mubr.bf16.gmra.mrb[0].mxu0 %v7934
      %v8516 = vpop.f32.mrb[0].mxu0
      %v8517 = vadd.f32 %v7960, %v8516
      %v8518 = vpop.f32.mrb[0].mxu0
      %v8519 = vpop.f32.mrb[0].mxu0
      %v8520 = vadd.f32 %v7960, %v8519
      %v8521 = vpop.f32.mrb[0].mxu0
      %8522 = vmatprep.mubr.bf16.mxu0 0
      %8523 = vmatmul.mubr.bf16.gmra.mrb[0].mxu0 %v7935
      %v8524 = vpop.f32.mrb[0].mxu0
      %v8525 = vadd.f32 %v7960, %v8524
      %v8526 = vpop.f32.mrb[0].mxu0
      %v8527 = vpop.f32.mrb[0].mxu0
      %v8528 = vadd.f32 %v7960, %v8527
      %v8529 = vpop.f32.mrb[0].mxu0
      %8530 = vmatprep.mubr.bf16.mxu0 0
      %8531 = vmatmul.mubr.bf16.gmra.mrb[0].mxu0 %v7936
      %v8532 = vpop.f32.mrb[0].mxu0
      %v8533 = vadd.f32 %v7960, %v8532
      %v8534 = vpop.f32.mrb[0].mxu0
      %v8535 = vpop.f32.mrb[0].mxu0
      %v8536 = vadd.f32 %v7960, %v8535
      %v8537 = vpop.f32.mrb[0].mxu0
      %8538 = vmatprep.mubr.bf16.mxu0 0
      %8539 = vmatmul.mubr.bf16.gmra.mrb[0].mxu0 %v7937
      %v8540 = vpop.f32.mrb[0].mxu0
      %v8541 = vadd.f32 %v7960, %v8540
      %v8542 = vpop.f32.mrb[0].mxu0
      %v8543 = vpop.f32.mrb[0].mxu0
      %v8544 = vadd.f32 %v7960, %v8543
      %v8545 = vpop.f32.mrb[0].mxu0
      %8546 = vmatprep.mubr.bf16.mxu0 0
      %8547 = vmatmul.mubr.bf16.gmra.mrb[0].mxu0 %v7938
      %v8548 = vpop.f32.mrb[0].mxu0
      %v8549 = vadd.f32 %v7960, %v8548
      %v8550 = vpop.f32.mrb[0].mxu0
      %v8551 = vpop.f32.mrb[0].mxu0
      %v8552 = vadd.f32 %v7960, %v8551
      %v8553 = vpop.f32.mrb[0].mxu0
      %8554 = vdwg.mxu0
      %v8555 = vunpack.c.l.bf16 %v460
      %v8556 = vunpack.c.l.bf16 %v461
      %v8557 = vunpack.c.l.bf16 %v462
      %v8558 = vunpack.c.l.bf16 %v463
      %v8559 = vunpack.c.l.bf16 %v464
      %v8560 = vunpack.c.l.bf16 %v465
      %v8561 = vunpack.c.l.bf16 %v466
      %v8562 = vunpack.c.l.bf16 %v467
      %v8563 = vunpack.c.l.bf16 %v468
      %v8564 = vunpack.c.l.bf16 %v469
      %v8565 = vunpack.c.l.bf16 %v470
      %v8566 = vunpack.c.l.bf16 %v471
      %v8567 = vunpack.c.l.bf16 %v472
      %v8568 = vunpack.c.l.bf16 %v473
      %v8569 = vunpack.c.l.bf16 %v474
      %v8570 = vunpack.c.l.bf16 %v475
      %v8571 = vunpack.c.l.bf16 %v476
      %v8572 = vunpack.c.l.bf16 %v477
      %v8573 = vunpack.c.l.bf16 %v478
      %v8574 = vunpack.c.l.bf16 %v479
      %v8575 = vunpack.c.l.bf16 %v480
      %v8576 = vunpack.c.l.bf16 %v481
      %v8577 = vunpack.c.l.bf16 %v482
      %v8578 = vunpack.c.l.bf16 %v483
      %v8579 = vunpack.c.l.bf16 %v484
      %v8580 = vunpack.c.l.bf16 %v485
      %v8581 = vunpack.c.l.bf16 %v486
      %v8582 = vunpack.c.l.bf16 %v487
      %v8583 = vunpack.c.l.bf16 %v488
      %v8584 = vunpack.c.l.bf16 %v489
      %v8585 = vunpack.c.l.bf16 %v490
      %v8586 = vunpack.c.l.bf16 %v491
      %v8587 = vunpack.c.l.bf16 %v492
      %v8588 = vunpack.c.l.bf16 %v493
      %v8589 = vunpack.c.l.bf16 %v494
      %v8590 = vunpack.c.l.bf16 %v495
      %v8591 = vunpack.c.l.bf16 %v496
      %v8592 = vunpack.c.l.bf16 %v497
      %v8593 = vunpack.c.l.bf16 %v498
      %v8594 = vunpack.c.l.bf16 %v499
      %v8595 = vunpack.c.l.bf16 %v500
      %v8596 = vunpack.c.l.bf16 %v501
      %v8597 = vunpack.c.l.bf16 %v502
      %v8598 = vunpack.c.l.bf16 %v503
      %v8599 = vunpack.c.l.bf16 %v504
      %v8600 = vunpack.c.l.bf16 %v505
      %v8601 = vunpack.c.l.bf16 %v506
      %v8602 = vunpack.c.l.bf16 %v507
      %v8603 = vunpack.c.l.bf16 %v508
      %v8604 = vunpack.c.l.bf16 %v509
      %v8605 = vunpack.c.l.bf16 %v510
      %v8606 = vunpack.c.l.bf16 %v511
      %v8607 = vunpack.c.l.bf16 %v512
      %v8608 = vunpack.c.l.bf16 %v513
      %v8609 = vunpack.c.l.bf16 %v514
      %v8610 = vunpack.c.l.bf16 %v515
      %v8611 = vunpack.c.l.bf16 %v516
      %v8612 = vunpack.c.l.bf16 %v517
      %v8613 = vunpack.c.l.bf16 %v518
      %v8614 = vunpack.c.l.bf16 %v519
      %v8615 = vunpack.c.l.bf16 %v520
      %v8616 = vunpack.c.l.bf16 %v521
      %v8617 = vunpack.c.l.bf16 %v522
      %v8618 = vunpack.c.l.bf16 %v523
      %v8619 = vunpack.c.l.bf16 %v524
      %v8620 = vunpack.c.l.bf16 %v525
      %v8621 = vunpack.c.l.bf16 %v526
      %v8622 = vunpack.c.l.bf16 %v527
      %v8623 = vunpack.c.l.bf16 %v528
      %v8624 = vunpack.c.l.bf16 %v529
      %v8625 = vunpack.c.l.bf16 %v530
      %v8626 = vunpack.c.l.bf16 %v531
      %v8627 = vunpack.c.l.bf16 %v532
      %v8628 = vunpack.c.l.bf16 %v533
      %v8629 = vunpack.c.l.bf16 %v534
      %v8630 = vunpack.c.l.bf16 %v535
      %v8631 = vunpack.c.l.bf16 %v536
      %v8632 = vunpack.c.l.bf16 %v537
      %v8633 = vunpack.c.l.bf16 %v538
      %v8634 = vunpack.c.l.bf16 %v539
      %v8635 = vunpack.c.l.bf16 %v540
      %v8636 = vunpack.c.l.bf16 %v541
      %v8637 = vunpack.c.l.bf16 %v542
      %v8638 = vunpack.c.l.bf16 %v543
      %v8639 = vunpack.c.l.bf16 %v544
      %v8640 = vunpack.c.l.bf16 %v545
      %v8641 = vunpack.c.l.bf16 %v546
      %v8642 = vunpack.c.l.bf16 %v547
      %v8643 = vunpack.c.l.bf16 %v548
      %v8644 = vunpack.c.l.bf16 %v549
      %v8645 = vunpack.c.l.bf16 %v550
      %v8646 = vunpack.c.l.bf16 %v551
      %v8647 = vunpack.c.l.bf16 %v552
      %v8648 = vunpack.c.l.bf16 %v553
      %v8649 = vunpack.c.l.bf16 %v554
      %v8650 = vunpack.c.l.bf16 %v555
      %v8651 = vunpack.c.l.bf16 %v556
      %v8652 = vunpack.c.l.bf16 %v557
      %v8653 = vunpack.c.l.bf16 %v558
      %v8654 = vunpack.c.l.bf16 %v559
      %v8655 = vunpack.c.l.bf16 %v560
      %v8656 = vunpack.c.l.bf16 %v561
      %v8657 = vunpack.c.l.bf16 %v562
      %v8658 = vunpack.c.l.bf16 %v563
      %v8659 = vunpack.c.l.bf16 %v564
      %v8660 = vunpack.c.l.bf16 %v565
      %v8661 = vunpack.c.l.bf16 %v566
      %v8662 = vunpack.c.l.bf16 %v567
      %v8663 = vunpack.c.l.bf16 %v568
      %v8664 = vunpack.c.l.bf16 %v569
      %v8665 = vunpack.c.l.bf16 %v570
      %v8666 = vunpack.c.l.bf16 %v571
      %v8667 = vunpack.c.l.bf16 %v572
      %v8668 = vunpack.c.l.bf16 %v573
      %v8669 = vunpack.c.l.bf16 %v574
      %v8670 = vunpack.c.l.bf16 %v575
      %v8671 = vunpack.c.l.bf16 %v576
      %v8672 = vunpack.c.l.bf16 %v577
      %v8673 = vunpack.c.l.bf16 %v578
      %v8674 = vunpack.c.l.bf16 %v579
      %v8675 = vunpack.c.l.bf16 %v580
      %v8676 = vunpack.c.l.bf16 %v581
      %v8677 = vunpack.c.l.bf16 %v582
      %v8678 = vunpack.c.l.bf16 %v583
      %v8679 = vunpack.c.l.bf16 %v584
      %v8680 = vunpack.c.l.bf16 %v585
      %v8681 = vunpack.c.l.bf16 %v586
      %v8682 = vunpack.c.l.bf16 %v587
      %v8683 = vmul.f32 %v8045, %v8555
      %v8684 = vmul.f32 %v8048, %v8556
      %v8685 = vmul.f32 %v8053, %v8557
      %v8686 = vmul.f32 %v8056, %v8558
      %v8687 = vmul.f32 %v8061, %v8559
      %v8688 = vmul.f32 %v8064, %v8560
      %v8689 = vmul.f32 %v8069, %v8561
      %v8690 = vmul.f32 %v8072, %v8562
      %v8691 = vmul.f32 %v8077, %v8563
      %v8692 = vmul.f32 %v8080, %v8564
      %v8693 = vmul.f32 %v8085, %v8565
      %v8694 = vmul.f32 %v8088, %v8566
      %v8695 = vmul.f32 %v8093, %v8567
      %v8696 = vmul.f32 %v8096, %v8568
      %v8697 = vmul.f32 %v8101, %v8569
      %v8698 = vmul.f32 %v8104, %v8570
      %v8699 = vmul.f32 %v8109, %v8571
      %v8700 = vmul.f32 %v8112, %v8572
      %v8701 = vmul.f32 %v8117, %v8573
      %v8702 = vmul.f32 %v8120, %v8574
      %v8703 = vmul.f32 %v8125, %v8575
      %v8704 = vmul.f32 %v8128, %v8576
      %v8705 = vmul.f32 %v8133, %v8577
      %v8706 = vmul.f32 %v8136, %v8578
      %v8707 = vmul.f32 %v8141, %v8579
      %v8708 = vmul.f32 %v8144, %v8580
      %v8709 = vmul.f32 %v8149, %v8581
      %v8710 = vmul.f32 %v8152, %v8582
      %v8711 = vmul.f32 %v8157, %v8583
      %v8712 = vmul.f32 %v8160, %v8584
      %v8713 = vmul.f32 %v8165, %v8585
      %v8714 = vmul.f32 %v8168, %v8586
      %v8715 = vmul.f32 %v8173, %v8587
      %v8716 = vmul.f32 %v8176, %v8588
      %v8717 = vmul.f32 %v8181, %v8589
      %v8718 = vmul.f32 %v8184, %v8590
      %v8719 = vmul.f32 %v8189, %v8591
      %v8720 = vmul.f32 %v8192, %v8592
      %v8721 = vmul.f32 %v8197, %v8593
      %v8722 = vmul.f32 %v8200, %v8594
      %v8723 = vmul.f32 %v8205, %v8595
      %v8724 = vmul.f32 %v8208, %v8596
      %v8725 = vmul.f32 %v8213, %v8597
      %v8726 = vmul.f32 %v8216, %v8598
      %v8727 = vmul.f32 %v8221, %v8599
      %v8728 = vmul.f32 %v8224, %v8600
      %v8729 = vmul.f32 %v8229, %v8601
      %v8730 = vmul.f32 %v8232, %v8602
      %v8731 = vmul.f32 %v8237, %v8603
      %v8732 = vmul.f32 %v8240, %v8604
      %v8733 = vmul.f32 %v8245, %v8605
      %v8734 = vmul.f32 %v8248, %v8606
      %v8735 = vmul.f32 %v8253, %v8607
      %v8736 = vmul.f32 %v8256, %v8608
      %v8737 = vmul.f32 %v8261, %v8609
      %v8738 = vmul.f32 %v8264, %v8610
      %v8739 = vmul.f32 %v8269, %v8611
      %v8740 = vmul.f32 %v8272, %v8612
      %v8741 = vmul.f32 %v8277, %v8613
      %v8742 = vmul.f32 %v8280, %v8614
      %v8743 = vmul.f32 %v8285, %v8615
      %v8744 = vmul.f32 %v8288, %v8616
      %v8745 = vmul.f32 %v8293, %v8617
      %v8746 = vmul.f32 %v8296, %v8618
      %v8747 = vmul.f32 %v8301, %v8619
      %v8748 = vmul.f32 %v8304, %v8620
      %v8749 = vmul.f32 %v8309, %v8621
      %v8750 = vmul.f32 %v8312, %v8622
      %v8751 = vmul.f32 %v8317, %v8623
      %v8752 = vmul.f32 %v8320, %v8624
      %v8753 = vmul.f32 %v8325, %v8625
      %v8754 = vmul.f32 %v8328, %v8626
      %v8755 = vmul.f32 %v8333, %v8627
      %v8756 = vmul.f32 %v8336, %v8628
      %v8757 = vmul.f32 %v8341, %v8629
      %v8758 = vmul.f32 %v8344, %v8630
      %v8759 = vmul.f32 %v8349, %v8631
      %v8760 = vmul.f32 %v8352, %v8632
      %v8761 = vmul.f32 %v8357, %v8633
      %v8762 = vmul.f32 %v8360, %v8634
      %v8763 = vmul.f32 %v8365, %v8635
      %v8764 = vmul.f32 %v8368, %v8636
      %v8765 = vmul.f32 %v8373, %v8637
      %v8766 = vmul.f32 %v8376, %v8638
      %v8767 = vmul.f32 %v8381, %v8639
      %v8768 = vmul.f32 %v8384, %v8640
      %v8769 = vmul.f32 %v8389, %v8641
      %v8770 = vmul.f32 %v8392, %v8642
      %v8771 = vmul.f32 %v8397, %v8643
      %v8772 = vmul.f32 %v8400, %v8644
      %v8773 = vmul.f32 %v8405, %v8645
      %v8774 = vmul.f32 %v8408, %v8646
      %v8775 = vmul.f32 %v8413, %v8647
      %v8776 = vmul.f32 %v8416, %v8648
      %v8777 = vmul.f32 %v8421, %v8649
      %v8778 = vmul.f32 %v8424, %v8650
      %v8779 = vmul.f32 %v8429, %v8651
      %v8780 = vmul.f32 %v8432, %v8652
      %v8781 = vmul.f32 %v8437, %v8653
      %v8782 = vmul.f32 %v8440, %v8654
      %v8783 = vmul.f32 %v8445, %v8655
      %v8784 = vmul.f32 %v8448, %v8656
      %v8785 = vmul.f32 %v8453, %v8657
      %v8786 = vmul.f32 %v8456, %v8658
      %v8787 = vmul.f32 %v8461, %v8659
      %v8788 = vmul.f32 %v8464, %v8660
      %v8789 = vmul.f32 %v8469, %v8661
      %v8790 = vmul.f32 %v8472, %v8662
      %v8791 = vmul.f32 %v8477, %v8663
      %v8792 = vmul.f32 %v8480, %v8664
      %v8793 = vmul.f32 %v8485, %v8665
      %v8794 = vmul.f32 %v8488, %v8666
      %v8795 = vmul.f32 %v8493, %v8667
      %v8796 = vmul.f32 %v8496, %v8668
      %v8797 = vmul.f32 %v8501, %v8669
      %v8798 = vmul.f32 %v8504, %v8670
      %v8799 = vmul.f32 %v8509, %v8671
      %v8800 = vmul.f32 %v8512, %v8672
      %v8801 = vmul.f32 %v8517, %v8673
      %v8802 = vmul.f32 %v8520, %v8674
      %v8803 = vmul.f32 %v8525, %v8675
      %v8804 = vmul.f32 %v8528, %v8676
      %v8805 = vmul.f32 %v8533, %v8677
      %v8806 = vmul.f32 %v8536, %v8678
      %v8807 = vmul.f32 %v8541, %v8679
      %v8808 = vmul.f32 %v8544, %v8680
      %v8809 = vmul.f32 %v8549, %v8681
      %v8810 = vmul.f32 %v8552, %v8682
      %vm8811 = vcmp.eq.f32.partialorder %v8683, 0.0
      %vm8812 = vcmp.eq.f32.partialorder %v8684, 0.0
      %vm8813 = vcmp.eq.f32.partialorder %v8685, 0.0
      %vm8814 = vcmp.eq.f32.partialorder %v8686, 0.0
      %vm8815 = vcmp.eq.f32.partialorder %v8687, 0.0
      %vm8816 = vcmp.eq.f32.partialorder %v8688, 0.0
      %vm8817 = vcmp.eq.f32.partialorder %v8689, 0.0
      %vm8818 = vcmp.eq.f32.partialorder %v8690, 0.0
      %vm8819 = vcmp.eq.f32.partialorder %v8691, 0.0
      %vm8820 = vcmp.eq.f32.partialorder %v8692, 0.0
      %vm8821 = vcmp.eq.f32.partialorder %v8693, 0.0
      %vm8822 = vcmp.eq.f32.partialorder %v8694, 0.0
      %vm8823 = vcmp.eq.f32.partialorder %v8695, 0.0
      %vm8824 = vcmp.eq.f32.partialorder %v8696, 0.0
      %vm8825 = vcmp.eq.f32.partialorder %v8697, 0.0
      %vm8826 = vcmp.eq.f32.partialorder %v8698, 0.0
      %vm8827 = vcmp.eq.f32.partialorder %v8699, 0.0
      %vm8828 = vcmp.eq.f32.partialorder %v8700, 0.0
      %vm8829 = vcmp.eq.f32.partialorder %v8701, 0.0
      %vm8830 = vcmp.eq.f32.partialorder %v8702, 0.0
      %vm8831 = vcmp.eq.f32.partialorder %v8703, 0.0
      %vm8832 = vcmp.eq.f32.partialorder %v8704, 0.0
      %vm8833 = vcmp.eq.f32.partialorder %v8705, 0.0
      %vm8834 = vcmp.eq.f32.partialorder %v8706, 0.0
      %vm8835 = vcmp.eq.f32.partialorder %v8707, 0.0
      %vm8836 = vcmp.eq.f32.partialorder %v8708, 0.0
      %vm8837 = vcmp.eq.f32.partialorder %v8709, 0.0
      %vm8838 = vcmp.eq.f32.partialorder %v8710, 0.0
      %vm8839 = vcmp.eq.f32.partialorder %v8711, 0.0
      %vm8840 = vcmp.eq.f32.partialorder %v8712, 0.0
      %vm8841 = vcmp.eq.f32.partialorder %v8713, 0.0
      %vm8842 = vcmp.eq.f32.partialorder %v8714, 0.0
      %vm8843 = vcmp.eq.f32.partialorder %v8715, 0.0
      %vm8844 = vcmp.eq.f32.partialorder %v8716, 0.0
      %vm8845 = vcmp.eq.f32.partialorder %v8717, 0.0
      %vm8846 = vcmp.eq.f32.partialorder %v8718, 0.0
      %vm8847 = vcmp.eq.f32.partialorder %v8719, 0.0
      %vm8848 = vcmp.eq.f32.partialorder %v8720, 0.0
      %vm8849 = vcmp.eq.f32.partialorder %v8721, 0.0
      %vm8850 = vcmp.eq.f32.partialorder %v8722, 0.0
      %vm8851 = vcmp.eq.f32.partialorder %v8723, 0.0
      %vm8852 = vcmp.eq.f32.partialorder %v8724, 0.0
      %vm8853 = vcmp.eq.f32.partialorder %v8725, 0.0
      %vm8854 = vcmp.eq.f32.partialorder %v8726, 0.0
      %vm8855 = vcmp.eq.f32.partialorder %v8727, 0.0
      %vm8856 = vcmp.eq.f32.partialorder %v8728, 0.0
      %vm8857 = vcmp.eq.f32.partialorder %v8729, 0.0
      %vm8858 = vcmp.eq.f32.partialorder %v8730, 0.0
      %vm8859 = vcmp.eq.f32.partialorder %v8731, 0.0
      %vm8860 = vcmp.eq.f32.partialorder %v8732, 0.0
      %vm8861 = vcmp.eq.f32.partialorder %v8733, 0.0
      %vm8862 = vcmp.eq.f32.partialorder %v8734, 0.0
      %vm8863 = vcmp.eq.f32.partialorder %v8735, 0.0
      %vm8864 = vcmp.eq.f32.partialorder %v8736, 0.0
      %vm8865 = vcmp.eq.f32.partialorder %v8737, 0.0
      %vm8866 = vcmp.eq.f32.partialorder %v8738, 0.0
      %vm8867 = vcmp.eq.f32.partialorder %v8739, 0.0
      %vm8868 = vcmp.eq.f32.partialorder %v8740, 0.0
      %vm8869 = vcmp.eq.f32.partialorder %v8741, 0.0
      %vm8870 = vcmp.eq.f32.partialorder %v8742, 0.0
      %vm8871 = vcmp.eq.f32.partialorder %v8743, 0.0
      %vm8872 = vcmp.eq.f32.partialorder %v8744, 0.0
      %vm8873 = vcmp.eq.f32.partialorder %v8745, 0.0
      %vm8874 = vcmp.eq.f32.partialorder %v8746, 0.0
      %vm8875 = vcmp.eq.f32.partialorder %v8747, 0.0
      %vm8876 = vcmp.eq.f32.partialorder %v8748, 0.0
      %vm8877 = vcmp.eq.f32.partialorder %v8749, 0.0
      %vm8878 = vcmp.eq.f32.partialorder %v8750, 0.0
      %vm8879 = vcmp.eq.f32.partialorder %v8751, 0.0
      %vm8880 = vcmp.eq.f32.partialorder %v8752, 0.0
      %vm8881 = vcmp.eq.f32.partialorder %v8753, 0.0
      %vm8882 = vcmp.eq.f32.partialorder %v8754, 0.0
      %vm8883 = vcmp.eq.f32.partialorder %v8755, 0.0
      %vm8884 = vcmp.eq.f32.partialorder %v8756, 0.0
      %vm8885 = vcmp.eq.f32.partialorder %v8757, 0.0
      %vm8886 = vcmp.eq.f32.partialorder %v8758, 0.0
      %vm8887 = vcmp.eq.f32.partialorder %v8759, 0.0
      %vm8888 = vcmp.eq.f32.partialorder %v8760, 0.0
      %vm8889 = vcmp.eq.f32.partialorder %v8761, 0.0
      %vm8890 = vcmp.eq.f32.partialorder %v8762, 0.0
      %vm8891 = vcmp.eq.f32.partialorder %v8763, 0.0
      %vm8892 = vcmp.eq.f32.partialorder %v8764, 0.0
      %vm8893 = vcmp.eq.f32.partialorder %v8765, 0.0
      %vm8894 = vcmp.eq.f32.partialorder %v8766, 0.0
      %vm8895 = vcmp.eq.f32.partialorder %v8767, 0.0
      %vm8896 = vcmp.eq.f32.partialorder %v8768, 0.0
      %vm8897 = vcmp.eq.f32.partialorder %v8769, 0.0
      %vm8898 = vcmp.eq.f32.partialorder %v8770, 0.0
      %vm8899 = vcmp.eq.f32.partialorder %v8771, 0.0
      %vm8900 = vcmp.eq.f32.partialorder %v8772, 0.0
      %vm8901 = vcmp.eq.f32.partialorder %v8773, 0.0
      %vm8902 = vcmp.eq.f32.partialorder %v8774, 0.0
      %vm8903 = vcmp.eq.f32.partialorder %v8775, 0.0
      %vm8904 = vcmp.eq.f32.partialorder %v8776, 0.0
      %vm8905 = vcmp.eq.f32.partialorder %v8777, 0.0
      %vm8906 = vcmp.eq.f32.partialorder %v8778, 0.0
      %vm8907 = vcmp.eq.f32.partialorder %v8779, 0.0
      %vm8908 = vcmp.eq.f32.partialorder %v8780, 0.0
      %vm8909 = vcmp.eq.f32.partialorder %v8781, 0.0
      %vm8910 = vcmp.eq.f32.partialorder %v8782, 0.0
      %vm8911 = vcmp.eq.f32.partialorder %v8783, 0.0
      %vm8912 = vcmp.eq.f32.partialorder %v8784, 0.0
      %vm8913 = vcmp.eq.f32.partialorder %v8785, 0.0
      %vm8914 = vcmp.eq.f32.partialorder %v8786, 0.0
      %vm8915 = vcmp.eq.f32.partialorder %v8787, 0.0
      %vm8916 = vcmp.eq.f32.partialorder %v8788, 0.0
      %vm8917 = vcmp.eq.f32.partialorder %v8789, 0.0
      %vm8918 = vcmp.eq.f32.partialorder %v8790, 0.0
      %vm8919 = vcmp.eq.f32.partialorder %v8791, 0.0
      %vm8920 = vcmp.eq.f32.partialorder %v8792, 0.0
      %vm8921 = vcmp.eq.f32.partialorder %v8793, 0.0
      %vm8922 = vcmp.eq.f32.partialorder %v8794, 0.0
      %vm8923 = vcmp.eq.f32.partialorder %v8795, 0.0
      %vm8924 = vcmp.eq.f32.partialorder %v8796, 0.0
      %vm8925 = vcmp.eq.f32.partialorder %v8797, 0.0
      %vm8926 = vcmp.eq.f32.partialorder %v8798, 0.0
      %vm8927 = vcmp.eq.f32.partialorder %v8799, 0.0
      %vm8928 = vcmp.eq.f32.partialorder %v8800, 0.0
      %vm8929 = vcmp.eq.f32.partialorder %v8801, 0.0
      %vm8930 = vcmp.eq.f32.partialorder %v8802, 0.0
      %vm8931 = vcmp.eq.f32.partialorder %v8803, 0.0
      %vm8932 = vcmp.eq.f32.partialorder %v8804, 0.0
      %vm8933 = vcmp.eq.f32.partialorder %v8805, 0.0
      %vm8934 = vcmp.eq.f32.partialorder %v8806, 0.0
      %vm8935 = vcmp.eq.f32.partialorder %v8807, 0.0
      %vm8936 = vcmp.eq.f32.partialorder %v8808, 0.0
      %vm8937 = vcmp.eq.f32.partialorder %v8809, 0.0
      %vm8938 = vcmp.eq.f32.partialorder %v8810, 0.0
      %v8939 = vsel %vm8811, -1e+20, %v8683
      %v8940 = vsel %vm8812, -1e+20, %v8684
      %v8941 = vsel %vm8813, -1e+20, %v8685
      %v8942 = vsel %vm8814, -1e+20, %v8686
      %v8943 = vsel %vm8815, -1e+20, %v8687
      %v8944 = vsel %vm8816, -1e+20, %v8688
      %v8945 = vsel %vm8817, -1e+20, %v8689
      %v8946 = vsel %vm8818, -1e+20, %v8690
      %v8947 = vsel %vm8819, -1e+20, %v8691
      %v8948 = vsel %vm8820, -1e+20, %v8692
      %v8949 = vsel %vm8821, -1e+20, %v8693
      %v8950 = vsel %vm8822, -1e+20, %v8694
      %v8951 = vsel %vm8823, -1e+20, %v8695
      %v8952 = vsel %vm8824, -1e+20, %v8696
      %v8953 = vsel %vm8825, -1e+20, %v8697
      %v8954 = vsel %vm8826, -1e+20, %v8698
      %v8955 = vsel %vm8827, -1e+20, %v8699
      %v8956 = vsel %vm8828, -1e+20, %v8700
      %v8957 = vsel %vm8829, -1e+20, %v8701
      %v8958 = vsel %vm8830, -1e+20, %v8702
      %v8959 = vsel %vm8831, -1e+20, %v8703
      %v8960 = vsel %vm8832, -1e+20, %v8704
      %v8961 = vsel %vm8833, -1e+20, %v8705
      %v8962 = vsel %vm8834, -1e+20, %v8706
      %v8963 = vsel %vm8835, -1e+20, %v8707
      %v8964 = vsel %vm8836, -1e+20, %v8708
      %v8965 = vsel %vm8837, -1e+20, %v8709
      %v8966 = vsel %vm8838, -1e+20, %v8710
      %v8967 = vsel %vm8839, -1e+20, %v8711
      %v8968 = vsel %vm8840, -1e+20, %v8712
      %v8969 = vsel %vm8841, -1e+20, %v8713
      %v8970 = vsel %vm8842, -1e+20, %v8714
      %v8971 = vsel %vm8843, -1e+20, %v8715
      %v8972 = vsel %vm8844, -1e+20, %v8716
      %v8973 = vsel %vm8845, -1e+20, %v8717
      %v8974 = vsel %vm8846, -1e+20, %v8718
      %v8975 = vsel %vm8847, -1e+20, %v8719
      %v8976 = vsel %vm8848, -1e+20, %v8720
      %v8977 = vsel %vm8849, -1e+20, %v8721
      %v8978 = vsel %vm8850, -1e+20, %v8722
      %v8979 = vsel %vm8851, -1e+20, %v8723
      %v8980 = vsel %vm8852, -1e+20, %v8724
      %v8981 = vsel %vm8853, -1e+20, %v8725
      %v8982 = vsel %vm8854, -1e+20, %v8726
      %v8983 = vsel %vm8855, -1e+20, %v8727
      %v8984 = vsel %vm8856, -1e+20, %v8728
      %v8985 = vsel %vm8857, -1e+20, %v8729
      %v8986 = vsel %vm8858, -1e+20, %v8730
      %v8987 = vsel %vm8859, -1e+20, %v8731
      %v8988 = vsel %vm8860, -1e+20, %v8732
      %v8989 = vsel %vm8861, -1e+20, %v8733
      %v8990 = vsel %vm8862, -1e+20, %v8734
      %v8991 = vsel %vm8863, -1e+20, %v8735
      %v8992 = vsel %vm8864, -1e+20, %v8736
      %v8993 = vsel %vm8865, -1e+20, %v8737
      %v8994 = vsel %vm8866, -1e+20, %v8738
      %v8995 = vsel %vm8867, -1e+20, %v8739
      %v8996 = vsel %vm8868, -1e+20, %v8740
      %v8997 = vsel %vm8869, -1e+20, %v8741
      %v8998 = vsel %vm8870, -1e+20, %v8742
      %v8999 = vsel %vm8871, -1e+20, %v8743
      %v9000 = vsel %vm8872, -1e+20, %v8744
      %v9001 = vsel %vm8873, -1e+20, %v8745
      %v9002 = vsel %vm8874, -1e+20, %v8746
      %v9003 = vsel %vm8875, -1e+20, %v8747
      %v9004 = vsel %vm8876, -1e+20, %v8748
      %v9005 = vsel %vm8877, -1e+20, %v8749
      %v9006 = vsel %vm8878, -1e+20, %v8750
      %v9007 = vsel %vm8879, -1e+20, %v8751
      %v9008 = vsel %vm8880, -1e+20, %v8752
      %v9009 = vsel %vm8881, -1e+20, %v8753
      %v9010 = vsel %vm8882, -1e+20, %v8754
      %v9011 = vsel %vm8883, -1e+20, %v8755
      %v9012 = vsel %vm8884, -1e+20, %v8756
      %v9013 = vsel %vm8885, -1e+20, %v8757
      %v9014 = vsel %vm8886, -1e+20, %v8758
      %v9015 = vsel %vm8887, -1e+20, %v8759
      %v9016 = vsel %vm8888, -1e+20, %v8760
      %v9017 = vsel %vm8889, -1e+20, %v8761
      %v9018 = vsel %vm8890, -1e+20, %v8762
      %v9019 = vsel %vm8891, -1e+20, %v8763
      %v9020 = vsel %vm8892, -1e+20, %v8764
      %v9021 = vsel %vm8893, -1e+20, %v8765
      %v9022 = vsel %vm8894, -1e+20, %v8766
      %v9023 = vsel %vm8895, -1e+20, %v8767
      %v9024 = vsel %vm8896, -1e+20, %v8768
      %v9025 = vsel %vm8897, -1e+20, %v8769
      %v9026 = vsel %vm8898, -1e+20, %v8770
      %v9027 = vsel %vm8899, -1e+20, %v8771
      %v9028 = vsel %vm8900, -1e+20, %v8772
      %v9029 = vsel %vm8901, -1e+20, %v8773
      %v9030 = vsel %vm8902, -1e+20, %v8774
      %v9031 = vsel %vm8903, -1e+20, %v8775
      %v9032 = vsel %vm8904, -1e+20, %v8776
      %v9033 = vsel %vm8905, -1e+20, %v8777
      %v9034 = vsel %vm8906, -1e+20, %v8778
      %v9035 = vsel %vm8907, -1e+20, %v8779
      %v9036 = vsel %vm8908, -1e+20, %v8780
      %v9037 = vsel %vm8909, -1e+20, %v8781
      %v9038 = vsel %vm8910, -1e+20, %v8782
      %v9039 = vsel %vm8911, -1e+20, %v8783
      %v9040 = vsel %vm8912, -1e+20, %v8784
      %v9041 = vsel %vm8913, -1e+20, %v8785
      %v9042 = vsel %vm8914, -1e+20, %v8786
      %v9043 = vsel %vm8915, -1e+20, %v8787
      %v9044 = vsel %vm8916, -1e+20, %v8788
      %v9045 = vsel %vm8917, -1e+20, %v8789
      %v9046 = vsel %vm8918, -1e+20, %v8790
      %v9047 = vsel %vm8919, -1e+20, %v8791
      %v9048 = vsel %vm8920, -1e+20, %v8792
      %v9049 = vsel %vm8921, -1e+20, %v8793
      %v9050 = vsel %vm8922, -1e+20, %v8794
      %v9051 = vsel %vm8923, -1e+20, %v8795
      %v9052 = vsel %vm8924, -1e+20, %v8796
      %v9053 = vsel %vm8925, -1e+20, %v8797
      %v9054 = vsel %vm8926, -1e+20, %v8798
      %v9055 = vsel %vm8927, -1e+20, %v8799
      %v9056 = vsel %vm8928, -1e+20, %v8800
      %v9057 = vsel %vm8929, -1e+20, %v8801
      %v9058 = vsel %vm8930, -1e+20, %v8802
      %v9059 = vsel %vm8931, -1e+20, %v8803
      %v9060 = vsel %vm8932, -1e+20, %v8804
      %v9061 = vsel %vm8933, -1e+20, %v8805
      %v9062 = vsel %vm8934, -1e+20, %v8806
      %v9063 = vsel %vm8935, -1e+20, %v8807
      %v9064 = vsel %vm8936, -1e+20, %v8808
      %v9065 = vsel %vm8937, -1e+20, %v8809
      %v9066 = vsel %vm8938, -1e+20, %v8810
      %9067 = vst.msk [vmem:[%s329] sm:$0xff] %vm1356, %v8939
      %9068 = vst.msk [vmem:[%s329 + $0x8] sm:$0xff] %vm1356, %v8940
      %9069 = vst.msk [vmem:[%s329 + $0x10] sm:$0xff] %vm1356, %v8941
      %9070 = vst.msk [vmem:[%s329 + $0x18] sm:$0xff] %vm1356, %v8942
      %9071 = vst.msk [vmem:[%s329 + $0x20] sm:$0xff] %vm1356, %v8943
      %9072 = vst.msk [vmem:[%s329 + $0x28] sm:$0xff] %vm1356, %v8944
      %9073 = vst.msk [vmem:[%s329 + $0x30] sm:$0xff] %vm1356, %v8945
      %9074 = vst.msk [vmem:[%s329 + $0x38] sm:$0xff] %vm1356, %v8946
      %9075 = vst.msk [vmem:[%s329 + $0x40] sm:$0xff] %vm1356, %v8947
      %9076 = vst.msk [vmem:[%s329 + $0x48] sm:$0xff] %vm1356, %v8948
      %9077 = vst.msk [vmem:[%s329 + $0x50] sm:$0xff] %vm1356, %v8949
      %9078 = vst.msk [vmem:[%s329 + $0x58] sm:$0xff] %vm1356, %v8950
      %9079 = vst.msk [vmem:[%s329 + $0x60] sm:$0xff] %vm1356, %v8951
      %9080 = vst.msk [vmem:[%s329 + $0x68] sm:$0xff] %vm1356, %v8952
      %9081 = vst.msk [vmem:[%s329 + $0x70] sm:$0xff] %vm1356, %v8953
      %9082 = vst.msk [vmem:[%s329 + $0x78] sm:$0xff] %vm1356, %v8954
      %9083 = vst.msk [vmem:[%s329 + $0x80] sm:$0xff] %vm1356, %v8955
      %9084 = vst.msk [vmem:[%s329 + $0x88] sm:$0xff] %vm1356, %v8956
      %9085 = vst.msk [vmem:[%s329 + $0x90] sm:$0xff] %vm1356, %v8957
      %9086 = vst.msk [vmem:[%s329 + $0x98] sm:$0xff] %vm1356, %v8958
      %9087 = vst.msk [vmem:[%s329 + $0xa0] sm:$0xff] %vm1356, %v8959
      %9088 = vst.msk [vmem:[%s329 + $0xa8] sm:$0xff] %vm1356, %v8960
      %9089 = vst.msk [vmem:[%s329 + $0xb0] sm:$0xff] %vm1356, %v8961
      %9090 = vst.msk [vmem:[%s329 + $0xb8] sm:$0xff] %vm1356, %v8962
      %9091 = vst.msk [vmem:[%s329 + $0xc0] sm:$0xff] %vm1356, %v8963
      %9092 = vst.msk [vmem:[%s329 + $0xc8] sm:$0xff] %vm1356, %v8964
      %9093 = vst.msk [vmem:[%s329 + $0xd0] sm:$0xff] %vm1356, %v8965
      %9094 = vst.msk [vmem:[%s329 + $0xd8] sm:$0xff] %vm1356, %v8966
      %9095 = vst.msk [vmem:[%s329 + $0xe0] sm:$0xff] %vm1356, %v8967
      %9096 = vst.msk [vmem:[%s329 + $0xe8] sm:$0xff] %vm1356, %v8968
      %9097 = vst.msk [vmem:[%s329 + $0xf0] sm:$0xff] %vm1356, %v8969
      %9098 = vst.msk [vmem:[%s329 + $0xf8] sm:$0xff] %vm1356, %v8970
      %9099 = vst.msk [vmem:[%s329 + $0x100] sm:$0xff] %vm1356, %v8971
      %9100 = vst.msk [vmem:[%s329 + $0x108] sm:$0xff] %vm1356, %v8972
      %9101 = vst.msk [vmem:[%s329 + $0x110] sm:$0xff] %vm1356, %v8973
      %9102 = vst.msk [vmem:[%s329 + $0x118] sm:$0xff] %vm1356, %v8974
      %9103 = vst.msk [vmem:[%s329 + $0x120] sm:$0xff] %vm1356, %v8975
      %9104 = vst.msk [vmem:[%s329 + $0x128] sm:$0xff] %vm1356, %v8976
      %9105 = vst.msk [vmem:[%s329 + $0x130] sm:$0xff] %vm1356, %v8977
      %9106 = vst.msk [vmem:[%s329 + $0x138] sm:$0xff] %vm1356, %v8978
      %9107 = vst.msk [vmem:[%s329 + $0x140] sm:$0xff] %vm1356, %v8979
      %9108 = vst.msk [vmem:[%s329 + $0x148] sm:$0xff] %vm1356, %v8980
      %9109 = vst.msk [vmem:[%s329 + $0x150] sm:$0xff] %vm1356, %v8981
      %9110 = vst.msk [vmem:[%s329 + $0x158] sm:$0xff] %vm1356, %v8982
      %9111 = vst.msk [vmem:[%s329 + $0x160] sm:$0xff] %vm1356, %v8983
      %9112 = vst.msk [vmem:[%s329 + $0x168] sm:$0xff] %vm1356, %v8984
      %9113 = vst.msk [vmem:[%s329 + $0x170] sm:$0xff] %vm1356, %v8985
      %9114 = vst.msk [vmem:[%s329 + $0x178] sm:$0xff] %vm1356, %v8986
      %9115 = vst.msk [vmem:[%s329 + $0x180] sm:$0xff] %vm1356, %v8987
      %9116 = vst.msk [vmem:[%s329 + $0x188] sm:$0xff] %vm1356, %v8988
      %9117 = vst.msk [vmem:[%s329 + $0x190] sm:$0xff] %vm1356, %v8989
      %9118 = vst.msk [vmem:[%s329 + $0x198] sm:$0xff] %vm1356, %v8990
      %9119 = vst.msk [vmem:[%s329 + $0x1a0] sm:$0xff] %vm1356, %v8991
      %9120 = vst.msk [vmem:[%s329 + $0x1a8] sm:$0xff] %vm1356, %v8992
      %9121 = vst.msk [vmem:[%s329 + $0x1b0] sm:$0xff] %vm1356, %v8993
      %9122 = vst.msk [vmem:[%s329 + $0x1b8] sm:$0xff] %vm1356, %v8994
      %9123 = vst.msk [vmem:[%s329 + $0x1c0] sm:$0xff] %vm1356, %v8995
      %9124 = vst.msk [vmem:[%s329 + $0x1c8] sm:$0xff] %vm1356, %v8996
      %9125 = vst.msk [vmem:[%s329 + $0x1d0] sm:$0xff] %vm1356, %v8997
      %9126 = vst.msk [vmem:[%s329 + $0x1d8] sm:$0xff] %vm1356, %v8998
      %9127 = vst.msk [vmem:[%s329 + $0x1e0] sm:$0xff] %vm1356, %v8999
      %9128 = vst.msk [vmem:[%s329 + $0x1e8] sm:$0xff] %vm1356, %v9000
      %9129 = vst.msk [vmem:[%s329 + $0x1f0] sm:$0xff] %vm1356, %v9001
      %9130 = vst.msk [vmem:[%s329 + $0x1f8] sm:$0xff] %vm1356, %v9002
      %9131 = vst.msk [vmem:[%s329 + $0x200] sm:$0xff] %vm1356, %v9003
      %9132 = vst.msk [vmem:[%s329 + $0x208] sm:$0xff] %vm1356, %v9004
      %9133 = vst.msk [vmem:[%s329 + $0x210] sm:$0xff] %vm1356, %v9005
      %9134 = vst.msk [vmem:[%s329 + $0x218] sm:$0xff] %vm1356, %v9006
      %9135 = vst.msk [vmem:[%s329 + $0x220] sm:$0xff] %vm1356, %v9007
      %9136 = vst.msk [vmem:[%s329 + $0x228] sm:$0xff] %vm1356, %v9008
      %9137 = vst.msk [vmem:[%s329 + $0x230] sm:$0xff] %vm1356, %v9009
      %9138 = vst.msk [vmem:[%s329 + $0x238] sm:$0xff] %vm1356, %v9010
      %9139 = vst.msk [vmem:[%s329 + $0x240] sm:$0xff] %vm1356, %v9011
      %9140 = vst.msk [vmem:[%s329 + $0x248] sm:$0xff] %vm1356, %v9012
      %9141 = vst.msk [vmem:[%s329 + $0x250] sm:$0xff] %vm1356, %v9013
      %9142 = vst.msk [vmem:[%s329 + $0x258] sm:$0xff] %vm1356, %v9014
      %9143 = vst.msk [vmem:[%s329 + $0x260] sm:$0xff] %vm1356, %v9015
      %9144 = vst.msk [vmem:[%s329 + $0x268] sm:$0xff] %vm1356, %v9016
      %9145 = vst.msk [vmem:[%s329 + $0x270] sm:$0xff] %vm1356, %v9017
      %9146 = vst.msk [vmem:[%s329 + $0x278] sm:$0xff] %vm1356, %v9018
      %9147 = vst.msk [vmem:[%s329 + $0x280] sm:$0xff] %vm1356, %v9019
      %9148 = vst.msk [vmem:[%s329 + $0x288] sm:$0xff] %vm1356, %v9020
      %9149 = vst.msk [vmem:[%s329 + $0x290] sm:$0xff] %vm1356, %v9021
      %9150 = vst.msk [vmem:[%s329 + $0x298] sm:$0xff] %vm1356, %v9022
      %9151 = vst.msk [vmem:[%s329 + $0x2a0] sm:$0xff] %vm1356, %v9023
      %9152 = vst.msk [vmem:[%s329 + $0x2a8] sm:$0xff] %vm1356, %v9024
      %9153 = vst.msk [vmem:[%s329 + $0x2b0] sm:$0xff] %vm1356, %v9025
      %9154 = vst.msk [vmem:[%s329 + $0x2b8] sm:$0xff] %vm1356, %v9026
      %9155 = vst.msk [vmem:[%s329 + $0x2c0] sm:$0xff] %vm1356, %v9027
      %9156 = vst.msk [vmem:[%s329 + $0x2c8] sm:$0xff] %vm1356, %v9028
      %9157 = vst.msk [vmem:[%s329 + $0x2d0] sm:$0xff] %vm1356, %v9029
      %9158 = vst.msk [vmem:[%s329 + $0x2d8] sm:$0xff] %vm1356, %v9030
      %9159 = vst.msk [vmem:[%s329 + $0x2e0] sm:$0xff] %vm1356, %v9031
      %9160 = vst.msk [vmem:[%s329 + $0x2e8] sm:$0xff] %vm1356, %v9032
      %9161 = vst.msk [vmem:[%s329 + $0x2f0] sm:$0xff] %vm1356, %v9033
      %9162 = vst.msk [vmem:[%s329 + $0x2f8] sm:$0xff] %vm1356, %v9034
      %9163 = vst.msk [vmem:[%s329 + $0x300] sm:$0xff] %vm1356, %v9035
      %9164 = vst.msk [vmem:[%s329 + $0x308] sm:$0xff] %vm1356, %v9036
      %9165 = vst.msk [vmem:[%s329 + $0x310] sm:$0xff] %vm1356, %v9037
      %9166 = vst.msk [vmem:[%s329 + $0x318] sm:$0xff] %vm1356, %v9038
      %9167 = vst.msk [vmem:[%s329 + $0x320] sm:$0xff] %vm1356, %v9039
      %9168 = vst.msk [vmem:[%s329 + $0x328] sm:$0xff] %vm1356, %v9040
      %9169 = vst.msk [vmem:[%s329 + $0x330] sm:$0xff] %vm1356, %v9041
      %9170 = vst.msk [vmem:[%s329 + $0x338] sm:$0xff] %vm1356, %v9042
      %9171 = vst.msk [vmem:[%s329 + $0x340] sm:$0xff] %vm1356, %v9043
      %9172 = vst.msk [vmem:[%s329 + $0x348] sm:$0xff] %vm1356, %v9044
      %9173 = vst.msk [vmem:[%s329 + $0x350] sm:$0xff] %vm1356, %v9045
      %9174 = vst.msk [vmem:[%s329 + $0x358] sm:$0xff] %vm1356, %v9046
      %9175 = vst.msk [vmem:[%s329 + $0x360] sm:$0xff] %vm1356, %v9047
      %9176 = vst.msk [vmem:[%s329 + $0x368] sm:$0xff] %vm1356, %v9048
      %9177 = vst.msk [vmem:[%s329 + $0x370] sm:$0xff] %vm1356, %v9049
      %9178 = vst.msk [vmem:[%s329 + $0x378] sm:$0xff] %vm1356, %v9050
      %9179 = vst.msk [vmem:[%s329 + $0x380] sm:$0xff] %vm1356, %v9051
      %9180 = vst.msk [vmem:[%s329 + $0x388] sm:$0xff] %vm1356, %v9052
      %9181 = vst.msk [vmem:[%s329 + $0x390] sm:$0xff] %vm1356, %v9053
      %9182 = vst.msk [vmem:[%s329 + $0x398] sm:$0xff] %vm1356, %v9054
      %9183 = vst.msk [vmem:[%s329 + $0x3a0] sm:$0xff] %vm1356, %v9055
      %9184 = vst.msk [vmem:[%s329 + $0x3a8] sm:$0xff] %vm1356, %v9056
      %9185 = vst.msk [vmem:[%s329 + $0x3b0] sm:$0xff] %vm1356, %v9057
      %9186 = vst.msk [vmem:[%s329 + $0x3b8] sm:$0xff] %vm1356, %v9058
      %9187 = vst.msk [vmem:[%s329 + $0x3c0] sm:$0xff] %vm1356, %v9059
      %9188 = vst.msk [vmem:[%s329 + $0x3c8] sm:$0xff] %vm1356, %v9060
      %9189 = vst.msk [vmem:[%s329 + $0x3d0] sm:$0xff] %vm1356, %v9061
      %9190 = vst.msk [vmem:[%s329 + $0x3d8] sm:$0xff] %vm1356, %v9062
      %9191 = vst.msk [vmem:[%s329 + $0x3e0] sm:$0xff] %vm1356, %v9063
      %9192 = vst.msk [vmem:[%s329 + $0x3e8] sm:$0xff] %vm1356, %v9064
      %9193 = vst.msk [vmem:[%s329 + $0x3f0] sm:$0xff] %vm1356, %v9065
      %9194 = vst.msk [vmem:[%s329 + $0x3f8] sm:$0xff] %vm1356, %v9066
      %s9195 = smul.u32 128, %s19
      %p9196 = scmp.lt.s32.totalorder %s9195, 255
      %s9197 = scalar_select %p9196, %s9195, 255
      %s9198 = smul.addr %s9197, 8
      %s9199 = scalar_lea.vmem %s8, %s9198
      // Predicated region
      $region53: #{tpu_custom_call.1} parent=51 // pred_check
        %p9200 = pneg %p215
      $region54: #{tpu_custom_call.1} parent=51 // pred_check_branch
        %9202 = sbr.rel (%p9200) target = $region56
      $region55: #{tpu_custom_call.1} parent=51 // pred_region
        %s9203 = smul.u32 128, %s19
      $region56: #{tpu_custom_call.1} parent=51 // pred_fallthru
        _
    $region52: #{tpu_custom_call.1} parent=5 // pred_fallthru
      _
    %p9204 = scmp.le.s32.totalorder 2, %s14
    // Predicated region
    $region57: #{tpu_custom_call.1} parent=5 // pred_check
      %p9205 = pneg %p9204
    $region58: #{tpu_custom_call.1} parent=5 // pred_check_branch
      %9207 = sbr.rel (%p9205) target = $region60
    $region59: #{tpu_custom_call.1} parent=5 // pred_region
      %s9208 = ssub.s32 %s14, 2
      // Predicated region
      $region61: #{tpu_custom_call.1} parent=59 // pred_check
        %p9209 = pneg %p221
      $region62: #{tpu_custom_call.1} parent=59 // pred_check_branch
        %9211 = sbr.rel (%p9209) target = $region64
      $region63: #{tpu_custom_call.1} parent=59 // pred_region
        %s9212 = smul.u32 128, %s20
        %p9213 = scmp.lt.s32.totalorder %s9212, 255
        %s9214 = scalar_select %p9213, %s9212, 255
        %s9215 = smul.addr %s9214, 8
        %s9216 = scalar_lea.vmem %s8, %s9215
      $region64: #{tpu_custom_call.1} parent=59 // pred_fallthru
        _
    $region60: #{tpu_custom_call.1} parent=5 // pred_fallthru
      _
  $region6: #{tpu_custom_call.1} parent=0 // loop_footer
    %s18 = sadd.s32 1, %s14
  $region7: #{tpu_custom_call.1} parent=0 // loop_footer_branch
    %13 = sbr.rel target = $region3
  $region8: #{tpu_custom_call.1} parent=0 // loop_exit
    _

</llo_original>
